<compile_context>
chip_gen: v6e
topology: v6e:2x2x1
jax: 0.10.0
libtpu: 0.0.40
codegen_flags: <defaults>
</compile_context>

<pallas_src>
import functools

import jax
import jax.numpy as jnp
from jax.experimental import pallas as pl
from jax.experimental.pallas import tpu as pltpu


# ----------------------------------------------------------------------------
# helpers
# ----------------------------------------------------------------------------
def _pick_row_tile(H, W):
    """Rows of the image processed per grid step.

    th*W (flattened pixels per step) must be a multiple of 128 so the
    transposed head stores are full-lane (unmasked), and we keep >=2 row tiles
    per image when possible so the grid has >=4 steps for B>=2 (v7x dual-TC
    sharding via 'parallel' semantics).  Falls back to th=H (block == full
    extent, always legal)."""
    valid = [th for th in range(1, H + 1)
             if H % th == 0 and (th * W) % 128 == 0 and th * W <= 4096]
    multi = [th for th in valid if H // th >= 2]
    if multi:
        return max(multi)
    if valid:
        return min(valid)
    return H


def _vmem_limit_bytes(*nbytes):
    """Double-buffered block bytes + headroom, clamped to a v7x-safe ceiling
    (64 MiB physical / 32 MiB scoped default there; v5e/v6e have 128 MiB)."""
    need = 2 * sum(int(n) for n in nbytes) + (8 << 20)
    return int(min(max(need, 16 << 20), 48 << 20))


# ----------------------------------------------------------------------------
# Pallas kernel A: fused pix2vox chain (stem 3x3 conv + residual 1x1 chain +
# per-stack heads), one (batch, row-tile) image slab per grid step.
# ----------------------------------------------------------------------------
def _fused_p2v_kernel(x_ref, sw_ref, sb_ref, rw_ref, rb_ref, hw_ref, hb_ref,
                      heads_ref, last_ref, *, stacks, blocks, th, W, C, feat):
    row0 = pl.multiple_of(pl.program_id(1) * th, th)
    M = th * W

    # --- stem: 3x3 conv as 9 shifted in-VMEM taps (no HBM im2col) -----------
    f = jnp.zeros((M, feat), jnp.float32)
    for di in range(3):
        for dj in range(3):
            patch = x_ref[0, pl.ds(row0 + di, th), pl.ds(dj, W), :]
            patch = patch.reshape(M, C)          # (th,W,C)->(th*W,C): W % 8 == 0
            f = f + jnp.dot(patch, sw_ref[di * 3 + dj],
                            preferred_element_type=jnp.float32)
    f = jnp.maximum(f + sb_ref[...], 0.0)

    # --- single transpose: pixels on lanes for the rest of the chain --------
    ft = f.T                                      # (feat, M), M multiple of 128

    # --- residual 1x1 chain + per-stack heads, activation resident in VMEM --
    # TODO(synk): switch to lax.fori_loop + VMEM scratch at production feat.
    idx = 0
    for si in range(stacks):
        for _ in range(blocks):
            h = jnp.dot(rw_ref[idx], ft.astype(jnp.bfloat16),
                        preferred_element_type=jnp.float32) + rb_ref[idx]
            ft = jnp.maximum(ft + h, 0.0)
            idx += 1
        head = jnp.dot(hw_ref[si], ft.astype(jnp.bfloat16),
                       preferred_element_type=jnp.float32) + hb_ref[si]
        heads_ref[si, 0] = head.astype(heads_ref.dtype)      # lane-dense store
        if si == stacks - 1:
            last_ref[0] = head.astype(last_ref.dtype)        # bf16 for vox2coord


def pallas_pix2vox(x_pad, p, *, stacks, blocks, feat, dmax, H, W, C):
    """x_pad: (B, H+2, W+2, C) bf16 -> heads (stacks,B,dmax,H*W) f32,
    last (B,dmax,H*W) bf16 (channels-first, lane-dense)."""
    B = x_pad.shape[0]
    th = _pick_row_tile(H, W)
    n_ht = H // th
    M = th * W
    HW = H * W
    nres = stacks * blocks

    wt_bytes = (9 * C * feat * 2 + feat * 4 + nres * feat * feat * 2
                + nres * feat * 4 + stacks * dmax * feat * 2 + stacks * dmax * 4)
    blk_bytes = ((H + 2) * (W + 2) * C * 2 + wt_bytes
                 + stacks * dmax * M * 4 + dmax * M * 2)
    cost = pl.CostEstimate(
        flops=2 * B * HW * (9 * C * feat + nres * feat * feat
                            + stacks * feat * dmax),
        transcendentals=0,
        bytes_accessed=int(x_pad.size * 2 + wt_bytes
                           + stacks * B * dmax * HW * 4 + B * dmax * HW * 2))

    heads, last = pl.pallas_call(
        functools.partial(_fused_p2v_kernel, stacks=stacks, blocks=blocks,
                          th=th, W=W, C=C, feat=feat),
        out_shape=(jax.ShapeDtypeStruct((stacks, B, dmax, HW), jnp.float32),
                   jax.ShapeDtypeStruct((B, dmax, HW), jnp.bfloat16)),
        grid_spec=pltpu.PrefetchScalarGridSpec(
            num_scalar_prefetch=0,
            grid=(B, n_ht),
            in_specs=[
                pl.BlockSpec((1, H + 2, W + 2, C), lambda b, hi: (b, 0, 0, 0)),
                pl.BlockSpec((9, C, feat), lambda b, hi: (0, 0, 0)),
                pl.BlockSpec((1, feat), lambda b, hi: (0, 0)),
                pl.BlockSpec((nres, feat, feat), lambda b, hi: (0, 0, 0)),
                pl.BlockSpec((nres, feat, 1), lambda b, hi: (0, 0, 0)),
                pl.BlockSpec((stacks, dmax, feat), lambda b, hi: (0, 0, 0)),
                pl.BlockSpec((stacks, dmax, 1), lambda b, hi: (0, 0, 0)),
            ],
            out_specs=(
                pl.BlockSpec((stacks, 1, dmax, M), lambda b, hi: (0, b, 0, hi)),
                pl.BlockSpec((1, dmax, M), lambda b, hi: (b, 0, hi)),
            ),
        ),
        compiler_params=pltpu.CompilerParams(
            dimension_semantics=("parallel", "parallel"),
            vmem_limit_bytes=_vmem_limit_bytes(blk_bytes)),
        cost_estimate=cost,
    )(x_pad, p["stem_w"], p["stem_b"], p["res_w_t"], p["res_b_t"],
      p["head_w_t"], p["head_b_t"])
    return heads, last


# ----------------------------------------------------------------------------
# Pallas kernel B: fused vox2coord (3x3x3 stride-2 conv -> fc1 -> fc2),
# one batch element per grid step; enc / h1 never leave VMEM.
# ----------------------------------------------------------------------------
def _fused_v2c_kernel(cols3t_ref, c3dw_ref, c3db_ref, fc1w_ref, fc1b_ref,
                      fc2w_ref, fc2b_ref, out_ref, *, conv3d_ch):
    # 3D conv over the 27 taps, channels-first -> (Cc, O123) lane-dense
    enc = jnp.dot(c3dw_ref[...], cols3t_ref[0],
                  preferred_element_type=jnp.float32)
    enc = jnp.maximum(enc + c3db_ref[...], 0.0)
    enc_bf = enc.astype(jnp.bfloat16)
    # fc1, flatten-free: channel-major accumulation h1 = sum_c enc[c,:] @ W1[c]
    h1 = fc1b_ref[...]
    for c in range(conv3d_ch):
        h1 = h1 + jnp.dot(enc_bf[c:c + 1, :], fc1w_ref[c],
                          preferred_element_type=jnp.float32)
    h1 = jnp.maximum(h1, 0.0)
    out = jnp.dot(h1.astype(jnp.bfloat16), fc2w_ref[...],
                  preferred_element_type=jnp.float32) + fc2b_ref[...]
    out_ref[0] = out.astype(out_ref.dtype)


def pallas_vox2coord(cols3t, p):
    """cols3t: (B, 27, O123) bf16 -> (B, 1, nParts*3) f32."""
    B, K3, O123 = cols3t.shape
    Cc = p["c3d_wt"].shape[0]
    hidden = p["fc1_w"].shape[-1]
    P3 = p["fc2_w"].shape[-1]

    wt_bytes = (Cc * K3 * 2 + Cc * 4 + Cc * O123 * hidden * 2 + hidden * 4
                + hidden * P3 * 2 + P3 * 4)
    blk_bytes = K3 * O123 * 2 + wt_bytes + P3 * 4
    cost = pl.CostEstimate(
        flops=2 * B * (Cc * K3 * O123 + Cc * O123 * hidden + hidden * P3),
        transcendentals=0,
        bytes_accessed=int(cols3t.size * 2 + wt_bytes + B * P3 * 4))

    return pl.pallas_call(
        functools.partial(_fused_v2c_kernel, conv3d_ch=Cc),
        out_shape=jax.ShapeDtypeStruct((B, 1, P3), jnp.float32),
        grid_spec=pltpu.PrefetchScalarGridSpec(
            num_scalar_prefetch=0,
            grid=(B,),
            in_specs=[
                pl.BlockSpec((1, K3, O123), lambda b: (b, 0, 0)),
                pl.BlockSpec((Cc, K3), lambda b: (0, 0)),
                pl.BlockSpec((Cc, 1), lambda b: (0, 0)),
                pl.BlockSpec((Cc, O123, hidden), lambda b: (0, 0, 0)),
                pl.BlockSpec((1, hidden), lambda b: (0, 0)),
                pl.BlockSpec((hidden, P3), lambda b: (0, 0)),
                pl.BlockSpec((1, P3), lambda b: (0, 0)),
            ],
            out_specs=pl.BlockSpec((1, 1, P3), lambda b: (b, 0, 0)),
        ),
        compiler_params=pltpu.CompilerParams(
            dimension_semantics=("parallel",),
            vmem_limit_bytes=_vmem_limit_bytes(blk_bytes)),
        cost_estimate=cost,
    )(cols3t, p["c3d_wt"], p["c3d_bt"], p["fc1_w"], p["fc1_b"],
      p["fc2_w"], p["fc2_b"])


# ----------------------------------------------------------------------------
# JAX glue: 3D stride-2 im2col on the bf16 heatmap (1-channel), channel-major.
# ----------------------------------------------------------------------------
def im2col_3d_t(x, k=3, pad=1, stride=2):
    # x: (B, D, H, W) bf16 -> (B, k^3, O1*O2*O3) bf16
    xp = jnp.pad(x, ((0, 0), (pad, pad), (pad, pad), (pad, pad)))
    B, D1, D2, D3 = xp.shape
    O1 = (D1 - k) // stride + 1
    O2 = (D2 - k) // stride + 1
    O3 = (D3 - k) // stride + 1
    taps = []
    for di in range(k):
        for dj in range(k):
            for dk in range(k):
                t = xp[:, di:di + stride * O1:stride,
                          dj:dj + stride * O2:stride,
                          dk:dk + stride * O3:stride]
                taps.append(t.reshape(B, 1, O1 * O2 * O3))
    return jnp.concatenate(taps, axis=1), (O1, O2, O3)


# ----------------------------------------------------------------------------
# Parameters: deterministic synthetic init; weights pre-cast to bf16, already
# in the transposed ("pixels on lanes") orientation and pre-padded to dmax.
# ----------------------------------------------------------------------------
def init_params(key, *, in_ch, feat, stacks, blocks, depth_res, nParts,
                vox_dhw, conv3d_ch, fc_hidden):
    ks = iter(jax.random.split(key, 32))
    s = 0.05

    def w(shape):
        return s * jax.random.normal(next(ks), shape, jnp.float32)

    dmax = max(depth_res)
    nres = stacks * blocks
    p = {}
    # pix2vox stem: 3x3 conv, per-tap (C, feat) weights
    p["stem_w"] = w((9, in_ch, feat)).astype(jnp.bfloat16)
    p["stem_b"] = w((1, feat))
    # residual 1x1 convs, stored transposed: h_t = W @ f_t
    p["res_w_t"] = w((nres, feat, feat)).astype(jnp.bfloat16)
    p["res_b_t"] = w((nres, feat, 1))
    # per-stack heads -> depth_res[s] channels, zero-padded rows up to dmax
    hw, hb = [], []
    for si in range(stacks):
        hw.append(jnp.pad(w((depth_res[si], feat)),
                          ((0, dmax - depth_res[si]), (0, 0))))
        hb.append(jnp.pad(w((depth_res[si], 1)),
                          ((0, dmax - depth_res[si]), (0, 0))))
    p["head_w_t"] = jnp.stack(hw).astype(jnp.bfloat16)
    p["head_b_t"] = jnp.stack(hb)
    # vox2coord: 3x3x3 stride-2 conv (1 -> conv3d_ch), channels-first weights
    D, H, W = vox_dhw
    O123 = (D // 2) * (H // 2) * (W // 2)
    p["c3d_wt"] = w((conv3d_ch, 27)).astype(jnp.bfloat16)
    p["c3d_bt"] = w((conv3d_ch, 1))
    p["fc1_w"] = w((conv3d_ch, O123, fc_hidden)).astype(jnp.bfloat16)
    p["fc1_b"] = w((1, fc_hidden))
    p["fc2_w"] = w((fc_hidden, nParts * 3)).astype(jnp.bfloat16)
    p["fc2_b"] = w((1, nParts * 3))
    return p


# ----------------------------------------------------------------------------
# Forward pass (mirrors pvcNet.forward: vox_list, voxel, coord).
# ----------------------------------------------------------------------------
def pvcnet_forward(params, x_nchw, *, stacks, blocks, depth_res, nParts, feat):
    B, C, H, W = x_nchw.shape
    dmax = max(depth_res)

    # pad once, NHWC bf16 (1x traffic); the 3x3 taps are taken in-kernel
    x = jnp.transpose(x_nchw, (0, 2, 3, 1)).astype(jnp.bfloat16)
    x_pad = jnp.pad(x, ((0, 0), (1, 1), (1, 1), (0, 0)))

    heads, last_bf = pallas_pix2vox(x_pad, params, stacks=stacks, blocks=blocks,
                                    feat=feat, dmax=dmax, H=H, W=W, C=C)
    # heads: (stacks, B, dmax, H*W) f32, already channels-first -> pure reshape
    vox_list = [heads[s, :, :depth_res[s], :].reshape(B, depth_res[s], H, W)
                for s in range(stacks)]
    voxel = vox_list[-1][:, None]                         # (B, 1, D, H, W)

    # vox2coord consumes the bf16 last heatmap emitted by the fused kernel
    D = depth_res[-1]
    v = last_bf[:, :D, :].reshape(B, D, H, W)
    cols3t, _ = im2col_3d_t(v)                            # (B, 27, O123) bf16
    out = pallas_vox2coord(cols3t, params)                # (B, 1, nParts*3)
    coord = out.reshape(B, nParts, 3)
    return vox_list, voxel, coord


# ----------------------------------------------------------------------------
if __name__ == "__main__":
    # small config consistent with pvcNet(stacks, blocks, depth_res, nParts)
    stacks, blocks = 2, 1
    depth_res = [8, 16]          # coarse-to-fine (c2f=True)
    nParts = 4
    feat = 16
    B, C, H, W = 2, 3, 16, 16
    conv3d_ch, fc_hidden = 8, 64

    key = jax.random.PRNGKey(0)
    kx, kp = jax.random.split(key)
    x = jax.random.normal(kx, (B, C, H, W), jnp.float32)   # NCHW like PyTorch

    params = init_params(
        kp, in_ch=C, feat=feat, stacks=stacks, blocks=blocks,
        depth_res=depth_res, nParts=nParts,
        vox_dhw=(depth_res[-1], H, W), conv3d_ch=conv3d_ch, fc_hidden=fc_hidden)

    fwd = jax.jit(functools.partial(
        pvcnet_forward, stacks=stacks, blocks=blocks,
        depth_res=depth_res, nParts=nParts, feat=feat))

    vox_list, voxel, coord = fwd(params, x)

    jax.block_until_ready(coord)
    jax.block_until_ready(voxel)
    for v in vox_list:
        jax.block_until_ready(v)

    assert len(vox_list) == stacks
    assert vox_list[0].shape == (B, depth_res[0], H, W)
    assert vox_list[1].shape == (B, depth_res[1], H, W)
    assert voxel.shape == (B, 1, depth_res[-1], H, W)
    assert coord.shape == (B, nParts, 3)
    print("KERNEL_OK")
</pallas_src>

<mosaic_0001>
module attributes {stable_mosaic.version = 11 : i64} {
  func.func @_fused_p2v_kernel(%arg0: i32, %arg1: i32, %arg2: memref<1x18x18x3xbf16, #tpu.memory_space<vmem>>, %arg3: memref<9x3x16xbf16, #tpu.memory_space<vmem>>, %arg4: memref<1x16xf32, #tpu.memory_space<vmem>>, %arg5: memref<2x16x16xbf16, #tpu.memory_space<vmem>>, %arg6: memref<2x16x1xf32, #tpu.memory_space<vmem>>, %arg7: memref<2x16x16xbf16, #tpu.memory_space<vmem>>, %arg8: memref<2x16x1xf32, #tpu.memory_space<vmem>>, %arg9: memref<2x1x16x128xf32, #tpu.memory_space<vmem>>, %arg10: memref<1x16x128xbf16, #tpu.memory_space<vmem>>) attributes {dimension_semantics = [#tpu.dimension_semantics<parallel>, #tpu.dimension_semantics<parallel>], iteration_bounds = array<i64: 2, 2>, scalar_prefetch = 0 : i64, scratch_operands = 0 : i64, tpu.core_type = #tpu.core_type<tc>, window_params = [{transform_indices = @transform_0, window_bounds = array<i64: 1, 18, 18, 3>}, {pipeline_mode = #tpu.pipeline_mode<synchronous>, transform_indices = @transform_1, window_bounds = array<i64: 9, 3, 16>}, {pipeline_mode = #tpu.pipeline_mode<synchronous>, transform_indices = @transform_2, window_bounds = array<i64: 1, 16>}, {pipeline_mode = #tpu.pipeline_mode<synchronous>, transform_indices = @transform_3, window_bounds = array<i64: 2, 16, 16>}, {pipeline_mode = #tpu.pipeline_mode<synchronous>, transform_indices = @transform_4, window_bounds = array<i64: 2, 16, 1>}, {pipeline_mode = #tpu.pipeline_mode<synchronous>, transform_indices = @transform_5, window_bounds = array<i64: 2, 16, 16>}, {pipeline_mode = #tpu.pipeline_mode<synchronous>, transform_indices = @transform_6, window_bounds = array<i64: 2, 16, 1>}, {transform_indices = @transform_7, window_bounds = array<i64: 2, 1, 16, 128>}, {transform_indices = @transform_8, window_bounds = array<i64: 1, 16, 128>}]} {
    %c8_i32 = arith.constant 8 : i32
    %0 = arith.muli %arg1, %c8_i32 : i32
    %1 = tpu.assume_multiple %0, 8 : i32
    %cst = arith.constant 0.000000e+00 : f32
    %2 = vector.broadcast %cst : f32 to vector<128x16xf32>
    %c0_i32 = arith.constant 0 : i32
    %3 = arith.addi %1, %c0_i32 : i32
    %c0 = arith.constant 0 : index
    %4 = arith.index_cast %3 : i32 to index
    %c0_0 = arith.constant 0 : index
    %c0_1 = arith.constant 0 : index
    %5 = vector.load %arg2[%c0, %4, %c0_0, %c0_1] : memref<1x18x18x3xbf16, #tpu.memory_space<vmem>>, vector<1x8x16x3xbf16>
    %6 = vector.shape_cast %5 : vector<1x8x16x3xbf16> to vector<8x16x3xbf16>
    %7 = vector.shape_cast %6 : vector<8x16x3xbf16> to vector<128x3xbf16>
    %c0_2 = arith.constant 0 : index
    %c0_3 = arith.constant 0 : index
    %c0_4 = arith.constant 0 : index
    %8 = vector.load %arg3[%c0_2, %c0_3, %c0_4] : memref<9x3x16xbf16, #tpu.memory_space<vmem>>, vector<1x3x16xbf16>
    %9 = vector.shape_cast %8 : vector<1x3x16xbf16> to vector<3x16xbf16>
    %cst_5 = arith.constant dense<0.000000e+00> : vector<128x16xf32>
    %10 = tpu.matmul %7, %9, %cst_5 {dimension_numbers = #tpu.dot_dimension_numbers<[1], [0], [0], [1], [0, 0, 1, 1], [], []>} : vector<128x3xbf16>, vector<3x16xbf16>, vector<128x16xf32> -> vector<128x16xf32>
    %11 = arith.addf %2, %10 : vector<128x16xf32>
    %c0_i32_6 = arith.constant 0 : i32
    %12 = arith.addi %1, %c0_i32_6 : i32
    %c0_7 = arith.constant 0 : index
    %13 = arith.index_cast %12 : i32 to index
    %c1 = arith.constant 1 : index
    %c0_8 = arith.constant 0 : index
    %14 = vector.load %arg2[%c0_7, %13, %c1, %c0_8] : memref<1x18x18x3xbf16, #tpu.memory_space<vmem>>, vector<1x8x16x3xbf16>
    %15 = vector.shape_cast %14 : vector<1x8x16x3xbf16> to vector<8x16x3xbf16>
    %16 = vector.shape_cast %15 : vector<8x16x3xbf16> to vector<128x3xbf16>
    %c1_9 = arith.constant 1 : index
    %c0_10 = arith.constant 0 : index
    %c0_11 = arith.constant 0 : index
    %17 = vector.load %arg3[%c1_9, %c0_10, %c0_11] : memref<9x3x16xbf16, #tpu.memory_space<vmem>>, vector<1x3x16xbf16>
    %18 = vector.shape_cast %17 : vector<1x3x16xbf16> to vector<3x16xbf16>
    %cst_12 = arith.constant dense<0.000000e+00> : vector<128x16xf32>
    %19 = tpu.matmul %16, %18, %cst_12 {dimension_numbers = #tpu.dot_dimension_numbers<[1], [0], [0], [1], [0, 0, 1, 1], [], []>} : vector<128x3xbf16>, vector<3x16xbf16>, vector<128x16xf32> -> vector<128x16xf32>
    %20 = arith.addf %11, %19 : vector<128x16xf32>
    %c0_i32_13 = arith.constant 0 : i32
    %21 = arith.addi %1, %c0_i32_13 : i32
    %c0_14 = arith.constant 0 : index
    %22 = arith.index_cast %21 : i32 to index
    %c2 = arith.constant 2 : index
    %c0_15 = arith.constant 0 : index
    %23 = vector.load %arg2[%c0_14, %22, %c2, %c0_15] : memref<1x18x18x3xbf16, #tpu.memory_space<vmem>>, vector<1x8x16x3xbf16>
    %24 = vector.shape_cast %23 : vector<1x8x16x3xbf16> to vector<8x16x3xbf16>
    %25 = vector.shape_cast %24 : vector<8x16x3xbf16> to vector<128x3xbf16>
    %c2_16 = arith.constant 2 : index
    %c0_17 = arith.constant 0 : index
    %c0_18 = arith.constant 0 : index
    %26 = vector.load %arg3[%c2_16, %c0_17, %c0_18] : memref<9x3x16xbf16, #tpu.memory_space<vmem>>, vector<1x3x16xbf16>
    %27 = vector.shape_cast %26 : vector<1x3x16xbf16> to vector<3x16xbf16>
    %cst_19 = arith.constant dense<0.000000e+00> : vector<128x16xf32>
    %28 = tpu.matmul %25, %27, %cst_19 {dimension_numbers = #tpu.dot_dimension_numbers<[1], [0], [0], [1], [0, 0, 1, 1], [], []>} : vector<128x3xbf16>, vector<3x16xbf16>, vector<128x16xf32> -> vector<128x16xf32>
    %29 = arith.addf %20, %28 : vector<128x16xf32>
    %c1_i32 = arith.constant 1 : i32
    %30 = arith.addi %1, %c1_i32 : i32
    %c0_20 = arith.constant 0 : index
    %31 = arith.index_cast %30 : i32 to index
    %c0_21 = arith.constant 0 : index
    %c0_22 = arith.constant 0 : index
    %32 = vector.load %arg2[%c0_20, %31, %c0_21, %c0_22] : memref<1x18x18x3xbf16, #tpu.memory_space<vmem>>, vector<1x8x16x3xbf16>
    %33 = vector.shape_cast %32 : vector<1x8x16x3xbf16> to vector<8x16x3xbf16>
    %34 = vector.shape_cast %33 : vector<8x16x3xbf16> to vector<128x3xbf16>
    %c3 = arith.constant 3 : index
    %c0_23 = arith.constant 0 : index
    %c0_24 = arith.constant 0 : index
    %35 = vector.load %arg3[%c3, %c0_23, %c0_24] : memref<9x3x16xbf16, #tpu.memory_space<vmem>>, vector<1x3x16xbf16>
    %36 = vector.shape_cast %35 : vector<1x3x16xbf16> to vector<3x16xbf16>
    %cst_25 = arith.constant dense<0.000000e+00> : vector<128x16xf32>
    %37 = tpu.matmul %34, %36, %cst_25 {dimension_numbers = #tpu.dot_dimension_numbers<[1], [0], [0], [1], [0, 0, 1, 1], [], []>} : vector<128x3xbf16>, vector<3x16xbf16>, vector<128x16xf32> -> vector<128x16xf32>
    %38 = arith.addf %29, %37 : vector<128x16xf32>
    %c1_i32_26 = arith.constant 1 : i32
    %39 = arith.addi %1, %c1_i32_26 : i32
    %c0_27 = arith.constant 0 : index
    %40 = arith.index_cast %39 : i32 to index
    %c1_28 = arith.constant 1 : index
    %c0_29 = arith.constant 0 : index
    %41 = vector.load %arg2[%c0_27, %40, %c1_28, %c0_29] : memref<1x18x18x3xbf16, #tpu.memory_space<vmem>>, vector<1x8x16x3xbf16>
    %42 = vector.shape_cast %41 : vector<1x8x16x3xbf16> to vector<8x16x3xbf16>
    %43 = vector.shape_cast %42 : vector<8x16x3xbf16> to vector<128x3xbf16>
    %c4 = arith.constant 4 : index
    %c0_30 = arith.constant 0 : index
    %c0_31 = arith.constant 0 : index
    %44 = vector.load %arg3[%c4, %c0_30, %c0_31] : memref<9x3x16xbf16, #tpu.memory_space<vmem>>, vector<1x3x16xbf16>
    %45 = vector.shape_cast %44 : vector<1x3x16xbf16> to vector<3x16xbf16>
    %cst_32 = arith.constant dense<0.000000e+00> : vector<128x16xf32>
    %46 = tpu.matmul %43, %45, %cst_32 {dimension_numbers = #tpu.dot_dimension_numbers<[1], [0], [0], [1], [0, 0, 1, 1], [], []>} : vector<128x3xbf16>, vector<3x16xbf16>, vector<128x16xf32> -> vector<128x16xf32>
    %47 = arith.addf %38, %46 : vector<128x16xf32>
    %c1_i32_33 = arith.constant 1 : i32
    %48 = arith.addi %1, %c1_i32_33 : i32
    %c0_34 = arith.constant 0 : index
    %49 = arith.index_cast %48 : i32 to index
    %c2_35 = arith.constant 2 : index
    %c0_36 = arith.constant 0 : index
    %50 = vector.load %arg2[%c0_34, %49, %c2_35, %c0_36] : memref<1x18x18x3xbf16, #tpu.memory_space<vmem>>, vector<1x8x16x3xbf16>
    %51 = vector.shape_cast %50 : vector<1x8x16x3xbf16> to vector<8x16x3xbf16>
    %52 = vector.shape_cast %51 : vector<8x16x3xbf16> to vector<128x3xbf16>
    %c5 = arith.constant 5 : index
    %c0_37 = arith.constant 0 : index
    %c0_38 = arith.constant 0 : index
    %53 = vector.load %arg3[%c5, %c0_37, %c0_38] : memref<9x3x16xbf16, #tpu.memory_space<vmem>>, vector<1x3x16xbf16>
    %54 = vector.shape_cast %53 : vector<1x3x16xbf16> to vector<3x16xbf16>
    %cst_39 = arith.constant dense<0.000000e+00> : vector<128x16xf32>
    %55 = tpu.matmul %52, %54, %cst_39 {dimension_numbers = #tpu.dot_dimension_numbers<[1], [0], [0], [1], [0, 0, 1, 1], [], []>} : vector<128x3xbf16>, vector<3x16xbf16>, vector<128x16xf32> -> vector<128x16xf32>
    %56 = arith.addf %47, %55 : vector<128x16xf32>
    %c2_i32 = arith.constant 2 : i32
    %57 = arith.addi %1, %c2_i32 : i32
    %c0_40 = arith.constant 0 : index
    %58 = arith.index_cast %57 : i32 to index
    %c0_41 = arith.constant 0 : index
    %c0_42 = arith.constant 0 : index
    %59 = vector.load %arg2[%c0_40, %58, %c0_41, %c0_42] : memref<1x18x18x3xbf16, #tpu.memory_space<vmem>>, vector<1x8x16x3xbf16>
    %60 = vector.shape_cast %59 : vector<1x8x16x3xbf16> to vector<8x16x3xbf16>
    %61 = vector.shape_cast %60 : vector<8x16x3xbf16> to vector<128x3xbf16>
    %c6 = arith.constant 6 : index
    %c0_43 = arith.constant 0 : index
    %c0_44 = arith.constant 0 : index
    %62 = vector.load %arg3[%c6, %c0_43, %c0_44] : memref<9x3x16xbf16, #tpu.memory_space<vmem>>, vector<1x3x16xbf16>
    %63 = vector.shape_cast %62 : vector<1x3x16xbf16> to vector<3x16xbf16>
    %cst_45 = arith.constant dense<0.000000e+00> : vector<128x16xf32>
    %64 = tpu.matmul %61, %63, %cst_45 {dimension_numbers = #tpu.dot_dimension_numbers<[1], [0], [0], [1], [0, 0, 1, 1], [], []>} : vector<128x3xbf16>, vector<3x16xbf16>, vector<128x16xf32> -> vector<128x16xf32>
    %65 = arith.addf %56, %64 : vector<128x16xf32>
    %c2_i32_46 = arith.constant 2 : i32
    %66 = arith.addi %1, %c2_i32_46 : i32
    %c0_47 = arith.constant 0 : index
    %67 = arith.index_cast %66 : i32 to index
    %c1_48 = arith.constant 1 : index
    %c0_49 = arith.constant 0 : index
    %68 = vector.load %arg2[%c0_47, %67, %c1_48, %c0_49] : memref<1x18x18x3xbf16, #tpu.memory_space<vmem>>, vector<1x8x16x3xbf16>
    %69 = vector.shape_cast %68 : vector<1x8x16x3xbf16> to vector<8x16x3xbf16>
    %70 = vector.shape_cast %69 : vector<8x16x3xbf16> to vector<128x3xbf16>
    %c7 = arith.constant 7 : index
    %c0_50 = arith.constant 0 : index
    %c0_51 = arith.constant 0 : index
    %71 = vector.load %arg3[%c7, %c0_50, %c0_51] : memref<9x3x16xbf16, #tpu.memory_space<vmem>>, vector<1x3x16xbf16>
    %72 = vector.shape_cast %71 : vector<1x3x16xbf16> to vector<3x16xbf16>
    %cst_52 = arith.constant dense<0.000000e+00> : vector<128x16xf32>
    %73 = tpu.matmul %70, %72, %cst_52 {dimension_numbers = #tpu.dot_dimension_numbers<[1], [0], [0], [1], [0, 0, 1, 1], [], []>} : vector<128x3xbf16>, vector<3x16xbf16>, vector<128x16xf32> -> vector<128x16xf32>
    %74 = arith.addf %65, %73 : vector<128x16xf32>
    %c2_i32_53 = arith.constant 2 : i32
    %75 = arith.addi %1, %c2_i32_53 : i32
    %c0_54 = arith.constant 0 : index
    %76 = arith.index_cast %75 : i32 to index
    %c2_55 = arith.constant 2 : index
    %c0_56 = arith.constant 0 : index
    %77 = vector.load %arg2[%c0_54, %76, %c2_55, %c0_56] : memref<1x18x18x3xbf16, #tpu.memory_space<vmem>>, vector<1x8x16x3xbf16>
    %78 = vector.shape_cast %77 : vector<1x8x16x3xbf16> to vector<8x16x3xbf16>
    %79 = vector.shape_cast %78 : vector<8x16x3xbf16> to vector<128x3xbf16>
    %c8 = arith.constant 8 : index
    %c0_57 = arith.constant 0 : index
    %c0_58 = arith.constant 0 : index
    %80 = vector.load %arg3[%c8, %c0_57, %c0_58] : memref<9x3x16xbf16, #tpu.memory_space<vmem>>, vector<1x3x16xbf16>
    %81 = vector.shape_cast %80 : vector<1x3x16xbf16> to vector<3x16xbf16>
    %cst_59 = arith.constant dense<0.000000e+00> : vector<128x16xf32>
    %82 = tpu.matmul %79, %81, %cst_59 {dimension_numbers = #tpu.dot_dimension_numbers<[1], [0], [0], [1], [0, 0, 1, 1], [], []>} : vector<128x3xbf16>, vector<3x16xbf16>, vector<128x16xf32> -> vector<128x16xf32>
    %83 = arith.addf %74, %82 : vector<128x16xf32>
    %c0_60 = arith.constant 0 : index
    %c0_61 = arith.constant 0 : index
    %84 = vector.load %arg4[%c0_60, %c0_61] : memref<1x16xf32, #tpu.memory_space<vmem>>, vector<1x16xf32>
    %85 = vector.broadcast %84 : vector<1x16xf32> to vector<128x16xf32>
    %86 = arith.addf %83, %85 : vector<128x16xf32>
    %cst_62 = arith.constant 0.000000e+00 : f32
    %87 = vector.broadcast %cst_62 : f32 to vector<128x16xf32>
    %88 = arith.maximumf %86, %87 : vector<128x16xf32>
    %89 = tpu.transpose %88, [1, 0] : vector<128x16xf32> -> vector<16x128xf32>
    %c0_63 = arith.constant 0 : index
    %c0_64 = arith.constant 0 : index
    %c0_65 = arith.constant 0 : index
    %90 = vector.load %arg5[%c0_63, %c0_64, %c0_65] : memref<2x16x16xbf16, #tpu.memory_space<vmem>>, vector<1x16x16xbf16>
    %91 = vector.shape_cast %90 : vector<1x16x16xbf16> to vector<16x16xbf16>
    %92 = arith.truncf %89 : vector<16x128xf32> to vector<16x128xbf16>
    %cst_66 = arith.constant dense<0.000000e+00> : vector<16x128xf32>
    %93 = tpu.matmul %91, %92, %cst_66 {dimension_numbers = #tpu.dot_dimension_numbers<[1], [0], [0], [1], [0, 0, 1, 1], [], []>} : vector<16x16xbf16>, vector<16x128xbf16>, vector<16x128xf32> -> vector<16x128xf32>
    %c0_67 = arith.constant 0 : index
    %c0_68 = arith.constant 0 : index
    %c0_69 = arith.constant 0 : index
    %94 = vector.load %arg6[%c0_67, %c0_68, %c0_69] : memref<2x16x1xf32, #tpu.memory_space<vmem>>, vector<1x16x1xf32>
    %95 = vector.shape_cast %94 : vector<1x16x1xf32> to vector<16x1xf32>
    %96 = vector.broadcast %95 : vector<16x1xf32> to vector<16x128xf32>
    %97 = arith.addf %93, %96 : vector<16x128xf32>
    %98 = arith.addf %89, %97 : vector<16x128xf32>
    %cst_70 = arith.constant 0.000000e+00 : f32
    %99 = vector.broadcast %cst_70 : f32 to vector<16x128xf32>
    %100 = arith.maximumf %98, %99 : vector<16x128xf32>
    %c0_71 = arith.constant 0 : index
    %c0_72 = arith.constant 0 : index
    %c0_73 = arith.constant 0 : index
    %101 = vector.load %arg7[%c0_71, %c0_72, %c0_73] : memref<2x16x16xbf16, #tpu.memory_space<vmem>>, vector<1x16x16xbf16>
    %102 = vector.shape_cast %101 : vector<1x16x16xbf16> to vector<16x16xbf16>
    %103 = arith.truncf %100 : vector<16x128xf32> to vector<16x128xbf16>
    %cst_74 = arith.constant dense<0.000000e+00> : vector<16x128xf32>
    %104 = tpu.matmul %102, %103, %cst_74 {dimension_numbers = #tpu.dot_dimension_numbers<[1], [0], [0], [1], [0, 0, 1, 1], [], []>} : vector<16x16xbf16>, vector<16x128xbf16>, vector<16x128xf32> -> vector<16x128xf32>
    %c0_75 = arith.constant 0 : index
    %c0_76 = arith.constant 0 : index
    %c0_77 = arith.constant 0 : index
    %105 = vector.load %arg8[%c0_75, %c0_76, %c0_77] : memref<2x16x1xf32, #tpu.memory_space<vmem>>, vector<1x16x1xf32>
    %106 = vector.shape_cast %105 : vector<1x16x1xf32> to vector<16x1xf32>
    %107 = vector.broadcast %106 : vector<16x1xf32> to vector<16x128xf32>
    %108 = arith.addf %104, %107 : vector<16x128xf32>
    %c0_78 = arith.constant 0 : index
    %c0_79 = arith.constant 0 : index
    %c0_80 = arith.constant 0 : index
    %c0_81 = arith.constant 0 : index
    %109 = vector.load %arg9[%c0_78, %c0_79, %c0_80, %c0_81] : memref<2x1x16x128xf32, #tpu.memory_space<vmem>>, vector<1x1x16x128xf32>
    %110 = vector.shape_cast %109 : vector<1x1x16x128xf32> to vector<16x128xf32>
    %111 = vector.shape_cast %108 : vector<16x128xf32> to vector<1x1x16x128xf32>
    tpu.vector_store %arg9[%c0_78, %c0_79, %c0_80, %c0_81], %111 {strides = array<i32>} : memref<2x1x16x128xf32, #tpu.memory_space<vmem>>, vector<1x1x16x128xf32>,
    %c1_82 = arith.constant 1 : index
    %c0_83 = arith.constant 0 : index
    %c0_84 = arith.constant 0 : index
    %112 = vector.load %arg5[%c1_82, %c0_83, %c0_84] : memref<2x16x16xbf16, #tpu.memory_space<vmem>>, vector<1x16x16xbf16>
    %113 = vector.shape_cast %112 : vector<1x16x16xbf16> to vector<16x16xbf16>
    %114 = arith.truncf %100 : vector<16x128xf32> to vector<16x128xbf16>
    %cst_85 = arith.constant dense<0.000000e+00> : vector<16x128xf32>
    %115 = tpu.matmul %113, %114, %cst_85 {dimension_numbers = #tpu.dot_dimension_numbers<[1], [0], [0], [1], [0, 0, 1, 1], [], []>} : vector<16x16xbf16>, vector<16x128xbf16>, vector<16x128xf32> -> vector<16x128xf32>
    %c1_86 = arith.constant 1 : index
    %c0_87 = arith.constant 0 : index
    %c0_88 = arith.constant 0 : index
    %116 = vector.load %arg6[%c1_86, %c0_87, %c0_88] : memref<2x16x1xf32, #tpu.memory_space<vmem>>, vector<1x16x1xf32>
    %117 = vector.shape_cast %116 : vector<1x16x1xf32> to vector<16x1xf32>
    %118 = vector.broadcast %117 : vector<16x1xf32> to vector<16x128xf32>
    %119 = arith.addf %115, %118 : vector<16x128xf32>
    %120 = arith.addf %100, %119 : vector<16x128xf32>
    %cst_89 = arith.constant 0.000000e+00 : f32
    %121 = vector.broadcast %cst_89 : f32 to vector<16x128xf32>
    %122 = arith.maximumf %120, %121 : vector<16x128xf32>
    %c1_90 = arith.constant 1 : index
    %c0_91 = arith.constant 0 : index
    %c0_92 = arith.constant 0 : index
    %123 = vector.load %arg7[%c1_90, %c0_91, %c0_92] : memref<2x16x16xbf16, #tpu.memory_space<vmem>>, vector<1x16x16xbf16>
    %124 = vector.shape_cast %123 : vector<1x16x16xbf16> to vector<16x16xbf16>
    %125 = arith.truncf %122 : vector<16x128xf32> to vector<16x128xbf16>
    %cst_93 = arith.constant dense<0.000000e+00> : vector<16x128xf32>
    %126 = tpu.matmul %124, %125, %cst_93 {dimension_numbers = #tpu.dot_dimension_numbers<[1], [0], [0], [1], [0, 0, 1, 1], [], []>} : vector<16x16xbf16>, vector<16x128xbf16>, vector<16x128xf32> -> vector<16x128xf32>
    %c1_94 = arith.constant 1 : index
    %c0_95 = arith.constant 0 : index
    %c0_96 = arith.constant 0 : index
    %127 = vector.load %arg8[%c1_94, %c0_95, %c0_96] : memref<2x16x1xf32, #tpu.memory_space<vmem>>, vector<1x16x1xf32>
    %128 = vector.shape_cast %127 : vector<1x16x1xf32> to vector<16x1xf32>
    %129 = vector.broadcast %128 : vector<16x1xf32> to vector<16x128xf32>
    %130 = arith.addf %126, %129 : vector<16x128xf32>
    %c1_97 = arith.constant 1 : index
    %c0_98 = arith.constant 0 : index
    %c0_99 = arith.constant 0 : index
    %c0_100 = arith.constant 0 : index
    %131 = vector.load %arg9[%c1_97, %c0_98, %c0_99, %c0_100] : memref<2x1x16x128xf32, #tpu.memory_space<vmem>>, vector<1x1x16x128xf32>
    %132 = vector.shape_cast %131 : vector<1x1x16x128xf32> to vector<16x128xf32>
    %133 = vector.shape_cast %130 : vector<16x128xf32> to vector<1x1x16x128xf32>
    tpu.vector_store %arg9[%c1_97, %c0_98, %c0_99, %c0_100], %133 {strides = array<i32>} : memref<2x1x16x128xf32, #tpu.memory_space<vmem>>, vector<1x1x16x128xf32>,
    %134 = arith.truncf %130 : vector<16x128xf32> to vector<16x128xbf16>
    %c0_101 = arith.constant 0 : index
    %c0_102 = arith.constant 0 : index
    %c0_103 = arith.constant 0 : index
    %135 = vector.load %arg10[%c0_101, %c0_102, %c0_103] : memref<1x16x128xbf16, #tpu.memory_space<vmem>>, vector<1x16x128xbf16>
    %136 = vector.shape_cast %135 : vector<1x16x128xbf16> to vector<16x128xbf16>
    %137 = vector.shape_cast %134 : vector<16x128xbf16> to vector<1x16x128xbf16>
    tpu.vector_store %arg10[%c0_101, %c0_102, %c0_103], %137 {strides = array<i32>} : memref<1x16x128xbf16, #tpu.memory_space<vmem>>, vector<1x16x128xbf16>,
    return
  }
  func.func @transform_0(%arg0: i32, %arg1: i32) -> (i32, i32, i32, i32) {
    %c0_i32 = arith.constant 0 : i32
    %c0_i32_0 = arith.constant 0 : i32
    %c0_i32_1 = arith.constant 0 : i32
    %c0_i32_2 = arith.constant 0 : i32
    return %arg0, %c0_i32, %c0_i32_0, %c0_i32_1 : i32, i32, i32, i32
  }
  func.func @transform_1(%arg0: i32, %arg1: i32) -> (i32, i32, i32) {
    %c0_i32 = arith.constant 0 : i32
    %c0_i32_0 = arith.constant 0 : i32
    %c0_i32_1 = arith.constant 0 : i32
    %c0_i32_2 = arith.constant 0 : i32
    return %c0_i32, %c0_i32_0, %c0_i32_1 : i32, i32, i32
  }
  func.func @transform_2(%arg0: i32, %arg1: i32) -> (i32, i32) {
    %c0_i32 = arith.constant 0 : i32
    %c0_i32_0 = arith.constant 0 : i32
    %c0_i32_1 = arith.constant 0 : i32
    return %c0_i32, %c0_i32_0 : i32, i32
  }
  func.func @transform_3(%arg0: i32, %arg1: i32) -> (i32, i32, i32) {
    %c0_i32 = arith.constant 0 : i32
    %c0_i32_0 = arith.constant 0 : i32
    %c0_i32_1 = arith.constant 0 : i32
    %c0_i32_2 = arith.constant 0 : i32
    return %c0_i32, %c0_i32_0, %c0_i32_1 : i32, i32, i32
  }
  func.func @transform_4(%arg0: i32, %arg1: i32) -> (i32, i32, i32) {
    %c0_i32 = arith.constant 0 : i32
    %c0_i32_0 = arith.constant 0 : i32
    %c0_i32_1 = arith.constant 0 : i32
    %c0_i32_2 = arith.constant 0 : i32
    return %c0_i32, %c0_i32_0, %c0_i32_1 : i32, i32, i32
  }
  func.func @transform_5(%arg0: i32, %arg1: i32) -> (i32, i32, i32) {
    %c0_i32 = arith.constant 0 : i32
    %c0_i32_0 = arith.constant 0 : i32
    %c0_i32_1 = arith.constant 0 : i32
    %c0_i32_2 = arith.constant 0 : i32
    return %c0_i32, %c0_i32_0, %c0_i32_1 : i32, i32, i32
  }
  func.func @transform_6(%arg0: i32, %arg1: i32) -> (i32, i32, i32) {
    %c0_i32 = arith.constant 0 : i32
    %c0_i32_0 = arith.constant 0 : i32
    %c0_i32_1 = arith.constant 0 : i32
    %c0_i32_2 = arith.constant 0 : i32
    return %c0_i32, %c0_i32_0, %c0_i32_1 : i32, i32, i32
  }
  func.func @transform_7(%arg0: i32, %arg1: i32) -> (i32, i32, i32, i32) {
    %c0_i32 = arith.constant 0 : i32
    %c0_i32_0 = arith.constant 0 : i32
    %c0_i32_1 = arith.constant 0 : i32
    return %c0_i32, %arg0, %c0_i32_0, %arg1 : i32, i32, i32, i32
  }
  func.func @transform_8(%arg0: i32, %arg1: i32) -> (i32, i32, i32) {
    %c0_i32 = arith.constant 0 : i32
    %c0_i32_0 = arith.constant 0 : i32
    return %arg0, %c0_i32, %arg1 : i32, i32, i32
  }
}

module attributes {stable_mosaic.version = 11 : i64} {
  func.func @_fused_v2c_kernel(%arg0: i32, %arg1: memref<1x27x512xbf16, #tpu.memory_space<vmem>>, %arg2: memref<8x27xbf16, #tpu.memory_space<vmem>>, %arg3: memref<8x1xf32, #tpu.memory_space<vmem>>, %arg4: memref<8x512x64xbf16, #tpu.memory_space<vmem>>, %arg5: memref<1x64xf32, #tpu.memory_space<vmem>>, %arg6: memref<64x12xbf16, #tpu.memory_space<vmem>>, %arg7: memref<1x12xf32, #tpu.memory_space<vmem>>, %arg8: memref<1x1x12xf32, #tpu.memory_space<vmem>>) attributes {dimension_semantics = [#tpu.dimension_semantics<parallel>], iteration_bounds = array<i64: 2>, scalar_prefetch = 0 : i64, scratch_operands = 0 : i64, tpu.core_type = #tpu.core_type<tc>, window_params = [{transform_indices = @transform_0, window_bounds = array<i64: 1, 27, 512>}, {pipeline_mode = #tpu.pipeline_mode<synchronous>, transform_indices = @transform_1, window_bounds = array<i64: 8, 27>}, {pipeline_mode = #tpu.pipeline_mode<synchronous>, transform_indices = @transform_2, window_bounds = array<i64: 8, 1>}, {pipeline_mode = #tpu.pipeline_mode<synchronous>, transform_indices = @transform_3, window_bounds = array<i64: 8, 512, 64>}, {pipeline_mode = #tpu.pipeline_mode<synchronous>, transform_indices = @transform_4, window_bounds = array<i64: 1, 64>}, {pipeline_mode = #tpu.pipeline_mode<synchronous>, transform_indices = @transform_5, window_bounds = array<i64: 64, 12>}, {pipeline_mode = #tpu.pipeline_mode<synchronous>, transform_indices = @transform_6, window_bounds = array<i64: 1, 12>}, {transform_indices = @transform_7, window_bounds = array<i64: 1, 1, 12>}]} {
    %c0 = arith.constant 0 : index
    %c0_0 = arith.constant 0 : index
    %0 = vector.load %arg2[%c0, %c0_0] : memref<8x27xbf16, #tpu.memory_space<vmem>>, vector<8x27xbf16>
    %c0_1 = arith.constant 0 : index
    %c0_2 = arith.constant 0 : index
    %c0_3 = arith.constant 0 : index
    %1 = vector.load %arg1[%c0_1, %c0_2, %c0_3] : memref<1x27x512xbf16, #tpu.memory_space<vmem>>, vector<1x27x512xbf16>
    %2 = vector.shape_cast %1 : vector<1x27x512xbf16> to vector<27x512xbf16>
    %cst = arith.constant dense<0.000000e+00> : vector<8x512xf32>
    %3 = tpu.matmul %0, %2, %cst {dimension_numbers = #tpu.dot_dimension_numbers<[1], [0], [0], [1], [0, 0, 1, 1], [], []>} : vector<8x27xbf16>, vector<27x512xbf16>, vector<8x512xf32> -> vector<8x512xf32>
    %c0_4 = arith.constant 0 : index
    %c0_5 = arith.constant 0 : index
    %4 = vector.load %arg3[%c0_4, %c0_5] : memref<8x1xf32, #tpu.memory_space<vmem>>, vector<8x1xf32>
    %5 = vector.broadcast %4 : vector<8x1xf32> to vector<8x512xf32>
    %6 = arith.addf %3, %5 : vector<8x512xf32>
    %cst_6 = arith.constant 0.000000e+00 : f32
    %7 = vector.broadcast %cst_6 : f32 to vector<8x512xf32>
    %8 = arith.maximumf %6, %7 : vector<8x512xf32>
    %9 = arith.truncf %8 : vector<8x512xf32> to vector<8x512xbf16>
    %c0_7 = arith.constant 0 : index
    %c0_8 = arith.constant 0 : index
    %10 = vector.load %arg5[%c0_7, %c0_8] : memref<1x64xf32, #tpu.memory_space<vmem>>, vector<1x64xf32>
    %11 = vector.extract_strided_slice %9 {offsets = [0, 0], sizes = [1, 512], strides = [1, 1]} : vector<8x512xbf16> to vector<1x512xbf16>
    %c0_9 = arith.constant 0 : index
    %c0_10 = arith.constant 0 : index
    %c0_11 = arith.constant 0 : index
    %12 = vector.load %arg4[%c0_9, %c0_10, %c0_11] : memref<8x512x64xbf16, #tpu.memory_space<vmem>>, vector<1x512x64xbf16>
    %13 = vector.shape_cast %12 : vector<1x512x64xbf16> to vector<512x64xbf16>
    %cst_12 = arith.constant dense<0.000000e+00> : vector<1x64xf32>
    %14 = tpu.matmul %11, %13, %cst_12 {dimension_numbers = #tpu.dot_dimension_numbers<[1], [0], [0], [1], [0, 0, 1, 1], [], []>} : vector<1x512xbf16>, vector<512x64xbf16>, vector<1x64xf32> -> vector<1x64xf32>
    %15 = arith.addf %10, %14 : vector<1x64xf32>
    %16 = vector.extract_strided_slice %9 {offsets = [1, 0], sizes = [1, 512], strides = [1, 1]} : vector<8x512xbf16> to vector<1x512xbf16>
    %c1 = arith.constant 1 : index
    %c0_13 = arith.constant 0 : index
    %c0_14 = arith.constant 0 : index
    %17 = vector.load %arg4[%c1, %c0_13, %c0_14] : memref<8x512x64xbf16, #tpu.memory_space<vmem>>, vector<1x512x64xbf16>
    %18 = vector.shape_cast %17 : vector<1x512x64xbf16> to vector<512x64xbf16>
    %cst_15 = arith.constant dense<0.000000e+00> : vector<1x64xf32>
    %19 = tpu.matmul %16, %18, %cst_15 {dimension_numbers = #tpu.dot_dimension_numbers<[1], [0], [0], [1], [0, 0, 1, 1], [], []>} : vector<1x512xbf16>, vector<512x64xbf16>, vector<1x64xf32> -> vector<1x64xf32>
    %20 = arith.addf %15, %19 : vector<1x64xf32>
    %21 = vector.extract_strided_slice %9 {offsets = [2, 0], sizes = [1, 512], strides = [1, 1]} : vector<8x512xbf16> to vector<1x512xbf16>
    %c2 = arith.constant 2 : index
    %c0_16 = arith.constant 0 : index
    %c0_17 = arith.constant 0 : index
    %22 = vector.load %arg4[%c2, %c0_16, %c0_17] : memref<8x512x64xbf16, #tpu.memory_space<vmem>>, vector<1x512x64xbf16>
    %23 = vector.shape_cast %22 : vector<1x512x64xbf16> to vector<512x64xbf16>
    %cst_18 = arith.constant dense<0.000000e+00> : vector<1x64xf32>
    %24 = tpu.matmul %21, %23, %cst_18 {dimension_numbers = #tpu.dot_dimension_numbers<[1], [0], [0], [1], [0, 0, 1, 1], [], []>} : vector<1x512xbf16>, vector<512x64xbf16>, vector<1x64xf32> -> vector<1x64xf32>
    %25 = arith.addf %20, %24 : vector<1x64xf32>
    %26 = vector.extract_strided_slice %9 {offsets = [3, 0], sizes = [1, 512], strides = [1, 1]} : vector<8x512xbf16> to vector<1x512xbf16>
    %c3 = arith.constant 3 : index
    %c0_19 = arith.constant 0 : index
    %c0_20 = arith.constant 0 : index
    %27 = vector.load %arg4[%c3, %c0_19, %c0_20] : memref<8x512x64xbf16, #tpu.memory_space<vmem>>, vector<1x512x64xbf16>
    %28 = vector.shape_cast %27 : vector<1x512x64xbf16> to vector<512x64xbf16>
    %cst_21 = arith.constant dense<0.000000e+00> : vector<1x64xf32>
    %29 = tpu.matmul %26, %28, %cst_21 {dimension_numbers = #tpu.dot_dimension_numbers<[1], [0], [0], [1], [0, 0, 1, 1], [], []>} : vector<1x512xbf16>, vector<512x64xbf16>, vector<1x64xf32> -> vector<1x64xf32>
    %30 = arith.addf %25, %29 : vector<1x64xf32>
    %31 = vector.extract_strided_slice %9 {offsets = [4, 0], sizes = [1, 512], strides = [1, 1]} : vector<8x512xbf16> to vector<1x512xbf16>
    %c4 = arith.constant 4 : index
    %c0_22 = arith.constant 0 : index
    %c0_23 = arith.constant 0 : index
    %32 = vector.load %arg4[%c4, %c0_22, %c0_23] : memref<8x512x64xbf16, #tpu.memory_space<vmem>>, vector<1x512x64xbf16>
    %33 = vector.shape_cast %32 : vector<1x512x64xbf16> to vector<512x64xbf16>
    %cst_24 = arith.constant dense<0.000000e+00> : vector<1x64xf32>
    %34 = tpu.matmul %31, %33, %cst_24 {dimension_numbers = #tpu.dot_dimension_numbers<[1], [0], [0], [1], [0, 0, 1, 1], [], []>} : vector<1x512xbf16>, vector<512x64xbf16>, vector<1x64xf32> -> vector<1x64xf32>
    %35 = arith.addf %30, %34 : vector<1x64xf32>
    %36 = vector.extract_strided_slice %9 {offsets = [5, 0], sizes = [1, 512], strides = [1, 1]} : vector<8x512xbf16> to vector<1x512xbf16>
    %c5 = arith.constant 5 : index
    %c0_25 = arith.constant 0 : index
    %c0_26 = arith.constant 0 : index
    %37 = vector.load %arg4[%c5, %c0_25, %c0_26] : memref<8x512x64xbf16, #tpu.memory_space<vmem>>, vector<1x512x64xbf16>
    %38 = vector.shape_cast %37 : vector<1x512x64xbf16> to vector<512x64xbf16>
    %cst_27 = arith.constant dense<0.000000e+00> : vector<1x64xf32>
    %39 = tpu.matmul %36, %38, %cst_27 {dimension_numbers = #tpu.dot_dimension_numbers<[1], [0], [0], [1], [0, 0, 1, 1], [], []>} : vector<1x512xbf16>, vector<512x64xbf16>, vector<1x64xf32> -> vector<1x64xf32>
    %40 = arith.addf %35, %39 : vector<1x64xf32>
    %41 = vector.extract_strided_slice %9 {offsets = [6, 0], sizes = [1, 512], strides = [1, 1]} : vector<8x512xbf16> to vector<1x512xbf16>
    %c6 = arith.constant 6 : index
    %c0_28 = arith.constant 0 : index
    %c0_29 = arith.constant 0 : index
    %42 = vector.load %arg4[%c6, %c0_28, %c0_29] : memref<8x512x64xbf16, #tpu.memory_space<vmem>>, vector<1x512x64xbf16>
    %43 = vector.shape_cast %42 : vector<1x512x64xbf16> to vector<512x64xbf16>
    %cst_30 = arith.constant dense<0.000000e+00> : vector<1x64xf32>
    %44 = tpu.matmul %41, %43, %cst_30 {dimension_numbers = #tpu.dot_dimension_numbers<[1], [0], [0], [1], [0, 0, 1, 1], [], []>} : vector<1x512xbf16>, vector<512x64xbf16>, vector<1x64xf32> -> vector<1x64xf32>
    %45 = arith.addf %40, %44 : vector<1x64xf32>
    %46 = vector.extract_strided_slice %9 {offsets = [7, 0], sizes = [1, 512], strides = [1, 1]} : vector<8x512xbf16> to vector<1x512xbf16>
    %c7 = arith.constant 7 : index
    %c0_31 = arith.constant 0 : index
    %c0_32 = arith.constant 0 : index
    %47 = vector.load %arg4[%c7, %c0_31, %c0_32] : memref<8x512x64xbf16, #tpu.memory_space<vmem>>, vector<1x512x64xbf16>
    %48 = vector.shape_cast %47 : vector<1x512x64xbf16> to vector<512x64xbf16>
    %cst_33 = arith.constant dense<0.000000e+00> : vector<1x64xf32>
    %49 = tpu.matmul %46, %48, %cst_33 {dimension_numbers = #tpu.dot_dimension_numbers<[1], [0], [0], [1], [0, 0, 1, 1], [], []>} : vector<1x512xbf16>, vector<512x64xbf16>, vector<1x64xf32> -> vector<1x64xf32>
    %50 = arith.addf %45, %49 : vector<1x64xf32>
    %cst_34 = arith.constant 0.000000e+00 : f32
    %51 = vector.broadcast %cst_34 : f32 to vector<1x64xf32>
    %52 = arith.maximumf %50, %51 : vector<1x64xf32>
    %53 = arith.truncf %52 : vector<1x64xf32> to vector<1x64xbf16>
    %c0_35 = arith.constant 0 : index
    %c0_36 = arith.constant 0 : index
    %54 = vector.load %arg6[%c0_35, %c0_36] : memref<64x12xbf16, #tpu.memory_space<vmem>>, vector<64x12xbf16>
    %cst_37 = arith.constant dense<0.000000e+00> : vector<1x12xf32>
    %55 = tpu.matmul %53, %54, %cst_37 {dimension_numbers = #tpu.dot_dimension_numbers<[1], [0], [0], [1], [0, 0, 1, 1], [], []>} : vector<1x64xbf16>, vector<64x12xbf16>, vector<1x12xf32> -> vector<1x12xf32>
    %c0_38 = arith.constant 0 : index
    %c0_39 = arith.constant 0 : index
    %56 = vector.load %arg7[%c0_38, %c0_39] : memref<1x12xf32, #tpu.memory_space<vmem>>, vector<1x12xf32>
    %57 = arith.addf %55, %56 : vector<1x12xf32>
    %c0_40 = arith.constant 0 : index
    %c0_41 = arith.constant 0 : index
    %c0_42 = arith.constant 0 : index
    %58 = vector.load %arg8[%c0_40, %c0_41, %c0_42] : memref<1x1x12xf32, #tpu.memory_space<vmem>>, vector<1x1x12xf32>
    %59 = vector.shape_cast %58 : vector<1x1x12xf32> to vector<1x12xf32>
    %60 = vector.shape_cast %57 : vector<1x12xf32> to vector<1x1x12xf32>
    tpu.vector_store %arg8[%c0_40, %c0_41, %c0_42], %60 {strides = array<i32>} : memref<1x1x12xf32, #tpu.memory_space<vmem>>, vector<1x1x12xf32>,
    return
  }
  func.func @transform_0(%arg0: i32) -> (i32, i32, i32) {
    %c0_i32 = arith.constant 0 : i32
    %c0_i32_0 = arith.constant 0 : i32
    %c0_i32_1 = arith.constant 0 : i32
    return %arg0, %c0_i32, %c0_i32_0 : i32, i32, i32
  }
  func.func @transform_1(%arg0: i32) -> (i32, i32) {
    %c0_i32 = arith.constant 0 : i32
    %c0_i32_0 = arith.constant 0 : i32
    %c0_i32_1 = arith.constant 0 : i32
    return %c0_i32, %c0_i32_0 : i32, i32
  }
  func.func @transform_2(%arg0: i32) -> (i32, i32) {
    %c0_i32 = arith.constant 0 : i32
    %c0_i32_0 = arith.constant 0 : i32
    %c0_i32_1 = arith.constant 0 : i32
    return %c0_i32, %c0_i32_0 : i32, i32
  }
  func.func @transform_3(%arg0: i32) -> (i32, i32, i32) {
    %c0_i32 = arith.constant 0 : i32
    %c0_i32_0 = arith.constant 0 : i32
    %c0_i32_1 = arith.constant 0 : i32
    %c0_i32_2 = arith.constant 0 : i32
    return %c0_i32, %c0_i32_0, %c0_i32_1 : i32, i32, i32
  }
  func.func @transform_4(%arg0: i32) -> (i32, i32) {
    %c0_i32 = arith.constant 0 : i32
    %c0_i32_0 = arith.constant 0 : i32
    %c0_i32_1 = arith.constant 0 : i32
    return %c0_i32, %c0_i32_0 : i32, i32
  }
  func.func @transform_5(%arg0: i32) -> (i32, i32) {
    %c0_i32 = arith.constant 0 : i32
    %c0_i32_0 = arith.constant 0 : i32
    %c0_i32_1 = arith.constant 0 : i32
    return %c0_i32, %c0_i32_0 : i32, i32
  }
  func.func @transform_6(%arg0: i32) -> (i32, i32) {
    %c0_i32 = arith.constant 0 : i32
    %c0_i32_0 = arith.constant 0 : i32
    %c0_i32_1 = arith.constant 0 : i32
    return %c0_i32, %c0_i32_0 : i32, i32
  }
  func.func @transform_7(%arg0: i32) -> (i32, i32, i32) {
    %c0_i32 = arith.constant 0 : i32
    %c0_i32_0 = arith.constant 0 : i32
    %c0_i32_1 = arith.constant 0 : i32
    return %arg0, %c0_i32, %c0_i32_0 : i32, i32, i32
  }
}

</mosaic_0001>

<llo_original>
// kernel: pvcnet_forward.2
$region0: #{pvcnet_forward.2}
  #allocation0 [shape = 'u32[]', space=smem, size = 0x4, offset = 0x4, fixed_abs, tag = 'smem constant byte address 0x4 - core index']
  #allocation1 [shape = 'u32[144,128]{1,0:T(1,128)}', space=vmem, size = 0x12000, scoped, tag = 'internal scratch']
  %s0 = inlined_call_operand.vmem [shape: bf16[2,18,18,3], index: 0, kind: input, shape index: {}]
  %s1 = inlined_call_operand.vmem [shape: bf16[9,3,16], index: 1, kind: input, shape index: {}]
  %s2 = inlined_call_operand.vmem [shape: f32[1,16], index: 2, kind: input, shape index: {}]
  %s3 = inlined_call_operand.vmem [shape: bf16[2,16,16], index: 3, kind: input, shape index: {}]
  %s4 = inlined_call_operand.vmem [shape: f32[2,16,1], index: 4, kind: input, shape index: {}]
  %s5 = inlined_call_operand.vmem [shape: bf16[2,16,16], index: 5, kind: input, shape index: {}]
  %s6 = inlined_call_operand.vmem [shape: f32[2,16,1], index: 6, kind: input, shape index: {}]
  %s7 = inlined_call_operand.vmem [shape: f32[2,2,16,256], index: 7, kind: output, shape index: {0}]
  %s8 = inlined_call_operand.vmem [shape: bf16[2,16,256], index: 8, kind: output, shape index: {1}]
  %9 = xla_tuple %s7, %s8
  %s10 = sld [smem:[#allocation0]]
  $region140: #{pvcnet_forward.2} parent=0
    _
  %s12 = ssub.s32 1, %s10
  %s13 = scalar_select 0, %s12, %s10
  $region1: #{pvcnet_forward.2} parent=0
    #allocation2 [shape = 'u8[32768]{0}', space=vmem, size = 0x8000, scoped, tag = 'output window, operand 0']
    #allocation3 [shape = 'u8[8192]{0}', space=vmem, size = 0x2000, scoped, tag = 'output window, operand 1']
    loop: start=0, step=1, limit=6
    $region2: #{pvcnet_forward.2} parent=1 // loop_pre_header
      _
    $region3: #{pvcnet_forward.2} parent=1 // loop_header
      %s15 = sphi 0, %s19
      %p16 = scmp.ge.s32.totalorder %s15, 6
      %s22 = sphi 0, %s34
      %s23 = sphi 0, %s30
      %s24 = sphi 0, %s22
      %s25 = sphi 0, %s23
      %s26 = sphi 0, %s24
      %s27 = sphi 0, %s25
      %s37 = sphi 0, %s39
      %s40 = sphi 0, %s37
      %s41 = sphi 0, %s40
      %s57 = sphi 0, %s41
      %s61 = sphi 0, %s61
      %s63 = sphi 0, %s61
      %s64 = sphi 0, %s63
      %s78 = sphi 0, %s64
      %s82 = sphi 0, %s82
      %s84 = sphi 0, %s82
      %s85 = sphi 0, %s84
      %s99 = sphi 0, %s85
      %s103 = sphi 0, %s103
      %s105 = sphi 0, %s103
      %s106 = sphi 0, %s105
      %s120 = sphi 0, %s106
      %s124 = sphi 0, %s124
      %s126 = sphi 0, %s124
      %s127 = sphi 0, %s126
      %s141 = sphi 0, %s127
      %s145 = sphi 0, %s145
      %s147 = sphi 0, %s145
      %s148 = sphi 0, %s147
      %s162 = sphi 0, %s148
      %s166 = sphi 0, %s166
      %s168 = sphi 0, %s166
      %s169 = sphi 0, %s168
      %s183 = sphi 0, %s169
      %s191 = sphi 0, %s193
      %s194 = sphi 0, %s191
      %s195 = sphi 0, %s194
      %s211 = sphi 0, %s195
      %s219 = sphi 0, %s221
      %s222 = sphi 0, %s219
      %s223 = sphi 0, %s222
      %s239 = sphi 0, %s223
    $region4: #{pvcnet_forward.2} parent=1 // loop_header_branch
      %18 = sbr.rel (%p16) target = $region8
    $region5: #{pvcnet_forward.2} parent=1 // loop_body
      %s20 = ssub.s32 %s15, 1
      %s21 = ssub.s32 %s15, 2
      %s28 = sadd.s32 1, %s23
      %p29 = scmp.ge.s32.totalorder %s28, 2
      %s30 = scalar_select %p29, 0, %s28
      %s31 = sadd.s32 1, %s22
      %s32 = scalar_select %p29, %s31, %s22
      %p33 = scmp.ge.s32.totalorder %s32, 2
      %s34 = scalar_select %p33, 0, %s32
      %s35 = ssub.s32 %s22, %s34
      %p36 = scmp.eq.s32.totalorder %s35, 0
      %s38 = sadd.s32 %s37, 1
      %s39 = scalar_select %p36, %s37, %s38
      %p42 = pneg %p36
      %p43 = scmp.eq.s32.totalorder %s15, 3
      %p44 = por %p42, %p43
      %p45 = scmp.ne.s32.totalorder %s37, %s40
      %p46 = scmp.eq.s32.totalorder %s15, 0
      %p47 = por %p45, %p46
      %p48 = scmp.ne.s32.totalorder %s37, %s40
      %p49 = scmp.eq.s32.totalorder %s20, 3
      %p50 = por %p48, %p49
      %p51 = scmp.ne.s32.totalorder %s40, %s41
      %p52 = scmp.eq.s32.totalorder %s20, 0
      %p53 = por %p51, %p52
      %p54 = scmp.ne.s32.totalorder %s40, %s41
      %p55 = scmp.eq.s32.totalorder %s21, 3
      %p56 = por %p54, %p55
      %p58 = scmp.ne.s32.totalorder %s41, %s57
      %p59 = scmp.eq.s32.totalorder %s21, 0
      %p60 = por %p58, %p59
      %s62 = sadd.s32 %s61, 1
      %p65 = scmp.eq.s32.totalorder %s15, 3
      %p66 = scmp.ne.s32.totalorder %s61, %s63
      %p67 = scmp.eq.s32.totalorder %s15, 0
      %p68 = por %p66, %p67
      %p69 = scmp.ne.s32.totalorder %s61, %s63
      %p70 = scmp.eq.s32.totalorder %s20, 3
      %p71 = por %p69, %p70
      %p72 = scmp.ne.s32.totalorder %s63, %s64
      %p73 = scmp.eq.s32.totalorder %s20, 0
      %p74 = por %p72, %p73
      %p75 = scmp.ne.s32.totalorder %s63, %s64
      %p76 = scmp.eq.s32.totalorder %s21, 3
      %p77 = por %p75, %p76
      %p79 = scmp.ne.s32.totalorder %s64, %s78
      %p80 = scmp.eq.s32.totalorder %s21, 0
      %p81 = por %p79, %p80
      %s83 = sadd.s32 %s82, 1
      %p86 = scmp.eq.s32.totalorder %s15, 3
      %p87 = scmp.ne.s32.totalorder %s82, %s84
      %p88 = scmp.eq.s32.totalorder %s15, 0
      %p89 = por %p87, %p88
      %p90 = scmp.ne.s32.totalorder %s82, %s84
      %p91 = scmp.eq.s32.totalorder %s20, 3
      %p92 = por %p90, %p91
      %p93 = scmp.ne.s32.totalorder %s84, %s85
      %p94 = scmp.eq.s32.totalorder %s20, 0
      %p95 = por %p93, %p94
      %p96 = scmp.ne.s32.totalorder %s84, %s85
      %p97 = scmp.eq.s32.totalorder %s21, 3
      %p98 = por %p96, %p97
      %p100 = scmp.ne.s32.totalorder %s85, %s99
      %p101 = scmp.eq.s32.totalorder %s21, 0
      %p102 = por %p100, %p101
      %s104 = sadd.s32 %s103, 1
      %p107 = scmp.eq.s32.totalorder %s15, 3
      %p108 = scmp.ne.s32.totalorder %s103, %s105
      %p109 = scmp.eq.s32.totalorder %s15, 0
      %p110 = por %p108, %p109
      %p111 = scmp.ne.s32.totalorder %s103, %s105
      %p112 = scmp.eq.s32.totalorder %s20, 3
      %p113 = por %p111, %p112
      %p114 = scmp.ne.s32.totalorder %s105, %s106
      %p115 = scmp.eq.s32.totalorder %s20, 0
      %p116 = por %p114, %p115
      %p117 = scmp.ne.s32.totalorder %s105, %s106
      %p118 = scmp.eq.s32.totalorder %s21, 3
      %p119 = por %p117, %p118
      %p121 = scmp.ne.s32.totalorder %s106, %s120
      %p122 = scmp.eq.s32.totalorder %s21, 0
      %p123 = por %p121, %p122
      %s125 = sadd.s32 %s124, 1
      %p128 = scmp.eq.s32.totalorder %s15, 3
      %p129 = scmp.ne.s32.totalorder %s124, %s126
      %p130 = scmp.eq.s32.totalorder %s15, 0
      %p131 = por %p129, %p130
      %p132 = scmp.ne.s32.totalorder %s124, %s126
      %p133 = scmp.eq.s32.totalorder %s20, 3
      %p134 = por %p132, %p133
      %p135 = scmp.ne.s32.totalorder %s126, %s127
      %p136 = scmp.eq.s32.totalorder %s20, 0
      %p137 = por %p135, %p136
      %p138 = scmp.ne.s32.totalorder %s126, %s127
      %p139 = scmp.eq.s32.totalorder %s21, 3
      %p140 = por %p138, %p139
      %p142 = scmp.ne.s32.totalorder %s127, %s141
      %p143 = scmp.eq.s32.totalorder %s21, 0
      %p144 = por %p142, %p143
      %s146 = sadd.s32 %s145, 1
      %p149 = scmp.eq.s32.totalorder %s15, 3
      %p150 = scmp.ne.s32.totalorder %s145, %s147
      %p151 = scmp.eq.s32.totalorder %s15, 0
      %p152 = por %p150, %p151
      %p153 = scmp.ne.s32.totalorder %s145, %s147
      %p154 = scmp.eq.s32.totalorder %s20, 3
      %p155 = por %p153, %p154
      %p156 = scmp.ne.s32.totalorder %s147, %s148
      %p157 = scmp.eq.s32.totalorder %s20, 0
      %p158 = por %p156, %p157
      %p159 = scmp.ne.s32.totalorder %s147, %s148
      %p160 = scmp.eq.s32.totalorder %s21, 3
      %p161 = por %p159, %p160
      %p163 = scmp.ne.s32.totalorder %s148, %s162
      %p164 = scmp.eq.s32.totalorder %s21, 0
      %p165 = por %p163, %p164
      %s167 = sadd.s32 %s166, 1
      %p170 = scmp.eq.s32.totalorder %s15, 3
      %p171 = scmp.ne.s32.totalorder %s166, %s168
      %p172 = scmp.eq.s32.totalorder %s15, 0
      %p173 = por %p171, %p172
      %p174 = scmp.ne.s32.totalorder %s166, %s168
      %p175 = scmp.eq.s32.totalorder %s20, 3
      %p176 = por %p174, %p175
      %p177 = scmp.ne.s32.totalorder %s168, %s169
      %p178 = scmp.eq.s32.totalorder %s20, 0
      %p179 = por %p177, %p178
      %p180 = scmp.ne.s32.totalorder %s168, %s169
      %p181 = scmp.eq.s32.totalorder %s21, 3
      %p182 = por %p180, %p181
      %p184 = scmp.ne.s32.totalorder %s169, %s183
      %p185 = scmp.eq.s32.totalorder %s21, 0
      %p186 = por %p184, %p185
      %s187 = ssub.s32 %s22, %s34
      %s188 = ssub.s32 %s23, %s30
      %s189 = sor.u32 %s187, %s188
      %p190 = scmp.eq.s32.totalorder %s189, 0
      %s192 = sadd.s32 %s191, 1
      %s193 = scalar_select %p190, %s191, %s192
      %p196 = pneg %p190
      %p197 = scmp.eq.s32.totalorder %s15, 3
      %p198 = por %p196, %p197
      %p199 = scmp.ne.s32.totalorder %s191, %s194
      %p200 = scmp.eq.s32.totalorder %s15, 0
      %p201 = por %p199, %p200
      %p202 = scmp.ne.s32.totalorder %s191, %s194
      %p203 = scmp.eq.s32.totalorder %s20, 3
      %p204 = por %p202, %p203
      %p205 = scmp.ne.s32.totalorder %s194, %s195
      %p206 = scmp.eq.s32.totalorder %s20, 0
      %p207 = por %p205, %p206
      %p208 = scmp.ne.s32.totalorder %s194, %s195
      %p209 = scmp.eq.s32.totalorder %s21, 3
      %p210 = por %p208, %p209
      %p212 = scmp.ne.s32.totalorder %s195, %s211
      %p213 = scmp.eq.s32.totalorder %s21, 0
      %p214 = por %p212, %p213
      %s215 = ssub.s32 %s22, %s34
      %s216 = ssub.s32 %s23, %s30
      %s217 = sor.u32 %s215, %s216
      %p218 = scmp.eq.s32.totalorder %s217, 0
      %s220 = sadd.s32 %s219, 1
      %s221 = scalar_select %p218, %s219, %s220
      %p224 = pneg %p218
      %p225 = scmp.eq.s32.totalorder %s15, 3
      %p226 = por %p224, %p225
      %p227 = scmp.ne.s32.totalorder %s219, %s222
      %p228 = scmp.eq.s32.totalorder %s15, 0
      %p229 = por %p227, %p228
      %p230 = scmp.ne.s32.totalorder %s219, %s222
      %p231 = scmp.eq.s32.totalorder %s20, 3
      %p232 = por %p230, %p231
      %p233 = scmp.ne.s32.totalorder %s222, %s223
      %p234 = scmp.eq.s32.totalorder %s20, 0
      %p235 = por %p233, %p234
      %p236 = scmp.ne.s32.totalorder %s222, %s223
      %p237 = scmp.eq.s32.totalorder %s21, 3
      %p238 = por %p236, %p237
      %p240 = scmp.ne.s32.totalorder %s223, %s239
      %p241 = scmp.eq.s32.totalorder %s21, 0
      %p242 = por %p240, %p241
      %p243 = scmp.le.s32.totalorder 1, %s15
      %p244 = scmp.lt.s32.totalorder %s15, 5
      %p245 = pnand %p243, %p244
      %p246 = pneg %p245
      // Predicated region
      $region9: #{pvcnet_forward.2} parent=5 // pred_check
        _
      $region10: #{pvcnet_forward.2} parent=5 // pred_check_branch
        %248 = sbr.rel (%p245) target = $region12
      $region11: #{pvcnet_forward.2} parent=5 // pred_region
        %s249 = ssub.s32 %s15, 1
        // Predicated region
        $region13: #{pvcnet_forward.2} parent=11 // pred_check
          %p250 = pneg %p74
        $region14: #{pvcnet_forward.2} parent=11 // pred_check_branch
          %252 = sbr.rel (%p250) target = $region16
        $region15: #{pvcnet_forward.2} parent=11 // pred_region
          _
        $region16: #{pvcnet_forward.2} parent=11 // pred_fallthru
          _
        // Predicated region
        $region17: #{pvcnet_forward.2} parent=11 // pred_check
          %p253 = pneg %p95
        $region18: #{pvcnet_forward.2} parent=11 // pred_check_branch
          %255 = sbr.rel (%p253) target = $region20
        $region19: #{pvcnet_forward.2} parent=11 // pred_region
          _
        $region20: #{pvcnet_forward.2} parent=11 // pred_fallthru
          _
        // Predicated region
        $region21: #{pvcnet_forward.2} parent=11 // pred_check
          %p256 = pneg %p116
        $region22: #{pvcnet_forward.2} parent=11 // pred_check_branch
          %258 = sbr.rel (%p256) target = $region24
        $region23: #{pvcnet_forward.2} parent=11 // pred_region
          _
        $region24: #{pvcnet_forward.2} parent=11 // pred_fallthru
          _
        // Predicated region
        $region25: #{pvcnet_forward.2} parent=11 // pred_check
          %p259 = pneg %p137
        $region26: #{pvcnet_forward.2} parent=11 // pred_check_branch
          %261 = sbr.rel (%p259) target = $region28
        $region27: #{pvcnet_forward.2} parent=11 // pred_region
          _
        $region28: #{pvcnet_forward.2} parent=11 // pred_fallthru
          _
        // Predicated region
        $region29: #{pvcnet_forward.2} parent=11 // pred_check
          %p262 = pneg %p158
        $region30: #{pvcnet_forward.2} parent=11 // pred_check_branch
          %264 = sbr.rel (%p262) target = $region32
        $region31: #{pvcnet_forward.2} parent=11 // pred_region
          _
        $region32: #{pvcnet_forward.2} parent=11 // pred_fallthru
          _
        // Predicated region
        $region33: #{pvcnet_forward.2} parent=11 // pred_check
          %p265 = pneg %p179
        $region34: #{pvcnet_forward.2} parent=11 // pred_check_branch
          %267 = sbr.rel (%p265) target = $region36
        $region35: #{pvcnet_forward.2} parent=11 // pred_region
          _
        $region36: #{pvcnet_forward.2} parent=11 // pred_fallthru
          _
      $region12: #{pvcnet_forward.2} parent=5 // pred_fallthru
        _
      %p268 = scmp.lt.s32.totalorder %s15, 4
      // Predicated region
      $region37: #{pvcnet_forward.2} parent=5 // pred_check
        %p269 = pneg %p268
      $region38: #{pvcnet_forward.2} parent=5 // pred_check_branch
        %271 = sbr.rel (%p269) target = $region40
      $region39: #{pvcnet_forward.2} parent=5 // pred_region
        // Predicated region
        $region41: #{pvcnet_forward.2} parent=39 // pred_check
          %p272 = pneg %p47
        $region42: #{pvcnet_forward.2} parent=39 // pred_check_branch
          %274 = sbr.rel (%p272) target = $region44
        $region43: #{pvcnet_forward.2} parent=39 // pred_region
          %p275 = scmp.lt.s32.totalorder %s22, 1
          %s276 = scalar_select %p275, %s22, 1
          %s277 = smul.addr %s276, 54
          %s278 = smul.addr %s277, 4
          %s279 = scalar_lea.vmem %s0, %s278
        $region44: #{pvcnet_forward.2} parent=39 // pred_fallthru
          _
      $region40: #{pvcnet_forward.2} parent=5 // pred_fallthru
        _
      %p280 = scmp.le.s32.totalorder 1, %s15
      %p281 = scmp.lt.s32.totalorder %s15, 5
      %p282 = pnand %p280, %p281
      %p283 = pneg %p282
      // Predicated region
      $region45: #{pvcnet_forward.2} parent=5 // pred_check
        _
      $region46: #{pvcnet_forward.2} parent=5 // pred_check_branch
        %285 = sbr.rel (%p282) target = $region48
      $region47: #{pvcnet_forward.2} parent=5 // pred_region
        %s286 = ssub.s32 %s15, 1
        %p287 = scmp.lt.s32.totalorder %s24, 1
        %s288 = scalar_select %p287, %s24, 1
        %s289 = smul.addr %s288, 54
        %s290 = smul.addr %s289, 4
        %s291 = scalar_lea.vmem %s0, %s290
        %p292 = pneg %p53
        %p293 = pneg %p50
        %p294 = pneg %p74
        %p295 = pneg %p71
        %p296 = pneg %p95
        %p297 = pneg %p92
        %p298 = pneg %p116
        %p299 = pneg %p113
        %p300 = pneg %p137
        %p301 = pneg %p134
        %p302 = pneg %p158
        %p303 = pneg %p155
        %p304 = pneg %p179
        %p305 = pneg %p176
        %p306 = pneg %p207
        %p307 = pneg %p204
        %s308 = sand.u32 %s194, 1
        %s309 = sand.u32 %s194, 1
        %s310 = smul.addr %s309, 32
        %s311 = scalar_lea.vmem [#allocation2], %s310
        %p312 = pneg %p235
        %p313 = pneg %p232
        %s314 = sand.u32 %s222, 1
        %s315 = sand.u32 %s222, 1
        %s316 = smul.addr %s315, 8
        %s317 = scalar_lea.vmem [#allocation3], %s316
        %p318 = scmp.lt.s32.totalorder %s24, 1
        %s319 = scalar_select %p318, %s24, 1
        %s320 = smul.addr %s319, 54
        %s321 = smul.addr %s320, 4
        %s322 = scalar_lea.vmem %s0, %s321
        %s324 = smul.u32 %s25, 8
        %s325 = smul.u32 %s324, 3
        %s326 = smul.addr %s325, 4
        %s327 = scalar_lea.vmem %s322, %s326
        %v328 = vld [vmem:[%s327] sm:$0xf]
        %v329 = vld [vmem:[%s327 + $0x4] sm:$0xf]
        %v330 = vld [vmem:[%s327 + $0xc] sm:$0xf]
        %v331 = vld [vmem:[%s327 + $0x10] sm:$0xf]
        %v332 = vld [vmem:[%s327 + $0x18] sm:$0xf]
        %v333 = vld [vmem:[%s327 + $0x1c] sm:$0xf]
        %v334 = vld [vmem:[%s327 + $0x24] sm:$0xf]
        %v335 = vld [vmem:[%s327 + $0x28] sm:$0xf]
        %v336 = vld [vmem:[%s327 + $0x30] sm:$0xf]
        %v337 = vld [vmem:[%s327 + $0x34] sm:$0xf]
        %v338 = vld [vmem:[%s327 + $0x3c] sm:$0xf]
        %v339 = vld [vmem:[%s327 + $0x40] sm:$0xf]
        %v340 = vld [vmem:[%s327 + $0x48] sm:$0xf]
        %v341 = vld [vmem:[%s327 + $0x4c] sm:$0xf]
        %v342 = vld [vmem:[%s327 + $0x54] sm:$0xf]
        %v343 = vld [vmem:[%s327 + $0x58] sm:$0xf]
        %v344 = vld [vmem:[%s1] sm:$0x3]
        %v345 = vld [vmem:[%s327 + $0x8] sm:$0x1]
        %v346 = vld [vmem:[%s327 + $0x14] sm:$0x1]
        %v347 = vld [vmem:[%s327 + $0x20] sm:$0x1]
        %v348 = vld [vmem:[%s327 + $0x2c] sm:$0x1]
        %v349 = vld [vmem:[%s327 + $0x38] sm:$0x1]
        %v350 = vld [vmem:[%s327 + $0x44] sm:$0x1]
        %v351 = vld [vmem:[%s327 + $0x50] sm:$0x1]
        %v352 = vld [vmem:[%s327 + $0x5c] sm:$0x1]
        %vm353 = vsmask.f32 3328
        %vm354 = vsmask.f32 7440
        %vm355 = vmor %vm353, %vm354
        %v357 = vshrl.u32 %v328, 16
        %v359 = vrot.slane %v357, 4
        %v360 = vshll.u32 %v328, 16
        %v362 = vrot.slane %v360, 5
        %v363 = vor.u32 %v359, %v362
        %v364 = vrot.slane %v363, 4
        %v366 = vshll.u32 %v329, 16
        %v368 = vrot.slane %v366, 5
        %v369 = vsel %vm355, %v364, %v368
        %v370 = vshrl.u32 %v329, 16
        %v372 = vrot.slane %v370, 4
        %v373 = vor.u32 %v372, %v368
        %v374 = vrot.slane %v373, 4
        %v376 = vshll.u32 %v345, 16
        %v378 = vrot.slane %v376, 5
        %v379 = vsel %vm355, %v374, %v378
        %v381 = vshrl.u32 %v330, 16
        %v383 = vrot.slane %v381, 4
        %v384 = vshll.u32 %v330, 16
        %v386 = vrot.slane %v384, 5
        %v387 = vor.u32 %v383, %v386
        %v388 = vrot.slane %v387, 4
        %v390 = vshll.u32 %v331, 16
        %v392 = vrot.slane %v390, 5
        %v393 = vsel %vm355, %v388, %v392
        %v394 = vshrl.u32 %v331, 16
        %v396 = vrot.slane %v394, 4
        %v397 = vor.u32 %v396, %v392
        %v398 = vrot.slane %v397, 4
        %v400 = vshll.u32 %v346, 16
        %v402 = vrot.slane %v400, 5
        %v403 = vsel %vm355, %v398, %v402
        %v405 = vshrl.u32 %v332, 16
        %v407 = vrot.slane %v405, 4
        %v408 = vshll.u32 %v332, 16
        %v410 = vrot.slane %v408, 5
        %v411 = vor.u32 %v407, %v410
        %v412 = vrot.slane %v411, 4
        %v414 = vshll.u32 %v333, 16
        %v416 = vrot.slane %v414, 5
        %v417 = vsel %vm355, %v412, %v416
        %v418 = vshrl.u32 %v333, 16
        %v420 = vrot.slane %v418, 4
        %v421 = vor.u32 %v420, %v416
        %v422 = vrot.slane %v421, 4
        %v424 = vshll.u32 %v347, 16
        %v426 = vrot.slane %v424, 5
        %v427 = vsel %vm355, %v422, %v426
        %v429 = vshrl.u32 %v334, 16
        %v431 = vrot.slane %v429, 4
        %v432 = vshll.u32 %v334, 16
        %v434 = vrot.slane %v432, 5
        %v435 = vor.u32 %v431, %v434
        %v436 = vrot.slane %v435, 4
        %v438 = vshll.u32 %v335, 16
        %v440 = vrot.slane %v438, 5
        %v441 = vsel %vm355, %v436, %v440
        %v442 = vshrl.u32 %v335, 16
        %v444 = vrot.slane %v442, 4
        %v445 = vor.u32 %v444, %v440
        %v446 = vrot.slane %v445, 4
        %v448 = vshll.u32 %v348, 16
        %v450 = vrot.slane %v448, 5
        %v451 = vsel %vm355, %v446, %v450
        %v453 = vshrl.u32 %v336, 16
        %v455 = vrot.slane %v453, 4
        %v456 = vshll.u32 %v336, 16
        %v458 = vrot.slane %v456, 5
        %v459 = vor.u32 %v455, %v458
        %v460 = vrot.slane %v459, 4
        %v462 = vshll.u32 %v337, 16
        %v464 = vrot.slane %v462, 5
        %v465 = vsel %vm355, %v460, %v464
        %v466 = vshrl.u32 %v337, 16
        %v468 = vrot.slane %v466, 4
        %v469 = vor.u32 %v468, %v464
        %v470 = vrot.slane %v469, 4
        %v472 = vshll.u32 %v349, 16
        %v474 = vrot.slane %v472, 5
        %v475 = vsel %vm355, %v470, %v474
        %v477 = vshrl.u32 %v338, 16
        %v479 = vrot.slane %v477, 4
        %v480 = vshll.u32 %v338, 16
        %v482 = vrot.slane %v480, 5
        %v483 = vor.u32 %v479, %v482
        %v484 = vrot.slane %v483, 4
        %v486 = vshll.u32 %v339, 16
        %v488 = vrot.slane %v486, 5
        %v489 = vsel %vm355, %v484, %v488
        %v490 = vshrl.u32 %v339, 16
        %v492 = vrot.slane %v490, 4
        %v493 = vor.u32 %v492, %v488
        %v494 = vrot.slane %v493, 4
        %v496 = vshll.u32 %v350, 16
        %v498 = vrot.slane %v496, 5
        %v499 = vsel %vm355, %v494, %v498
        %v501 = vshrl.u32 %v340, 16
        %v503 = vrot.slane %v501, 4
        %v504 = vshll.u32 %v340, 16
        %v506 = vrot.slane %v504, 5
        %v507 = vor.u32 %v503, %v506
        %v508 = vrot.slane %v507, 4
        %v510 = vshll.u32 %v341, 16
        %v512 = vrot.slane %v510, 5
        %v513 = vsel %vm355, %v508, %v512
        %v514 = vshrl.u32 %v341, 16
        %v516 = vrot.slane %v514, 4
        %v517 = vor.u32 %v516, %v512
        %v518 = vrot.slane %v517, 4
        %v520 = vshll.u32 %v351, 16
        %v522 = vrot.slane %v520, 5
        %v523 = vsel %vm355, %v518, %v522
        %v525 = vshrl.u32 %v342, 16
        %v527 = vrot.slane %v525, 4
        %v528 = vshll.u32 %v342, 16
        %v530 = vrot.slane %v528, 5
        %v531 = vor.u32 %v527, %v530
        %v532 = vrot.slane %v531, 4
        %v534 = vshll.u32 %v343, 16
        %v536 = vrot.slane %v534, 5
        %v537 = vsel %vm355, %v532, %v536
        %v538 = vshrl.u32 %v343, 16
        %v540 = vrot.slane %v538, 4
        %v541 = vor.u32 %v540, %v536
        %v542 = vrot.slane %v541, 4
        %v544 = vshll.u32 %v352, 16
        %v546 = vrot.slane %v544, 5
        %v547 = vsel %vm355, %v542, %v546
        %s548 = scalar_lea.vmem %s1, 2
        %v549 = vld [vmem:[%s548] sm:$0x3]
        %v550 = vunpack.c.l.b16 %v369
        %v551 = vunpack.c.l.b16 %v379
        %v552 = vunpack.c.l.b16 %v393
        %v553 = vunpack.c.l.b16 %v403
        %v554 = vunpack.c.l.b16 %v417
        %v555 = vunpack.c.l.b16 %v427
        %v556 = vunpack.c.l.b16 %v441
        %v557 = vunpack.c.l.b16 %v451
        %v558 = vunpack.c.l.b16 %v465
        %v559 = vunpack.c.l.b16 %v475
        %v560 = vunpack.c.l.b16 %v489
        %v561 = vunpack.c.l.b16 %v499
        %v562 = vunpack.c.l.b16 %v513
        %v563 = vunpack.c.l.b16 %v523
        %v564 = vunpack.c.l.b16 %v537
        %v565 = vunpack.c.l.b16 %v547
        %v566 = vpack.c.b16 %v551, %v550
        %v567 = vpack.c.b16 %v553, %v552
        %v568 = vpack.c.b16 %v555, %v554
        %v569 = vpack.c.b16 %v557, %v556
        %v570 = vpack.c.b16 %v559, %v558
        %v571 = vpack.c.b16 %v561, %v560
        %v572 = vpack.c.b16 %v563, %v562
        %v573 = vpack.c.b16 %v565, %v564
        %vm574 = vcmask 23552
        %v576 = vsel %vm574, %v566, 0
        %v579 = vsel %vm574, %v567, 0
        %v582 = vsel %vm574, %v568, 0
        %v585 = vsel %vm574, %v569, 0
        %v588 = vsel %vm574, %v570, 0
        %v591 = vsel %vm574, %v571, 0
        %v594 = vsel %vm574, %v572, 0
        %v597 = vsel %vm574, %v573, 0
        %vm599 = vcmask 1040384
        %vm600 = vcmask 1041408
        %v601 = vsel %vm599, 4294967295, 65535
        %v602 = vsel %vm600, %v601, 0
        %v604 = vand.u32 %v549, %v602
        %606 = vmatprep.subr.bf16.mxu0 0
        %607 = vmatpush1.bf16.msra.mxu0 0
        %608 = vmatprep.subr.bf16.mxu0 0
        %609 = vmatpush1.bf16.msra.mxu0 0
        %610 = vmatprep.subr.bf16.mxu0 0
        %611 = vmatpush1.bf16.msra.mxu0 0
        %612 = vmatprep.subr.bf16.mxu0 0
        %613 = vmatpush1.bf16.msra.mxu0 0
        %614 = vmatprep.subr.bf16.mxu0 0
        %615 = vmatpush1.bf16.msra.mxu0 0
        %616 = vmatprep.subr.bf16.mxu0 0
        %617 = vmatpush1.bf16.msra.mxu0 0
        %618 = vmatprep.subr.bf16.mxu0 0
        %619 = vmatpush1.bf16.msra.mxu0 0
        %620 = vmatprep.subr.bf16.mxu0 0
        %621 = vmatpush1.bf16.msra.mxu0 %v604
        %622 = vmatprep.subr.bf16.mxu0 0
        %623 = vmatpush2.bf16.msra.mxu0 0
        %624 = vmatprep.subr.bf16.mxu0 0
        %625 = vmatpush2.bf16.msra.mxu0 0
        %626 = vmatprep.subr.bf16.mxu0 0
        %627 = vmatpush2.bf16.msra.mxu0 0
        %628 = vmatprep.subr.bf16.mxu0 0
        %629 = vmatpush2.bf16.msra.mxu0 0
        %630 = vmatprep.subr.bf16.mxu0 0
        %631 = vmatpush2.bf16.msra.mxu0 0
        %632 = vmatprep.subr.bf16.mxu0 0
        %633 = vmatpush2.bf16.msra.mxu0 0
        %634 = vmatprep.subr.bf16.mxu0 0
        %635 = vmatpush2.bf16.msra.mxu0 0
        %636 = vmatprep.subr.bf16.mxu0 0
        %637 = vmatpush2.bf16.msra.mxu0 0
        %638 = vmatprep.mubr.bf16.mxu0 0
        %639 = vmatmul.mubr.bf16.gmra.mxu0 %v576
        %v640 = vpop.f32.mrf.mxu0
        %v641 = vadd.f32 0.0, %v640
        %v642 = vpop.f32.mrf.mxu0
        %v643 = vpop.f32.mrf.mxu0
        %v644 = vadd.f32 0.0, %v643
        %v645 = vpop.f32.mrf.mxu0
        %646 = vmatprep.mubr.bf16.mxu0 0
        %647 = vmatmul.mubr.bf16.gmra.mxu0 %v579
        %v648 = vpop.f32.mrf.mxu0
        %v649 = vadd.f32 0.0, %v648
        %v650 = vpop.f32.mrf.mxu0
        %v651 = vpop.f32.mrf.mxu0
        %v652 = vadd.f32 0.0, %v651
        %v653 = vpop.f32.mrf.mxu0
        %654 = vmatprep.mubr.bf16.mxu0 0
        %655 = vmatmul.mubr.bf16.gmra.mxu0 %v582
        %v656 = vpop.f32.mrf.mxu0
        %v657 = vadd.f32 0.0, %v656
        %v658 = vpop.f32.mrf.mxu0
        %v659 = vpop.f32.mrf.mxu0
        %v660 = vadd.f32 0.0, %v659
        %v661 = vpop.f32.mrf.mxu0
        %662 = vmatprep.mubr.bf16.mxu0 0
        %663 = vmatmul.mubr.bf16.gmra.mxu0 %v585
        %v664 = vpop.f32.mrf.mxu0
        %v665 = vadd.f32 0.0, %v664
        %v666 = vpop.f32.mrf.mxu0
        %v667 = vpop.f32.mrf.mxu0
        %v668 = vadd.f32 0.0, %v667
        %v669 = vpop.f32.mrf.mxu0
        %670 = vmatprep.mubr.bf16.mxu0 0
        %671 = vmatmul.mubr.bf16.gmra.mxu0 %v588
        %v672 = vpop.f32.mrf.mxu0
        %v673 = vadd.f32 0.0, %v672
        %v674 = vpop.f32.mrf.mxu0
        %v675 = vpop.f32.mrf.mxu0
        %v676 = vadd.f32 0.0, %v675
        %v677 = vpop.f32.mrf.mxu0
        %678 = vmatprep.mubr.bf16.mxu0 0
        %679 = vmatmul.mubr.bf16.gmra.mxu0 %v591
        %v680 = vpop.f32.mrf.mxu0
        %v681 = vadd.f32 0.0, %v680
        %v682 = vpop.f32.mrf.mxu0
        %v683 = vpop.f32.mrf.mxu0
        %v684 = vadd.f32 0.0, %v683
        %v685 = vpop.f32.mrf.mxu0
        %686 = vmatprep.mubr.bf16.mxu0 0
        %687 = vmatmul.mubr.bf16.gmra.mxu0 %v594
        %v688 = vpop.f32.mrf.mxu0
        %v689 = vadd.f32 0.0, %v688
        %v690 = vpop.f32.mrf.mxu0
        %v691 = vpop.f32.mrf.mxu0
        %v692 = vadd.f32 0.0, %v691
        %v693 = vpop.f32.mrf.mxu0
        %694 = vmatprep.mubr.bf16.mxu0 0
        %695 = vmatmul.mubr.bf16.gmra.mxu0 %v597
        %v696 = vpop.f32.mrf.mxu0
        %v697 = vadd.f32 0.0, %v696
        %v698 = vpop.f32.mrf.mxu0
        %v699 = vpop.f32.mrf.mxu0
        %v700 = vadd.f32 0.0, %v699
        %v701 = vpop.f32.mrf.mxu0
        %702 = vdwg.mxu0
        %v719 = vunpack.c.l.b16 %v328
        %v720 = vunpack.c.l.b16 %v329
        %v721 = vunpack.c.l.b16 %v330
        %v722 = vunpack.c.l.b16 %v331
        %v723 = vunpack.c.l.b16 %v332
        %v724 = vunpack.c.l.b16 %v333
        %v725 = vunpack.c.l.b16 %v334
        %v726 = vunpack.c.l.b16 %v335
        %v727 = vunpack.c.l.b16 %v336
        %v728 = vunpack.c.l.b16 %v337
        %v729 = vunpack.c.l.b16 %v338
        %v730 = vunpack.c.l.b16 %v339
        %v731 = vunpack.c.l.b16 %v340
        %v732 = vunpack.c.l.b16 %v341
        %v733 = vunpack.c.l.b16 %v342
        %v734 = vunpack.c.l.b16 %v343
        %v735 = vpack.c.b16 %v720, %v719
        %v736 = vpack.c.b16 %v722, %v721
        %v737 = vpack.c.b16 %v724, %v723
        %v738 = vpack.c.b16 %v726, %v725
        %v739 = vpack.c.b16 %v728, %v727
        %v740 = vpack.c.b16 %v730, %v729
        %v741 = vpack.c.b16 %v732, %v731
        %v742 = vpack.c.b16 %v734, %v733
        %v744 = vsel %vm574, %v735, 0
        %v747 = vsel %vm574, %v736, 0
        %v750 = vsel %vm574, %v737, 0
        %v753 = vsel %vm574, %v738, 0
        %v756 = vsel %vm574, %v739, 0
        %v759 = vsel %vm574, %v740, 0
        %v762 = vsel %vm574, %v741, 0
        %v765 = vsel %vm574, %v742, 0
        %v768 = vand.u32 %v344, %v602
        %770 = vmatprep.subr.bf16.mxu0 0
        %771 = vmatpush1.bf16.msra.mxu0 0
        %772 = vmatprep.subr.bf16.mxu0 0
        %773 = vmatpush1.bf16.msra.mxu0 0
        %774 = vmatprep.subr.bf16.mxu0 0
        %775 = vmatpush1.bf16.msra.mxu0 0
        %776 = vmatprep.subr.bf16.mxu0 0
        %777 = vmatpush1.bf16.msra.mxu0 0
        %778 = vmatprep.subr.bf16.mxu0 0
        %779 = vmatpush1.bf16.msra.mxu0 0
        %780 = vmatprep.subr.bf16.mxu0 0
        %781 = vmatpush1.bf16.msra.mxu0 0
        %782 = vmatprep.subr.bf16.mxu0 0
        %783 = vmatpush1.bf16.msra.mxu0 0
        %784 = vmatprep.subr.bf16.mxu0 0
        %785 = vmatpush1.bf16.msra.mxu0 %v768
        %786 = vmatprep.subr.bf16.mxu0 0
        %787 = vmatpush2.bf16.msra.mxu0 0
        %788 = vmatprep.subr.bf16.mxu0 0
        %789 = vmatpush2.bf16.msra.mxu0 0
        %790 = vmatprep.subr.bf16.mxu0 0
        %791 = vmatpush2.bf16.msra.mxu0 0
        %792 = vmatprep.subr.bf16.mxu0 0
        %793 = vmatpush2.bf16.msra.mxu0 0
        %794 = vmatprep.subr.bf16.mxu0 0
        %795 = vmatpush2.bf16.msra.mxu0 0
        %796 = vmatprep.subr.bf16.mxu0 0
        %797 = vmatpush2.bf16.msra.mxu0 0
        %798 = vmatprep.subr.bf16.mxu0 0
        %799 = vmatpush2.bf16.msra.mxu0 0
        %800 = vmatprep.subr.bf16.mxu0 0
        %801 = vmatpush2.bf16.msra.mxu0 0
        %802 = vmatprep.mubr.bf16.mxu0 0
        %803 = vmatmul.mubr.bf16.gmra.mxu0 %v744
        %v804 = vpop.f32.mrf.mxu0
        %v805 = vadd.f32 %v641, %v804
        %v806 = vpop.f32.mrf.mxu0
        %v807 = vpop.f32.mrf.mxu0
        %v808 = vadd.f32 %v644, %v807
        %v809 = vpop.f32.mrf.mxu0
        %810 = vmatprep.mubr.bf16.mxu0 0
        %811 = vmatmul.mubr.bf16.gmra.mxu0 %v747
        %v812 = vpop.f32.mrf.mxu0
        %v813 = vadd.f32 %v649, %v812
        %v814 = vpop.f32.mrf.mxu0
        %v815 = vpop.f32.mrf.mxu0
        %v816 = vadd.f32 %v652, %v815
        %v817 = vpop.f32.mrf.mxu0
        %818 = vmatprep.mubr.bf16.mxu0 0
        %819 = vmatmul.mubr.bf16.gmra.mxu0 %v750
        %v820 = vpop.f32.mrf.mxu0
        %v821 = vadd.f32 %v657, %v820
        %v822 = vpop.f32.mrf.mxu0
        %v823 = vpop.f32.mrf.mxu0
        %v824 = vadd.f32 %v660, %v823
        %v825 = vpop.f32.mrf.mxu0
        %826 = vmatprep.mubr.bf16.mxu0 0
        %827 = vmatmul.mubr.bf16.gmra.mxu0 %v753
        %v828 = vpop.f32.mrf.mxu0
        %v829 = vadd.f32 %v665, %v828
        %v830 = vpop.f32.mrf.mxu0
        %v831 = vpop.f32.mrf.mxu0
        %v832 = vadd.f32 %v668, %v831
        %v833 = vpop.f32.mrf.mxu0
        %834 = vmatprep.mubr.bf16.mxu0 0
        %835 = vmatmul.mubr.bf16.gmra.mxu0 %v756
        %v836 = vpop.f32.mrf.mxu0
        %v837 = vadd.f32 %v673, %v836
        %v838 = vpop.f32.mrf.mxu0
        %v839 = vpop.f32.mrf.mxu0
        %v840 = vadd.f32 %v676, %v839
        %v841 = vpop.f32.mrf.mxu0
        %842 = vmatprep.mubr.bf16.mxu0 0
        %843 = vmatmul.mubr.bf16.gmra.mxu0 %v759
        %v844 = vpop.f32.mrf.mxu0
        %v845 = vadd.f32 %v681, %v844
        %v846 = vpop.f32.mrf.mxu0
        %v847 = vpop.f32.mrf.mxu0
        %v848 = vadd.f32 %v684, %v847
        %v849 = vpop.f32.mrf.mxu0
        %850 = vmatprep.mubr.bf16.mxu0 0
        %851 = vmatmul.mubr.bf16.gmra.mxu0 %v762
        %v852 = vpop.f32.mrf.mxu0
        %v853 = vadd.f32 %v689, %v852
        %v854 = vpop.f32.mrf.mxu0
        %v855 = vpop.f32.mrf.mxu0
        %v856 = vadd.f32 %v692, %v855
        %v857 = vpop.f32.mrf.mxu0
        %858 = vmatprep.mubr.bf16.mxu0 0
        %859 = vmatmul.mubr.bf16.gmra.mxu0 %v765
        %v860 = vpop.f32.mrf.mxu0
        %v861 = vadd.f32 %v697, %v860
        %v862 = vpop.f32.mrf.mxu0
        %v863 = vpop.f32.mrf.mxu0
        %v864 = vadd.f32 %v700, %v863
        %v865 = vpop.f32.mrf.mxu0
        %866 = vdwg.mxu0
        %v867 = vld [vmem:[%s327] sm:$0xe]
        %v868 = vld [vmem:[%s327 + $0xc] sm:$0xe]
        %v869 = vld [vmem:[%s327 + $0x18] sm:$0xe]
        %v870 = vld [vmem:[%s327 + $0x24] sm:$0xe]
        %v871 = vld [vmem:[%s327 + $0x30] sm:$0xe]
        %v872 = vld [vmem:[%s327 + $0x3c] sm:$0xe]
        %v873 = vld [vmem:[%s327 + $0x48] sm:$0xe]
        %v874 = vld [vmem:[%s327 + $0x54] sm:$0xe]
        %vm891 = vcmask 1042432
        %vm892 = vcmask 1046532
        %vm893 = vmor %vm891, %vm892
        %v894 = vrot.slane %v867, 5
        %v895 = vrot.slane %v894, 4
        %v896 = vrot.slane %v329, 5
        %v897 = vsel %vm893, %v895, %v896
        %v898 = vrot.slane %v896, 4
        %v899 = vrot.slane %v345, 5
        %v900 = vsel %vm893, %v898, %v899
        %v901 = vrot.slane %v868, 5
        %v902 = vrot.slane %v901, 4
        %v903 = vrot.slane %v331, 5
        %v904 = vsel %vm893, %v902, %v903
        %v905 = vrot.slane %v903, 4
        %v906 = vrot.slane %v346, 5
        %v907 = vsel %vm893, %v905, %v906
        %v908 = vrot.slane %v869, 5
        %v909 = vrot.slane %v908, 4
        %v910 = vrot.slane %v333, 5
        %v911 = vsel %vm893, %v909, %v910
        %v912 = vrot.slane %v910, 4
        %v913 = vrot.slane %v347, 5
        %v914 = vsel %vm893, %v912, %v913
        %v915 = vrot.slane %v870, 5
        %v916 = vrot.slane %v915, 4
        %v917 = vrot.slane %v335, 5
        %v918 = vsel %vm893, %v916, %v917
        %v919 = vrot.slane %v917, 4
        %v920 = vrot.slane %v348, 5
        %v921 = vsel %vm893, %v919, %v920
        %v922 = vrot.slane %v871, 5
        %v923 = vrot.slane %v922, 4
        %v924 = vrot.slane %v337, 5
        %v925 = vsel %vm893, %v923, %v924
        %v926 = vrot.slane %v924, 4
        %v927 = vrot.slane %v349, 5
        %v928 = vsel %vm893, %v926, %v927
        %v929 = vrot.slane %v872, 5
        %v930 = vrot.slane %v929, 4
        %v931 = vrot.slane %v339, 5
        %v932 = vsel %vm893, %v930, %v931
        %v933 = vrot.slane %v931, 4
        %v934 = vrot.slane %v350, 5
        %v935 = vsel %vm893, %v933, %v934
        %v936 = vrot.slane %v873, 5
        %v937 = vrot.slane %v936, 4
        %v938 = vrot.slane %v341, 5
        %v939 = vsel %vm893, %v937, %v938
        %v940 = vrot.slane %v938, 4
        %v941 = vrot.slane %v351, 5
        %v942 = vsel %vm893, %v940, %v941
        %v943 = vrot.slane %v874, 5
        %v944 = vrot.slane %v943, 4
        %v945 = vrot.slane %v343, 5
        %v946 = vsel %vm893, %v944, %v945
        %v947 = vrot.slane %v945, 4
        %v948 = vrot.slane %v352, 5
        %v949 = vsel %vm893, %v947, %v948
        %s950 = scalar_lea.vmem %s1, 4
        %v951 = vld [vmem:[%s950] sm:$0x3]
        %v952 = vunpack.c.l.b16 %v897
        %v953 = vunpack.c.l.b16 %v900
        %v954 = vunpack.c.l.b16 %v904
        %v955 = vunpack.c.l.b16 %v907
        %v956 = vunpack.c.l.b16 %v911
        %v957 = vunpack.c.l.b16 %v914
        %v958 = vunpack.c.l.b16 %v918
        %v959 = vunpack.c.l.b16 %v921
        %v960 = vunpack.c.l.b16 %v925
        %v961 = vunpack.c.l.b16 %v928
        %v962 = vunpack.c.l.b16 %v932
        %v963 = vunpack.c.l.b16 %v935
        %v964 = vunpack.c.l.b16 %v939
        %v965 = vunpack.c.l.b16 %v942
        %v966 = vunpack.c.l.b16 %v946
        %v967 = vunpack.c.l.b16 %v949
        %v968 = vpack.c.b16 %v953, %v952
        %v969 = vpack.c.b16 %v955, %v954
        %v970 = vpack.c.b16 %v957, %v956
        %v971 = vpack.c.b16 %v959, %v958
        %v972 = vpack.c.b16 %v961, %v960
        %v973 = vpack.c.b16 %v963, %v962
        %v974 = vpack.c.b16 %v965, %v964
        %v975 = vpack.c.b16 %v967, %v966
        %v977 = vsel %vm574, %v968, 0
        %v980 = vsel %vm574, %v969, 0
        %v983 = vsel %vm574, %v970, 0
        %v986 = vsel %vm574, %v971, 0
        %v989 = vsel %vm574, %v972, 0
        %v992 = vsel %vm574, %v973, 0
        %v995 = vsel %vm574, %v974, 0
        %v998 = vsel %vm574, %v975, 0
        %v1001 = vand.u32 %v951, %v602
        %1003 = vmatprep.subr.bf16.mxu0 0
        %1004 = vmatpush1.bf16.msra.mxu0 0
        %1005 = vmatprep.subr.bf16.mxu0 0
        %1006 = vmatpush1.bf16.msra.mxu0 0
        %1007 = vmatprep.subr.bf16.mxu0 0
        %1008 = vmatpush1.bf16.msra.mxu0 0
        %1009 = vmatprep.subr.bf16.mxu0 0
        %1010 = vmatpush1.bf16.msra.mxu0 0
        %1011 = vmatprep.subr.bf16.mxu0 0
        %1012 = vmatpush1.bf16.msra.mxu0 0
        %1013 = vmatprep.subr.bf16.mxu0 0
        %1014 = vmatpush1.bf16.msra.mxu0 0
        %1015 = vmatprep.subr.bf16.mxu0 0
        %1016 = vmatpush1.bf16.msra.mxu0 0
        %1017 = vmatprep.subr.bf16.mxu0 0
        %1018 = vmatpush1.bf16.msra.mxu0 %v1001
        %1019 = vmatprep.subr.bf16.mxu0 0
        %1020 = vmatpush2.bf16.msra.mxu0 0
        %1021 = vmatprep.subr.bf16.mxu0 0
        %1022 = vmatpush2.bf16.msra.mxu0 0
        %1023 = vmatprep.subr.bf16.mxu0 0
        %1024 = vmatpush2.bf16.msra.mxu0 0
        %1025 = vmatprep.subr.bf16.mxu0 0
        %1026 = vmatpush2.bf16.msra.mxu0 0
        %1027 = vmatprep.subr.bf16.mxu0 0
        %1028 = vmatpush2.bf16.msra.mxu0 0
        %1029 = vmatprep.subr.bf16.mxu0 0
        %1030 = vmatpush2.bf16.msra.mxu0 0
        %1031 = vmatprep.subr.bf16.mxu0 0
        %1032 = vmatpush2.bf16.msra.mxu0 0
        %1033 = vmatprep.subr.bf16.mxu0 0
        %1034 = vmatpush2.bf16.msra.mxu0 0
        %1035 = vmatprep.mubr.bf16.mxu0 0
        %1036 = vmatmul.mubr.bf16.gmra.mxu0 %v977
        %v1037 = vpop.f32.mrf.mxu0
        %v1038 = vadd.f32 0.0, %v1037
        %v1039 = vpop.f32.mrf.mxu0
        %v1040 = vpop.f32.mrf.mxu0
        %v1041 = vadd.f32 0.0, %v1040
        %v1042 = vpop.f32.mrf.mxu0
        %1043 = vmatprep.mubr.bf16.mxu0 0
        %1044 = vmatmul.mubr.bf16.gmra.mxu0 %v980
        %v1045 = vpop.f32.mrf.mxu0
        %v1046 = vadd.f32 0.0, %v1045
        %v1047 = vpop.f32.mrf.mxu0
        %v1048 = vpop.f32.mrf.mxu0
        %v1049 = vadd.f32 0.0, %v1048
        %v1050 = vpop.f32.mrf.mxu0
        %1051 = vmatprep.mubr.bf16.mxu0 0
        %1052 = vmatmul.mubr.bf16.gmra.mxu0 %v983
        %v1053 = vpop.f32.mrf.mxu0
        %v1054 = vadd.f32 0.0, %v1053
        %v1055 = vpop.f32.mrf.mxu0
        %v1056 = vpop.f32.mrf.mxu0
        %v1057 = vadd.f32 0.0, %v1056
        %v1058 = vpop.f32.mrf.mxu0
        %1059 = vmatprep.mubr.bf16.mxu0 0
        %1060 = vmatmul.mubr.bf16.gmra.mxu0 %v986
        %v1061 = vpop.f32.mrf.mxu0
        %v1062 = vadd.f32 0.0, %v1061
        %v1063 = vpop.f32.mrf.mxu0
        %v1064 = vpop.f32.mrf.mxu0
        %v1065 = vadd.f32 0.0, %v1064
        %v1066 = vpop.f32.mrf.mxu0
        %1067 = vmatprep.mubr.bf16.mxu0 0
        %1068 = vmatmul.mubr.bf16.gmra.mxu0 %v989
        %v1069 = vpop.f32.mrf.mxu0
        %v1070 = vadd.f32 0.0, %v1069
        %v1071 = vpop.f32.mrf.mxu0
        %v1072 = vpop.f32.mrf.mxu0
        %v1073 = vadd.f32 0.0, %v1072
        %v1074 = vpop.f32.mrf.mxu0
        %1075 = vmatprep.mubr.bf16.mxu0 0
        %1076 = vmatmul.mubr.bf16.gmra.mxu0 %v992
        %v1077 = vpop.f32.mrf.mxu0
        %v1078 = vadd.f32 0.0, %v1077
        %v1079 = vpop.f32.mrf.mxu0
        %v1080 = vpop.f32.mrf.mxu0
        %v1081 = vadd.f32 0.0, %v1080
        %v1082 = vpop.f32.mrf.mxu0
        %1083 = vmatprep.mubr.bf16.mxu0 0
        %1084 = vmatmul.mubr.bf16.gmra.mxu0 %v995
        %v1085 = vpop.f32.mrf.mxu0
        %v1086 = vadd.f32 0.0, %v1085
        %v1087 = vpop.f32.mrf.mxu0
        %v1088 = vpop.f32.mrf.mxu0
        %v1089 = vadd.f32 0.0, %v1088
        %v1090 = vpop.f32.mrf.mxu0
        %1091 = vmatprep.mubr.bf16.mxu0 0
        %1092 = vmatmul.mubr.bf16.gmra.mxu0 %v998
        %v1093 = vpop.f32.mrf.mxu0
        %v1094 = vadd.f32 0.0, %v1093
        %v1095 = vpop.f32.mrf.mxu0
        %v1096 = vpop.f32.mrf.mxu0
        %v1097 = vadd.f32 0.0, %v1096
        %v1098 = vpop.f32.mrf.mxu0
        %1099 = vdwg.mxu0
        %v1100 = vadd.f32 %v805, %v1038
        %v1101 = vadd.f32 %v808, %v1041
        %v1102 = vadd.f32 %v813, %v1046
        %v1103 = vadd.f32 %v816, %v1049
        %v1104 = vadd.f32 %v821, %v1054
        %v1105 = vadd.f32 %v824, %v1057
        %v1106 = vadd.f32 %v829, %v1062
        %v1107 = vadd.f32 %v832, %v1065
        %v1108 = vadd.f32 %v837, %v1070
        %v1109 = vadd.f32 %v840, %v1073
        %v1110 = vadd.f32 %v845, %v1078
        %v1111 = vadd.f32 %v848, %v1081
        %v1112 = vadd.f32 %v853, %v1086
        %v1113 = vadd.f32 %v856, %v1089
        %v1114 = vadd.f32 %v861, %v1094
        %v1115 = vadd.f32 %v864, %v1097
        %s1116 = sadd.s32 %s324, 1
        %s1117 = smul.u32 %s1116, 3
        %s1118 = smul.addr %s1117, 4
        %s1119 = scalar_lea.vmem %s322, %s1118
        %v1120 = vld [vmem:[%s1119] sm:$0xf]
        %v1121 = vld [vmem:[%s1119 + $0x4] sm:$0xf]
        %v1122 = vld [vmem:[%s1119 + $0xc] sm:$0xf]
        %v1123 = vld [vmem:[%s1119 + $0x10] sm:$0xf]
        %v1124 = vld [vmem:[%s1119 + $0x18] sm:$0xf]
        %v1125 = vld [vmem:[%s1119 + $0x1c] sm:$0xf]
        %v1126 = vld [vmem:[%s1119 + $0x24] sm:$0xf]
        %v1127 = vld [vmem:[%s1119 + $0x28] sm:$0xf]
        %v1128 = vld [vmem:[%s1119 + $0x30] sm:$0xf]
        %v1129 = vld [vmem:[%s1119 + $0x34] sm:$0xf]
        %v1130 = vld [vmem:[%s1119 + $0x3c] sm:$0xf]
        %v1131 = vld [vmem:[%s1119 + $0x40] sm:$0xf]
        %v1132 = vld [vmem:[%s1119 + $0x48] sm:$0xf]
        %v1133 = vld [vmem:[%s1119 + $0x4c] sm:$0xf]
        %v1134 = vld [vmem:[%s1119 + $0x54] sm:$0xf]
        %v1135 = vld [vmem:[%s1119 + $0x58] sm:$0xf]
        %s1136 = scalar_lea.vmem %s1, 6
        %v1137 = vld [vmem:[%s1136] sm:$0x3]
        %v1154 = vunpack.c.l.b16 %v1120
        %v1155 = vunpack.c.l.b16 %v1121
        %v1156 = vunpack.c.l.b16 %v1122
        %v1157 = vunpack.c.l.b16 %v1123
        %v1158 = vunpack.c.l.b16 %v1124
        %v1159 = vunpack.c.l.b16 %v1125
        %v1160 = vunpack.c.l.b16 %v1126
        %v1161 = vunpack.c.l.b16 %v1127
        %v1162 = vunpack.c.l.b16 %v1128
        %v1163 = vunpack.c.l.b16 %v1129
        %v1164 = vunpack.c.l.b16 %v1130
        %v1165 = vunpack.c.l.b16 %v1131
        %v1166 = vunpack.c.l.b16 %v1132
        %v1167 = vunpack.c.l.b16 %v1133
        %v1168 = vunpack.c.l.b16 %v1134
        %v1169 = vunpack.c.l.b16 %v1135
        %v1170 = vpack.c.b16 %v1155, %v1154
        %v1171 = vpack.c.b16 %v1157, %v1156
        %v1172 = vpack.c.b16 %v1159, %v1158
        %v1173 = vpack.c.b16 %v1161, %v1160
        %v1174 = vpack.c.b16 %v1163, %v1162
        %v1175 = vpack.c.b16 %v1165, %v1164
        %v1176 = vpack.c.b16 %v1167, %v1166
        %v1177 = vpack.c.b16 %v1169, %v1168
        %v1179 = vsel %vm574, %v1170, 0
        %v1182 = vsel %vm574, %v1171, 0
        %v1185 = vsel %vm574, %v1172, 0
        %v1188 = vsel %vm574, %v1173, 0
        %v1191 = vsel %vm574, %v1174, 0
        %v1194 = vsel %vm574, %v1175, 0
        %v1197 = vsel %vm574, %v1176, 0
        %v1200 = vsel %vm574, %v1177, 0
        %v1203 = vand.u32 %v1137, %v602
        %1205 = vmatprep.subr.bf16.mxu0 0
        %1206 = vmatpush1.bf16.msra.mxu0 0
        %1207 = vmatprep.subr.bf16.mxu0 0
        %1208 = vmatpush1.bf16.msra.mxu0 0
        %1209 = vmatprep.subr.bf16.mxu0 0
        %1210 = vmatpush1.bf16.msra.mxu0 0
        %1211 = vmatprep.subr.bf16.mxu0 0
        %1212 = vmatpush1.bf16.msra.mxu0 0
        %1213 = vmatprep.subr.bf16.mxu0 0
        %1214 = vmatpush1.bf16.msra.mxu0 0
        %1215 = vmatprep.subr.bf16.mxu0 0
        %1216 = vmatpush1.bf16.msra.mxu0 0
        %1217 = vmatprep.subr.bf16.mxu0 0
        %1218 = vmatpush1.bf16.msra.mxu0 0
        %1219 = vmatprep.subr.bf16.mxu0 0
        %1220 = vmatpush1.bf16.msra.mxu0 %v1203
        %1221 = vmatprep.subr.bf16.mxu0 0
        %1222 = vmatpush2.bf16.msra.mxu0 0
        %1223 = vmatprep.subr.bf16.mxu0 0
        %1224 = vmatpush2.bf16.msra.mxu0 0
        %1225 = vmatprep.subr.bf16.mxu0 0
        %1226 = vmatpush2.bf16.msra.mxu0 0
        %1227 = vmatprep.subr.bf16.mxu0 0
        %1228 = vmatpush2.bf16.msra.mxu0 0
        %1229 = vmatprep.subr.bf16.mxu0 0
        %1230 = vmatpush2.bf16.msra.mxu0 0
        %1231 = vmatprep.subr.bf16.mxu0 0
        %1232 = vmatpush2.bf16.msra.mxu0 0
        %1233 = vmatprep.subr.bf16.mxu0 0
        %1234 = vmatpush2.bf16.msra.mxu0 0
        %1235 = vmatprep.subr.bf16.mxu0 0
        %1236 = vmatpush2.bf16.msra.mxu0 0
        %1237 = vmatprep.mubr.bf16.mxu0 0
        %1238 = vmatmul.mubr.bf16.gmra.mxu0 %v1179
        %v1239 = vpop.f32.mrf.mxu0
        %v1240 = vadd.f32 0.0, %v1239
        %v1241 = vpop.f32.mrf.mxu0
        %v1242 = vpop.f32.mrf.mxu0
        %v1243 = vadd.f32 0.0, %v1242
        %v1244 = vpop.f32.mrf.mxu0
        %1245 = vmatprep.mubr.bf16.mxu0 0
        %1246 = vmatmul.mubr.bf16.gmra.mxu0 %v1182
        %v1247 = vpop.f32.mrf.mxu0
        %v1248 = vadd.f32 0.0, %v1247
        %v1249 = vpop.f32.mrf.mxu0
        %v1250 = vpop.f32.mrf.mxu0
        %v1251 = vadd.f32 0.0, %v1250
        %v1252 = vpop.f32.mrf.mxu0
        %1253 = vmatprep.mubr.bf16.mxu0 0
        %1254 = vmatmul.mubr.bf16.gmra.mxu0 %v1185
        %v1255 = vpop.f32.mrf.mxu0
        %v1256 = vadd.f32 0.0, %v1255
        %v1257 = vpop.f32.mrf.mxu0
        %v1258 = vpop.f32.mrf.mxu0
        %v1259 = vadd.f32 0.0, %v1258
        %v1260 = vpop.f32.mrf.mxu0
        %1261 = vmatprep.mubr.bf16.mxu0 0
        %1262 = vmatmul.mubr.bf16.gmra.mxu0 %v1188
        %v1263 = vpop.f32.mrf.mxu0
        %v1264 = vadd.f32 0.0, %v1263
        %v1265 = vpop.f32.mrf.mxu0
        %v1266 = vpop.f32.mrf.mxu0
        %v1267 = vadd.f32 0.0, %v1266
        %v1268 = vpop.f32.mrf.mxu0
        %1269 = vmatprep.mubr.bf16.mxu0 0
        %1270 = vmatmul.mubr.bf16.gmra.mxu0 %v1191
        %v1271 = vpop.f32.mrf.mxu0
        %v1272 = vadd.f32 0.0, %v1271
        %v1273 = vpop.f32.mrf.mxu0
        %v1274 = vpop.f32.mrf.mxu0
        %v1275 = vadd.f32 0.0, %v1274
        %v1276 = vpop.f32.mrf.mxu0
        %1277 = vmatprep.mubr.bf16.mxu0 0
        %1278 = vmatmul.mubr.bf16.gmra.mxu0 %v1194
        %v1279 = vpop.f32.mrf.mxu0
        %v1280 = vadd.f32 0.0, %v1279
        %v1281 = vpop.f32.mrf.mxu0
        %v1282 = vpop.f32.mrf.mxu0
        %v1283 = vadd.f32 0.0, %v1282
        %v1284 = vpop.f32.mrf.mxu0
        %1285 = vmatprep.mubr.bf16.mxu0 0
        %1286 = vmatmul.mubr.bf16.gmra.mxu0 %v1197
        %v1287 = vpop.f32.mrf.mxu0
        %v1288 = vadd.f32 0.0, %v1287
        %v1289 = vpop.f32.mrf.mxu0
        %v1290 = vpop.f32.mrf.mxu0
        %v1291 = vadd.f32 0.0, %v1290
        %v1292 = vpop.f32.mrf.mxu0
        %1293 = vmatprep.mubr.bf16.mxu0 0
        %1294 = vmatmul.mubr.bf16.gmra.mxu0 %v1200
        %v1295 = vpop.f32.mrf.mxu0
        %v1296 = vadd.f32 0.0, %v1295
        %v1297 = vpop.f32.mrf.mxu0
        %v1298 = vpop.f32.mrf.mxu0
        %v1299 = vadd.f32 0.0, %v1298
        %v1300 = vpop.f32.mrf.mxu0
        %1301 = vdwg.mxu0
        %v1302 = vadd.f32 %v1100, %v1240
        %v1303 = vadd.f32 %v1101, %v1243
        %v1304 = vadd.f32 %v1102, %v1248
        %v1305 = vadd.f32 %v1103, %v1251
        %v1306 = vadd.f32 %v1104, %v1256
        %v1307 = vadd.f32 %v1105, %v1259
        %v1308 = vadd.f32 %v1106, %v1264
        %v1309 = vadd.f32 %v1107, %v1267
        %v1310 = vadd.f32 %v1108, %v1272
        %v1311 = vadd.f32 %v1109, %v1275
        %v1312 = vadd.f32 %v1110, %v1280
        %v1313 = vadd.f32 %v1111, %v1283
        %v1314 = vadd.f32 %v1112, %v1288
        %v1315 = vadd.f32 %v1113, %v1291
        %v1316 = vadd.f32 %v1114, %v1296
        %v1317 = vadd.f32 %v1115, %v1299
        %v1318 = vld [vmem:[%s1119] sm:$0xf]
        %v1319 = vld [vmem:[%s1119 + $0x4] sm:$0xf]
        %v1320 = vld [vmem:[%s1119 + $0x8] sm:$0x1]
        %v1321 = vld [vmem:[%s1119 + $0xc] sm:$0xf]
        %v1322 = vld [vmem:[%s1119 + $0x10] sm:$0xf]
        %v1323 = vld [vmem:[%s1119 + $0x14] sm:$0x1]
        %v1324 = vld [vmem:[%s1119 + $0x18] sm:$0xf]
        %v1325 = vld [vmem:[%s1119 + $0x1c] sm:$0xf]
        %v1326 = vld [vmem:[%s1119 + $0x20] sm:$0x1]
        %v1327 = vld [vmem:[%s1119 + $0x24] sm:$0xf]
        %v1328 = vld [vmem:[%s1119 + $0x28] sm:$0xf]
        %v1329 = vld [vmem:[%s1119 + $0x2c] sm:$0x1]
        %v1330 = vld [vmem:[%s1119 + $0x30] sm:$0xf]
        %v1331 = vld [vmem:[%s1119 + $0x34] sm:$0xf]
        %v1332 = vld [vmem:[%s1119 + $0x38] sm:$0x1]
        %v1333 = vld [vmem:[%s1119 + $0x3c] sm:$0xf]
        %v1334 = vld [vmem:[%s1119 + $0x40] sm:$0xf]
        %v1335 = vld [vmem:[%s1119 + $0x44] sm:$0x1]
        %v1336 = vld [vmem:[%s1119 + $0x48] sm:$0xf]
        %v1337 = vld [vmem:[%s1119 + $0x4c] sm:$0xf]
        %v1338 = vld [vmem:[%s1119 + $0x50] sm:$0x1]
        %v1339 = vld [vmem:[%s1119 + $0x54] sm:$0xf]
        %v1340 = vld [vmem:[%s1119 + $0x58] sm:$0xf]
        %v1341 = vld [vmem:[%s1119 + $0x5c] sm:$0x1]
        %v1343 = vshrl.u32 %v1318, 16
        %v1345 = vrot.slane %v1343, 4
        %v1346 = vshll.u32 %v1318, 16
        %v1348 = vrot.slane %v1346, 5
        %v1349 = vor.u32 %v1345, %v1348
        %v1350 = vrot.slane %v1349, 4
        %v1352 = vshll.u32 %v1319, 16
        %v1354 = vrot.slane %v1352, 5
        %v1355 = vsel %vm355, %v1350, %v1354
        %v1356 = vshrl.u32 %v1319, 16
        %v1358 = vrot.slane %v1356, 4
        %v1359 = vor.u32 %v1358, %v1354
        %v1360 = vrot.slane %v1359, 4
        %v1362 = vshll.u32 %v1320, 16
        %v1364 = vrot.slane %v1362, 5
        %v1365 = vsel %vm355, %v1360, %v1364
        %v1367 = vshrl.u32 %v1321, 16
        %v1369 = vrot.slane %v1367, 4
        %v1370 = vshll.u32 %v1321, 16
        %v1372 = vrot.slane %v1370, 5
        %v1373 = vor.u32 %v1369, %v1372
        %v1374 = vrot.slane %v1373, 4
        %v1376 = vshll.u32 %v1322, 16
        %v1378 = vrot.slane %v1376, 5
        %v1379 = vsel %vm355, %v1374, %v1378
        %v1380 = vshrl.u32 %v1322, 16
        %v1382 = vrot.slane %v1380, 4
        %v1383 = vor.u32 %v1382, %v1378
        %v1384 = vrot.slane %v1383, 4
        %v1386 = vshll.u32 %v1323, 16
        %v1388 = vrot.slane %v1386, 5
        %v1389 = vsel %vm355, %v1384, %v1388
        %v1391 = vshrl.u32 %v1324, 16
        %v1393 = vrot.slane %v1391, 4
        %v1394 = vshll.u32 %v1324, 16
        %v1396 = vrot.slane %v1394, 5
        %v1397 = vor.u32 %v1393, %v1396
        %v1398 = vrot.slane %v1397, 4
        %v1400 = vshll.u32 %v1325, 16
        %v1402 = vrot.slane %v1400, 5
        %v1403 = vsel %vm355, %v1398, %v1402
        %v1404 = vshrl.u32 %v1325, 16
        %v1406 = vrot.slane %v1404, 4
        %v1407 = vor.u32 %v1406, %v1402
        %v1408 = vrot.slane %v1407, 4
        %v1410 = vshll.u32 %v1326, 16
        %v1412 = vrot.slane %v1410, 5
        %v1413 = vsel %vm355, %v1408, %v1412
        %v1415 = vshrl.u32 %v1327, 16
        %v1417 = vrot.slane %v1415, 4
        %v1418 = vshll.u32 %v1327, 16
        %v1420 = vrot.slane %v1418, 5
        %v1421 = vor.u32 %v1417, %v1420
        %v1422 = vrot.slane %v1421, 4
        %v1424 = vshll.u32 %v1328, 16
        %v1426 = vrot.slane %v1424, 5
        %v1427 = vsel %vm355, %v1422, %v1426
        %v1428 = vshrl.u32 %v1328, 16
        %v1430 = vrot.slane %v1428, 4
        %v1431 = vor.u32 %v1430, %v1426
        %v1432 = vrot.slane %v1431, 4
        %v1434 = vshll.u32 %v1329, 16
        %v1436 = vrot.slane %v1434, 5
        %v1437 = vsel %vm355, %v1432, %v1436
        %v1439 = vshrl.u32 %v1330, 16
        %v1441 = vrot.slane %v1439, 4
        %v1442 = vshll.u32 %v1330, 16
        %v1444 = vrot.slane %v1442, 5
        %v1445 = vor.u32 %v1441, %v1444
        %v1446 = vrot.slane %v1445, 4
        %v1448 = vshll.u32 %v1331, 16
        %v1450 = vrot.slane %v1448, 5
        %v1451 = vsel %vm355, %v1446, %v1450
        %v1452 = vshrl.u32 %v1331, 16
        %v1454 = vrot.slane %v1452, 4
        %v1455 = vor.u32 %v1454, %v1450
        %v1456 = vrot.slane %v1455, 4
        %v1458 = vshll.u32 %v1332, 16
        %v1460 = vrot.slane %v1458, 5
        %v1461 = vsel %vm355, %v1456, %v1460
        %v1463 = vshrl.u32 %v1333, 16
        %v1465 = vrot.slane %v1463, 4
        %v1466 = vshll.u32 %v1333, 16
        %v1468 = vrot.slane %v1466, 5
        %v1469 = vor.u32 %v1465, %v1468
        %v1470 = vrot.slane %v1469, 4
        %v1472 = vshll.u32 %v1334, 16
        %v1474 = vrot.slane %v1472, 5
        %v1475 = vsel %vm355, %v1470, %v1474
        %v1476 = vshrl.u32 %v1334, 16
        %v1478 = vrot.slane %v1476, 4
        %v1479 = vor.u32 %v1478, %v1474
        %v1480 = vrot.slane %v1479, 4
        %v1482 = vshll.u32 %v1335, 16
        %v1484 = vrot.slane %v1482, 5
        %v1485 = vsel %vm355, %v1480, %v1484
        %v1487 = vshrl.u32 %v1336, 16
        %v1489 = vrot.slane %v1487, 4
        %v1490 = vshll.u32 %v1336, 16
        %v1492 = vrot.slane %v1490, 5
        %v1493 = vor.u32 %v1489, %v1492
        %v1494 = vrot.slane %v1493, 4
        %v1496 = vshll.u32 %v1337, 16
        %v1498 = vrot.slane %v1496, 5
        %v1499 = vsel %vm355, %v1494, %v1498
        %v1500 = vshrl.u32 %v1337, 16
        %v1502 = vrot.slane %v1500, 4
        %v1503 = vor.u32 %v1502, %v1498
        %v1504 = vrot.slane %v1503, 4
        %v1506 = vshll.u32 %v1338, 16
        %v1508 = vrot.slane %v1506, 5
        %v1509 = vsel %vm355, %v1504, %v1508
        %v1511 = vshrl.u32 %v1339, 16
        %v1513 = vrot.slane %v1511, 4
        %v1514 = vshll.u32 %v1339, 16
        %v1516 = vrot.slane %v1514, 5
        %v1517 = vor.u32 %v1513, %v1516
        %v1518 = vrot.slane %v1517, 4
        %v1520 = vshll.u32 %v1340, 16
        %v1522 = vrot.slane %v1520, 5
        %v1523 = vsel %vm355, %v1518, %v1522
        %v1524 = vshrl.u32 %v1340, 16
        %v1526 = vrot.slane %v1524, 4
        %v1527 = vor.u32 %v1526, %v1522
        %v1528 = vrot.slane %v1527, 4
        %v1530 = vshll.u32 %v1341, 16
        %v1532 = vrot.slane %v1530, 5
        %v1533 = vsel %vm355, %v1528, %v1532
        %s1534 = scalar_lea.vmem %s1, 8
        %v1535 = vld [vmem:[%s1534] sm:$0x3]
        %v1536 = vunpack.c.l.b16 %v1355
        %v1537 = vunpack.c.l.b16 %v1365
        %v1538 = vunpack.c.l.b16 %v1379
        %v1539 = vunpack.c.l.b16 %v1389
        %v1540 = vunpack.c.l.b16 %v1403
        %v1541 = vunpack.c.l.b16 %v1413
        %v1542 = vunpack.c.l.b16 %v1427
        %v1543 = vunpack.c.l.b16 %v1437
        %v1544 = vunpack.c.l.b16 %v1451
        %v1545 = vunpack.c.l.b16 %v1461
        %v1546 = vunpack.c.l.b16 %v1475
        %v1547 = vunpack.c.l.b16 %v1485
        %v1548 = vunpack.c.l.b16 %v1499
        %v1549 = vunpack.c.l.b16 %v1509
        %v1550 = vunpack.c.l.b16 %v1523
        %v1551 = vunpack.c.l.b16 %v1533
        %v1552 = vpack.c.b16 %v1537, %v1536
        %v1553 = vpack.c.b16 %v1539, %v1538
        %v1554 = vpack.c.b16 %v1541, %v1540
        %v1555 = vpack.c.b16 %v1543, %v1542
        %v1556 = vpack.c.b16 %v1545, %v1544
        %v1557 = vpack.c.b16 %v1547, %v1546
        %v1558 = vpack.c.b16 %v1549, %v1548
        %v1559 = vpack.c.b16 %v1551, %v1550
        %v1561 = vsel %vm574, %v1552, 0
        %v1564 = vsel %vm574, %v1553, 0
        %v1567 = vsel %vm574, %v1554, 0
        %v1570 = vsel %vm574, %v1555, 0
        %v1573 = vsel %vm574, %v1556, 0
        %v1576 = vsel %vm574, %v1557, 0
        %v1579 = vsel %vm574, %v1558, 0
        %v1582 = vsel %vm574, %v1559, 0
        %v1585 = vand.u32 %v1535, %v602
        %1587 = vmatprep.subr.bf16.mxu0 0
        %1588 = vmatpush1.bf16.msra.mxu0 0
        %1589 = vmatprep.subr.bf16.mxu0 0
        %1590 = vmatpush1.bf16.msra.mxu0 0
        %1591 = vmatprep.subr.bf16.mxu0 0
        %1592 = vmatpush1.bf16.msra.mxu0 0
        %1593 = vmatprep.subr.bf16.mxu0 0
        %1594 = vmatpush1.bf16.msra.mxu0 0
        %1595 = vmatprep.subr.bf16.mxu0 0
        %1596 = vmatpush1.bf16.msra.mxu0 0
        %1597 = vmatprep.subr.bf16.mxu0 0
        %1598 = vmatpush1.bf16.msra.mxu0 0
        %1599 = vmatprep.subr.bf16.mxu0 0
        %1600 = vmatpush1.bf16.msra.mxu0 0
        %1601 = vmatprep.subr.bf16.mxu0 0
        %1602 = vmatpush1.bf16.msra.mxu0 %v1585
        %1603 = vmatprep.subr.bf16.mxu0 0
        %1604 = vmatpush2.bf16.msra.mxu0 0
        %1605 = vmatprep.subr.bf16.mxu0 0
        %1606 = vmatpush2.bf16.msra.mxu0 0
        %1607 = vmatprep.subr.bf16.mxu0 0
        %1608 = vmatpush2.bf16.msra.mxu0 0
        %1609 = vmatprep.subr.bf16.mxu0 0
        %1610 = vmatpush2.bf16.msra.mxu0 0
        %1611 = vmatprep.subr.bf16.mxu0 0
        %1612 = vmatpush2.bf16.msra.mxu0 0
        %1613 = vmatprep.subr.bf16.mxu0 0
        %1614 = vmatpush2.bf16.msra.mxu0 0
        %1615 = vmatprep.subr.bf16.mxu0 0
        %1616 = vmatpush2.bf16.msra.mxu0 0
        %1617 = vmatprep.subr.bf16.mxu0 0
        %1618 = vmatpush2.bf16.msra.mxu0 0
        %1619 = vmatprep.mubr.bf16.mxu0 0
        %1620 = vmatmul.mubr.bf16.gmra.mxu0 %v1561
        %v1621 = vpop.f32.mrf.mxu0
        %v1622 = vadd.f32 0.0, %v1621
        %v1623 = vpop.f32.mrf.mxu0
        %v1624 = vpop.f32.mrf.mxu0
        %v1625 = vadd.f32 0.0, %v1624
        %v1626 = vpop.f32.mrf.mxu0
        %1627 = vmatprep.mubr.bf16.mxu0 0
        %1628 = vmatmul.mubr.bf16.gmra.mxu0 %v1564
        %v1629 = vpop.f32.mrf.mxu0
        %v1630 = vadd.f32 0.0, %v1629
        %v1631 = vpop.f32.mrf.mxu0
        %v1632 = vpop.f32.mrf.mxu0
        %v1633 = vadd.f32 0.0, %v1632
        %v1634 = vpop.f32.mrf.mxu0
        %1635 = vmatprep.mubr.bf16.mxu0 0
        %1636 = vmatmul.mubr.bf16.gmra.mxu0 %v1567
        %v1637 = vpop.f32.mrf.mxu0
        %v1638 = vadd.f32 0.0, %v1637
        %v1639 = vpop.f32.mrf.mxu0
        %v1640 = vpop.f32.mrf.mxu0
        %v1641 = vadd.f32 0.0, %v1640
        %v1642 = vpop.f32.mrf.mxu0
        %1643 = vmatprep.mubr.bf16.mxu0 0
        %1644 = vmatmul.mubr.bf16.gmra.mxu0 %v1570
        %v1645 = vpop.f32.mrf.mxu0
        %v1646 = vadd.f32 0.0, %v1645
        %v1647 = vpop.f32.mrf.mxu0
        %v1648 = vpop.f32.mrf.mxu0
        %v1649 = vadd.f32 0.0, %v1648
        %v1650 = vpop.f32.mrf.mxu0
        %1651 = vmatprep.mubr.bf16.mxu0 0
        %1652 = vmatmul.mubr.bf16.gmra.mxu0 %v1573
        %v1653 = vpop.f32.mrf.mxu0
        %v1654 = vadd.f32 0.0, %v1653
        %v1655 = vpop.f32.mrf.mxu0
        %v1656 = vpop.f32.mrf.mxu0
        %v1657 = vadd.f32 0.0, %v1656
        %v1658 = vpop.f32.mrf.mxu0
        %1659 = vmatprep.mubr.bf16.mxu0 0
        %1660 = vmatmul.mubr.bf16.gmra.mxu0 %v1576
        %v1661 = vpop.f32.mrf.mxu0
        %v1662 = vadd.f32 0.0, %v1661
        %v1663 = vpop.f32.mrf.mxu0
        %v1664 = vpop.f32.mrf.mxu0
        %v1665 = vadd.f32 0.0, %v1664
        %v1666 = vpop.f32.mrf.mxu0
        %1667 = vmatprep.mubr.bf16.mxu0 0
        %1668 = vmatmul.mubr.bf16.gmra.mxu0 %v1579
        %v1669 = vpop.f32.mrf.mxu0
        %v1670 = vadd.f32 0.0, %v1669
        %v1671 = vpop.f32.mrf.mxu0
        %v1672 = vpop.f32.mrf.mxu0
        %v1673 = vadd.f32 0.0, %v1672
        %v1674 = vpop.f32.mrf.mxu0
        %1675 = vmatprep.mubr.bf16.mxu0 0
        %1676 = vmatmul.mubr.bf16.gmra.mxu0 %v1582
        %v1677 = vpop.f32.mrf.mxu0
        %v1678 = vadd.f32 0.0, %v1677
        %v1679 = vpop.f32.mrf.mxu0
        %v1680 = vpop.f32.mrf.mxu0
        %v1681 = vadd.f32 0.0, %v1680
        %v1682 = vpop.f32.mrf.mxu0
        %1683 = vdwg.mxu0
        %v1684 = vadd.f32 %v1302, %v1622
        %v1685 = vadd.f32 %v1303, %v1625
        %v1686 = vadd.f32 %v1304, %v1630
        %v1687 = vadd.f32 %v1305, %v1633
        %v1688 = vadd.f32 %v1306, %v1638
        %v1689 = vadd.f32 %v1307, %v1641
        %v1690 = vadd.f32 %v1308, %v1646
        %v1691 = vadd.f32 %v1309, %v1649
        %v1692 = vadd.f32 %v1310, %v1654
        %v1693 = vadd.f32 %v1311, %v1657
        %v1694 = vadd.f32 %v1312, %v1662
        %v1695 = vadd.f32 %v1313, %v1665
        %v1696 = vadd.f32 %v1314, %v1670
        %v1697 = vadd.f32 %v1315, %v1673
        %v1698 = vadd.f32 %v1316, %v1678
        %v1699 = vadd.f32 %v1317, %v1681
        %v1700 = vld [vmem:[%s1119] sm:$0xe]
        %v1701 = vld [vmem:[%s1119 + $0xc] sm:$0xe]
        %v1702 = vld [vmem:[%s1119 + $0x18] sm:$0xe]
        %v1703 = vld [vmem:[%s1119 + $0x24] sm:$0xe]
        %v1704 = vld [vmem:[%s1119 + $0x30] sm:$0xe]
        %v1705 = vld [vmem:[%s1119 + $0x3c] sm:$0xe]
        %v1706 = vld [vmem:[%s1119 + $0x48] sm:$0xe]
        %v1707 = vld [vmem:[%s1119 + $0x54] sm:$0xe]
        %v1732 = vrot.slane %v1700, 5
        %v1733 = vrot.slane %v1732, 4
        %v1734 = vrot.slane %v1319, 5
        %v1735 = vsel %vm893, %v1733, %v1734
        %v1736 = vrot.slane %v1734, 4
        %v1737 = vrot.slane %v1320, 5
        %v1738 = vsel %vm893, %v1736, %v1737
        %v1739 = vrot.slane %v1701, 5
        %v1740 = vrot.slane %v1739, 4
        %v1741 = vrot.slane %v1322, 5
        %v1742 = vsel %vm893, %v1740, %v1741
        %v1743 = vrot.slane %v1741, 4
        %v1744 = vrot.slane %v1323, 5
        %v1745 = vsel %vm893, %v1743, %v1744
        %v1746 = vrot.slane %v1702, 5
        %v1747 = vrot.slane %v1746, 4
        %v1748 = vrot.slane %v1325, 5
        %v1749 = vsel %vm893, %v1747, %v1748
        %v1750 = vrot.slane %v1748, 4
        %v1751 = vrot.slane %v1326, 5
        %v1752 = vsel %vm893, %v1750, %v1751
        %v1753 = vrot.slane %v1703, 5
        %v1754 = vrot.slane %v1753, 4
        %v1755 = vrot.slane %v1328, 5
        %v1756 = vsel %vm893, %v1754, %v1755
        %v1757 = vrot.slane %v1755, 4
        %v1758 = vrot.slane %v1329, 5
        %v1759 = vsel %vm893, %v1757, %v1758
        %v1760 = vrot.slane %v1704, 5
        %v1761 = vrot.slane %v1760, 4
        %v1762 = vrot.slane %v1331, 5
        %v1763 = vsel %vm893, %v1761, %v1762
        %v1764 = vrot.slane %v1762, 4
        %v1765 = vrot.slane %v1332, 5
        %v1766 = vsel %vm893, %v1764, %v1765
        %v1767 = vrot.slane %v1705, 5
        %v1768 = vrot.slane %v1767, 4
        %v1769 = vrot.slane %v1334, 5
        %v1770 = vsel %vm893, %v1768, %v1769
        %v1771 = vrot.slane %v1769, 4
        %v1772 = vrot.slane %v1335, 5
        %v1773 = vsel %vm893, %v1771, %v1772
        %v1774 = vrot.slane %v1706, 5
        %v1775 = vrot.slane %v1774, 4
        %v1776 = vrot.slane %v1337, 5
        %v1777 = vsel %vm893, %v1775, %v1776
        %v1778 = vrot.slane %v1776, 4
        %v1779 = vrot.slane %v1338, 5
        %v1780 = vsel %vm893, %v1778, %v1779
        %v1781 = vrot.slane %v1707, 5
        %v1782 = vrot.slane %v1781, 4
        %v1783 = vrot.slane %v1340, 5
        %v1784 = vsel %vm893, %v1782, %v1783
        %v1785 = vrot.slane %v1783, 4
        %v1786 = vrot.slane %v1341, 5
        %v1787 = vsel %vm893, %v1785, %v1786
        %s1788 = scalar_lea.vmem %s1, 10
        %v1789 = vld [vmem:[%s1788] sm:$0x3]
        %v1790 = vunpack.c.l.b16 %v1735
        %v1791 = vunpack.c.l.b16 %v1738
        %v1792 = vunpack.c.l.b16 %v1742
        %v1793 = vunpack.c.l.b16 %v1745
        %v1794 = vunpack.c.l.b16 %v1749
        %v1795 = vunpack.c.l.b16 %v1752
        %v1796 = vunpack.c.l.b16 %v1756
        %v1797 = vunpack.c.l.b16 %v1759
        %v1798 = vunpack.c.l.b16 %v1763
        %v1799 = vunpack.c.l.b16 %v1766
        %v1800 = vunpack.c.l.b16 %v1770
        %v1801 = vunpack.c.l.b16 %v1773
        %v1802 = vunpack.c.l.b16 %v1777
        %v1803 = vunpack.c.l.b16 %v1780
        %v1804 = vunpack.c.l.b16 %v1784
        %v1805 = vunpack.c.l.b16 %v1787
        %v1806 = vpack.c.b16 %v1791, %v1790
        %v1807 = vpack.c.b16 %v1793, %v1792
        %v1808 = vpack.c.b16 %v1795, %v1794
        %v1809 = vpack.c.b16 %v1797, %v1796
        %v1810 = vpack.c.b16 %v1799, %v1798
        %v1811 = vpack.c.b16 %v1801, %v1800
        %v1812 = vpack.c.b16 %v1803, %v1802
        %v1813 = vpack.c.b16 %v1805, %v1804
        %v1815 = vsel %vm574, %v1806, 0
        %v1818 = vsel %vm574, %v1807, 0
        %v1821 = vsel %vm574, %v1808, 0
        %v1824 = vsel %vm574, %v1809, 0
        %v1827 = vsel %vm574, %v1810, 0
        %v1830 = vsel %vm574, %v1811, 0
        %v1833 = vsel %vm574, %v1812, 0
        %v1836 = vsel %vm574, %v1813, 0
        %v1839 = vand.u32 %v1789, %v602
        %1841 = vmatprep.subr.bf16.mxu0 0
        %1842 = vmatpush1.bf16.msra.mxu0 0
        %1843 = vmatprep.subr.bf16.mxu0 0
        %1844 = vmatpush1.bf16.msra.mxu0 0
        %1845 = vmatprep.subr.bf16.mxu0 0
        %1846 = vmatpush1.bf16.msra.mxu0 0
        %1847 = vmatprep.subr.bf16.mxu0 0
        %1848 = vmatpush1.bf16.msra.mxu0 0
        %1849 = vmatprep.subr.bf16.mxu0 0
        %1850 = vmatpush1.bf16.msra.mxu0 0
        %1851 = vmatprep.subr.bf16.mxu0 0
        %1852 = vmatpush1.bf16.msra.mxu0 0
        %1853 = vmatprep.subr.bf16.mxu0 0
        %1854 = vmatpush1.bf16.msra.mxu0 0
        %1855 = vmatprep.subr.bf16.mxu0 0
        %1856 = vmatpush1.bf16.msra.mxu0 %v1839
        %1857 = vmatprep.subr.bf16.mxu0 0
        %1858 = vmatpush2.bf16.msra.mxu0 0
        %1859 = vmatprep.subr.bf16.mxu0 0
        %1860 = vmatpush2.bf16.msra.mxu0 0
        %1861 = vmatprep.subr.bf16.mxu0 0
        %1862 = vmatpush2.bf16.msra.mxu0 0
        %1863 = vmatprep.subr.bf16.mxu0 0
        %1864 = vmatpush2.bf16.msra.mxu0 0
        %1865 = vmatprep.subr.bf16.mxu0 0
        %1866 = vmatpush2.bf16.msra.mxu0 0
        %1867 = vmatprep.subr.bf16.mxu0 0
        %1868 = vmatpush2.bf16.msra.mxu0 0
        %1869 = vmatprep.subr.bf16.mxu0 0
        %1870 = vmatpush2.bf16.msra.mxu0 0
        %1871 = vmatprep.subr.bf16.mxu0 0
        %1872 = vmatpush2.bf16.msra.mxu0 0
        %1873 = vmatprep.mubr.bf16.mxu0 0
        %1874 = vmatmul.mubr.bf16.gmra.mxu0 %v1815
        %v1875 = vpop.f32.mrf.mxu0
        %v1876 = vadd.f32 0.0, %v1875
        %v1877 = vpop.f32.mrf.mxu0
        %v1878 = vpop.f32.mrf.mxu0
        %v1879 = vadd.f32 0.0, %v1878
        %v1880 = vpop.f32.mrf.mxu0
        %1881 = vmatprep.mubr.bf16.mxu0 0
        %1882 = vmatmul.mubr.bf16.gmra.mxu0 %v1818
        %v1883 = vpop.f32.mrf.mxu0
        %v1884 = vadd.f32 0.0, %v1883
        %v1885 = vpop.f32.mrf.mxu0
        %v1886 = vpop.f32.mrf.mxu0
        %v1887 = vadd.f32 0.0, %v1886
        %v1888 = vpop.f32.mrf.mxu0
        %1889 = vmatprep.mubr.bf16.mxu0 0
        %1890 = vmatmul.mubr.bf16.gmra.mxu0 %v1821
        %v1891 = vpop.f32.mrf.mxu0
        %v1892 = vadd.f32 0.0, %v1891
        %v1893 = vpop.f32.mrf.mxu0
        %v1894 = vpop.f32.mrf.mxu0
        %v1895 = vadd.f32 0.0, %v1894
        %v1896 = vpop.f32.mrf.mxu0
        %1897 = vmatprep.mubr.bf16.mxu0 0
        %1898 = vmatmul.mubr.bf16.gmra.mxu0 %v1824
        %v1899 = vpop.f32.mrf.mxu0
        %v1900 = vadd.f32 0.0, %v1899
        %v1901 = vpop.f32.mrf.mxu0
        %v1902 = vpop.f32.mrf.mxu0
        %v1903 = vadd.f32 0.0, %v1902
        %v1904 = vpop.f32.mrf.mxu0
        %1905 = vmatprep.mubr.bf16.mxu0 0
        %1906 = vmatmul.mubr.bf16.gmra.mxu0 %v1827
        %v1907 = vpop.f32.mrf.mxu0
        %v1908 = vadd.f32 0.0, %v1907
        %v1909 = vpop.f32.mrf.mxu0
        %v1910 = vpop.f32.mrf.mxu0
        %v1911 = vadd.f32 0.0, %v1910
        %v1912 = vpop.f32.mrf.mxu0
        %1913 = vmatprep.mubr.bf16.mxu0 0
        %1914 = vmatmul.mubr.bf16.gmra.mxu0 %v1830
        %v1915 = vpop.f32.mrf.mxu0
        %v1916 = vadd.f32 0.0, %v1915
        %v1917 = vpop.f32.mrf.mxu0
        %v1918 = vpop.f32.mrf.mxu0
        %v1919 = vadd.f32 0.0, %v1918
        %v1920 = vpop.f32.mrf.mxu0
        %1921 = vmatprep.mubr.bf16.mxu0 0
        %1922 = vmatmul.mubr.bf16.gmra.mxu0 %v1833
        %v1923 = vpop.f32.mrf.mxu0
        %v1924 = vadd.f32 0.0, %v1923
        %v1925 = vpop.f32.mrf.mxu0
        %v1926 = vpop.f32.mrf.mxu0
        %v1927 = vadd.f32 0.0, %v1926
        %v1928 = vpop.f32.mrf.mxu0
        %1929 = vmatprep.mubr.bf16.mxu0 0
        %1930 = vmatmul.mubr.bf16.gmra.mxu0 %v1836
        %v1931 = vpop.f32.mrf.mxu0
        %v1932 = vadd.f32 0.0, %v1931
        %v1933 = vpop.f32.mrf.mxu0
        %v1934 = vpop.f32.mrf.mxu0
        %v1935 = vadd.f32 0.0, %v1934
        %v1936 = vpop.f32.mrf.mxu0
        %1937 = vdwg.mxu0
        %v1938 = vadd.f32 %v1684, %v1876
        %v1939 = vadd.f32 %v1685, %v1879
        %v1940 = vadd.f32 %v1686, %v1884
        %v1941 = vadd.f32 %v1687, %v1887
        %v1942 = vadd.f32 %v1688, %v1892
        %v1943 = vadd.f32 %v1689, %v1895
        %v1944 = vadd.f32 %v1690, %v1900
        %v1945 = vadd.f32 %v1691, %v1903
        %v1946 = vadd.f32 %v1692, %v1908
        %v1947 = vadd.f32 %v1693, %v1911
        %v1948 = vadd.f32 %v1694, %v1916
        %v1949 = vadd.f32 %v1695, %v1919
        %v1950 = vadd.f32 %v1696, %v1924
        %v1951 = vadd.f32 %v1697, %v1927
        %v1952 = vadd.f32 %v1698, %v1932
        %v1953 = vadd.f32 %v1699, %v1935
        %s1954 = sadd.s32 %s324, 2
        %s1955 = smul.u32 %s1954, 3
        %s1956 = smul.addr %s1955, 4
        %s1957 = scalar_lea.vmem %s322, %s1956
        %v1958 = vld [vmem:[%s1957] sm:$0xf]
        %v1959 = vld [vmem:[%s1957 + $0x4] sm:$0xf]
        %v1960 = vld [vmem:[%s1957 + $0xc] sm:$0xf]
        %v1961 = vld [vmem:[%s1957 + $0x10] sm:$0xf]
        %v1962 = vld [vmem:[%s1957 + $0x18] sm:$0xf]
        %v1963 = vld [vmem:[%s1957 + $0x1c] sm:$0xf]
        %v1964 = vld [vmem:[%s1957 + $0x24] sm:$0xf]
        %v1965 = vld [vmem:[%s1957 + $0x28] sm:$0xf]
        %v1966 = vld [vmem:[%s1957 + $0x30] sm:$0xf]
        %v1967 = vld [vmem:[%s1957 + $0x34] sm:$0xf]
        %v1968 = vld [vmem:[%s1957 + $0x3c] sm:$0xf]
        %v1969 = vld [vmem:[%s1957 + $0x40] sm:$0xf]
        %v1970 = vld [vmem:[%s1957 + $0x48] sm:$0xf]
        %v1971 = vld [vmem:[%s1957 + $0x4c] sm:$0xf]
        %v1972 = vld [vmem:[%s1957 + $0x54] sm:$0xf]
        %v1973 = vld [vmem:[%s1957 + $0x58] sm:$0xf]
        %s1974 = scalar_lea.vmem %s1, 12
        %v1975 = vld [vmem:[%s1974] sm:$0x3]
        %v1992 = vunpack.c.l.b16 %v1958
        %v1993 = vunpack.c.l.b16 %v1959
        %v1994 = vunpack.c.l.b16 %v1960
        %v1995 = vunpack.c.l.b16 %v1961
        %v1996 = vunpack.c.l.b16 %v1962
        %v1997 = vunpack.c.l.b16 %v1963
        %v1998 = vunpack.c.l.b16 %v1964
        %v1999 = vunpack.c.l.b16 %v1965
        %v2000 = vunpack.c.l.b16 %v1966
        %v2001 = vunpack.c.l.b16 %v1967
        %v2002 = vunpack.c.l.b16 %v1968
        %v2003 = vunpack.c.l.b16 %v1969
        %v2004 = vunpack.c.l.b16 %v1970
        %v2005 = vunpack.c.l.b16 %v1971
        %v2006 = vunpack.c.l.b16 %v1972
        %v2007 = vunpack.c.l.b16 %v1973
        %v2008 = vpack.c.b16 %v1993, %v1992
        %v2009 = vpack.c.b16 %v1995, %v1994
        %v2010 = vpack.c.b16 %v1997, %v1996
        %v2011 = vpack.c.b16 %v1999, %v1998
        %v2012 = vpack.c.b16 %v2001, %v2000
        %v2013 = vpack.c.b16 %v2003, %v2002
        %v2014 = vpack.c.b16 %v2005, %v2004
        %v2015 = vpack.c.b16 %v2007, %v2006
        %v2017 = vsel %vm574, %v2008, 0
        %v2020 = vsel %vm574, %v2009, 0
        %v2023 = vsel %vm574, %v2010, 0
        %v2026 = vsel %vm574, %v2011, 0
        %v2029 = vsel %vm574, %v2012, 0
        %v2032 = vsel %vm574, %v2013, 0
        %v2035 = vsel %vm574, %v2014, 0
        %v2038 = vsel %vm574, %v2015, 0
        %v2041 = vand.u32 %v1975, %v602
        %2043 = vmatprep.subr.bf16.mxu0 0
        %2044 = vmatpush1.bf16.msra.mxu0 0
        %2045 = vmatprep.subr.bf16.mxu0 0
        %2046 = vmatpush1.bf16.msra.mxu0 0
        %2047 = vmatprep.subr.bf16.mxu0 0
        %2048 = vmatpush1.bf16.msra.mxu0 0
        %2049 = vmatprep.subr.bf16.mxu0 0
        %2050 = vmatpush1.bf16.msra.mxu0 0
        %2051 = vmatprep.subr.bf16.mxu0 0
        %2052 = vmatpush1.bf16.msra.mxu0 0
        %2053 = vmatprep.subr.bf16.mxu0 0
        %2054 = vmatpush1.bf16.msra.mxu0 0
        %2055 = vmatprep.subr.bf16.mxu0 0
        %2056 = vmatpush1.bf16.msra.mxu0 0
        %2057 = vmatprep.subr.bf16.mxu0 0
        %2058 = vmatpush1.bf16.msra.mxu0 %v2041
        %2059 = vmatprep.subr.bf16.mxu0 0
        %2060 = vmatpush2.bf16.msra.mxu0 0
        %2061 = vmatprep.subr.bf16.mxu0 0
        %2062 = vmatpush2.bf16.msra.mxu0 0
        %2063 = vmatprep.subr.bf16.mxu0 0
        %2064 = vmatpush2.bf16.msra.mxu0 0
        %2065 = vmatprep.subr.bf16.mxu0 0
        %2066 = vmatpush2.bf16.msra.mxu0 0
        %2067 = vmatprep.subr.bf16.mxu0 0
        %2068 = vmatpush2.bf16.msra.mxu0 0
        %2069 = vmatprep.subr.bf16.mxu0 0
        %2070 = vmatpush2.bf16.msra.mxu0 0
        %2071 = vmatprep.subr.bf16.mxu0 0
        %2072 = vmatpush2.bf16.msra.mxu0 0
        %2073 = vmatprep.subr.bf16.mxu0 0
        %2074 = vmatpush2.bf16.msra.mxu0 0
        %2075 = vmatprep.mubr.bf16.mxu0 0
        %2076 = vmatmul.mubr.bf16.gmra.mxu0 %v2017
        %v2077 = vpop.f32.mrf.mxu0
        %v2078 = vadd.f32 0.0, %v2077
        %v2079 = vpop.f32.mrf.mxu0
        %v2080 = vpop.f32.mrf.mxu0
        %v2081 = vadd.f32 0.0, %v2080
        %v2082 = vpop.f32.mrf.mxu0
        %2083 = vmatprep.mubr.bf16.mxu0 0
        %2084 = vmatmul.mubr.bf16.gmra.mxu0 %v2020
        %v2085 = vpop.f32.mrf.mxu0
        %v2086 = vadd.f32 0.0, %v2085
        %v2087 = vpop.f32.mrf.mxu0
        %v2088 = vpop.f32.mrf.mxu0
        %v2089 = vadd.f32 0.0, %v2088
        %v2090 = vpop.f32.mrf.mxu0
        %2091 = vmatprep.mubr.bf16.mxu0 0
        %2092 = vmatmul.mubr.bf16.gmra.mxu0 %v2023
        %v2093 = vpop.f32.mrf.mxu0
        %v2094 = vadd.f32 0.0, %v2093
        %v2095 = vpop.f32.mrf.mxu0
        %v2096 = vpop.f32.mrf.mxu0
        %v2097 = vadd.f32 0.0, %v2096
        %v2098 = vpop.f32.mrf.mxu0
        %2099 = vmatprep.mubr.bf16.mxu0 0
        %2100 = vmatmul.mubr.bf16.gmra.mxu0 %v2026
        %v2101 = vpop.f32.mrf.mxu0
        %v2102 = vadd.f32 0.0, %v2101
        %v2103 = vpop.f32.mrf.mxu0
        %v2104 = vpop.f32.mrf.mxu0
        %v2105 = vadd.f32 0.0, %v2104
        %v2106 = vpop.f32.mrf.mxu0
        %2107 = vmatprep.mubr.bf16.mxu0 0
        %2108 = vmatmul.mubr.bf16.gmra.mxu0 %v2029
        %v2109 = vpop.f32.mrf.mxu0
        %v2110 = vadd.f32 0.0, %v2109
        %v2111 = vpop.f32.mrf.mxu0
        %v2112 = vpop.f32.mrf.mxu0
        %v2113 = vadd.f32 0.0, %v2112
        %v2114 = vpop.f32.mrf.mxu0
        %2115 = vmatprep.mubr.bf16.mxu0 0
        %2116 = vmatmul.mubr.bf16.gmra.mxu0 %v2032
        %v2117 = vpop.f32.mrf.mxu0
        %v2118 = vadd.f32 0.0, %v2117
        %v2119 = vpop.f32.mrf.mxu0
        %v2120 = vpop.f32.mrf.mxu0
        %v2121 = vadd.f32 0.0, %v2120
        %v2122 = vpop.f32.mrf.mxu0
        %2123 = vmatprep.mubr.bf16.mxu0 0
        %2124 = vmatmul.mubr.bf16.gmra.mxu0 %v2035
        %v2125 = vpop.f32.mrf.mxu0
        %v2126 = vadd.f32 0.0, %v2125
        %v2127 = vpop.f32.mrf.mxu0
        %v2128 = vpop.f32.mrf.mxu0
        %v2129 = vadd.f32 0.0, %v2128
        %v2130 = vpop.f32.mrf.mxu0
        %2131 = vmatprep.mubr.bf16.mxu0 0
        %2132 = vmatmul.mubr.bf16.gmra.mxu0 %v2038
        %v2133 = vpop.f32.mrf.mxu0
        %v2134 = vadd.f32 0.0, %v2133
        %v2135 = vpop.f32.mrf.mxu0
        %v2136 = vpop.f32.mrf.mxu0
        %v2137 = vadd.f32 0.0, %v2136
        %v2138 = vpop.f32.mrf.mxu0
        %2139 = vdwg.mxu0
        %v2140 = vadd.f32 %v1938, %v2078
        %v2141 = vadd.f32 %v1939, %v2081
        %v2142 = vadd.f32 %v1940, %v2086
        %v2143 = vadd.f32 %v1941, %v2089
        %v2144 = vadd.f32 %v1942, %v2094
        %v2145 = vadd.f32 %v1943, %v2097
        %v2146 = vadd.f32 %v1944, %v2102
        %v2147 = vadd.f32 %v1945, %v2105
        %v2148 = vadd.f32 %v1946, %v2110
        %v2149 = vadd.f32 %v1947, %v2113
        %v2150 = vadd.f32 %v1948, %v2118
        %v2151 = vadd.f32 %v1949, %v2121
        %v2152 = vadd.f32 %v1950, %v2126
        %v2153 = vadd.f32 %v1951, %v2129
        %v2154 = vadd.f32 %v1952, %v2134
        %v2155 = vadd.f32 %v1953, %v2137
        %v2156 = vld [vmem:[%s1957] sm:$0xf]
        %v2157 = vld [vmem:[%s1957 + $0x4] sm:$0xf]
        %v2158 = vld [vmem:[%s1957 + $0x8] sm:$0x1]
        %v2159 = vld [vmem:[%s1957 + $0xc] sm:$0xf]
        %v2160 = vld [vmem:[%s1957 + $0x10] sm:$0xf]
        %v2161 = vld [vmem:[%s1957 + $0x14] sm:$0x1]
        %v2162 = vld [vmem:[%s1957 + $0x18] sm:$0xf]
        %v2163 = vld [vmem:[%s1957 + $0x1c] sm:$0xf]
        %v2164 = vld [vmem:[%s1957 + $0x20] sm:$0x1]
        %v2165 = vld [vmem:[%s1957 + $0x24] sm:$0xf]
        %v2166 = vld [vmem:[%s1957 + $0x28] sm:$0xf]
        %v2167 = vld [vmem:[%s1957 + $0x2c] sm:$0x1]
        %v2168 = vld [vmem:[%s1957 + $0x30] sm:$0xf]
        %v2169 = vld [vmem:[%s1957 + $0x34] sm:$0xf]
        %v2170 = vld [vmem:[%s1957 + $0x38] sm:$0x1]
        %v2171 = vld [vmem:[%s1957 + $0x3c] sm:$0xf]
        %v2172 = vld [vmem:[%s1957 + $0x40] sm:$0xf]
        %v2173 = vld [vmem:[%s1957 + $0x44] sm:$0x1]
        %v2174 = vld [vmem:[%s1957 + $0x48] sm:$0xf]
        %v2175 = vld [vmem:[%s1957 + $0x4c] sm:$0xf]
        %v2176 = vld [vmem:[%s1957 + $0x50] sm:$0x1]
        %v2177 = vld [vmem:[%s1957 + $0x54] sm:$0xf]
        %v2178 = vld [vmem:[%s1957 + $0x58] sm:$0xf]
        %v2179 = vld [vmem:[%s1957 + $0x5c] sm:$0x1]
        %v2181 = vshrl.u32 %v2156, 16
        %v2183 = vrot.slane %v2181, 4
        %v2184 = vshll.u32 %v2156, 16
        %v2186 = vrot.slane %v2184, 5
        %v2187 = vor.u32 %v2183, %v2186
        %v2188 = vrot.slane %v2187, 4
        %v2190 = vshll.u32 %v2157, 16
        %v2192 = vrot.slane %v2190, 5
        %v2193 = vsel %vm355, %v2188, %v2192
        %v2194 = vshrl.u32 %v2157, 16
        %v2196 = vrot.slane %v2194, 4
        %v2197 = vor.u32 %v2196, %v2192
        %v2198 = vrot.slane %v2197, 4
        %v2200 = vshll.u32 %v2158, 16
        %v2202 = vrot.slane %v2200, 5
        %v2203 = vsel %vm355, %v2198, %v2202
        %v2205 = vshrl.u32 %v2159, 16
        %v2207 = vrot.slane %v2205, 4
        %v2208 = vshll.u32 %v2159, 16
        %v2210 = vrot.slane %v2208, 5
        %v2211 = vor.u32 %v2207, %v2210
        %v2212 = vrot.slane %v2211, 4
        %v2214 = vshll.u32 %v2160, 16
        %v2216 = vrot.slane %v2214, 5
        %v2217 = vsel %vm355, %v2212, %v2216
        %v2218 = vshrl.u32 %v2160, 16
        %v2220 = vrot.slane %v2218, 4
        %v2221 = vor.u32 %v2220, %v2216
        %v2222 = vrot.slane %v2221, 4
        %v2224 = vshll.u32 %v2161, 16
        %v2226 = vrot.slane %v2224, 5
        %v2227 = vsel %vm355, %v2222, %v2226
        %v2229 = vshrl.u32 %v2162, 16
        %v2231 = vrot.slane %v2229, 4
        %v2232 = vshll.u32 %v2162, 16
        %v2234 = vrot.slane %v2232, 5
        %v2235 = vor.u32 %v2231, %v2234
        %v2236 = vrot.slane %v2235, 4
        %v2238 = vshll.u32 %v2163, 16
        %v2240 = vrot.slane %v2238, 5
        %v2241 = vsel %vm355, %v2236, %v2240
        %v2242 = vshrl.u32 %v2163, 16
        %v2244 = vrot.slane %v2242, 4
        %v2245 = vor.u32 %v2244, %v2240
        %v2246 = vrot.slane %v2245, 4
        %v2248 = vshll.u32 %v2164, 16
        %v2250 = vrot.slane %v2248, 5
        %v2251 = vsel %vm355, %v2246, %v2250
        %v2253 = vshrl.u32 %v2165, 16
        %v2255 = vrot.slane %v2253, 4
        %v2256 = vshll.u32 %v2165, 16
        %v2258 = vrot.slane %v2256, 5
        %v2259 = vor.u32 %v2255, %v2258
        %v2260 = vrot.slane %v2259, 4
        %v2262 = vshll.u32 %v2166, 16
        %v2264 = vrot.slane %v2262, 5
        %v2265 = vsel %vm355, %v2260, %v2264
        %v2266 = vshrl.u32 %v2166, 16
        %v2268 = vrot.slane %v2266, 4
        %v2269 = vor.u32 %v2268, %v2264
        %v2270 = vrot.slane %v2269, 4
        %v2272 = vshll.u32 %v2167, 16
        %v2274 = vrot.slane %v2272, 5
        %v2275 = vsel %vm355, %v2270, %v2274
        %v2277 = vshrl.u32 %v2168, 16
        %v2279 = vrot.slane %v2277, 4
        %v2280 = vshll.u32 %v2168, 16
        %v2282 = vrot.slane %v2280, 5
        %v2283 = vor.u32 %v2279, %v2282
        %v2284 = vrot.slane %v2283, 4
        %v2286 = vshll.u32 %v2169, 16
        %v2288 = vrot.slane %v2286, 5
        %v2289 = vsel %vm355, %v2284, %v2288
        %v2290 = vshrl.u32 %v2169, 16
        %v2292 = vrot.slane %v2290, 4
        %v2293 = vor.u32 %v2292, %v2288
        %v2294 = vrot.slane %v2293, 4
        %v2296 = vshll.u32 %v2170, 16
        %v2298 = vrot.slane %v2296, 5
        %v2299 = vsel %vm355, %v2294, %v2298
        %v2301 = vshrl.u32 %v2171, 16
        %v2303 = vrot.slane %v2301, 4
        %v2304 = vshll.u32 %v2171, 16
        %v2306 = vrot.slane %v2304, 5
        %v2307 = vor.u32 %v2303, %v2306
        %v2308 = vrot.slane %v2307, 4
        %v2310 = vshll.u32 %v2172, 16
        %v2312 = vrot.slane %v2310, 5
        %v2313 = vsel %vm355, %v2308, %v2312
        %v2314 = vshrl.u32 %v2172, 16
        %v2316 = vrot.slane %v2314, 4
        %v2317 = vor.u32 %v2316, %v2312
        %v2318 = vrot.slane %v2317, 4
        %v2320 = vshll.u32 %v2173, 16
        %v2322 = vrot.slane %v2320, 5
        %v2323 = vsel %vm355, %v2318, %v2322
        %v2325 = vshrl.u32 %v2174, 16
        %v2327 = vrot.slane %v2325, 4
        %v2328 = vshll.u32 %v2174, 16
        %v2330 = vrot.slane %v2328, 5
        %v2331 = vor.u32 %v2327, %v2330
        %v2332 = vrot.slane %v2331, 4
        %v2334 = vshll.u32 %v2175, 16
        %v2336 = vrot.slane %v2334, 5
        %v2337 = vsel %vm355, %v2332, %v2336
        %v2338 = vshrl.u32 %v2175, 16
        %v2340 = vrot.slane %v2338, 4
        %v2341 = vor.u32 %v2340, %v2336
        %v2342 = vrot.slane %v2341, 4
        %v2344 = vshll.u32 %v2176, 16
        %v2346 = vrot.slane %v2344, 5
        %v2347 = vsel %vm355, %v2342, %v2346
        %v2349 = vshrl.u32 %v2177, 16
        %v2351 = vrot.slane %v2349, 4
        %v2352 = vshll.u32 %v2177, 16
        %v2354 = vrot.slane %v2352, 5
        %v2355 = vor.u32 %v2351, %v2354
        %v2356 = vrot.slane %v2355, 4
        %v2358 = vshll.u32 %v2178, 16
        %v2360 = vrot.slane %v2358, 5
        %v2361 = vsel %vm355, %v2356, %v2360
        %v2362 = vshrl.u32 %v2178, 16
        %v2364 = vrot.slane %v2362, 4
        %v2365 = vor.u32 %v2364, %v2360
        %v2366 = vrot.slane %v2365, 4
        %v2368 = vshll.u32 %v2179, 16
        %v2370 = vrot.slane %v2368, 5
        %v2371 = vsel %vm355, %v2366, %v2370
        %s2372 = scalar_lea.vmem %s1, 14
        %v2373 = vld [vmem:[%s2372] sm:$0x3]
        %v2374 = vunpack.c.l.b16 %v2193
        %v2375 = vunpack.c.l.b16 %v2203
        %v2376 = vunpack.c.l.b16 %v2217
        %v2377 = vunpack.c.l.b16 %v2227
        %v2378 = vunpack.c.l.b16 %v2241
        %v2379 = vunpack.c.l.b16 %v2251
        %v2380 = vunpack.c.l.b16 %v2265
        %v2381 = vunpack.c.l.b16 %v2275
        %v2382 = vunpack.c.l.b16 %v2289
        %v2383 = vunpack.c.l.b16 %v2299
        %v2384 = vunpack.c.l.b16 %v2313
        %v2385 = vunpack.c.l.b16 %v2323
        %v2386 = vunpack.c.l.b16 %v2337
        %v2387 = vunpack.c.l.b16 %v2347
        %v2388 = vunpack.c.l.b16 %v2361
        %v2389 = vunpack.c.l.b16 %v2371
        %v2390 = vpack.c.b16 %v2375, %v2374
        %v2391 = vpack.c.b16 %v2377, %v2376
        %v2392 = vpack.c.b16 %v2379, %v2378
        %v2393 = vpack.c.b16 %v2381, %v2380
        %v2394 = vpack.c.b16 %v2383, %v2382
        %v2395 = vpack.c.b16 %v2385, %v2384
        %v2396 = vpack.c.b16 %v2387, %v2386
        %v2397 = vpack.c.b16 %v2389, %v2388
        %v2399 = vsel %vm574, %v2390, 0
        %v2402 = vsel %vm574, %v2391, 0
        %v2405 = vsel %vm574, %v2392, 0
        %v2408 = vsel %vm574, %v2393, 0
        %v2411 = vsel %vm574, %v2394, 0
        %v2414 = vsel %vm574, %v2395, 0
        %v2417 = vsel %vm574, %v2396, 0
        %v2420 = vsel %vm574, %v2397, 0
        %v2423 = vand.u32 %v2373, %v602
        %2425 = vmatprep.subr.bf16.mxu0 0
        %2426 = vmatpush1.bf16.msra.mxu0 0
        %2427 = vmatprep.subr.bf16.mxu0 0
        %2428 = vmatpush1.bf16.msra.mxu0 0
        %2429 = vmatprep.subr.bf16.mxu0 0
        %2430 = vmatpush1.bf16.msra.mxu0 0
        %2431 = vmatprep.subr.bf16.mxu0 0
        %2432 = vmatpush1.bf16.msra.mxu0 0
        %2433 = vmatprep.subr.bf16.mxu0 0
        %2434 = vmatpush1.bf16.msra.mxu0 0
        %2435 = vmatprep.subr.bf16.mxu0 0
        %2436 = vmatpush1.bf16.msra.mxu0 0
        %2437 = vmatprep.subr.bf16.mxu0 0
        %2438 = vmatpush1.bf16.msra.mxu0 0
        %2439 = vmatprep.subr.bf16.mxu0 0
        %2440 = vmatpush1.bf16.msra.mxu0 %v2423
        %2441 = vmatprep.subr.bf16.mxu0 0
        %2442 = vmatpush2.bf16.msra.mxu0 0
        %2443 = vmatprep.subr.bf16.mxu0 0
        %2444 = vmatpush2.bf16.msra.mxu0 0
        %2445 = vmatprep.subr.bf16.mxu0 0
        %2446 = vmatpush2.bf16.msra.mxu0 0
        %2447 = vmatprep.subr.bf16.mxu0 0
        %2448 = vmatpush2.bf16.msra.mxu0 0
        %2449 = vmatprep.subr.bf16.mxu0 0
        %2450 = vmatpush2.bf16.msra.mxu0 0
        %2451 = vmatprep.subr.bf16.mxu0 0
        %2452 = vmatpush2.bf16.msra.mxu0 0
        %2453 = vmatprep.subr.bf16.mxu0 0
        %2454 = vmatpush2.bf16.msra.mxu0 0
        %2455 = vmatprep.subr.bf16.mxu0 0
        %2456 = vmatpush2.bf16.msra.mxu0 0
        %2457 = vmatprep.mubr.bf16.mxu0 0
        %2458 = vmatmul.mubr.bf16.gmra.mxu0 %v2399
        %v2459 = vpop.f32.mrf.mxu0
        %v2460 = vadd.f32 0.0, %v2459
        %v2461 = vpop.f32.mrf.mxu0
        %v2462 = vpop.f32.mrf.mxu0
        %v2463 = vadd.f32 0.0, %v2462
        %v2464 = vpop.f32.mrf.mxu0
        %2465 = vmatprep.mubr.bf16.mxu0 0
        %2466 = vmatmul.mubr.bf16.gmra.mxu0 %v2402
        %v2467 = vpop.f32.mrf.mxu0
        %v2468 = vadd.f32 0.0, %v2467
        %v2469 = vpop.f32.mrf.mxu0
        %v2470 = vpop.f32.mrf.mxu0
        %v2471 = vadd.f32 0.0, %v2470
        %v2472 = vpop.f32.mrf.mxu0
        %2473 = vmatprep.mubr.bf16.mxu0 0
        %2474 = vmatmul.mubr.bf16.gmra.mxu0 %v2405
        %v2475 = vpop.f32.mrf.mxu0
        %v2476 = vadd.f32 0.0, %v2475
        %v2477 = vpop.f32.mrf.mxu0
        %v2478 = vpop.f32.mrf.mxu0
        %v2479 = vadd.f32 0.0, %v2478
        %v2480 = vpop.f32.mrf.mxu0
        %2481 = vmatprep.mubr.bf16.mxu0 0
        %2482 = vmatmul.mubr.bf16.gmra.mxu0 %v2408
        %v2483 = vpop.f32.mrf.mxu0
        %v2484 = vadd.f32 0.0, %v2483
        %v2485 = vpop.f32.mrf.mxu0
        %v2486 = vpop.f32.mrf.mxu0
        %v2487 = vadd.f32 0.0, %v2486
        %v2488 = vpop.f32.mrf.mxu0
        %2489 = vmatprep.mubr.bf16.mxu0 0
        %2490 = vmatmul.mubr.bf16.gmra.mxu0 %v2411
        %v2491 = vpop.f32.mrf.mxu0
        %v2492 = vadd.f32 0.0, %v2491
        %v2493 = vpop.f32.mrf.mxu0
        %v2494 = vpop.f32.mrf.mxu0
        %v2495 = vadd.f32 0.0, %v2494
        %v2496 = vpop.f32.mrf.mxu0
        %2497 = vmatprep.mubr.bf16.mxu0 0
        %2498 = vmatmul.mubr.bf16.gmra.mxu0 %v2414
        %v2499 = vpop.f32.mrf.mxu0
        %v2500 = vadd.f32 0.0, %v2499
        %v2501 = vpop.f32.mrf.mxu0
        %v2502 = vpop.f32.mrf.mxu0
        %v2503 = vadd.f32 0.0, %v2502
        %v2504 = vpop.f32.mrf.mxu0
        %2505 = vmatprep.mubr.bf16.mxu0 0
        %2506 = vmatmul.mubr.bf16.gmra.mxu0 %v2417
        %v2507 = vpop.f32.mrf.mxu0
        %v2508 = vadd.f32 0.0, %v2507
        %v2509 = vpop.f32.mrf.mxu0
        %v2510 = vpop.f32.mrf.mxu0
        %v2511 = vadd.f32 0.0, %v2510
        %v2512 = vpop.f32.mrf.mxu0
        %2513 = vmatprep.mubr.bf16.mxu0 0
        %2514 = vmatmul.mubr.bf16.gmra.mxu0 %v2420
        %v2515 = vpop.f32.mrf.mxu0
        %v2516 = vadd.f32 0.0, %v2515
        %v2517 = vpop.f32.mrf.mxu0
        %v2518 = vpop.f32.mrf.mxu0
        %v2519 = vadd.f32 0.0, %v2518
        %v2520 = vpop.f32.mrf.mxu0
        %2521 = vdwg.mxu0
        %v2522 = vadd.f32 %v2140, %v2460
        %v2523 = vadd.f32 %v2141, %v2463
        %v2524 = vadd.f32 %v2142, %v2468
        %v2525 = vadd.f32 %v2143, %v2471
        %v2526 = vadd.f32 %v2144, %v2476
        %v2527 = vadd.f32 %v2145, %v2479
        %v2528 = vadd.f32 %v2146, %v2484
        %v2529 = vadd.f32 %v2147, %v2487
        %v2530 = vadd.f32 %v2148, %v2492
        %v2531 = vadd.f32 %v2149, %v2495
        %v2532 = vadd.f32 %v2150, %v2500
        %v2533 = vadd.f32 %v2151, %v2503
        %v2534 = vadd.f32 %v2152, %v2508
        %v2535 = vadd.f32 %v2153, %v2511
        %v2536 = vadd.f32 %v2154, %v2516
        %v2537 = vadd.f32 %v2155, %v2519
        %v2538 = vld [vmem:[%s1957] sm:$0xe]
        %v2539 = vld [vmem:[%s1957 + $0xc] sm:$0xe]
        %v2540 = vld [vmem:[%s1957 + $0x18] sm:$0xe]
        %v2541 = vld [vmem:[%s1957 + $0x24] sm:$0xe]
        %v2542 = vld [vmem:[%s1957 + $0x30] sm:$0xe]
        %v2543 = vld [vmem:[%s1957 + $0x3c] sm:$0xe]
        %v2544 = vld [vmem:[%s1957 + $0x48] sm:$0xe]
        %v2545 = vld [vmem:[%s1957 + $0x54] sm:$0xe]
        %v2570 = vrot.slane %v2538, 5
        %v2571 = vrot.slane %v2570, 4
        %v2572 = vrot.slane %v2157, 5
        %v2573 = vsel %vm893, %v2571, %v2572
        %v2574 = vrot.slane %v2572, 4
        %v2575 = vrot.slane %v2158, 5
        %v2576 = vsel %vm893, %v2574, %v2575
        %v2577 = vrot.slane %v2539, 5
        %v2578 = vrot.slane %v2577, 4
        %v2579 = vrot.slane %v2160, 5
        %v2580 = vsel %vm893, %v2578, %v2579
        %v2581 = vrot.slane %v2579, 4
        %v2582 = vrot.slane %v2161, 5
        %v2583 = vsel %vm893, %v2581, %v2582
        %v2584 = vrot.slane %v2540, 5
        %v2585 = vrot.slane %v2584, 4
        %v2586 = vrot.slane %v2163, 5
        %v2587 = vsel %vm893, %v2585, %v2586
        %v2588 = vrot.slane %v2586, 4
        %v2589 = vrot.slane %v2164, 5
        %v2590 = vsel %vm893, %v2588, %v2589
        %v2591 = vrot.slane %v2541, 5
        %v2592 = vrot.slane %v2591, 4
        %v2593 = vrot.slane %v2166, 5
        %v2594 = vsel %vm893, %v2592, %v2593
        %v2595 = vrot.slane %v2593, 4
        %v2596 = vrot.slane %v2167, 5
        %v2597 = vsel %vm893, %v2595, %v2596
        %v2598 = vrot.slane %v2542, 5
        %v2599 = vrot.slane %v2598, 4
        %v2600 = vrot.slane %v2169, 5
        %v2601 = vsel %vm893, %v2599, %v2600
        %v2602 = vrot.slane %v2600, 4
        %v2603 = vrot.slane %v2170, 5
        %v2604 = vsel %vm893, %v2602, %v2603
        %v2605 = vrot.slane %v2543, 5
        %v2606 = vrot.slane %v2605, 4
        %v2607 = vrot.slane %v2172, 5
        %v2608 = vsel %vm893, %v2606, %v2607
        %v2609 = vrot.slane %v2607, 4
        %v2610 = vrot.slane %v2173, 5
        %v2611 = vsel %vm893, %v2609, %v2610
        %v2612 = vrot.slane %v2544, 5
        %v2613 = vrot.slane %v2612, 4
        %v2614 = vrot.slane %v2175, 5
        %v2615 = vsel %vm893, %v2613, %v2614
        %v2616 = vrot.slane %v2614, 4
        %v2617 = vrot.slane %v2176, 5
        %v2618 = vsel %vm893, %v2616, %v2617
        %v2619 = vrot.slane %v2545, 5
        %v2620 = vrot.slane %v2619, 4
        %v2621 = vrot.slane %v2178, 5
        %v2622 = vsel %vm893, %v2620, %v2621
        %v2623 = vrot.slane %v2621, 4
        %v2624 = vrot.slane %v2179, 5
        %v2625 = vsel %vm893, %v2623, %v2624
        %s2626 = scalar_lea.vmem %s1, 16
        %v2627 = vld [vmem:[%s2626] sm:$0x3]
        %v2628 = vunpack.c.l.b16 %v2573
        %v2629 = vunpack.c.l.b16 %v2576
        %v2630 = vunpack.c.l.b16 %v2580
        %v2631 = vunpack.c.l.b16 %v2583
        %v2632 = vunpack.c.l.b16 %v2587
        %v2633 = vunpack.c.l.b16 %v2590
        %v2634 = vunpack.c.l.b16 %v2594
        %v2635 = vunpack.c.l.b16 %v2597
        %v2636 = vunpack.c.l.b16 %v2601
        %v2637 = vunpack.c.l.b16 %v2604
        %v2638 = vunpack.c.l.b16 %v2608
        %v2639 = vunpack.c.l.b16 %v2611
        %v2640 = vunpack.c.l.b16 %v2615
        %v2641 = vunpack.c.l.b16 %v2618
        %v2642 = vunpack.c.l.b16 %v2622
        %v2643 = vunpack.c.l.b16 %v2625
        %v2644 = vpack.c.b16 %v2629, %v2628
        %v2645 = vpack.c.b16 %v2631, %v2630
        %v2646 = vpack.c.b16 %v2633, %v2632
        %v2647 = vpack.c.b16 %v2635, %v2634
        %v2648 = vpack.c.b16 %v2637, %v2636
        %v2649 = vpack.c.b16 %v2639, %v2638
        %v2650 = vpack.c.b16 %v2641, %v2640
        %v2651 = vpack.c.b16 %v2643, %v2642
        %v2653 = vsel %vm574, %v2644, 0
        %v2656 = vsel %vm574, %v2645, 0
        %v2659 = vsel %vm574, %v2646, 0
        %v2662 = vsel %vm574, %v2647, 0
        %v2665 = vsel %vm574, %v2648, 0
        %v2668 = vsel %vm574, %v2649, 0
        %v2671 = vsel %vm574, %v2650, 0
        %v2674 = vsel %vm574, %v2651, 0
        %v2677 = vand.u32 %v2627, %v602
        %2679 = vmatprep.subr.bf16.mxu0 0
        %2680 = vmatpush1.bf16.msra.mxu0 0
        %2681 = vmatprep.subr.bf16.mxu0 0
        %2682 = vmatpush1.bf16.msra.mxu0 0
        %2683 = vmatprep.subr.bf16.mxu0 0
        %2684 = vmatpush1.bf16.msra.mxu0 0
        %2685 = vmatprep.subr.bf16.mxu0 0
        %2686 = vmatpush1.bf16.msra.mxu0 0
        %2687 = vmatprep.subr.bf16.mxu0 0
        %2688 = vmatpush1.bf16.msra.mxu0 0
        %2689 = vmatprep.subr.bf16.mxu0 0
        %2690 = vmatpush1.bf16.msra.mxu0 0
        %2691 = vmatprep.subr.bf16.mxu0 0
        %2692 = vmatpush1.bf16.msra.mxu0 0
        %2693 = vmatprep.subr.bf16.mxu0 0
        %2694 = vmatpush1.bf16.msra.mxu0 %v2677
        %2695 = vmatprep.subr.bf16.mxu0 0
        %2696 = vmatpush2.bf16.msra.mxu0 0
        %2697 = vmatprep.subr.bf16.mxu0 0
        %2698 = vmatpush2.bf16.msra.mxu0 0
        %2699 = vmatprep.subr.bf16.mxu0 0
        %2700 = vmatpush2.bf16.msra.mxu0 0
        %2701 = vmatprep.subr.bf16.mxu0 0
        %2702 = vmatpush2.bf16.msra.mxu0 0
        %2703 = vmatprep.subr.bf16.mxu0 0
        %2704 = vmatpush2.bf16.msra.mxu0 0
        %2705 = vmatprep.subr.bf16.mxu0 0
        %2706 = vmatpush2.bf16.msra.mxu0 0
        %2707 = vmatprep.subr.bf16.mxu0 0
        %2708 = vmatpush2.bf16.msra.mxu0 0
        %2709 = vmatprep.subr.bf16.mxu0 0
        %2710 = vmatpush2.bf16.msra.mxu0 0
        %2711 = vmatprep.mubr.bf16.mxu0 0
        %2712 = vmatmul.mubr.bf16.gmra.mxu0 %v2653
        %v2713 = vpop.f32.mrf.mxu0
        %v2714 = vadd.f32 0.0, %v2713
        %v2715 = vpop.f32.mrf.mxu0
        %v2716 = vpop.f32.mrf.mxu0
        %v2717 = vadd.f32 0.0, %v2716
        %v2718 = vpop.f32.mrf.mxu0
        %2719 = vmatprep.mubr.bf16.mxu0 0
        %2720 = vmatmul.mubr.bf16.gmra.mxu0 %v2656
        %v2721 = vpop.f32.mrf.mxu0
        %v2722 = vadd.f32 0.0, %v2721
        %v2723 = vpop.f32.mrf.mxu0
        %v2724 = vpop.f32.mrf.mxu0
        %v2725 = vadd.f32 0.0, %v2724
        %v2726 = vpop.f32.mrf.mxu0
        %2727 = vmatprep.mubr.bf16.mxu0 0
        %2728 = vmatmul.mubr.bf16.gmra.mxu0 %v2659
        %v2729 = vpop.f32.mrf.mxu0
        %v2730 = vadd.f32 0.0, %v2729
        %v2731 = vpop.f32.mrf.mxu0
        %v2732 = vpop.f32.mrf.mxu0
        %v2733 = vadd.f32 0.0, %v2732
        %v2734 = vpop.f32.mrf.mxu0
        %2735 = vmatprep.mubr.bf16.mxu0 0
        %2736 = vmatmul.mubr.bf16.gmra.mxu0 %v2662
        %v2737 = vpop.f32.mrf.mxu0
        %v2738 = vadd.f32 0.0, %v2737
        %v2739 = vpop.f32.mrf.mxu0
        %v2740 = vpop.f32.mrf.mxu0
        %v2741 = vadd.f32 0.0, %v2740
        %v2742 = vpop.f32.mrf.mxu0
        %2743 = vmatprep.mubr.bf16.mxu0 0
        %2744 = vmatmul.mubr.bf16.gmra.mxu0 %v2665
        %v2745 = vpop.f32.mrf.mxu0
        %v2746 = vadd.f32 0.0, %v2745
        %v2747 = vpop.f32.mrf.mxu0
        %v2748 = vpop.f32.mrf.mxu0
        %v2749 = vadd.f32 0.0, %v2748
        %v2750 = vpop.f32.mrf.mxu0
        %2751 = vmatprep.mubr.bf16.mxu0 0
        %2752 = vmatmul.mubr.bf16.gmra.mxu0 %v2668
        %v2753 = vpop.f32.mrf.mxu0
        %v2754 = vadd.f32 0.0, %v2753
        %v2755 = vpop.f32.mrf.mxu0
        %v2756 = vpop.f32.mrf.mxu0
        %v2757 = vadd.f32 0.0, %v2756
        %v2758 = vpop.f32.mrf.mxu0
        %2759 = vmatprep.mubr.bf16.mxu0 0
        %2760 = vmatmul.mubr.bf16.gmra.mxu0 %v2671
        %v2761 = vpop.f32.mrf.mxu0
        %v2762 = vadd.f32 0.0, %v2761
        %v2763 = vpop.f32.mrf.mxu0
        %v2764 = vpop.f32.mrf.mxu0
        %v2765 = vadd.f32 0.0, %v2764
        %v2766 = vpop.f32.mrf.mxu0
        %2767 = vmatprep.mubr.bf16.mxu0 0
        %2768 = vmatmul.mubr.bf16.gmra.mxu0 %v2674
        %v2769 = vpop.f32.mrf.mxu0
        %v2770 = vadd.f32 0.0, %v2769
        %v2771 = vpop.f32.mrf.mxu0
        %v2772 = vpop.f32.mrf.mxu0
        %v2773 = vadd.f32 0.0, %v2772
        %v2774 = vpop.f32.mrf.mxu0
        %2775 = vdwg.mxu0
        %v2776 = vadd.f32 %v2522, %v2714
        %v2777 = vadd.f32 %v2523, %v2717
        %v2778 = vadd.f32 %v2524, %v2722
        %v2779 = vadd.f32 %v2525, %v2725
        %v2780 = vadd.f32 %v2526, %v2730
        %v2781 = vadd.f32 %v2527, %v2733
        %v2782 = vadd.f32 %v2528, %v2738
        %v2783 = vadd.f32 %v2529, %v2741
        %v2784 = vadd.f32 %v2530, %v2746
        %v2785 = vadd.f32 %v2531, %v2749
        %v2786 = vadd.f32 %v2532, %v2754
        %v2787 = vadd.f32 %v2533, %v2757
        %v2788 = vadd.f32 %v2534, %v2762
        %v2789 = vadd.f32 %v2535, %v2765
        %v2790 = vadd.f32 %v2536, %v2770
        %v2791 = vadd.f32 %v2537, %v2773
        %v2792 = vld [vmem:[%s2] sm:$0x1]
        %v2794 = vlaneseq
        %v2795 = vshrl.u32 %v2794, 7
        %v2796 = vsub.s32 0, %v2795
        %v2797 = vrot.slane %v2792, %v2796
        %v2799 = vadd.f32 %v2776, %v2797
        %v2800 = vadd.f32 %v2777, %v2797
        %v2801 = vadd.f32 %v2778, %v2797
        %v2802 = vadd.f32 %v2779, %v2797
        %v2803 = vadd.f32 %v2780, %v2797
        %v2804 = vadd.f32 %v2781, %v2797
        %v2805 = vadd.f32 %v2782, %v2797
        %v2806 = vadd.f32 %v2783, %v2797
        %v2807 = vadd.f32 %v2784, %v2797
        %v2808 = vadd.f32 %v2785, %v2797
        %v2809 = vadd.f32 %v2786, %v2797
        %v2810 = vadd.f32 %v2787, %v2797
        %v2811 = vadd.f32 %v2788, %v2797
        %v2812 = vadd.f32 %v2789, %v2797
        %v2813 = vadd.f32 %v2790, %v2797
        %v2814 = vadd.f32 %v2791, %v2797
        %v2815 = vmax.f32 %v2799, 0.0
        %v2816 = vmax.f32 %v2800, 0.0
        %v2817 = vmax.f32 %v2801, 0.0
        %v2818 = vmax.f32 %v2802, 0.0
        %v2819 = vmax.f32 %v2803, 0.0
        %v2820 = vmax.f32 %v2804, 0.0
        %v2821 = vmax.f32 %v2805, 0.0
        %v2822 = vmax.f32 %v2806, 0.0
        %v2823 = vmax.f32 %v2807, 0.0
        %v2824 = vmax.f32 %v2808, 0.0
        %v2825 = vmax.f32 %v2809, 0.0
        %v2826 = vmax.f32 %v2810, 0.0
        %v2827 = vmax.f32 %v2811, 0.0
        %v2828 = vmax.f32 %v2812, 0.0
        %v2829 = vmax.f32 %v2813, 0.0
        %v2830 = vmax.f32 %v2814, 0.0
        %2831 = vxpose.xlu0.b32.start [1/16] %v2815, 128
        %2832 = vxpose.xlu0.b32.cont [2/16] %v2816, 128
        %2833 = vxpose.xlu0.b32.cont [3/16] %v2817, 128
        %2834 = vxpose.xlu0.b32.cont [4/16] %v2818, 128
        %2835 = vxpose.xlu0.b32.cont [5/16] %v2819, 128
        %2836 = vxpose.xlu0.b32.cont [6/16] %v2820, 128
        %2837 = vxpose.xlu0.b32.cont [7/16] %v2821, 128
        %2838 = vxpose.xlu0.b32.cont [8/16] %v2822, 128
        %2839 = vxpose.xlu0.b32.cont [9/16] %v2823, 128
        %2840 = vxpose.xlu0.b32.cont [10/16] %v2824, 128
        %2841 = vxpose.xlu0.b32.cont [11/16] %v2825, 128
        %2842 = vxpose.xlu0.b32.cont [12/16] %v2826, 128
        %2843 = vxpose.xlu0.b32.cont [13/16] %v2827, 128
        %2844 = vxpose.xlu0.b32.cont [14/16] %v2828, 128
        %2845 = vxpose.xlu0.b32.cont [15/16] %v2829, 128
        %2846 = vxpose.xlu0.b32.end [16/16] %v2830, 128
        %v2847 = vpop.trf.xlu0
        %v2848 = vpop.trf.xlu0
        %v2849 = vpop.trf.xlu0
        %v2850 = vpop.trf.xlu0
        %v2851 = vpop.trf.xlu0
        %v2852 = vpop.trf.xlu0
        %v2853 = vpop.trf.xlu0
        %v2854 = vpop.trf.xlu0
        %v2855 = vpop.trf.xlu0
        %v2856 = vpop.trf.xlu0
        %v2857 = vpop.trf.xlu0
        %v2858 = vpop.trf.xlu0
        %v2859 = vpop.trf.xlu0
        %v2860 = vpop.trf.xlu0
        %v2861 = vpop.trf.xlu0
        %v2862 = vpop.trf.xlu0
        %v2863 = vld [vmem:[%s3] sm:$0xf]
        %v2864 = vld [vmem:[%s3 + $0x4] sm:$0xf]
        %v2865 = vpack.c.bf16 %v2848, %v2847
        %v2866 = vld [vmem:[%s4] sm:$0xff]
        %v2867 = vld [vmem:[%s4 + $0x8] sm:$0xff]
        %2869 = vset.pattern.permute.xlu0 0
        %2870 = vperm.xlu0 %2869, %v2866
        %v2871 = vpop.permute.xlu0 %2870
        %2874 = vset.pattern.permute.xlu0 0
        %2875 = vperm.xlu0 %2874, %v2867
        %v2876 = vpop.permute.xlu0 %2875
        %v2880 = vunpack.c.l.b16 %v2863
        %v2881 = vunpack.c.l.b16 %v2864
        %v2882 = vpack.c.b16 %v2881, %v2880
        %vm2883 = vcmask 130048
        %v2885 = vsel %vm2883, %v2882, 0
        %2887 = vmatprep.subr.bf16.mxu0 0
        %2888 = vmatpush1.bf16.msra.mxu0 0
        %2889 = vmatprep.subr.bf16.mxu0 0
        %2890 = vmatpush1.bf16.msra.mxu0 0
        %2891 = vmatprep.subr.bf16.mxu0 0
        %2892 = vmatpush1.bf16.msra.mxu0 0
        %2893 = vmatprep.subr.bf16.mxu0 0
        %2894 = vmatpush1.bf16.msra.mxu0 0
        %2895 = vmatprep.subr.bf16.mxu0 0
        %2896 = vmatpush1.bf16.msra.mxu0 0
        %2897 = vmatprep.subr.bf16.mxu0 0
        %2898 = vmatpush1.bf16.msra.mxu0 0
        %2899 = vmatprep.subr.bf16.mxu0 0
        %2900 = vmatpush1.bf16.msra.mxu0 0
        %2901 = vmatprep.subr.bf16.mxu0 0
        %2902 = vmatpush1.bf16.msra.mxu0 %v2865
        %2903 = vmatprep.subr.bf16.mxu0 0
        %2904 = vmatpush2.bf16.msra.mxu0 0
        %2905 = vmatprep.subr.bf16.mxu0 0
        %2906 = vmatpush2.bf16.msra.mxu0 0
        %2907 = vmatprep.subr.bf16.mxu0 0
        %2908 = vmatpush2.bf16.msra.mxu0 0
        %2909 = vmatprep.subr.bf16.mxu0 0
        %2910 = vmatpush2.bf16.msra.mxu0 0
        %2911 = vmatprep.subr.bf16.mxu0 0
        %2912 = vmatpush2.bf16.msra.mxu0 0
        %2913 = vmatprep.subr.bf16.mxu0 0
        %2914 = vmatpush2.bf16.msra.mxu0 0
        %2915 = vmatprep.subr.bf16.mxu0 0
        %2916 = vmatpush2.bf16.msra.mxu0 0
        %2917 = vmatprep.subr.bf16.mxu0 0
        %2918 = vmatpush2.bf16.msra.mxu0 0
        %2919 = vmatprep.mubr.bf16.mxu0 0
        %2920 = vmatmul.mubr.bf16.gmra.mxu0 %v2885
        %v2921 = vpop.f32.mrf.mxu0
        %v2922 = vadd.f32 %v2871, %v2921
        %v2923 = vpop.f32.mrf.mxu0
        %v2924 = vpop.f32.mrf.mxu0
        %v2925 = vadd.f32 %v2876, %v2924
        %v2926 = vpop.f32.mrf.mxu0
        %2927 = vdwg.mxu0
        %v2928 = vadd.f32 %v2847, %v2922
        %v2929 = vadd.f32 %v2848, %v2925
        %v2930 = vmax.f32 %v2928, 0.0
        %v2931 = vmax.f32 %v2929, 0.0
        %v2932 = vld [vmem:[%s5] sm:$0xf]
        %v2933 = vld [vmem:[%s5 + $0x4] sm:$0xf]
        %v2934 = vpack.c.bf16 %v2931, %v2930
        %v2935 = vld [vmem:[%s6] sm:$0xff]
        %v2936 = vld [vmem:[%s6 + $0x8] sm:$0xff]
        %2938 = vset.pattern.permute.xlu0 0
        %2939 = vperm.xlu0 %2938, %v2935
        %v2940 = vpop.permute.xlu0 %2939
        %2943 = vset.pattern.permute.xlu0 0
        %2944 = vperm.xlu0 %2943, %v2936
        %v2945 = vpop.permute.xlu0 %2944
        %v2949 = vunpack.c.l.b16 %v2932
        %v2950 = vunpack.c.l.b16 %v2933
        %v2951 = vpack.c.b16 %v2950, %v2949
        %v2953 = vsel %vm2883, %v2951, 0
        %2955 = vmatprep.subr.bf16.mxu0 0
        %2956 = vmatpush1.bf16.msra.mxu0 0
        %2957 = vmatprep.subr.bf16.mxu0 0
        %2958 = vmatpush1.bf16.msra.mxu0 0
        %2959 = vmatprep.subr.bf16.mxu0 0
        %2960 = vmatpush1.bf16.msra.mxu0 0
        %2961 = vmatprep.subr.bf16.mxu0 0
        %2962 = vmatpush1.bf16.msra.mxu0 0
        %2963 = vmatprep.subr.bf16.mxu0 0
        %2964 = vmatpush1.bf16.msra.mxu0 0
        %2965 = vmatprep.subr.bf16.mxu0 0
        %2966 = vmatpush1.bf16.msra.mxu0 0
        %2967 = vmatprep.subr.bf16.mxu0 0
        %2968 = vmatpush1.bf16.msra.mxu0 0
        %2969 = vmatprep.subr.bf16.mxu0 0
        %2970 = vmatpush1.bf16.msra.mxu0 %v2934
        %2971 = vmatprep.subr.bf16.mxu0 0
        %2972 = vmatpush2.bf16.msra.mxu0 0
        %2973 = vmatprep.subr.bf16.mxu0 0
        %2974 = vmatpush2.bf16.msra.mxu0 0
        %2975 = vmatprep.subr.bf16.mxu0 0
        %2976 = vmatpush2.bf16.msra.mxu0 0
        %2977 = vmatprep.subr.bf16.mxu0 0
        %2978 = vmatpush2.bf16.msra.mxu0 0
        %2979 = vmatprep.subr.bf16.mxu0 0
        %2980 = vmatpush2.bf16.msra.mxu0 0
        %2981 = vmatprep.subr.bf16.mxu0 0
        %2982 = vmatpush2.bf16.msra.mxu0 0
        %2983 = vmatprep.subr.bf16.mxu0 0
        %2984 = vmatpush2.bf16.msra.mxu0 0
        %2985 = vmatprep.subr.bf16.mxu0 0
        %2986 = vmatpush2.bf16.msra.mxu0 0
        %2987 = vmatprep.mubr.bf16.mxu0 0
        %2988 = vmatmul.mubr.bf16.gmra.mxu0 %v2953
        %v2989 = vpop.f32.mrf.mxu0
        %v2990 = vadd.f32 %v2940, %v2989
        %v2991 = vpop.f32.mrf.mxu0
        %v2992 = vpop.f32.mrf.mxu0
        %v2993 = vadd.f32 %v2945, %v2992
        %v2994 = vpop.f32.mrf.mxu0
        %2995 = vdwg.mxu0
        %2996 = vst [vmem:[%s311] sm:$0xff] %v2990
        %2997 = vst [vmem:[%s311 + $0x8] sm:$0xff] %v2993
        %s2998 = scalar_lea.vmem %s3, 8
        %v2999 = vld [vmem:[%s2998] sm:$0xf]
        %v3000 = vld [vmem:[%s2998 + $0x4] sm:$0xf]
        %s3001 = scalar_lea.vmem %s4, 16
        %v3002 = vld [vmem:[%s3001] sm:$0xff]
        %v3003 = vld [vmem:[%s3001 + $0x8] sm:$0xff]
        %3005 = vset.pattern.permute.xlu0 0
        %3006 = vperm.xlu0 %3005, %v3002
        %v3007 = vpop.permute.xlu0 %3006
        %3010 = vset.pattern.permute.xlu0 0
        %3011 = vperm.xlu0 %3010, %v3003
        %v3012 = vpop.permute.xlu0 %3011
        %v3016 = vunpack.c.l.b16 %v2999
        %v3017 = vunpack.c.l.b16 %v3000
        %v3018 = vpack.c.b16 %v3017, %v3016
        %v3020 = vsel %vm2883, %v3018, 0
        %3022 = vmatprep.subr.bf16.mxu0 0
        %3023 = vmatpush1.bf16.msra.mxu0 0
        %3024 = vmatprep.subr.bf16.mxu0 0
        %3025 = vmatpush1.bf16.msra.mxu0 0
        %3026 = vmatprep.subr.bf16.mxu0 0
        %3027 = vmatpush1.bf16.msra.mxu0 0
        %3028 = vmatprep.subr.bf16.mxu0 0
        %3029 = vmatpush1.bf16.msra.mxu0 0
        %3030 = vmatprep.subr.bf16.mxu0 0
        %3031 = vmatpush1.bf16.msra.mxu0 0
        %3032 = vmatprep.subr.bf16.mxu0 0
        %3033 = vmatpush1.bf16.msra.mxu0 0
        %3034 = vmatprep.subr.bf16.mxu0 0
        %3035 = vmatpush1.bf16.msra.mxu0 0
        %3036 = vmatprep.subr.bf16.mxu0 0
        %3037 = vmatpush1.bf16.msra.mxu0 %v2934
        %3038 = vmatprep.subr.bf16.mxu0 0
        %3039 = vmatpush2.bf16.msra.mxu0 0
        %3040 = vmatprep.subr.bf16.mxu0 0
        %3041 = vmatpush2.bf16.msra.mxu0 0
        %3042 = vmatprep.subr.bf16.mxu0 0
        %3043 = vmatpush2.bf16.msra.mxu0 0
        %3044 = vmatprep.subr.bf16.mxu0 0
        %3045 = vmatpush2.bf16.msra.mxu0 0
        %3046 = vmatprep.subr.bf16.mxu0 0
        %3047 = vmatpush2.bf16.msra.mxu0 0
        %3048 = vmatprep.subr.bf16.mxu0 0
        %3049 = vmatpush2.bf16.msra.mxu0 0
        %3050 = vmatprep.subr.bf16.mxu0 0
        %3051 = vmatpush2.bf16.msra.mxu0 0
        %3052 = vmatprep.subr.bf16.mxu0 0
        %3053 = vmatpush2.bf16.msra.mxu0 0
        %3054 = vmatprep.mubr.bf16.mxu0 0
        %3055 = vmatmul.mubr.bf16.gmra.mxu0 %v3020
        %v3056 = vpop.f32.mrf.mxu0
        %v3057 = vadd.f32 %v3007, %v3056
        %v3058 = vpop.f32.mrf.mxu0
        %v3059 = vpop.f32.mrf.mxu0
        %v3060 = vadd.f32 %v3012, %v3059
        %v3061 = vpop.f32.mrf.mxu0
        %3062 = vdwg.mxu0
        %v3063 = vadd.f32 %v2930, %v3057
        %v3064 = vadd.f32 %v2931, %v3060
        %v3065 = vmax.f32 %v3063, 0.0
        %v3066 = vmax.f32 %v3064, 0.0
        %s3067 = scalar_lea.vmem %s5, 8
        %v3068 = vld [vmem:[%s3067] sm:$0xf]
        %v3069 = vld [vmem:[%s3067 + $0x4] sm:$0xf]
        %v3070 = vpack.c.bf16 %v3066, %v3065
        %s3071 = scalar_lea.vmem %s6, 16
        %v3072 = vld [vmem:[%s3071] sm:$0xff]
        %v3073 = vld [vmem:[%s3071 + $0x8] sm:$0xff]
        %3075 = vset.pattern.permute.xlu0 0
        %3076 = vperm.xlu0 %3075, %v3072
        %v3077 = vpop.permute.xlu0 %3076
        %3080 = vset.pattern.permute.xlu0 0
        %3081 = vperm.xlu0 %3080, %v3073
        %v3082 = vpop.permute.xlu0 %3081
        %v3086 = vunpack.c.l.b16 %v3068
        %v3087 = vunpack.c.l.b16 %v3069
        %v3088 = vpack.c.b16 %v3087, %v3086
        %v3090 = vsel %vm2883, %v3088, 0
        %3092 = vmatprep.subr.bf16.mxu0 0
        %3093 = vmatpush1.bf16.msra.mxu0 0
        %3094 = vmatprep.subr.bf16.mxu0 0
        %3095 = vmatpush1.bf16.msra.mxu0 0
        %3096 = vmatprep.subr.bf16.mxu0 0
        %3097 = vmatpush1.bf16.msra.mxu0 0
        %3098 = vmatprep.subr.bf16.mxu0 0
        %3099 = vmatpush1.bf16.msra.mxu0 0
        %3100 = vmatprep.subr.bf16.mxu0 0
        %3101 = vmatpush1.bf16.msra.mxu0 0
        %3102 = vmatprep.subr.bf16.mxu0 0
        %3103 = vmatpush1.bf16.msra.mxu0 0
        %3104 = vmatprep.subr.bf16.mxu0 0
        %3105 = vmatpush1.bf16.msra.mxu0 0
        %3106 = vmatprep.subr.bf16.mxu0 0
        %3107 = vmatpush1.bf16.msra.mxu0 %v3070
        %3108 = vmatprep.subr.bf16.mxu0 0
        %3109 = vmatpush2.bf16.msra.mxu0 0
        %3110 = vmatprep.subr.bf16.mxu0 0
        %3111 = vmatpush2.bf16.msra.mxu0 0
        %3112 = vmatprep.subr.bf16.mxu0 0
        %3113 = vmatpush2.bf16.msra.mxu0 0
        %3114 = vmatprep.subr.bf16.mxu0 0
        %3115 = vmatpush2.bf16.msra.mxu0 0
        %3116 = vmatprep.subr.bf16.mxu0 0
        %3117 = vmatpush2.bf16.msra.mxu0 0
        %3118 = vmatprep.subr.bf16.mxu0 0
        %3119 = vmatpush2.bf16.msra.mxu0 0
        %3120 = vmatprep.subr.bf16.mxu0 0
        %3121 = vmatpush2.bf16.msra.mxu0 0
        %3122 = vmatprep.subr.bf16.mxu0 0
        %3123 = vmatpush2.bf16.msra.mxu0 0
        %3124 = vmatprep.mubr.bf16.mxu0 0
        %3125 = vmatmul.mubr.bf16.gmra.mxu0 %v3090
        %v3126 = vpop.f32.mrf.mxu0
        %v3127 = vadd.f32 %v3077, %v3126
        %v3128 = vpop.f32.mrf.mxu0
        %v3129 = vpop.f32.mrf.mxu0
        %v3130 = vadd.f32 %v3082, %v3129
        %v3131 = vpop.f32.mrf.mxu0
        %3132 = vdwg.mxu0
        %s3133 = scalar_lea.vmem %s311, 16 [#allocation2]
        %3134 = vst [vmem:[%s3133] sm:$0xff] %v3127
        %3135 = vst [vmem:[%s3133 + $0x8] sm:$0xff] %v3130
        %v3136 = vpack.c.bf16 %v3130, %v3127
        %v3138 = vunpack.c.l.b16 %v3136
        %v3139 = vunpack.c.h.b16 %v3136
        %v3140 = vpack.c.b16 %v3138, %v3138
        %v3141 = vpack.c.b16 %v3139, %v3139
        %3144 = vst [vmem:[%s317] sm:$0xf] %v3140
        %3145 = vst [vmem:[%s317 + $0x4] sm:$0xf] %v3141
        %s3146 = sand.u32 %s194, 1
        %s3147 = sand.u32 %s194, 1
        %s3148 = smul.addr %s3147, 32
        %s3149 = scalar_lea.vmem [#allocation2], %s3148
        %s3150 = sand.u32 %s222, 1
        %s3151 = sand.u32 %s222, 1
        %s3152 = smul.addr %s3151, 8
        %s3153 = scalar_lea.vmem [#allocation3], %s3152
        // Predicated region
        $region49: #{pvcnet_forward.2} parent=47 // pred_check
          %p3154 = pneg %p204
        $region50: #{pvcnet_forward.2} parent=47 // pred_check_branch
          %3156 = sbr.rel (%p3154) target = $region52
        $region51: #{pvcnet_forward.2} parent=47 // pred_region
          %s3157 = smul.addr %s24, 4
          %s3158 = sadd.s32 %s25, %s3157
          %s3159 = smul.addr %s3158, 8
          %s3160 = scalar_lea.vmem %s7, %s3159
          // Predicated region
          $region53: #{pvcnet_forward.2} parent=51 // pred_check
            _
          $region54: #{pvcnet_forward.2} parent=51 // pred_check_branch
            %3162 = sbr.rel (0) target = $region56
          $region55: #{pvcnet_forward.2} parent=51 // pred_region
            // Predicated region
            $region57: #{pvcnet_forward.2} parent=55 // pred_check
              _
            $region58: #{pvcnet_forward.2} parent=55 // pred_check_branch
              %3164 = sbr.rel (0) target = $region60
            $region59: #{pvcnet_forward.2} parent=55 // pred_region
              // Predicated region
              $region72: #{pvcnet_forward.2} parent=59 // pred_check
                _
              $region73: #{pvcnet_forward.2} parent=59 // pred_check_branch
                %3186 = sbr.rel (0) target = $region75
              $region74: #{pvcnet_forward.2} parent=59 // pred_region
                loop: start=0, step=1, limit=1
                $region76: #{pvcnet_forward.2} parent=74 // loop_pre_header
                  _
                $region77: #{pvcnet_forward.2} parent=74 // loop_header
                  %s3188 = sphi 0, %s3192
                  %p3189 = scmp.ge.s32.totalorder %s3188, 1
                  %s3193 = sphi %s3149, %s3149
                  %s3194 = sphi %s3160, %s3160
                $region78: #{pvcnet_forward.2} parent=74 // loop_header_branch
                  %3191 = sbr.rel (%p3189) target = $region82
                $region79: #{pvcnet_forward.2} parent=74 // loop_body
                  %v3195 = vld [vmem:[%s3193] sm:$0xff]
                  %3196 = vst [vmem:[%s3194] sm:$0xff] %v3195
                  %v3197 = vld [vmem:[%s3193 + $0x8] sm:$0xff]
                  %3198 = vst [vmem:[%s3194 + $0x10] sm:$0xff] %v3197
                  %v3199 = vld [vmem:[%s3193 + $0x10] sm:$0xff]
                  %3200 = vst [vmem:[%s3194 + $0x40] sm:$0xff] %v3199
                  %v3201 = vld [vmem:[%s3193 + $0x18] sm:$0xff]
                  %3202 = vst [vmem:[%s3194 + $0x50] sm:$0xff] %v3201
                $region80: #{pvcnet_forward.2} parent=74 // loop_footer
                  %s3192 = sadd.s32 1, %s3188
                $region81: #{pvcnet_forward.2} parent=74 // loop_footer_branch
                  %3187 = sbr.rel target = $region77
                $region82: #{pvcnet_forward.2} parent=74 // loop_exit
                  _
              $region75: #{pvcnet_forward.2} parent=59 // pred_fallthru
                _
              // Predicated region
              $region83: #{pvcnet_forward.2} parent=59 // pred_check
                _
              $region84: #{pvcnet_forward.2} parent=59 // pred_check_branch
                %3204 = sbr.rel target = $region86
              $region85: #{pvcnet_forward.2} parent=59 // pred_region
                _
              $region86: #{pvcnet_forward.2} parent=59 // pred_fallthru
                _
            $region60: #{pvcnet_forward.2} parent=55 // pred_fallthru
              _
            // Predicated region
            $region61: #{pvcnet_forward.2} parent=55 // pred_check
              _
            $region62: #{pvcnet_forward.2} parent=55 // pred_check_branch
              %3166 = sbr.rel target = $region64
            $region63: #{pvcnet_forward.2} parent=55 // pred_region
              %s3168 = ssub.s32 256, 1
              loop: start=0, step=1, limit=1
              $region65: #{pvcnet_forward.2} parent=63 // loop_pre_header
                _
              $region66: #{pvcnet_forward.2} parent=63 // loop_header
                %s3170 = sphi 0, %s3174
                %p3171 = scmp.ge.s32.totalorder %s3170, 1
                %s3175 = sphi %s3149, %s3149
                %s3176 = sphi %s3160, %s3160
              $region67: #{pvcnet_forward.2} parent=63 // loop_header_branch
                %3173 = sbr.rel (%p3171) target = $region71
              $region68: #{pvcnet_forward.2} parent=63 // loop_body
                %v3177 = vld [vmem:[%s3175] sm:%s3168]
                %3178 = vst [vmem:[%s3176] sm:%s3168] %v3177
                %v3179 = vld [vmem:[%s3175 + $0x8] sm:%s3168]
                %3180 = vst [vmem:[%s3176 + $0x10] sm:%s3168] %v3179
                %v3181 = vld [vmem:[%s3175 + $0x10] sm:%s3168]
                %3182 = vst [vmem:[%s3176 + $0x40] sm:%s3168] %v3181
                %v3183 = vld [vmem:[%s3175 + $0x18] sm:%s3168]
                %3184 = vst [vmem:[%s3176 + $0x50] sm:%s3168] %v3183
              $region69: #{pvcnet_forward.2} parent=63 // loop_footer
                %s3174 = sadd.s32 1, %s3170
              $region70: #{pvcnet_forward.2} parent=63 // loop_footer_branch
                %3169 = sbr.rel target = $region66
              $region71: #{pvcnet_forward.2} parent=63 // loop_exit
                _
            $region64: #{pvcnet_forward.2} parent=55 // pred_fallthru
              _
          $region56: #{pvcnet_forward.2} parent=51 // pred_fallthru
            _
          %3205 = vnop
        $region52: #{pvcnet_forward.2} parent=47 // pred_fallthru
          _
        // Predicated region
        $region87: #{pvcnet_forward.2} parent=47 // pred_check
          %p3206 = pneg %p232
        $region88: #{pvcnet_forward.2} parent=47 // pred_check_branch
          %3208 = sbr.rel (%p3206) target = $region90
        $region89: #{pvcnet_forward.2} parent=47 // pred_region
          %s3209 = smul.addr %s24, 4
          %s3210 = sadd.s32 %s25, %s3209
          %s3211 = smul.addr %s3210, 4
          %s3212 = scalar_lea.vmem %s8, %s3211
          // Predicated region
          $region91: #{pvcnet_forward.2} parent=89 // pred_check
            _
          $region92: #{pvcnet_forward.2} parent=89 // pred_check_branch
            %3214 = sbr.rel (0) target = $region94
          $region93: #{pvcnet_forward.2} parent=89 // pred_region
            // Predicated region
            $region95: #{pvcnet_forward.2} parent=93 // pred_check
              _
            $region96: #{pvcnet_forward.2} parent=93 // pred_check_branch
              %3216 = sbr.rel target = $region98
            $region97: #{pvcnet_forward.2} parent=93 // pred_region
              // Predicated region
              $region110: #{pvcnet_forward.2} parent=97 // pred_check
                _
              $region111: #{pvcnet_forward.2} parent=97 // pred_check_branch
                %3234 = sbr.rel (0) target = $region113
              $region112: #{pvcnet_forward.2} parent=97 // pred_region
                loop: start=0, step=1, limit=1
                $region114: #{pvcnet_forward.2} parent=112 // loop_pre_header
                  _
                $region115: #{pvcnet_forward.2} parent=112 // loop_header
                  %s3236 = sphi 0, %s3240
                  %p3237 = scmp.ge.s32.totalorder %s3236, 1
                  %s3241 = sphi %s3153, %s3153
                  %s3242 = sphi %s3212, %s3212
                $region116: #{pvcnet_forward.2} parent=112 // loop_header_branch
                  %3239 = sbr.rel (%p3237) target = $region120
                $region117: #{pvcnet_forward.2} parent=112 // loop_body
                  _
                $region118: #{pvcnet_forward.2} parent=112 // loop_footer
                  %s3240 = sadd.s32 1, %s3236
                $region119: #{pvcnet_forward.2} parent=112 // loop_footer_branch
                  %3235 = sbr.rel target = $region115
                $region120: #{pvcnet_forward.2} parent=112 // loop_exit
                  _
                %s3244 = ssub.s32 16, 1
                loop: start=0, step=1, limit=1
                $region121: #{pvcnet_forward.2} parent=112 // loop_pre_header
                  _
                $region122: #{pvcnet_forward.2} parent=112 // loop_header
                  %s3246 = sphi 0, %s3250
                  %p3247 = scmp.ge.s32.totalorder %s3246, 1
                  %s3251 = sphi %s3153, %s3153
                  %s3252 = sphi %s3212, %s3212
                $region123: #{pvcnet_forward.2} parent=112 // loop_header_branch
                  %3249 = sbr.rel (%p3247) target = $region127
                $region124: #{pvcnet_forward.2} parent=112 // loop_body
                  %v3253 = vld [vmem:[%s3251] sm:%s3244]
                  %3254 = vst [vmem:[%s3252] sm:%s3244] %v3253
                  %v3255 = vld [vmem:[%s3251 + $0x4] sm:%s3244]
                  %3256 = vst [vmem:[%s3252 + $0x8] sm:%s3244] %v3255
                $region125: #{pvcnet_forward.2} parent=112 // loop_footer
                  %s3250 = sadd.s32 1, %s3246
                $region126: #{pvcnet_forward.2} parent=112 // loop_footer_branch
                  %3245 = sbr.rel target = $region122
                $region127: #{pvcnet_forward.2} parent=112 // loop_exit
                  _
              $region113: #{pvcnet_forward.2} parent=97 // pred_fallthru
                _
            $region98: #{pvcnet_forward.2} parent=93 // pred_fallthru
              _
            // Predicated region
            $region99: #{pvcnet_forward.2} parent=93 // pred_check
              _
            $region100: #{pvcnet_forward.2} parent=93 // pred_check_branch
              %3218 = sbr.rel (0) target = $region102
            $region101: #{pvcnet_forward.2} parent=93 // pred_region
              %s3220 = ssub.s32 16, 1
              loop: start=0, step=1, limit=1
              $region103: #{pvcnet_forward.2} parent=101 // loop_pre_header
                _
              $region104: #{pvcnet_forward.2} parent=101 // loop_header
                %s3222 = sphi 0, %s3226
                %p3223 = scmp.ge.s32.totalorder %s3222, 1
                %s3227 = sphi %s3153, %s3153
                %s3228 = sphi %s3212, %s3212
              $region105: #{pvcnet_forward.2} parent=101 // loop_header_branch
                %3225 = sbr.rel (%p3223) target = $region109
              $region106: #{pvcnet_forward.2} parent=101 // loop_body
                %v3229 = vld [vmem:[%s3227] sm:%s3220]
                %3230 = vst [vmem:[%s3228] sm:%s3220] %v3229
                %v3231 = vld [vmem:[%s3227 + $0x4] sm:%s3220]
                %3232 = vst [vmem:[%s3228 + $0x8] sm:%s3220] %v3231
              $region107: #{pvcnet_forward.2} parent=101 // loop_footer
                %s3226 = sadd.s32 1, %s3222
              $region108: #{pvcnet_forward.2} parent=101 // loop_footer_branch
                %3221 = sbr.rel target = $region104
              $region109: #{pvcnet_forward.2} parent=101 // loop_exit
                _
            $region102: #{pvcnet_forward.2} parent=93 // pred_fallthru
              _
          $region94: #{pvcnet_forward.2} parent=89 // pred_fallthru
            _
          %3257 = vnop
        $region90: #{pvcnet_forward.2} parent=47 // pred_fallthru
          _
      $region48: #{pvcnet_forward.2} parent=5 // pred_fallthru
        _
      %p3258 = scmp.le.s32.totalorder 2, %s15
      // Predicated region
      $region128: #{pvcnet_forward.2} parent=5 // pred_check
        %p3259 = pneg %p3258
      $region129: #{pvcnet_forward.2} parent=5 // pred_check_branch
        %3261 = sbr.rel (%p3259) target = $region131
      $region130: #{pvcnet_forward.2} parent=5 // pred_region
        %s3262 = ssub.s32 %s15, 2
        // Predicated region
        $region132: #{pvcnet_forward.2} parent=130 // pred_check
          %p3263 = pneg %p210
        $region133: #{pvcnet_forward.2} parent=130 // pred_check_branch
          %3265 = sbr.rel (%p3263) target = $region135
        $region134: #{pvcnet_forward.2} parent=130 // pred_region
          %s3266 = sand.u32 %s195, 1
          %s3267 = sand.u32 %s195, 1
          %s3268 = smul.addr %s3267, 32
          %s3269 = scalar_lea.vmem [#allocation2], %s3268
        $region135: #{pvcnet_forward.2} parent=130 // pred_fallthru
          _
        // Predicated region
        $region136: #{pvcnet_forward.2} parent=130 // pred_check
          %p3270 = pneg %p238
        $region137: #{pvcnet_forward.2} parent=130 // pred_check_branch
          %3272 = sbr.rel (%p3270) target = $region139
        $region138: #{pvcnet_forward.2} parent=130 // pred_region
          %s3273 = sand.u32 %s223, 1
          %s3274 = sand.u32 %s223, 1
          %s3275 = smul.addr %s3274, 8
          %s3276 = scalar_lea.vmem [#allocation3], %s3275
        $region139: #{pvcnet_forward.2} parent=130 // pred_fallthru
          _
      $region131: #{pvcnet_forward.2} parent=5 // pred_fallthru
        _
    $region6: #{pvcnet_forward.2} parent=1 // loop_footer
      %s19 = sadd.s32 1, %s15
    $region7: #{pvcnet_forward.2} parent=1 // loop_footer_branch
      %14 = sbr.rel target = $region3
    $region8: #{pvcnet_forward.2} parent=1 // loop_exit
      _

// kernel: squeeze.5
$region0: #{squeeze.5}
  %s0 = inlined_call_operand.vmem [shape: f32[1,2,16,256], index: 0, kind: input, shape index: {}]
  %s1 = inlined_call_operand.hbm [shape: f32[2,1,16,16,16], index: 1, kind: output, shape index: {}]
  $region1: #{squeeze.5} parent=0
    #allocation0 [shape = 'u8[262144]{0}', space=vmem, size = 0x40000, scoped, tag = 'operand span for operand 1']
    #allocation1 [shape = 's32[1]{0}', space=sflag, size = 0x4, scoped, tag = 'scoped memory for squeeze.5']
    %2 = vsyncpa [#allocation1], 0
    %v3 = vld [vmem:[%s0] sm:$0xff]
    %vm4 = vcmask 130048
    %5 = vst.msk [vmem:[#allocation0] ss:$16 sm:$0x3] %vm4, %v3
    %6 = vst.msk [vmem:[#allocation0] ss:$16 sm:$0xc] %vm4, %v3
    %7 = vst.msk [vmem:[#allocation0] ss:$16 sm:$0x30] %vm4, %v3
    %8 = vst.msk [vmem:[#allocation0] ss:$16 sm:$0xc0] %vm4, %v3
    %s9 = scalar_lea.vmem %s0, 8
    %v10 = vld [vmem:[%s9] sm:$0xff]
    %vm11 = vcmask 130048
    %s12 = scalar_lea.vmem [#allocation0], 8
    %13 = vst.msk [vmem:[%s12] ss:$16 sm:$0x3] %vm11, %v10
    %s14 = scalar_lea.vmem [#allocation0], 8
    %15 = vst.msk [vmem:[%s14] ss:$16 sm:$0xc] %vm11, %v10
    %s16 = scalar_lea.vmem [#allocation0], 8
    %17 = vst.msk [vmem:[%s16] ss:$16 sm:$0x30] %vm11, %v10
    %s18 = scalar_lea.vmem [#allocation0], 8
    %19 = vst.msk [vmem:[%s18] ss:$16 sm:$0xc0] %vm11, %v10
    %s20 = scalar_lea.vmem %s0, 16
    %v21 = vld [vmem:[%s20] sm:$0xff]
    %vm22 = vcmask 130048
    %s23 = scalar_lea.vmem [#allocation0], 128
    %24 = vst.msk [vmem:[%s23] ss:$16 sm:$0x3] %vm22, %v21
    %s25 = scalar_lea.vmem [#allocation0], 128
    %26 = vst.msk [vmem:[%s25] ss:$16 sm:$0xc] %vm22, %v21
    %s27 = scalar_lea.vmem [#allocation0], 128
    %28 = vst.msk [vmem:[%s27] ss:$16 sm:$0x30] %vm22, %v21
    %s29 = scalar_lea.vmem [#allocation0], 128
    %30 = vst.msk [vmem:[%s29] ss:$16 sm:$0xc0] %vm22, %v21
    %s31 = scalar_lea.vmem %s0, 24
    %v32 = vld [vmem:[%s31] sm:$0xff]
    %vm33 = vcmask 130048
    %s34 = scalar_lea.vmem [#allocation0], 136
    %35 = vst.msk [vmem:[%s34] ss:$16 sm:$0x3] %vm33, %v32
    %s36 = scalar_lea.vmem [#allocation0], 136
    %37 = vst.msk [vmem:[%s36] ss:$16 sm:$0xc] %vm33, %v32
    %s38 = scalar_lea.vmem [#allocation0], 136
    %39 = vst.msk [vmem:[%s38] ss:$16 sm:$0x30] %vm33, %v32
    %s40 = scalar_lea.vmem [#allocation0], 136
    %41 = vst.msk [vmem:[%s40] ss:$16 sm:$0xc0] %vm33, %v32
    %s42 = scalar_lea.vmem %s0, 32
    %v43 = vld [vmem:[%s42] sm:$0xff]
    %vm44 = vcmask 130048
    %s45 = scalar_lea.vmem [#allocation0], 256
    %46 = vst.msk [vmem:[%s45] ss:$16 sm:$0x3] %vm44, %v43
    %s47 = scalar_lea.vmem [#allocation0], 256
    %48 = vst.msk [vmem:[%s47] ss:$16 sm:$0xc] %vm44, %v43
    %s49 = scalar_lea.vmem [#allocation0], 256
    %50 = vst.msk [vmem:[%s49] ss:$16 sm:$0x30] %vm44, %v43
    %s51 = scalar_lea.vmem [#allocation0], 256
    %52 = vst.msk [vmem:[%s51] ss:$16 sm:$0xc0] %vm44, %v43
    %s53 = scalar_lea.vmem %s0, 40
    %v54 = vld [vmem:[%s53] sm:$0xff]
    %vm55 = vcmask 130048
    %s56 = scalar_lea.vmem [#allocation0], 264
    %57 = vst.msk [vmem:[%s56] ss:$16 sm:$0x3] %vm55, %v54
    %s58 = scalar_lea.vmem [#allocation0], 264
    %59 = vst.msk [vmem:[%s58] ss:$16 sm:$0xc] %vm55, %v54
    %s60 = scalar_lea.vmem [#allocation0], 264
    %61 = vst.msk [vmem:[%s60] ss:$16 sm:$0x30] %vm55, %v54
    %s62 = scalar_lea.vmem [#allocation0], 264
    %63 = vst.msk [vmem:[%s62] ss:$16 sm:$0xc0] %vm55, %v54
    %s64 = scalar_lea.vmem %s0, 48
    %v65 = vld [vmem:[%s64] sm:$0xff]
    %vm66 = vcmask 130048
    %s67 = scalar_lea.vmem [#allocation0], 384
    %68 = vst.msk [vmem:[%s67] ss:$16 sm:$0x3] %vm66, %v65
    %s69 = scalar_lea.vmem [#allocation0], 384
    %70 = vst.msk [vmem:[%s69] ss:$16 sm:$0xc] %vm66, %v65
    %s71 = scalar_lea.vmem [#allocation0], 384
    %72 = vst.msk [vmem:[%s71] ss:$16 sm:$0x30] %vm66, %v65
    %s73 = scalar_lea.vmem [#allocation0], 384
    %74 = vst.msk [vmem:[%s73] ss:$16 sm:$0xc0] %vm66, %v65
    %s75 = scalar_lea.vmem %s0, 56
    %v76 = vld [vmem:[%s75] sm:$0xff]
    %vm77 = vcmask 130048
    %s78 = scalar_lea.vmem [#allocation0], 392
    %79 = vst.msk [vmem:[%s78] ss:$16 sm:$0x3] %vm77, %v76
    %s80 = scalar_lea.vmem [#allocation0], 392
    %81 = vst.msk [vmem:[%s80] ss:$16 sm:$0xc] %vm77, %v76
    %s82 = scalar_lea.vmem [#allocation0], 392
    %83 = vst.msk [vmem:[%s82] ss:$16 sm:$0x30] %vm77, %v76
    %s84 = scalar_lea.vmem [#allocation0], 392
    %85 = vst.msk [vmem:[%s84] ss:$16 sm:$0xc0] %vm77, %v76
    %v86 = vld.sshfl [vmem:[%s0] sm:$0xff pattern:$0xb3a29180]
    %87 = vrot.lane.b32.xlu0 %v86, 112
    %v88 = vpop.permute.xlu0 %87
    %vm89 = vcmask 130048
    %s90 = scalar_lea.vmem [#allocation0], 1
    %91 = vst.msk [vmem:[%s90] ss:$8 sm:$0xf] %vm89, %v88
    %s92 = scalar_lea.vmem [#allocation0], 1
    %93 = vst.msk [vmem:[%s92] ss:$8 sm:$0xf0] %vm89, %v88
    %s94 = scalar_lea.vmem %s0, 4
    %v95 = vld.sshfl [vmem:[%s94] sm:$0xff pattern:$0xb3a29180]
    %96 = vrot.lane.b32.xlu0 %v95, 112
    %v97 = vpop.permute.xlu0 %96
    %vm98 = vcmask 130048
    %s99 = scalar_lea.vmem [#allocation0], 65
    %100 = vst.msk [vmem:[%s99] ss:$8 sm:$0xf] %vm98, %v97
    %s101 = scalar_lea.vmem [#allocation0], 65
    %102 = vst.msk [vmem:[%s101] ss:$8 sm:$0xf0] %vm98, %v97
    %s103 = scalar_lea.vmem %s0, 16
    %v104 = vld.sshfl [vmem:[%s103] sm:$0xff pattern:$0xb3a29180]
    %105 = vrot.lane.b32.xlu0 %v104, 112
    %v106 = vpop.permute.xlu0 %105
    %vm107 = vcmask 130048
    %s108 = scalar_lea.vmem [#allocation0], 129
    %109 = vst.msk [vmem:[%s108] ss:$8 sm:$0xf] %vm107, %v106
    %s110 = scalar_lea.vmem [#allocation0], 129
    %111 = vst.msk [vmem:[%s110] ss:$8 sm:$0xf0] %vm107, %v106
    %s112 = scalar_lea.vmem %s0, 20
    %v113 = vld.sshfl [vmem:[%s112] sm:$0xff pattern:$0xb3a29180]
    %114 = vrot.lane.b32.xlu0 %v113, 112
    %v115 = vpop.permute.xlu0 %114
    %vm116 = vcmask 130048
    %s117 = scalar_lea.vmem [#allocation0], 193
    %118 = vst.msk [vmem:[%s117] ss:$8 sm:$0xf] %vm116, %v115
    %s119 = scalar_lea.vmem [#allocation0], 193
    %120 = vst.msk [vmem:[%s119] ss:$8 sm:$0xf0] %vm116, %v115
    %s121 = scalar_lea.vmem %s0, 32
    %v122 = vld.sshfl [vmem:[%s121] sm:$0xff pattern:$0xb3a29180]
    %123 = vrot.lane.b32.xlu0 %v122, 112
    %v124 = vpop.permute.xlu0 %123
    %vm125 = vcmask 130048
    %s126 = scalar_lea.vmem [#allocation0], 257
    %127 = vst.msk [vmem:[%s126] ss:$8 sm:$0xf] %vm125, %v124
    %s128 = scalar_lea.vmem [#allocation0], 257
    %129 = vst.msk [vmem:[%s128] ss:$8 sm:$0xf0] %vm125, %v124
    %s130 = scalar_lea.vmem %s0, 36
    %v131 = vld.sshfl [vmem:[%s130] sm:$0xff pattern:$0xb3a29180]
    %132 = vrot.lane.b32.xlu0 %v131, 112
    %v133 = vpop.permute.xlu0 %132
    %vm134 = vcmask 130048
    %s135 = scalar_lea.vmem [#allocation0], 321
    %136 = vst.msk [vmem:[%s135] ss:$8 sm:$0xf] %vm134, %v133
    %s137 = scalar_lea.vmem [#allocation0], 321
    %138 = vst.msk [vmem:[%s137] ss:$8 sm:$0xf0] %vm134, %v133
    %s139 = scalar_lea.vmem %s0, 48
    %v140 = vld.sshfl [vmem:[%s139] sm:$0xff pattern:$0xb3a29180]
    %141 = vrot.lane.b32.xlu0 %v140, 112
    %v142 = vpop.permute.xlu0 %141
    %vm143 = vcmask 130048
    %s144 = scalar_lea.vmem [#allocation0], 385
    %145 = vst.msk [vmem:[%s144] ss:$8 sm:$0xf] %vm143, %v142
    %s146 = scalar_lea.vmem [#allocation0], 385
    %147 = vst.msk [vmem:[%s146] ss:$8 sm:$0xf0] %vm143, %v142
    %s148 = scalar_lea.vmem %s0, 52
    %v149 = vld.sshfl [vmem:[%s148] sm:$0xff pattern:$0xb3a29180]
    %150 = vrot.lane.b32.xlu0 %v149, 112
    %v151 = vpop.permute.xlu0 %150
    %vm152 = vcmask 130048
    %s153 = scalar_lea.vmem [#allocation0], 449
    %154 = vst.msk [vmem:[%s153] ss:$8 sm:$0xf] %vm152, %v151
    %s155 = scalar_lea.vmem [#allocation0], 449
    %156 = vst.msk [vmem:[%s155] ss:$8 sm:$0xf0] %vm152, %v151
    %v157 = vld.sshfl [vmem:[%s0] sm:$0xff pattern:$0xb3a29180]
    %158 = vrot.lane.b32.xlu0 %v157, 96
    %v159 = vpop.permute.xlu0 %158
    %vm160 = vcmask 130048
    %s161 = scalar_lea.vmem [#allocation0], 2
    %162 = vst.msk [vmem:[%s161] ss:$8 sm:$0xf] %vm160, %v159
    %s163 = scalar_lea.vmem [#allocation0], 2
    %164 = vst.msk [vmem:[%s163] ss:$8 sm:$0xf0] %vm160, %v159
    %s165 = scalar_lea.vmem %s0, 4
    %v166 = vld.sshfl [vmem:[%s165] sm:$0xff pattern:$0xb3a29180]
    %167 = vrot.lane.b32.xlu0 %v166, 96
    %v168 = vpop.permute.xlu0 %167
    %vm169 = vcmask 130048
    %s170 = scalar_lea.vmem [#allocation0], 66
    %171 = vst.msk [vmem:[%s170] ss:$8 sm:$0xf] %vm169, %v168
    %s172 = scalar_lea.vmem [#allocation0], 66
    %173 = vst.msk [vmem:[%s172] ss:$8 sm:$0xf0] %vm169, %v168
    %s174 = scalar_lea.vmem %s0, 16
    %v175 = vld.sshfl [vmem:[%s174] sm:$0xff pattern:$0xb3a29180]
    %176 = vrot.lane.b32.xlu0 %v175, 96
    %v177 = vpop.permute.xlu0 %176
    %vm178 = vcmask 130048
    %s179 = scalar_lea.vmem [#allocation0], 130
    %180 = vst.msk [vmem:[%s179] ss:$8 sm:$0xf] %vm178, %v177
    %s181 = scalar_lea.vmem [#allocation0], 130
    %182 = vst.msk [vmem:[%s181] ss:$8 sm:$0xf0] %vm178, %v177
    %s183 = scalar_lea.vmem %s0, 20
    %v184 = vld.sshfl [vmem:[%s183] sm:$0xff pattern:$0xb3a29180]
    %185 = vrot.lane.b32.xlu0 %v184, 96
    %v186 = vpop.permute.xlu0 %185
    %vm187 = vcmask 130048
    %s188 = scalar_lea.vmem [#allocation0], 194
    %189 = vst.msk [vmem:[%s188] ss:$8 sm:$0xf] %vm187, %v186
    %s190 = scalar_lea.vmem [#allocation0], 194
    %191 = vst.msk [vmem:[%s190] ss:$8 sm:$0xf0] %vm187, %v186
    %s192 = scalar_lea.vmem %s0, 32
    %v193 = vld.sshfl [vmem:[%s192] sm:$0xff pattern:$0xb3a29180]
    %194 = vrot.lane.b32.xlu0 %v193, 96
    %v195 = vpop.permute.xlu0 %194
    %vm196 = vcmask 130048
    %s197 = scalar_lea.vmem [#allocation0], 258
    %198 = vst.msk [vmem:[%s197] ss:$8 sm:$0xf] %vm196, %v195
    %s199 = scalar_lea.vmem [#allocation0], 258
    %200 = vst.msk [vmem:[%s199] ss:$8 sm:$0xf0] %vm196, %v195
    %s201 = scalar_lea.vmem %s0, 36
    %v202 = vld.sshfl [vmem:[%s201] sm:$0xff pattern:$0xb3a29180]
    %203 = vrot.lane.b32.xlu0 %v202, 96
    %v204 = vpop.permute.xlu0 %203
    %vm205 = vcmask 130048
    %s206 = scalar_lea.vmem [#allocation0], 322
    %207 = vst.msk [vmem:[%s206] ss:$8 sm:$0xf] %vm205, %v204
    %s208 = scalar_lea.vmem [#allocation0], 322
    %209 = vst.msk [vmem:[%s208] ss:$8 sm:$0xf0] %vm205, %v204
    %s210 = scalar_lea.vmem %s0, 48
    %v211 = vld.sshfl [vmem:[%s210] sm:$0xff pattern:$0xb3a29180]
    %212 = vrot.lane.b32.xlu0 %v211, 96
    %v213 = vpop.permute.xlu0 %212
    %vm214 = vcmask 130048
    %s215 = scalar_lea.vmem [#allocation0], 386
    %216 = vst.msk [vmem:[%s215] ss:$8 sm:$0xf] %vm214, %v213
    %s217 = scalar_lea.vmem [#allocation0], 386
    %218 = vst.msk [vmem:[%s217] ss:$8 sm:$0xf0] %vm214, %v213
    %s219 = scalar_lea.vmem %s0, 52
    %v220 = vld.sshfl [vmem:[%s219] sm:$0xff pattern:$0xb3a29180]
    %221 = vrot.lane.b32.xlu0 %v220, 96
    %v222 = vpop.permute.xlu0 %221
    %vm223 = vcmask 130048
    %s224 = scalar_lea.vmem [#allocation0], 450
    %225 = vst.msk [vmem:[%s224] ss:$8 sm:$0xf] %vm223, %v222
    %s226 = scalar_lea.vmem [#allocation0], 450
    %227 = vst.msk [vmem:[%s226] ss:$8 sm:$0xf0] %vm223, %v222
    %v228 = vld.sshfl [vmem:[%s0] sm:$0xff pattern:$0xb3a29180]
    %229 = vrot.lane.b32.xlu0 %v228, 80
    %v230 = vpop.permute.xlu0 %229
    %vm231 = vcmask 130048
    %s232 = scalar_lea.vmem [#allocation0], 3
    %233 = vst.msk [vmem:[%s232] ss:$8 sm:$0xf] %vm231, %v230
    %s234 = scalar_lea.vmem [#allocation0], 3
    %235 = vst.msk [vmem:[%s234] ss:$8 sm:$0xf0] %vm231, %v230
    %s236 = scalar_lea.vmem %s0, 4
    %v237 = vld.sshfl [vmem:[%s236] sm:$0xff pattern:$0xb3a29180]
    %238 = vrot.lane.b32.xlu0 %v237, 80
    %v239 = vpop.permute.xlu0 %238
    %vm240 = vcmask 130048
    %s241 = scalar_lea.vmem [#allocation0], 67
    %242 = vst.msk [vmem:[%s241] ss:$8 sm:$0xf] %vm240, %v239
    %s243 = scalar_lea.vmem [#allocation0], 67
    %244 = vst.msk [vmem:[%s243] ss:$8 sm:$0xf0] %vm240, %v239
    %s245 = scalar_lea.vmem %s0, 16
    %v246 = vld.sshfl [vmem:[%s245] sm:$0xff pattern:$0xb3a29180]
    %247 = vrot.lane.b32.xlu0 %v246, 80
    %v248 = vpop.permute.xlu0 %247
    %vm249 = vcmask 130048
    %s250 = scalar_lea.vmem [#allocation0], 131
    %251 = vst.msk [vmem:[%s250] ss:$8 sm:$0xf] %vm249, %v248
    %s252 = scalar_lea.vmem [#allocation0], 131
    %253 = vst.msk [vmem:[%s252] ss:$8 sm:$0xf0] %vm249, %v248
    %s254 = scalar_lea.vmem %s0, 20
    %v255 = vld.sshfl [vmem:[%s254] sm:$0xff pattern:$0xb3a29180]
    %256 = vrot.lane.b32.xlu0 %v255, 80
    %v257 = vpop.permute.xlu0 %256
    %vm258 = vcmask 130048
    %s259 = scalar_lea.vmem [#allocation0], 195
    %260 = vst.msk [vmem:[%s259] ss:$8 sm:$0xf] %vm258, %v257
    %s261 = scalar_lea.vmem [#allocation0], 195
    %262 = vst.msk [vmem:[%s261] ss:$8 sm:$0xf0] %vm258, %v257
    %s263 = scalar_lea.vmem %s0, 32
    %v264 = vld.sshfl [vmem:[%s263] sm:$0xff pattern:$0xb3a29180]
    %265 = vrot.lane.b32.xlu0 %v264, 80
    %v266 = vpop.permute.xlu0 %265
    %vm267 = vcmask 130048
    %s268 = scalar_lea.vmem [#allocation0], 259
    %269 = vst.msk [vmem:[%s268] ss:$8 sm:$0xf] %vm267, %v266
    %s270 = scalar_lea.vmem [#allocation0], 259
    %271 = vst.msk [vmem:[%s270] ss:$8 sm:$0xf0] %vm267, %v266
    %s272 = scalar_lea.vmem %s0, 36
    %v273 = vld.sshfl [vmem:[%s272] sm:$0xff pattern:$0xb3a29180]
    %274 = vrot.lane.b32.xlu0 %v273, 80
    %v275 = vpop.permute.xlu0 %274
    %vm276 = vcmask 130048
    %s277 = scalar_lea.vmem [#allocation0], 323
    %278 = vst.msk [vmem:[%s277] ss:$8 sm:$0xf] %vm276, %v275
    %s279 = scalar_lea.vmem [#allocation0], 323
    %280 = vst.msk [vmem:[%s279] ss:$8 sm:$0xf0] %vm276, %v275
    %s281 = scalar_lea.vmem %s0, 48
    %v282 = vld.sshfl [vmem:[%s281] sm:$0xff pattern:$0xb3a29180]
    %283 = vrot.lane.b32.xlu0 %v282, 80
    %v284 = vpop.permute.xlu0 %283
    %vm285 = vcmask 130048
    %s286 = scalar_lea.vmem [#allocation0], 387
    %287 = vst.msk [vmem:[%s286] ss:$8 sm:$0xf] %vm285, %v284
    %s288 = scalar_lea.vmem [#allocation0], 387
    %289 = vst.msk [vmem:[%s288] ss:$8 sm:$0xf0] %vm285, %v284
    %s290 = scalar_lea.vmem %s0, 52
    %v291 = vld.sshfl [vmem:[%s290] sm:$0xff pattern:$0xb3a29180]
    %292 = vrot.lane.b32.xlu0 %v291, 80
    %v293 = vpop.permute.xlu0 %292
    %vm294 = vcmask 130048
    %s295 = scalar_lea.vmem [#allocation0], 451
    %296 = vst.msk [vmem:[%s295] ss:$8 sm:$0xf] %vm294, %v293
    %s297 = scalar_lea.vmem [#allocation0], 451
    %298 = vst.msk [vmem:[%s297] ss:$8 sm:$0xf0] %vm294, %v293
    %v299 = vld.sshfl [vmem:[%s0] sm:$0xff pattern:$0xb3a29180]
    %300 = vrot.lane.b32.xlu0 %v299, 64
    %v301 = vpop.permute.xlu0 %300
    %vm302 = vcmask 130048
    %s303 = scalar_lea.vmem [#allocation0], 4
    %304 = vst.msk [vmem:[%s303] ss:$8 sm:$0xf] %vm302, %v301
    %s305 = scalar_lea.vmem [#allocation0], 4
    %306 = vst.msk [vmem:[%s305] ss:$8 sm:$0xf0] %vm302, %v301
    %s307 = scalar_lea.vmem %s0, 4
    %v308 = vld.sshfl [vmem:[%s307] sm:$0xff pattern:$0xb3a29180]
    %309 = vrot.lane.b32.xlu0 %v308, 64
    %v310 = vpop.permute.xlu0 %309
    %vm311 = vcmask 130048
    %s312 = scalar_lea.vmem [#allocation0], 68
    %313 = vst.msk [vmem:[%s312] ss:$8 sm:$0xf] %vm311, %v310
    %s314 = scalar_lea.vmem [#allocation0], 68
    %315 = vst.msk [vmem:[%s314] ss:$8 sm:$0xf0] %vm311, %v310
    %s316 = scalar_lea.vmem %s0, 16
    %v317 = vld.sshfl [vmem:[%s316] sm:$0xff pattern:$0xb3a29180]
    %318 = vrot.lane.b32.xlu0 %v317, 64
    %v319 = vpop.permute.xlu0 %318
    %vm320 = vcmask 130048
    %s321 = scalar_lea.vmem [#allocation0], 132
    %322 = vst.msk [vmem:[%s321] ss:$8 sm:$0xf] %vm320, %v319
    %s323 = scalar_lea.vmem [#allocation0], 132
    %324 = vst.msk [vmem:[%s323] ss:$8 sm:$0xf0] %vm320, %v319
    %s325 = scalar_lea.vmem %s0, 20
    %v326 = vld.sshfl [vmem:[%s325] sm:$0xff pattern:$0xb3a29180]
    %327 = vrot.lane.b32.xlu0 %v326, 64
    %v328 = vpop.permute.xlu0 %327
    %vm329 = vcmask 130048
    %s330 = scalar_lea.vmem [#allocation0], 196
    %331 = vst.msk [vmem:[%s330] ss:$8 sm:$0xf] %vm329, %v328
    %s332 = scalar_lea.vmem [#allocation0], 196
    %333 = vst.msk [vmem:[%s332] ss:$8 sm:$0xf0] %vm329, %v328
    %s334 = scalar_lea.vmem %s0, 32
    %v335 = vld.sshfl [vmem:[%s334] sm:$0xff pattern:$0xb3a29180]
    %336 = vrot.lane.b32.xlu0 %v335, 64
    %v337 = vpop.permute.xlu0 %336
    %vm338 = vcmask 130048
    %s339 = scalar_lea.vmem [#allocation0], 260
    %340 = vst.msk [vmem:[%s339] ss:$8 sm:$0xf] %vm338, %v337
    %s341 = scalar_lea.vmem [#allocation0], 260
    %342 = vst.msk [vmem:[%s341] ss:$8 sm:$0xf0] %vm338, %v337
    %s343 = scalar_lea.vmem %s0, 36
    %v344 = vld.sshfl [vmem:[%s343] sm:$0xff pattern:$0xb3a29180]
    %345 = vrot.lane.b32.xlu0 %v344, 64
    %v346 = vpop.permute.xlu0 %345
    %vm347 = vcmask 130048
    %s348 = scalar_lea.vmem [#allocation0], 324
    %349 = vst.msk [vmem:[%s348] ss:$8 sm:$0xf] %vm347, %v346
    %s350 = scalar_lea.vmem [#allocation0], 324
    %351 = vst.msk [vmem:[%s350] ss:$8 sm:$0xf0] %vm347, %v346
    %s352 = scalar_lea.vmem %s0, 48
    %v353 = vld.sshfl [vmem:[%s352] sm:$0xff pattern:$0xb3a29180]
    %354 = vrot.lane.b32.xlu0 %v353, 64
    %v355 = vpop.permute.xlu0 %354
    %vm356 = vcmask 130048
    %s357 = scalar_lea.vmem [#allocation0], 388
    %358 = vst.msk [vmem:[%s357] ss:$8 sm:$0xf] %vm356, %v355
    %s359 = scalar_lea.vmem [#allocation0], 388
    %360 = vst.msk [vmem:[%s359] ss:$8 sm:$0xf0] %vm356, %v355
    %s361 = scalar_lea.vmem %s0, 52
    %v362 = vld.sshfl [vmem:[%s361] sm:$0xff pattern:$0xb3a29180]
    %363 = vrot.lane.b32.xlu0 %v362, 64
    %v364 = vpop.permute.xlu0 %363
    %vm365 = vcmask 130048
    %s366 = scalar_lea.vmem [#allocation0], 452
    %367 = vst.msk [vmem:[%s366] ss:$8 sm:$0xf] %vm365, %v364
    %s368 = scalar_lea.vmem [#allocation0], 452
    %369 = vst.msk [vmem:[%s368] ss:$8 sm:$0xf0] %vm365, %v364
    %v370 = vld.sshfl [vmem:[%s0] sm:$0xff pattern:$0xb3a29180]
    %371 = vrot.lane.b32.xlu0 %v370, 48
    %v372 = vpop.permute.xlu0 %371
    %vm373 = vcmask 130048
    %s374 = scalar_lea.vmem [#allocation0], 5
    %375 = vst.msk [vmem:[%s374] ss:$8 sm:$0xf] %vm373, %v372
    %s376 = scalar_lea.vmem [#allocation0], 5
    %377 = vst.msk [vmem:[%s376] ss:$8 sm:$0xf0] %vm373, %v372
    %s378 = scalar_lea.vmem %s0, 4
    %v379 = vld.sshfl [vmem:[%s378] sm:$0xff pattern:$0xb3a29180]
    %380 = vrot.lane.b32.xlu0 %v379, 48
    %v381 = vpop.permute.xlu0 %380
    %vm382 = vcmask 130048
    %s383 = scalar_lea.vmem [#allocation0], 69
    %384 = vst.msk [vmem:[%s383] ss:$8 sm:$0xf] %vm382, %v381
    %s385 = scalar_lea.vmem [#allocation0], 69
    %386 = vst.msk [vmem:[%s385] ss:$8 sm:$0xf0] %vm382, %v381
    %s387 = scalar_lea.vmem %s0, 16
    %v388 = vld.sshfl [vmem:[%s387] sm:$0xff pattern:$0xb3a29180]
    %389 = vrot.lane.b32.xlu0 %v388, 48
    %v390 = vpop.permute.xlu0 %389
    %vm391 = vcmask 130048
    %s392 = scalar_lea.vmem [#allocation0], 133
    %393 = vst.msk [vmem:[%s392] ss:$8 sm:$0xf] %vm391, %v390
    %s394 = scalar_lea.vmem [#allocation0], 133
    %395 = vst.msk [vmem:[%s394] ss:$8 sm:$0xf0] %vm391, %v390
    %s396 = scalar_lea.vmem %s0, 20
    %v397 = vld.sshfl [vmem:[%s396] sm:$0xff pattern:$0xb3a29180]
    %398 = vrot.lane.b32.xlu0 %v397, 48
    %v399 = vpop.permute.xlu0 %398
    %vm400 = vcmask 130048
    %s401 = scalar_lea.vmem [#allocation0], 197
    %402 = vst.msk [vmem:[%s401] ss:$8 sm:$0xf] %vm400, %v399
    %s403 = scalar_lea.vmem [#allocation0], 197
    %404 = vst.msk [vmem:[%s403] ss:$8 sm:$0xf0] %vm400, %v399
    %s405 = scalar_lea.vmem %s0, 32
    %v406 = vld.sshfl [vmem:[%s405] sm:$0xff pattern:$0xb3a29180]
    %407 = vrot.lane.b32.xlu0 %v406, 48
    %v408 = vpop.permute.xlu0 %407
    %vm409 = vcmask 130048
    %s410 = scalar_lea.vmem [#allocation0], 261
    %411 = vst.msk [vmem:[%s410] ss:$8 sm:$0xf] %vm409, %v408
    %s412 = scalar_lea.vmem [#allocation0], 261
    %413 = vst.msk [vmem:[%s412] ss:$8 sm:$0xf0] %vm409, %v408
    %s414 = scalar_lea.vmem %s0, 36
    %v415 = vld.sshfl [vmem:[%s414] sm:$0xff pattern:$0xb3a29180]
    %416 = vrot.lane.b32.xlu0 %v415, 48
    %v417 = vpop.permute.xlu0 %416
    %vm418 = vcmask 130048
    %s419 = scalar_lea.vmem [#allocation0], 325
    %420 = vst.msk [vmem:[%s419] ss:$8 sm:$0xf] %vm418, %v417
    %s421 = scalar_lea.vmem [#allocation0], 325
    %422 = vst.msk [vmem:[%s421] ss:$8 sm:$0xf0] %vm418, %v417
    %s423 = scalar_lea.vmem %s0, 48
    %v424 = vld.sshfl [vmem:[%s423] sm:$0xff pattern:$0xb3a29180]
    %425 = vrot.lane.b32.xlu0 %v424, 48
    %v426 = vpop.permute.xlu0 %425
    %vm427 = vcmask 130048
    %s428 = scalar_lea.vmem [#allocation0], 389
    %429 = vst.msk [vmem:[%s428] ss:$8 sm:$0xf] %vm427, %v426
    %s430 = scalar_lea.vmem [#allocation0], 389
    %431 = vst.msk [vmem:[%s430] ss:$8 sm:$0xf0] %vm427, %v426
    %s432 = scalar_lea.vmem %s0, 52
    %v433 = vld.sshfl [vmem:[%s432] sm:$0xff pattern:$0xb3a29180]
    %434 = vrot.lane.b32.xlu0 %v433, 48
    %v435 = vpop.permute.xlu0 %434
    %vm436 = vcmask 130048
    %s437 = scalar_lea.vmem [#allocation0], 453
    %438 = vst.msk [vmem:[%s437] ss:$8 sm:$0xf] %vm436, %v435
    %s439 = scalar_lea.vmem [#allocation0], 453
    %440 = vst.msk [vmem:[%s439] ss:$8 sm:$0xf0] %vm436, %v435
    %v441 = vld.sshfl [vmem:[%s0] sm:$0xff pattern:$0xb3a29180]
    %442 = vrot.lane.b32.xlu0 %v441, 32
    %v443 = vpop.permute.xlu0 %442
    %vm444 = vcmask 130048
    %s445 = scalar_lea.vmem [#allocation0], 6
    %446 = vst.msk [vmem:[%s445] ss:$8 sm:$0xf] %vm444, %v443
    %s447 = scalar_lea.vmem [#allocation0], 6
    %448 = vst.msk [vmem:[%s447] ss:$8 sm:$0xf0] %vm444, %v443
    %s449 = scalar_lea.vmem %s0, 4
    %v450 = vld.sshfl [vmem:[%s449] sm:$0xff pattern:$0xb3a29180]
    %451 = vrot.lane.b32.xlu0 %v450, 32
    %v452 = vpop.permute.xlu0 %451
    %vm453 = vcmask 130048
    %s454 = scalar_lea.vmem [#allocation0], 70
    %455 = vst.msk [vmem:[%s454] ss:$8 sm:$0xf] %vm453, %v452
    %s456 = scalar_lea.vmem [#allocation0], 70
    %457 = vst.msk [vmem:[%s456] ss:$8 sm:$0xf0] %vm453, %v452
    %s458 = scalar_lea.vmem %s0, 16
    %v459 = vld.sshfl [vmem:[%s458] sm:$0xff pattern:$0xb3a29180]
    %460 = vrot.lane.b32.xlu0 %v459, 32
    %v461 = vpop.permute.xlu0 %460
    %vm462 = vcmask 130048
    %s463 = scalar_lea.vmem [#allocation0], 134
    %464 = vst.msk [vmem:[%s463] ss:$8 sm:$0xf] %vm462, %v461
    %s465 = scalar_lea.vmem [#allocation0], 134
    %466 = vst.msk [vmem:[%s465] ss:$8 sm:$0xf0] %vm462, %v461
    %s467 = scalar_lea.vmem %s0, 20
    %v468 = vld.sshfl [vmem:[%s467] sm:$0xff pattern:$0xb3a29180]
    %469 = vrot.lane.b32.xlu0 %v468, 32
    %v470 = vpop.permute.xlu0 %469
    %vm471 = vcmask 130048
    %s472 = scalar_lea.vmem [#allocation0], 198
    %473 = vst.msk [vmem:[%s472] ss:$8 sm:$0xf] %vm471, %v470
    %s474 = scalar_lea.vmem [#allocation0], 198
    %475 = vst.msk [vmem:[%s474] ss:$8 sm:$0xf0] %vm471, %v470
    %s476 = scalar_lea.vmem %s0, 32
    %v477 = vld.sshfl [vmem:[%s476] sm:$0xff pattern:$0xb3a29180]
    %478 = vrot.lane.b32.xlu0 %v477, 32
    %v479 = vpop.permute.xlu0 %478
    %vm480 = vcmask 130048
    %s481 = scalar_lea.vmem [#allocation0], 262
    %482 = vst.msk [vmem:[%s481] ss:$8 sm:$0xf] %vm480, %v479
    %s483 = scalar_lea.vmem [#allocation0], 262
    %484 = vst.msk [vmem:[%s483] ss:$8 sm:$0xf0] %vm480, %v479
    %s485 = scalar_lea.vmem %s0, 36
    %v486 = vld.sshfl [vmem:[%s485] sm:$0xff pattern:$0xb3a29180]
    %487 = vrot.lane.b32.xlu0 %v486, 32
    %v488 = vpop.permute.xlu0 %487
    %vm489 = vcmask 130048
    %s490 = scalar_lea.vmem [#allocation0], 326
    %491 = vst.msk [vmem:[%s490] ss:$8 sm:$0xf] %vm489, %v488
    %s492 = scalar_lea.vmem [#allocation0], 326
    %493 = vst.msk [vmem:[%s492] ss:$8 sm:$0xf0] %vm489, %v488
    %s494 = scalar_lea.vmem %s0, 48
    %v495 = vld.sshfl [vmem:[%s494] sm:$0xff pattern:$0xb3a29180]
    %496 = vrot.lane.b32.xlu0 %v495, 32
    %v497 = vpop.permute.xlu0 %496
    %vm498 = vcmask 130048
    %s499 = scalar_lea.vmem [#allocation0], 390
    %500 = vst.msk [vmem:[%s499] ss:$8 sm:$0xf] %vm498, %v497
    %s501 = scalar_lea.vmem [#allocation0], 390
    %502 = vst.msk [vmem:[%s501] ss:$8 sm:$0xf0] %vm498, %v497
    %s503 = scalar_lea.vmem %s0, 52
    %v504 = vld.sshfl [vmem:[%s503] sm:$0xff pattern:$0xb3a29180]
    %505 = vrot.lane.b32.xlu0 %v504, 32
    %v506 = vpop.permute.xlu0 %505
    %vm507 = vcmask 130048
    %s508 = scalar_lea.vmem [#allocation0], 454
    %509 = vst.msk [vmem:[%s508] ss:$8 sm:$0xf] %vm507, %v506
    %s510 = scalar_lea.vmem [#allocation0], 454
    %511 = vst.msk [vmem:[%s510] ss:$8 sm:$0xf0] %vm507, %v506
    %v512 = vld.sshfl [vmem:[%s0] sm:$0xff pattern:$0xb3a29180]
    %513 = vrot.lane.b32.xlu0 %v512, 16
    %v514 = vpop.permute.xlu0 %513
    %vm515 = vcmask 130048
    %s516 = scalar_lea.vmem [#allocation0], 7
    %517 = vst.msk [vmem:[%s516] ss:$8 sm:$0xf] %vm515, %v514
    %s518 = scalar_lea.vmem [#allocation0], 7
    %519 = vst.msk [vmem:[%s518] ss:$8 sm:$0xf0] %vm515, %v514
    %s520 = scalar_lea.vmem %s0, 4
    %v521 = vld.sshfl [vmem:[%s520] sm:$0xff pattern:$0xb3a29180]
    %522 = vrot.lane.b32.xlu0 %v521, 16
    %v523 = vpop.permute.xlu0 %522
    %vm524 = vcmask 130048
    %s525 = scalar_lea.vmem [#allocation0], 71
    %526 = vst.msk [vmem:[%s525] ss:$8 sm:$0xf] %vm524, %v523
    %s527 = scalar_lea.vmem [#allocation0], 71
    %528 = vst.msk [vmem:[%s527] ss:$8 sm:$0xf0] %vm524, %v523
    %s529 = scalar_lea.vmem %s0, 16
    %v530 = vld.sshfl [vmem:[%s529] sm:$0xff pattern:$0xb3a29180]
    %531 = vrot.lane.b32.xlu0 %v530, 16
    %v532 = vpop.permute.xlu0 %531
    %vm533 = vcmask 130048
    %s534 = scalar_lea.vmem [#allocation0], 135
    %535 = vst.msk [vmem:[%s534] ss:$8 sm:$0xf] %vm533, %v532
    %s536 = scalar_lea.vmem [#allocation0], 135
    %537 = vst.msk [vmem:[%s536] ss:$8 sm:$0xf0] %vm533, %v532
    %s538 = scalar_lea.vmem %s0, 20
    %v539 = vld.sshfl [vmem:[%s538] sm:$0xff pattern:$0xb3a29180]
    %540 = vrot.lane.b32.xlu0 %v539, 16
    %v541 = vpop.permute.xlu0 %540
    %vm542 = vcmask 130048
    %s543 = scalar_lea.vmem [#allocation0], 199
    %544 = vst.msk [vmem:[%s543] ss:$8 sm:$0xf] %vm542, %v541
    %s545 = scalar_lea.vmem [#allocation0], 199
    %546 = vst.msk [vmem:[%s545] ss:$8 sm:$0xf0] %vm542, %v541
    %s547 = scalar_lea.vmem %s0, 32
    %v548 = vld.sshfl [vmem:[%s547] sm:$0xff pattern:$0xb3a29180]
    %549 = vrot.lane.b32.xlu0 %v548, 16
    %v550 = vpop.permute.xlu0 %549
    %vm551 = vcmask 130048
    %s552 = scalar_lea.vmem [#allocation0], 263
    %553 = vst.msk [vmem:[%s552] ss:$8 sm:$0xf] %vm551, %v550
    %s554 = scalar_lea.vmem [#allocation0], 263
    %555 = vst.msk [vmem:[%s554] ss:$8 sm:$0xf0] %vm551, %v550
    %s556 = scalar_lea.vmem %s0, 36
    %v557 = vld.sshfl [vmem:[%s556] sm:$0xff pattern:$0xb3a29180]
    %558 = vrot.lane.b32.xlu0 %v557, 16
    %v559 = vpop.permute.xlu0 %558
    %vm560 = vcmask 130048
    %s561 = scalar_lea.vmem [#allocation0], 327
    %562 = vst.msk [vmem:[%s561] ss:$8 sm:$0xf] %vm560, %v559
    %s563 = scalar_lea.vmem [#allocation0], 327
    %564 = vst.msk [vmem:[%s563] ss:$8 sm:$0xf0] %vm560, %v559
    %s565 = scalar_lea.vmem %s0, 48
    %v566 = vld.sshfl [vmem:[%s565] sm:$0xff pattern:$0xb3a29180]
    %567 = vrot.lane.b32.xlu0 %v566, 16
    %v568 = vpop.permute.xlu0 %567
    %vm569 = vcmask 130048
    %s570 = scalar_lea.vmem [#allocation0], 391
    %571 = vst.msk [vmem:[%s570] ss:$8 sm:$0xf] %vm569, %v568
    %s572 = scalar_lea.vmem [#allocation0], 391
    %573 = vst.msk [vmem:[%s572] ss:$8 sm:$0xf0] %vm569, %v568
    %s574 = scalar_lea.vmem %s0, 52
    %v575 = vld.sshfl [vmem:[%s574] sm:$0xff pattern:$0xb3a29180]
    %576 = vrot.lane.b32.xlu0 %v575, 16
    %v577 = vpop.permute.xlu0 %576
    %vm578 = vcmask 130048
    %s579 = scalar_lea.vmem [#allocation0], 455
    %580 = vst.msk [vmem:[%s579] ss:$8 sm:$0xf] %vm578, %v577
    %s581 = scalar_lea.vmem [#allocation0], 455
    %582 = vst.msk [vmem:[%s581] ss:$8 sm:$0xf0] %vm578, %v577
    %s584 = ssub.s32 8192, 8192
    %585 = vsyncadd [#allocation1], %s584
    %s587 = sshll.u32 [#allocation0], 4
    %s588 = int_to_ptr.vmem [resolvable:$true] %s587
    %590 = dma.vmem_to_hbm [thread:$0]  %s588, 8192, %s1, [#allocation1]
    %591 = dma.done [#allocation1], 8192
    %592 = vsyncpa [#allocation1], 1

// kernel: squeeze.4
$region0: #{squeeze.4}
  %s0 = inlined_call_operand.vmem [shape: f32[1,2,16,256], index: 0, kind: input, shape index: {}]
  %s1 = inlined_call_operand.hbm [shape: f32[2,16,16,16], index: 1, kind: output, shape index: {}]
  $region1: #{squeeze.4} parent=0
    #allocation0 [shape = 'u8[262144]{0}', space=vmem, size = 0x40000, scoped, tag = 'operand span for operand 1']
    #allocation1 [shape = 's32[1]{0}', space=sflag, size = 0x4, scoped, tag = 'scoped memory for squeeze.4']
    %2 = vsyncpa [#allocation1], 0
    %v3 = vld [vmem:[%s0] sm:$0xff]
    %vm4 = vcmask 130048
    %5 = vst.msk [vmem:[#allocation0] ss:$16 sm:$0x3] %vm4, %v3
    %6 = vst.msk [vmem:[#allocation0] ss:$16 sm:$0xc] %vm4, %v3
    %7 = vst.msk [vmem:[#allocation0] ss:$16 sm:$0x30] %vm4, %v3
    %8 = vst.msk [vmem:[#allocation0] ss:$16 sm:$0xc0] %vm4, %v3
    %s9 = scalar_lea.vmem %s0, 8
    %v10 = vld [vmem:[%s9] sm:$0xff]
    %vm11 = vcmask 130048
    %s12 = scalar_lea.vmem [#allocation0], 8
    %13 = vst.msk [vmem:[%s12] ss:$16 sm:$0x3] %vm11, %v10
    %s14 = scalar_lea.vmem [#allocation0], 8
    %15 = vst.msk [vmem:[%s14] ss:$16 sm:$0xc] %vm11, %v10
    %s16 = scalar_lea.vmem [#allocation0], 8
    %17 = vst.msk [vmem:[%s16] ss:$16 sm:$0x30] %vm11, %v10
    %s18 = scalar_lea.vmem [#allocation0], 8
    %19 = vst.msk [vmem:[%s18] ss:$16 sm:$0xc0] %vm11, %v10
    %s20 = scalar_lea.vmem %s0, 16
    %v21 = vld [vmem:[%s20] sm:$0xff]
    %vm22 = vcmask 130048
    %s23 = scalar_lea.vmem [#allocation0], 128
    %24 = vst.msk [vmem:[%s23] ss:$16 sm:$0x3] %vm22, %v21
    %s25 = scalar_lea.vmem [#allocation0], 128
    %26 = vst.msk [vmem:[%s25] ss:$16 sm:$0xc] %vm22, %v21
    %s27 = scalar_lea.vmem [#allocation0], 128
    %28 = vst.msk [vmem:[%s27] ss:$16 sm:$0x30] %vm22, %v21
    %s29 = scalar_lea.vmem [#allocation0], 128
    %30 = vst.msk [vmem:[%s29] ss:$16 sm:$0xc0] %vm22, %v21
    %s31 = scalar_lea.vmem %s0, 24
    %v32 = vld [vmem:[%s31] sm:$0xff]
    %vm33 = vcmask 130048
    %s34 = scalar_lea.vmem [#allocation0], 136
    %35 = vst.msk [vmem:[%s34] ss:$16 sm:$0x3] %vm33, %v32
    %s36 = scalar_lea.vmem [#allocation0], 136
    %37 = vst.msk [vmem:[%s36] ss:$16 sm:$0xc] %vm33, %v32
    %s38 = scalar_lea.vmem [#allocation0], 136
    %39 = vst.msk [vmem:[%s38] ss:$16 sm:$0x30] %vm33, %v32
    %s40 = scalar_lea.vmem [#allocation0], 136
    %41 = vst.msk [vmem:[%s40] ss:$16 sm:$0xc0] %vm33, %v32
    %s42 = scalar_lea.vmem %s0, 32
    %v43 = vld [vmem:[%s42] sm:$0xff]
    %vm44 = vcmask 130048
    %s45 = scalar_lea.vmem [#allocation0], 256
    %46 = vst.msk [vmem:[%s45] ss:$16 sm:$0x3] %vm44, %v43
    %s47 = scalar_lea.vmem [#allocation0], 256
    %48 = vst.msk [vmem:[%s47] ss:$16 sm:$0xc] %vm44, %v43
    %s49 = scalar_lea.vmem [#allocation0], 256
    %50 = vst.msk [vmem:[%s49] ss:$16 sm:$0x30] %vm44, %v43
    %s51 = scalar_lea.vmem [#allocation0], 256
    %52 = vst.msk [vmem:[%s51] ss:$16 sm:$0xc0] %vm44, %v43
    %s53 = scalar_lea.vmem %s0, 40
    %v54 = vld [vmem:[%s53] sm:$0xff]
    %vm55 = vcmask 130048
    %s56 = scalar_lea.vmem [#allocation0], 264
    %57 = vst.msk [vmem:[%s56] ss:$16 sm:$0x3] %vm55, %v54
    %s58 = scalar_lea.vmem [#allocation0], 264
    %59 = vst.msk [vmem:[%s58] ss:$16 sm:$0xc] %vm55, %v54
    %s60 = scalar_lea.vmem [#allocation0], 264
    %61 = vst.msk [vmem:[%s60] ss:$16 sm:$0x30] %vm55, %v54
    %s62 = scalar_lea.vmem [#allocation0], 264
    %63 = vst.msk [vmem:[%s62] ss:$16 sm:$0xc0] %vm55, %v54
    %s64 = scalar_lea.vmem %s0, 48
    %v65 = vld [vmem:[%s64] sm:$0xff]
    %vm66 = vcmask 130048
    %s67 = scalar_lea.vmem [#allocation0], 384
    %68 = vst.msk [vmem:[%s67] ss:$16 sm:$0x3] %vm66, %v65
    %s69 = scalar_lea.vmem [#allocation0], 384
    %70 = vst.msk [vmem:[%s69] ss:$16 sm:$0xc] %vm66, %v65
    %s71 = scalar_lea.vmem [#allocation0], 384
    %72 = vst.msk [vmem:[%s71] ss:$16 sm:$0x30] %vm66, %v65
    %s73 = scalar_lea.vmem [#allocation0], 384
    %74 = vst.msk [vmem:[%s73] ss:$16 sm:$0xc0] %vm66, %v65
    %s75 = scalar_lea.vmem %s0, 56
    %v76 = vld [vmem:[%s75] sm:$0xff]
    %vm77 = vcmask 130048
    %s78 = scalar_lea.vmem [#allocation0], 392
    %79 = vst.msk [vmem:[%s78] ss:$16 sm:$0x3] %vm77, %v76
    %s80 = scalar_lea.vmem [#allocation0], 392
    %81 = vst.msk [vmem:[%s80] ss:$16 sm:$0xc] %vm77, %v76
    %s82 = scalar_lea.vmem [#allocation0], 392
    %83 = vst.msk [vmem:[%s82] ss:$16 sm:$0x30] %vm77, %v76
    %s84 = scalar_lea.vmem [#allocation0], 392
    %85 = vst.msk [vmem:[%s84] ss:$16 sm:$0xc0] %vm77, %v76
    %v86 = vld.sshfl [vmem:[%s0] sm:$0xff pattern:$0xb3a29180]
    %87 = vrot.lane.b32.xlu0 %v86, 112
    %v88 = vpop.permute.xlu0 %87
    %vm89 = vcmask 130048
    %s90 = scalar_lea.vmem [#allocation0], 1
    %91 = vst.msk [vmem:[%s90] ss:$8 sm:$0xf] %vm89, %v88
    %s92 = scalar_lea.vmem [#allocation0], 1
    %93 = vst.msk [vmem:[%s92] ss:$8 sm:$0xf0] %vm89, %v88
    %s94 = scalar_lea.vmem %s0, 4
    %v95 = vld.sshfl [vmem:[%s94] sm:$0xff pattern:$0xb3a29180]
    %96 = vrot.lane.b32.xlu0 %v95, 112
    %v97 = vpop.permute.xlu0 %96
    %vm98 = vcmask 130048
    %s99 = scalar_lea.vmem [#allocation0], 65
    %100 = vst.msk [vmem:[%s99] ss:$8 sm:$0xf] %vm98, %v97
    %s101 = scalar_lea.vmem [#allocation0], 65
    %102 = vst.msk [vmem:[%s101] ss:$8 sm:$0xf0] %vm98, %v97
    %s103 = scalar_lea.vmem %s0, 16
    %v104 = vld.sshfl [vmem:[%s103] sm:$0xff pattern:$0xb3a29180]
    %105 = vrot.lane.b32.xlu0 %v104, 112
    %v106 = vpop.permute.xlu0 %105
    %vm107 = vcmask 130048
    %s108 = scalar_lea.vmem [#allocation0], 129
    %109 = vst.msk [vmem:[%s108] ss:$8 sm:$0xf] %vm107, %v106
    %s110 = scalar_lea.vmem [#allocation0], 129
    %111 = vst.msk [vmem:[%s110] ss:$8 sm:$0xf0] %vm107, %v106
    %s112 = scalar_lea.vmem %s0, 20
    %v113 = vld.sshfl [vmem:[%s112] sm:$0xff pattern:$0xb3a29180]
    %114 = vrot.lane.b32.xlu0 %v113, 112
    %v115 = vpop.permute.xlu0 %114
    %vm116 = vcmask 130048
    %s117 = scalar_lea.vmem [#allocation0], 193
    %118 = vst.msk [vmem:[%s117] ss:$8 sm:$0xf] %vm116, %v115
    %s119 = scalar_lea.vmem [#allocation0], 193
    %120 = vst.msk [vmem:[%s119] ss:$8 sm:$0xf0] %vm116, %v115
    %s121 = scalar_lea.vmem %s0, 32
    %v122 = vld.sshfl [vmem:[%s121] sm:$0xff pattern:$0xb3a29180]
    %123 = vrot.lane.b32.xlu0 %v122, 112
    %v124 = vpop.permute.xlu0 %123
    %vm125 = vcmask 130048
    %s126 = scalar_lea.vmem [#allocation0], 257
    %127 = vst.msk [vmem:[%s126] ss:$8 sm:$0xf] %vm125, %v124
    %s128 = scalar_lea.vmem [#allocation0], 257
    %129 = vst.msk [vmem:[%s128] ss:$8 sm:$0xf0] %vm125, %v124
    %s130 = scalar_lea.vmem %s0, 36
    %v131 = vld.sshfl [vmem:[%s130] sm:$0xff pattern:$0xb3a29180]
    %132 = vrot.lane.b32.xlu0 %v131, 112
    %v133 = vpop.permute.xlu0 %132
    %vm134 = vcmask 130048
    %s135 = scalar_lea.vmem [#allocation0], 321
    %136 = vst.msk [vmem:[%s135] ss:$8 sm:$0xf] %vm134, %v133
    %s137 = scalar_lea.vmem [#allocation0], 321
    %138 = vst.msk [vmem:[%s137] ss:$8 sm:$0xf0] %vm134, %v133
    %s139 = scalar_lea.vmem %s0, 48
    %v140 = vld.sshfl [vmem:[%s139] sm:$0xff pattern:$0xb3a29180]
    %141 = vrot.lane.b32.xlu0 %v140, 112
    %v142 = vpop.permute.xlu0 %141
    %vm143 = vcmask 130048
    %s144 = scalar_lea.vmem [#allocation0], 385
    %145 = vst.msk [vmem:[%s144] ss:$8 sm:$0xf] %vm143, %v142
    %s146 = scalar_lea.vmem [#allocation0], 385
    %147 = vst.msk [vmem:[%s146] ss:$8 sm:$0xf0] %vm143, %v142
    %s148 = scalar_lea.vmem %s0, 52
    %v149 = vld.sshfl [vmem:[%s148] sm:$0xff pattern:$0xb3a29180]
    %150 = vrot.lane.b32.xlu0 %v149, 112
    %v151 = vpop.permute.xlu0 %150
    %vm152 = vcmask 130048
    %s153 = scalar_lea.vmem [#allocation0], 449
    %154 = vst.msk [vmem:[%s153] ss:$8 sm:$0xf] %vm152, %v151
    %s155 = scalar_lea.vmem [#allocation0], 449
    %156 = vst.msk [vmem:[%s155] ss:$8 sm:$0xf0] %vm152, %v151
    %v157 = vld.sshfl [vmem:[%s0] sm:$0xff pattern:$0xb3a29180]
    %158 = vrot.lane.b32.xlu0 %v157, 96
    %v159 = vpop.permute.xlu0 %158
    %vm160 = vcmask 130048
    %s161 = scalar_lea.vmem [#allocation0], 2
    %162 = vst.msk [vmem:[%s161] ss:$8 sm:$0xf] %vm160, %v159
    %s163 = scalar_lea.vmem [#allocation0], 2
    %164 = vst.msk [vmem:[%s163] ss:$8 sm:$0xf0] %vm160, %v159
    %s165 = scalar_lea.vmem %s0, 4
    %v166 = vld.sshfl [vmem:[%s165] sm:$0xff pattern:$0xb3a29180]
    %167 = vrot.lane.b32.xlu0 %v166, 96
    %v168 = vpop.permute.xlu0 %167
    %vm169 = vcmask 130048
    %s170 = scalar_lea.vmem [#allocation0], 66
    %171 = vst.msk [vmem:[%s170] ss:$8 sm:$0xf] %vm169, %v168
    %s172 = scalar_lea.vmem [#allocation0], 66
    %173 = vst.msk [vmem:[%s172] ss:$8 sm:$0xf0] %vm169, %v168
    %s174 = scalar_lea.vmem %s0, 16
    %v175 = vld.sshfl [vmem:[%s174] sm:$0xff pattern:$0xb3a29180]
    %176 = vrot.lane.b32.xlu0 %v175, 96
    %v177 = vpop.permute.xlu0 %176
    %vm178 = vcmask 130048
    %s179 = scalar_lea.vmem [#allocation0], 130
    %180 = vst.msk [vmem:[%s179] ss:$8 sm:$0xf] %vm178, %v177
    %s181 = scalar_lea.vmem [#allocation0], 130
    %182 = vst.msk [vmem:[%s181] ss:$8 sm:$0xf0] %vm178, %v177
    %s183 = scalar_lea.vmem %s0, 20
    %v184 = vld.sshfl [vmem:[%s183] sm:$0xff pattern:$0xb3a29180]
    %185 = vrot.lane.b32.xlu0 %v184, 96
    %v186 = vpop.permute.xlu0 %185
    %vm187 = vcmask 130048
    %s188 = scalar_lea.vmem [#allocation0], 194
    %189 = vst.msk [vmem:[%s188] ss:$8 sm:$0xf] %vm187, %v186
    %s190 = scalar_lea.vmem [#allocation0], 194
    %191 = vst.msk [vmem:[%s190] ss:$8 sm:$0xf0] %vm187, %v186
    %s192 = scalar_lea.vmem %s0, 32
    %v193 = vld.sshfl [vmem:[%s192] sm:$0xff pattern:$0xb3a29180]
    %194 = vrot.lane.b32.xlu0 %v193, 96
    %v195 = vpop.permute.xlu0 %194
    %vm196 = vcmask 130048
    %s197 = scalar_lea.vmem [#allocation0], 258
    %198 = vst.msk [vmem:[%s197] ss:$8 sm:$0xf] %vm196, %v195
    %s199 = scalar_lea.vmem [#allocation0], 258
    %200 = vst.msk [vmem:[%s199] ss:$8 sm:$0xf0] %vm196, %v195
    %s201 = scalar_lea.vmem %s0, 36
    %v202 = vld.sshfl [vmem:[%s201] sm:$0xff pattern:$0xb3a29180]
    %203 = vrot.lane.b32.xlu0 %v202, 96
    %v204 = vpop.permute.xlu0 %203
    %vm205 = vcmask 130048
    %s206 = scalar_lea.vmem [#allocation0], 322
    %207 = vst.msk [vmem:[%s206] ss:$8 sm:$0xf] %vm205, %v204
    %s208 = scalar_lea.vmem [#allocation0], 322
    %209 = vst.msk [vmem:[%s208] ss:$8 sm:$0xf0] %vm205, %v204
    %s210 = scalar_lea.vmem %s0, 48
    %v211 = vld.sshfl [vmem:[%s210] sm:$0xff pattern:$0xb3a29180]
    %212 = vrot.lane.b32.xlu0 %v211, 96
    %v213 = vpop.permute.xlu0 %212
    %vm214 = vcmask 130048
    %s215 = scalar_lea.vmem [#allocation0], 386
    %216 = vst.msk [vmem:[%s215] ss:$8 sm:$0xf] %vm214, %v213
    %s217 = scalar_lea.vmem [#allocation0], 386
    %218 = vst.msk [vmem:[%s217] ss:$8 sm:$0xf0] %vm214, %v213
    %s219 = scalar_lea.vmem %s0, 52
    %v220 = vld.sshfl [vmem:[%s219] sm:$0xff pattern:$0xb3a29180]
    %221 = vrot.lane.b32.xlu0 %v220, 96
    %v222 = vpop.permute.xlu0 %221
    %vm223 = vcmask 130048
    %s224 = scalar_lea.vmem [#allocation0], 450
    %225 = vst.msk [vmem:[%s224] ss:$8 sm:$0xf] %vm223, %v222
    %s226 = scalar_lea.vmem [#allocation0], 450
    %227 = vst.msk [vmem:[%s226] ss:$8 sm:$0xf0] %vm223, %v222
    %v228 = vld.sshfl [vmem:[%s0] sm:$0xff pattern:$0xb3a29180]
    %229 = vrot.lane.b32.xlu0 %v228, 80
    %v230 = vpop.permute.xlu0 %229
    %vm231 = vcmask 130048
    %s232 = scalar_lea.vmem [#allocation0], 3
    %233 = vst.msk [vmem:[%s232] ss:$8 sm:$0xf] %vm231, %v230
    %s234 = scalar_lea.vmem [#allocation0], 3
    %235 = vst.msk [vmem:[%s234] ss:$8 sm:$0xf0] %vm231, %v230
    %s236 = scalar_lea.vmem %s0, 4
    %v237 = vld.sshfl [vmem:[%s236] sm:$0xff pattern:$0xb3a29180]
    %238 = vrot.lane.b32.xlu0 %v237, 80
    %v239 = vpop.permute.xlu0 %238
    %vm240 = vcmask 130048
    %s241 = scalar_lea.vmem [#allocation0], 67
    %242 = vst.msk [vmem:[%s241] ss:$8 sm:$0xf] %vm240, %v239
    %s243 = scalar_lea.vmem [#allocation0], 67
    %244 = vst.msk [vmem:[%s243] ss:$8 sm:$0xf0] %vm240, %v239
    %s245 = scalar_lea.vmem %s0, 16
    %v246 = vld.sshfl [vmem:[%s245] sm:$0xff pattern:$0xb3a29180]
    %247 = vrot.lane.b32.xlu0 %v246, 80
    %v248 = vpop.permute.xlu0 %247
    %vm249 = vcmask 130048
    %s250 = scalar_lea.vmem [#allocation0], 131
    %251 = vst.msk [vmem:[%s250] ss:$8 sm:$0xf] %vm249, %v248
    %s252 = scalar_lea.vmem [#allocation0], 131
    %253 = vst.msk [vmem:[%s252] ss:$8 sm:$0xf0] %vm249, %v248
    %s254 = scalar_lea.vmem %s0, 20
    %v255 = vld.sshfl [vmem:[%s254] sm:$0xff pattern:$0xb3a29180]
    %256 = vrot.lane.b32.xlu0 %v255, 80
    %v257 = vpop.permute.xlu0 %256
    %vm258 = vcmask 130048
    %s259 = scalar_lea.vmem [#allocation0], 195
    %260 = vst.msk [vmem:[%s259] ss:$8 sm:$0xf] %vm258, %v257
    %s261 = scalar_lea.vmem [#allocation0], 195
    %262 = vst.msk [vmem:[%s261] ss:$8 sm:$0xf0] %vm258, %v257
    %s263 = scalar_lea.vmem %s0, 32
    %v264 = vld.sshfl [vmem:[%s263] sm:$0xff pattern:$0xb3a29180]
    %265 = vrot.lane.b32.xlu0 %v264, 80
    %v266 = vpop.permute.xlu0 %265
    %vm267 = vcmask 130048
    %s268 = scalar_lea.vmem [#allocation0], 259
    %269 = vst.msk [vmem:[%s268] ss:$8 sm:$0xf] %vm267, %v266
    %s270 = scalar_lea.vmem [#allocation0], 259
    %271 = vst.msk [vmem:[%s270] ss:$8 sm:$0xf0] %vm267, %v266
    %s272 = scalar_lea.vmem %s0, 36
    %v273 = vld.sshfl [vmem:[%s272] sm:$0xff pattern:$0xb3a29180]
    %274 = vrot.lane.b32.xlu0 %v273, 80
    %v275 = vpop.permute.xlu0 %274
    %vm276 = vcmask 130048
    %s277 = scalar_lea.vmem [#allocation0], 323
    %278 = vst.msk [vmem:[%s277] ss:$8 sm:$0xf] %vm276, %v275
    %s279 = scalar_lea.vmem [#allocation0], 323
    %280 = vst.msk [vmem:[%s279] ss:$8 sm:$0xf0] %vm276, %v275
    %s281 = scalar_lea.vmem %s0, 48
    %v282 = vld.sshfl [vmem:[%s281] sm:$0xff pattern:$0xb3a29180]
    %283 = vrot.lane.b32.xlu0 %v282, 80
    %v284 = vpop.permute.xlu0 %283
    %vm285 = vcmask 130048
    %s286 = scalar_lea.vmem [#allocation0], 387
    %287 = vst.msk [vmem:[%s286] ss:$8 sm:$0xf] %vm285, %v284
    %s288 = scalar_lea.vmem [#allocation0], 387
    %289 = vst.msk [vmem:[%s288] ss:$8 sm:$0xf0] %vm285, %v284
    %s290 = scalar_lea.vmem %s0, 52
    %v291 = vld.sshfl [vmem:[%s290] sm:$0xff pattern:$0xb3a29180]
    %292 = vrot.lane.b32.xlu0 %v291, 80
    %v293 = vpop.permute.xlu0 %292
    %vm294 = vcmask 130048
    %s295 = scalar_lea.vmem [#allocation0], 451
    %296 = vst.msk [vmem:[%s295] ss:$8 sm:$0xf] %vm294, %v293
    %s297 = scalar_lea.vmem [#allocation0], 451
    %298 = vst.msk [vmem:[%s297] ss:$8 sm:$0xf0] %vm294, %v293
    %v299 = vld.sshfl [vmem:[%s0] sm:$0xff pattern:$0xb3a29180]
    %300 = vrot.lane.b32.xlu0 %v299, 64
    %v301 = vpop.permute.xlu0 %300
    %vm302 = vcmask 130048
    %s303 = scalar_lea.vmem [#allocation0], 4
    %304 = vst.msk [vmem:[%s303] ss:$8 sm:$0xf] %vm302, %v301
    %s305 = scalar_lea.vmem [#allocation0], 4
    %306 = vst.msk [vmem:[%s305] ss:$8 sm:$0xf0] %vm302, %v301
    %s307 = scalar_lea.vmem %s0, 4
    %v308 = vld.sshfl [vmem:[%s307] sm:$0xff pattern:$0xb3a29180]
    %309 = vrot.lane.b32.xlu0 %v308, 64
    %v310 = vpop.permute.xlu0 %309
    %vm311 = vcmask 130048
    %s312 = scalar_lea.vmem [#allocation0], 68
    %313 = vst.msk [vmem:[%s312] ss:$8 sm:$0xf] %vm311, %v310
    %s314 = scalar_lea.vmem [#allocation0], 68
    %315 = vst.msk [vmem:[%s314] ss:$8 sm:$0xf0] %vm311, %v310
    %s316 = scalar_lea.vmem %s0, 16
    %v317 = vld.sshfl [vmem:[%s316] sm:$0xff pattern:$0xb3a29180]
    %318 = vrot.lane.b32.xlu0 %v317, 64
    %v319 = vpop.permute.xlu0 %318
    %vm320 = vcmask 130048
    %s321 = scalar_lea.vmem [#allocation0], 132
    %322 = vst.msk [vmem:[%s321] ss:$8 sm:$0xf] %vm320, %v319
    %s323 = scalar_lea.vmem [#allocation0], 132
    %324 = vst.msk [vmem:[%s323] ss:$8 sm:$0xf0] %vm320, %v319
    %s325 = scalar_lea.vmem %s0, 20
    %v326 = vld.sshfl [vmem:[%s325] sm:$0xff pattern:$0xb3a29180]
    %327 = vrot.lane.b32.xlu0 %v326, 64
    %v328 = vpop.permute.xlu0 %327
    %vm329 = vcmask 130048
    %s330 = scalar_lea.vmem [#allocation0], 196
    %331 = vst.msk [vmem:[%s330] ss:$8 sm:$0xf] %vm329, %v328
    %s332 = scalar_lea.vmem [#allocation0], 196
    %333 = vst.msk [vmem:[%s332] ss:$8 sm:$0xf0] %vm329, %v328
    %s334 = scalar_lea.vmem %s0, 32
    %v335 = vld.sshfl [vmem:[%s334] sm:$0xff pattern:$0xb3a29180]
    %336 = vrot.lane.b32.xlu0 %v335, 64
    %v337 = vpop.permute.xlu0 %336
    %vm338 = vcmask 130048
    %s339 = scalar_lea.vmem [#allocation0], 260
    %340 = vst.msk [vmem:[%s339] ss:$8 sm:$0xf] %vm338, %v337
    %s341 = scalar_lea.vmem [#allocation0], 260
    %342 = vst.msk [vmem:[%s341] ss:$8 sm:$0xf0] %vm338, %v337
    %s343 = scalar_lea.vmem %s0, 36
    %v344 = vld.sshfl [vmem:[%s343] sm:$0xff pattern:$0xb3a29180]
    %345 = vrot.lane.b32.xlu0 %v344, 64
    %v346 = vpop.permute.xlu0 %345
    %vm347 = vcmask 130048
    %s348 = scalar_lea.vmem [#allocation0], 324
    %349 = vst.msk [vmem:[%s348] ss:$8 sm:$0xf] %vm347, %v346
    %s350 = scalar_lea.vmem [#allocation0], 324
    %351 = vst.msk [vmem:[%s350] ss:$8 sm:$0xf0] %vm347, %v346
    %s352 = scalar_lea.vmem %s0, 48
    %v353 = vld.sshfl [vmem:[%s352] sm:$0xff pattern:$0xb3a29180]
    %354 = vrot.lane.b32.xlu0 %v353, 64
    %v355 = vpop.permute.xlu0 %354
    %vm356 = vcmask 130048
    %s357 = scalar_lea.vmem [#allocation0], 388
    %358 = vst.msk [vmem:[%s357] ss:$8 sm:$0xf] %vm356, %v355
    %s359 = scalar_lea.vmem [#allocation0], 388
    %360 = vst.msk [vmem:[%s359] ss:$8 sm:$0xf0] %vm356, %v355
    %s361 = scalar_lea.vmem %s0, 52
    %v362 = vld.sshfl [vmem:[%s361] sm:$0xff pattern:$0xb3a29180]
    %363 = vrot.lane.b32.xlu0 %v362, 64
    %v364 = vpop.permute.xlu0 %363
    %vm365 = vcmask 130048
    %s366 = scalar_lea.vmem [#allocation0], 452
    %367 = vst.msk [vmem:[%s366] ss:$8 sm:$0xf] %vm365, %v364
    %s368 = scalar_lea.vmem [#allocation0], 452
    %369 = vst.msk [vmem:[%s368] ss:$8 sm:$0xf0] %vm365, %v364
    %v370 = vld.sshfl [vmem:[%s0] sm:$0xff pattern:$0xb3a29180]
    %371 = vrot.lane.b32.xlu0 %v370, 48
    %v372 = vpop.permute.xlu0 %371
    %vm373 = vcmask 130048
    %s374 = scalar_lea.vmem [#allocation0], 5
    %375 = vst.msk [vmem:[%s374] ss:$8 sm:$0xf] %vm373, %v372
    %s376 = scalar_lea.vmem [#allocation0], 5
    %377 = vst.msk [vmem:[%s376] ss:$8 sm:$0xf0] %vm373, %v372
    %s378 = scalar_lea.vmem %s0, 4
    %v379 = vld.sshfl [vmem:[%s378] sm:$0xff pattern:$0xb3a29180]
    %380 = vrot.lane.b32.xlu0 %v379, 48
    %v381 = vpop.permute.xlu0 %380
    %vm382 = vcmask 130048
    %s383 = scalar_lea.vmem [#allocation0], 69
    %384 = vst.msk [vmem:[%s383] ss:$8 sm:$0xf] %vm382, %v381
    %s385 = scalar_lea.vmem [#allocation0], 69
    %386 = vst.msk [vmem:[%s385] ss:$8 sm:$0xf0] %vm382, %v381
    %s387 = scalar_lea.vmem %s0, 16
    %v388 = vld.sshfl [vmem:[%s387] sm:$0xff pattern:$0xb3a29180]
    %389 = vrot.lane.b32.xlu0 %v388, 48
    %v390 = vpop.permute.xlu0 %389
    %vm391 = vcmask 130048
    %s392 = scalar_lea.vmem [#allocation0], 133
    %393 = vst.msk [vmem:[%s392] ss:$8 sm:$0xf] %vm391, %v390
    %s394 = scalar_lea.vmem [#allocation0], 133
    %395 = vst.msk [vmem:[%s394] ss:$8 sm:$0xf0] %vm391, %v390
    %s396 = scalar_lea.vmem %s0, 20
    %v397 = vld.sshfl [vmem:[%s396] sm:$0xff pattern:$0xb3a29180]
    %398 = vrot.lane.b32.xlu0 %v397, 48
    %v399 = vpop.permute.xlu0 %398
    %vm400 = vcmask 130048
    %s401 = scalar_lea.vmem [#allocation0], 197
    %402 = vst.msk [vmem:[%s401] ss:$8 sm:$0xf] %vm400, %v399
    %s403 = scalar_lea.vmem [#allocation0], 197
    %404 = vst.msk [vmem:[%s403] ss:$8 sm:$0xf0] %vm400, %v399
    %s405 = scalar_lea.vmem %s0, 32
    %v406 = vld.sshfl [vmem:[%s405] sm:$0xff pattern:$0xb3a29180]
    %407 = vrot.lane.b32.xlu0 %v406, 48
    %v408 = vpop.permute.xlu0 %407
    %vm409 = vcmask 130048
    %s410 = scalar_lea.vmem [#allocation0], 261
    %411 = vst.msk [vmem:[%s410] ss:$8 sm:$0xf] %vm409, %v408
    %s412 = scalar_lea.vmem [#allocation0], 261
    %413 = vst.msk [vmem:[%s412] ss:$8 sm:$0xf0] %vm409, %v408
    %s414 = scalar_lea.vmem %s0, 36
    %v415 = vld.sshfl [vmem:[%s414] sm:$0xff pattern:$0xb3a29180]
    %416 = vrot.lane.b32.xlu0 %v415, 48
    %v417 = vpop.permute.xlu0 %416
    %vm418 = vcmask 130048
    %s419 = scalar_lea.vmem [#allocation0], 325
    %420 = vst.msk [vmem:[%s419] ss:$8 sm:$0xf] %vm418, %v417
    %s421 = scalar_lea.vmem [#allocation0], 325
    %422 = vst.msk [vmem:[%s421] ss:$8 sm:$0xf0] %vm418, %v417
    %s423 = scalar_lea.vmem %s0, 48
    %v424 = vld.sshfl [vmem:[%s423] sm:$0xff pattern:$0xb3a29180]
    %425 = vrot.lane.b32.xlu0 %v424, 48
    %v426 = vpop.permute.xlu0 %425
    %vm427 = vcmask 130048
    %s428 = scalar_lea.vmem [#allocation0], 389
    %429 = vst.msk [vmem:[%s428] ss:$8 sm:$0xf] %vm427, %v426
    %s430 = scalar_lea.vmem [#allocation0], 389
    %431 = vst.msk [vmem:[%s430] ss:$8 sm:$0xf0] %vm427, %v426
    %s432 = scalar_lea.vmem %s0, 52
    %v433 = vld.sshfl [vmem:[%s432] sm:$0xff pattern:$0xb3a29180]
    %434 = vrot.lane.b32.xlu0 %v433, 48
    %v435 = vpop.permute.xlu0 %434
    %vm436 = vcmask 130048
    %s437 = scalar_lea.vmem [#allocation0], 453
    %438 = vst.msk [vmem:[%s437] ss:$8 sm:$0xf] %vm436, %v435
    %s439 = scalar_lea.vmem [#allocation0], 453
    %440 = vst.msk [vmem:[%s439] ss:$8 sm:$0xf0] %vm436, %v435
    %v441 = vld.sshfl [vmem:[%s0] sm:$0xff pattern:$0xb3a29180]
    %442 = vrot.lane.b32.xlu0 %v441, 32
    %v443 = vpop.permute.xlu0 %442
    %vm444 = vcmask 130048
    %s445 = scalar_lea.vmem [#allocation0], 6
    %446 = vst.msk [vmem:[%s445] ss:$8 sm:$0xf] %vm444, %v443
    %s447 = scalar_lea.vmem [#allocation0], 6
    %448 = vst.msk [vmem:[%s447] ss:$8 sm:$0xf0] %vm444, %v443
    %s449 = scalar_lea.vmem %s0, 4
    %v450 = vld.sshfl [vmem:[%s449] sm:$0xff pattern:$0xb3a29180]
    %451 = vrot.lane.b32.xlu0 %v450, 32
    %v452 = vpop.permute.xlu0 %451
    %vm453 = vcmask 130048
    %s454 = scalar_lea.vmem [#allocation0], 70
    %455 = vst.msk [vmem:[%s454] ss:$8 sm:$0xf] %vm453, %v452
    %s456 = scalar_lea.vmem [#allocation0], 70
    %457 = vst.msk [vmem:[%s456] ss:$8 sm:$0xf0] %vm453, %v452
    %s458 = scalar_lea.vmem %s0, 16
    %v459 = vld.sshfl [vmem:[%s458] sm:$0xff pattern:$0xb3a29180]
    %460 = vrot.lane.b32.xlu0 %v459, 32
    %v461 = vpop.permute.xlu0 %460
    %vm462 = vcmask 130048
    %s463 = scalar_lea.vmem [#allocation0], 134
    %464 = vst.msk [vmem:[%s463] ss:$8 sm:$0xf] %vm462, %v461
    %s465 = scalar_lea.vmem [#allocation0], 134
    %466 = vst.msk [vmem:[%s465] ss:$8 sm:$0xf0] %vm462, %v461
    %s467 = scalar_lea.vmem %s0, 20
    %v468 = vld.sshfl [vmem:[%s467] sm:$0xff pattern:$0xb3a29180]
    %469 = vrot.lane.b32.xlu0 %v468, 32
    %v470 = vpop.permute.xlu0 %469
    %vm471 = vcmask 130048
    %s472 = scalar_lea.vmem [#allocation0], 198
    %473 = vst.msk [vmem:[%s472] ss:$8 sm:$0xf] %vm471, %v470
    %s474 = scalar_lea.vmem [#allocation0], 198
    %475 = vst.msk [vmem:[%s474] ss:$8 sm:$0xf0] %vm471, %v470
    %s476 = scalar_lea.vmem %s0, 32
    %v477 = vld.sshfl [vmem:[%s476] sm:$0xff pattern:$0xb3a29180]
    %478 = vrot.lane.b32.xlu0 %v477, 32
    %v479 = vpop.permute.xlu0 %478
    %vm480 = vcmask 130048
    %s481 = scalar_lea.vmem [#allocation0], 262
    %482 = vst.msk [vmem:[%s481] ss:$8 sm:$0xf] %vm480, %v479
    %s483 = scalar_lea.vmem [#allocation0], 262
    %484 = vst.msk [vmem:[%s483] ss:$8 sm:$0xf0] %vm480, %v479
    %s485 = scalar_lea.vmem %s0, 36
    %v486 = vld.sshfl [vmem:[%s485] sm:$0xff pattern:$0xb3a29180]
    %487 = vrot.lane.b32.xlu0 %v486, 32
    %v488 = vpop.permute.xlu0 %487
    %vm489 = vcmask 130048
    %s490 = scalar_lea.vmem [#allocation0], 326
    %491 = vst.msk [vmem:[%s490] ss:$8 sm:$0xf] %vm489, %v488
    %s492 = scalar_lea.vmem [#allocation0], 326
    %493 = vst.msk [vmem:[%s492] ss:$8 sm:$0xf0] %vm489, %v488
    %s494 = scalar_lea.vmem %s0, 48
    %v495 = vld.sshfl [vmem:[%s494] sm:$0xff pattern:$0xb3a29180]
    %496 = vrot.lane.b32.xlu0 %v495, 32
    %v497 = vpop.permute.xlu0 %496
    %vm498 = vcmask 130048
    %s499 = scalar_lea.vmem [#allocation0], 390
    %500 = vst.msk [vmem:[%s499] ss:$8 sm:$0xf] %vm498, %v497
    %s501 = scalar_lea.vmem [#allocation0], 390
    %502 = vst.msk [vmem:[%s501] ss:$8 sm:$0xf0] %vm498, %v497
    %s503 = scalar_lea.vmem %s0, 52
    %v504 = vld.sshfl [vmem:[%s503] sm:$0xff pattern:$0xb3a29180]
    %505 = vrot.lane.b32.xlu0 %v504, 32
    %v506 = vpop.permute.xlu0 %505
    %vm507 = vcmask 130048
    %s508 = scalar_lea.vmem [#allocation0], 454
    %509 = vst.msk [vmem:[%s508] ss:$8 sm:$0xf] %vm507, %v506
    %s510 = scalar_lea.vmem [#allocation0], 454
    %511 = vst.msk [vmem:[%s510] ss:$8 sm:$0xf0] %vm507, %v506
    %v512 = vld.sshfl [vmem:[%s0] sm:$0xff pattern:$0xb3a29180]
    %513 = vrot.lane.b32.xlu0 %v512, 16
    %v514 = vpop.permute.xlu0 %513
    %vm515 = vcmask 130048
    %s516 = scalar_lea.vmem [#allocation0], 7
    %517 = vst.msk [vmem:[%s516] ss:$8 sm:$0xf] %vm515, %v514
    %s518 = scalar_lea.vmem [#allocation0], 7
    %519 = vst.msk [vmem:[%s518] ss:$8 sm:$0xf0] %vm515, %v514
    %s520 = scalar_lea.vmem %s0, 4
    %v521 = vld.sshfl [vmem:[%s520] sm:$0xff pattern:$0xb3a29180]
    %522 = vrot.lane.b32.xlu0 %v521, 16
    %v523 = vpop.permute.xlu0 %522
    %vm524 = vcmask 130048
    %s525 = scalar_lea.vmem [#allocation0], 71
    %526 = vst.msk [vmem:[%s525] ss:$8 sm:$0xf] %vm524, %v523
    %s527 = scalar_lea.vmem [#allocation0], 71
    %528 = vst.msk [vmem:[%s527] ss:$8 sm:$0xf0] %vm524, %v523
    %s529 = scalar_lea.vmem %s0, 16
    %v530 = vld.sshfl [vmem:[%s529] sm:$0xff pattern:$0xb3a29180]
    %531 = vrot.lane.b32.xlu0 %v530, 16
    %v532 = vpop.permute.xlu0 %531
    %vm533 = vcmask 130048
    %s534 = scalar_lea.vmem [#allocation0], 135
    %535 = vst.msk [vmem:[%s534] ss:$8 sm:$0xf] %vm533, %v532
    %s536 = scalar_lea.vmem [#allocation0], 135
    %537 = vst.msk [vmem:[%s536] ss:$8 sm:$0xf0] %vm533, %v532
    %s538 = scalar_lea.vmem %s0, 20
    %v539 = vld.sshfl [vmem:[%s538] sm:$0xff pattern:$0xb3a29180]
    %540 = vrot.lane.b32.xlu0 %v539, 16
    %v541 = vpop.permute.xlu0 %540
    %vm542 = vcmask 130048
    %s543 = scalar_lea.vmem [#allocation0], 199
    %544 = vst.msk [vmem:[%s543] ss:$8 sm:$0xf] %vm542, %v541
    %s545 = scalar_lea.vmem [#allocation0], 199
    %546 = vst.msk [vmem:[%s545] ss:$8 sm:$0xf0] %vm542, %v541
    %s547 = scalar_lea.vmem %s0, 32
    %v548 = vld.sshfl [vmem:[%s547] sm:$0xff pattern:$0xb3a29180]
    %549 = vrot.lane.b32.xlu0 %v548, 16
    %v550 = vpop.permute.xlu0 %549
    %vm551 = vcmask 130048
    %s552 = scalar_lea.vmem [#allocation0], 263
    %553 = vst.msk [vmem:[%s552] ss:$8 sm:$0xf] %vm551, %v550
    %s554 = scalar_lea.vmem [#allocation0], 263
    %555 = vst.msk [vmem:[%s554] ss:$8 sm:$0xf0] %vm551, %v550
    %s556 = scalar_lea.vmem %s0, 36
    %v557 = vld.sshfl [vmem:[%s556] sm:$0xff pattern:$0xb3a29180]
    %558 = vrot.lane.b32.xlu0 %v557, 16
    %v559 = vpop.permute.xlu0 %558
    %vm560 = vcmask 130048
    %s561 = scalar_lea.vmem [#allocation0], 327
    %562 = vst.msk [vmem:[%s561] ss:$8 sm:$0xf] %vm560, %v559
    %s563 = scalar_lea.vmem [#allocation0], 327
    %564 = vst.msk [vmem:[%s563] ss:$8 sm:$0xf0] %vm560, %v559
    %s565 = scalar_lea.vmem %s0, 48
    %v566 = vld.sshfl [vmem:[%s565] sm:$0xff pattern:$0xb3a29180]
    %567 = vrot.lane.b32.xlu0 %v566, 16
    %v568 = vpop.permute.xlu0 %567
    %vm569 = vcmask 130048
    %s570 = scalar_lea.vmem [#allocation0], 391
    %571 = vst.msk [vmem:[%s570] ss:$8 sm:$0xf] %vm569, %v568
    %s572 = scalar_lea.vmem [#allocation0], 391
    %573 = vst.msk [vmem:[%s572] ss:$8 sm:$0xf0] %vm569, %v568
    %s574 = scalar_lea.vmem %s0, 52
    %v575 = vld.sshfl [vmem:[%s574] sm:$0xff pattern:$0xb3a29180]
    %576 = vrot.lane.b32.xlu0 %v575, 16
    %v577 = vpop.permute.xlu0 %576
    %vm578 = vcmask 130048
    %s579 = scalar_lea.vmem [#allocation0], 455
    %580 = vst.msk [vmem:[%s579] ss:$8 sm:$0xf] %vm578, %v577
    %s581 = scalar_lea.vmem [#allocation0], 455
    %582 = vst.msk [vmem:[%s581] ss:$8 sm:$0xf0] %vm578, %v577
    %s584 = ssub.s32 8192, 8192
    %585 = vsyncadd [#allocation1], %s584
    %s587 = sshll.u32 [#allocation0], 4
    %s588 = int_to_ptr.vmem [resolvable:$true] %s587
    %590 = dma.vmem_to_hbm [thread:$0]  %s588, 8192, %s1, [#allocation1]
    %591 = dma.done [#allocation1], 8192
    %592 = vsyncpa [#allocation1], 1

// kernel: squeeze.3
$region0: #{squeeze.3}
  %s0 = inlined_call_operand.vmem [shape: f32[1,2,8,256], index: 0, kind: input, shape index: {}]
  %s1 = inlined_call_operand.hbm [shape: f32[2,8,16,16], index: 1, kind: output, shape index: {}]
  $region1: #{squeeze.3} parent=0
    #allocation0 [shape = 'u8[131072]{0}', space=vmem, size = 0x20000, scoped, tag = 'operand span for operand 1']
    #allocation1 [shape = 's32[1]{0}', space=sflag, size = 0x4, scoped, tag = 'scoped memory for squeeze.3']
    %2 = vsyncpa [#allocation1], 0
    %v3 = vld [vmem:[%s0] sm:$0xff]
    %vm4 = vcmask 130048
    %5 = vst.msk [vmem:[#allocation0] ss:$16 sm:$0x3] %vm4, %v3
    %6 = vst.msk [vmem:[#allocation0] ss:$16 sm:$0xc] %vm4, %v3
    %7 = vst.msk [vmem:[#allocation0] ss:$16 sm:$0x30] %vm4, %v3
    %8 = vst.msk [vmem:[#allocation0] ss:$16 sm:$0xc0] %vm4, %v3
    %s9 = scalar_lea.vmem %s0, 8
    %v10 = vld [vmem:[%s9] sm:$0xff]
    %vm11 = vcmask 130048
    %s12 = scalar_lea.vmem [#allocation0], 8
    %13 = vst.msk [vmem:[%s12] ss:$16 sm:$0x3] %vm11, %v10
    %s14 = scalar_lea.vmem [#allocation0], 8
    %15 = vst.msk [vmem:[%s14] ss:$16 sm:$0xc] %vm11, %v10
    %s16 = scalar_lea.vmem [#allocation0], 8
    %17 = vst.msk [vmem:[%s16] ss:$16 sm:$0x30] %vm11, %v10
    %s18 = scalar_lea.vmem [#allocation0], 8
    %19 = vst.msk [vmem:[%s18] ss:$16 sm:$0xc0] %vm11, %v10
    %s20 = scalar_lea.vmem %s0, 16
    %v21 = vld [vmem:[%s20] sm:$0xff]
    %vm22 = vcmask 130048
    %s23 = scalar_lea.vmem [#allocation0], 128
    %24 = vst.msk [vmem:[%s23] ss:$16 sm:$0x3] %vm22, %v21
    %s25 = scalar_lea.vmem [#allocation0], 128
    %26 = vst.msk [vmem:[%s25] ss:$16 sm:$0xc] %vm22, %v21
    %s27 = scalar_lea.vmem [#allocation0], 128
    %28 = vst.msk [vmem:[%s27] ss:$16 sm:$0x30] %vm22, %v21
    %s29 = scalar_lea.vmem [#allocation0], 128
    %30 = vst.msk [vmem:[%s29] ss:$16 sm:$0xc0] %vm22, %v21
    %s31 = scalar_lea.vmem %s0, 24
    %v32 = vld [vmem:[%s31] sm:$0xff]
    %vm33 = vcmask 130048
    %s34 = scalar_lea.vmem [#allocation0], 136
    %35 = vst.msk [vmem:[%s34] ss:$16 sm:$0x3] %vm33, %v32
    %s36 = scalar_lea.vmem [#allocation0], 136
    %37 = vst.msk [vmem:[%s36] ss:$16 sm:$0xc] %vm33, %v32
    %s38 = scalar_lea.vmem [#allocation0], 136
    %39 = vst.msk [vmem:[%s38] ss:$16 sm:$0x30] %vm33, %v32
    %s40 = scalar_lea.vmem [#allocation0], 136
    %41 = vst.msk [vmem:[%s40] ss:$16 sm:$0xc0] %vm33, %v32
    %v42 = vld.sshfl [vmem:[%s0] sm:$0xff pattern:$0xb3a29180]
    %43 = vrot.lane.b32.xlu0 %v42, 112
    %v44 = vpop.permute.xlu0 %43
    %vm45 = vcmask 130048
    %s46 = scalar_lea.vmem [#allocation0], 1
    %47 = vst.msk [vmem:[%s46] ss:$8 sm:$0xf] %vm45, %v44
    %s48 = scalar_lea.vmem [#allocation0], 1
    %49 = vst.msk [vmem:[%s48] ss:$8 sm:$0xf0] %vm45, %v44
    %s50 = scalar_lea.vmem %s0, 4
    %v51 = vld.sshfl [vmem:[%s50] sm:$0xff pattern:$0xb3a29180]
    %52 = vrot.lane.b32.xlu0 %v51, 112
    %v53 = vpop.permute.xlu0 %52
    %vm54 = vcmask 130048
    %s55 = scalar_lea.vmem [#allocation0], 65
    %56 = vst.msk [vmem:[%s55] ss:$8 sm:$0xf] %vm54, %v53
    %s57 = scalar_lea.vmem [#allocation0], 65
    %58 = vst.msk [vmem:[%s57] ss:$8 sm:$0xf0] %vm54, %v53
    %s59 = scalar_lea.vmem %s0, 16
    %v60 = vld.sshfl [vmem:[%s59] sm:$0xff pattern:$0xb3a29180]
    %61 = vrot.lane.b32.xlu0 %v60, 112
    %v62 = vpop.permute.xlu0 %61
    %vm63 = vcmask 130048
    %s64 = scalar_lea.vmem [#allocation0], 129
    %65 = vst.msk [vmem:[%s64] ss:$8 sm:$0xf] %vm63, %v62
    %s66 = scalar_lea.vmem [#allocation0], 129
    %67 = vst.msk [vmem:[%s66] ss:$8 sm:$0xf0] %vm63, %v62
    %s68 = scalar_lea.vmem %s0, 20
    %v69 = vld.sshfl [vmem:[%s68] sm:$0xff pattern:$0xb3a29180]
    %70 = vrot.lane.b32.xlu0 %v69, 112
    %v71 = vpop.permute.xlu0 %70
    %vm72 = vcmask 130048
    %s73 = scalar_lea.vmem [#allocation0], 193
    %74 = vst.msk [vmem:[%s73] ss:$8 sm:$0xf] %vm72, %v71
    %s75 = scalar_lea.vmem [#allocation0], 193
    %76 = vst.msk [vmem:[%s75] ss:$8 sm:$0xf0] %vm72, %v71
    %v77 = vld.sshfl [vmem:[%s0] sm:$0xff pattern:$0xb3a29180]
    %78 = vrot.lane.b32.xlu0 %v77, 96
    %v79 = vpop.permute.xlu0 %78
    %vm80 = vcmask 130048
    %s81 = scalar_lea.vmem [#allocation0], 2
    %82 = vst.msk [vmem:[%s81] ss:$8 sm:$0xf] %vm80, %v79
    %s83 = scalar_lea.vmem [#allocation0], 2
    %84 = vst.msk [vmem:[%s83] ss:$8 sm:$0xf0] %vm80, %v79
    %s85 = scalar_lea.vmem %s0, 4
    %v86 = vld.sshfl [vmem:[%s85] sm:$0xff pattern:$0xb3a29180]
    %87 = vrot.lane.b32.xlu0 %v86, 96
    %v88 = vpop.permute.xlu0 %87
    %vm89 = vcmask 130048
    %s90 = scalar_lea.vmem [#allocation0], 66
    %91 = vst.msk [vmem:[%s90] ss:$8 sm:$0xf] %vm89, %v88
    %s92 = scalar_lea.vmem [#allocation0], 66
    %93 = vst.msk [vmem:[%s92] ss:$8 sm:$0xf0] %vm89, %v88
    %s94 = scalar_lea.vmem %s0, 16
    %v95 = vld.sshfl [vmem:[%s94] sm:$0xff pattern:$0xb3a29180]
    %96 = vrot.lane.b32.xlu0 %v95, 96
    %v97 = vpop.permute.xlu0 %96
    %vm98 = vcmask 130048
    %s99 = scalar_lea.vmem [#allocation0], 130
    %100 = vst.msk [vmem:[%s99] ss:$8 sm:$0xf] %vm98, %v97
    %s101 = scalar_lea.vmem [#allocation0], 130
    %102 = vst.msk [vmem:[%s101] ss:$8 sm:$0xf0] %vm98, %v97
    %s103 = scalar_lea.vmem %s0, 20
    %v104 = vld.sshfl [vmem:[%s103] sm:$0xff pattern:$0xb3a29180]
    %105 = vrot.lane.b32.xlu0 %v104, 96
    %v106 = vpop.permute.xlu0 %105
    %vm107 = vcmask 130048
    %s108 = scalar_lea.vmem [#allocation0], 194
    %109 = vst.msk [vmem:[%s108] ss:$8 sm:$0xf] %vm107, %v106
    %s110 = scalar_lea.vmem [#allocation0], 194
    %111 = vst.msk [vmem:[%s110] ss:$8 sm:$0xf0] %vm107, %v106
    %v112 = vld.sshfl [vmem:[%s0] sm:$0xff pattern:$0xb3a29180]
    %113 = vrot.lane.b32.xlu0 %v112, 80
    %v114 = vpop.permute.xlu0 %113
    %vm115 = vcmask 130048
    %s116 = scalar_lea.vmem [#allocation0], 3
    %117 = vst.msk [vmem:[%s116] ss:$8 sm:$0xf] %vm115, %v114
    %s118 = scalar_lea.vmem [#allocation0], 3
    %119 = vst.msk [vmem:[%s118] ss:$8 sm:$0xf0] %vm115, %v114
    %s120 = scalar_lea.vmem %s0, 4
    %v121 = vld.sshfl [vmem:[%s120] sm:$0xff pattern:$0xb3a29180]
    %122 = vrot.lane.b32.xlu0 %v121, 80
    %v123 = vpop.permute.xlu0 %122
    %vm124 = vcmask 130048
    %s125 = scalar_lea.vmem [#allocation0], 67
    %126 = vst.msk [vmem:[%s125] ss:$8 sm:$0xf] %vm124, %v123
    %s127 = scalar_lea.vmem [#allocation0], 67
    %128 = vst.msk [vmem:[%s127] ss:$8 sm:$0xf0] %vm124, %v123
    %s129 = scalar_lea.vmem %s0, 16
    %v130 = vld.sshfl [vmem:[%s129] sm:$0xff pattern:$0xb3a29180]
    %131 = vrot.lane.b32.xlu0 %v130, 80
    %v132 = vpop.permute.xlu0 %131
    %vm133 = vcmask 130048
    %s134 = scalar_lea.vmem [#allocation0], 131
    %135 = vst.msk [vmem:[%s134] ss:$8 sm:$0xf] %vm133, %v132
    %s136 = scalar_lea.vmem [#allocation0], 131
    %137 = vst.msk [vmem:[%s136] ss:$8 sm:$0xf0] %vm133, %v132
    %s138 = scalar_lea.vmem %s0, 20
    %v139 = vld.sshfl [vmem:[%s138] sm:$0xff pattern:$0xb3a29180]
    %140 = vrot.lane.b32.xlu0 %v139, 80
    %v141 = vpop.permute.xlu0 %140
    %vm142 = vcmask 130048
    %s143 = scalar_lea.vmem [#allocation0], 195
    %144 = vst.msk [vmem:[%s143] ss:$8 sm:$0xf] %vm142, %v141
    %s145 = scalar_lea.vmem [#allocation0], 195
    %146 = vst.msk [vmem:[%s145] ss:$8 sm:$0xf0] %vm142, %v141
    %v147 = vld.sshfl [vmem:[%s0] sm:$0xff pattern:$0xb3a29180]
    %148 = vrot.lane.b32.xlu0 %v147, 64
    %v149 = vpop.permute.xlu0 %148
    %vm150 = vcmask 130048
    %s151 = scalar_lea.vmem [#allocation0], 4
    %152 = vst.msk [vmem:[%s151] ss:$8 sm:$0xf] %vm150, %v149
    %s153 = scalar_lea.vmem [#allocation0], 4
    %154 = vst.msk [vmem:[%s153] ss:$8 sm:$0xf0] %vm150, %v149
    %s155 = scalar_lea.vmem %s0, 4
    %v156 = vld.sshfl [vmem:[%s155] sm:$0xff pattern:$0xb3a29180]
    %157 = vrot.lane.b32.xlu0 %v156, 64
    %v158 = vpop.permute.xlu0 %157
    %vm159 = vcmask 130048
    %s160 = scalar_lea.vmem [#allocation0], 68
    %161 = vst.msk [vmem:[%s160] ss:$8 sm:$0xf] %vm159, %v158
    %s162 = scalar_lea.vmem [#allocation0], 68
    %163 = vst.msk [vmem:[%s162] ss:$8 sm:$0xf0] %vm159, %v158
    %s164 = scalar_lea.vmem %s0, 16
    %v165 = vld.sshfl [vmem:[%s164] sm:$0xff pattern:$0xb3a29180]
    %166 = vrot.lane.b32.xlu0 %v165, 64
    %v167 = vpop.permute.xlu0 %166
    %vm168 = vcmask 130048
    %s169 = scalar_lea.vmem [#allocation0], 132
    %170 = vst.msk [vmem:[%s169] ss:$8 sm:$0xf] %vm168, %v167
    %s171 = scalar_lea.vmem [#allocation0], 132
    %172 = vst.msk [vmem:[%s171] ss:$8 sm:$0xf0] %vm168, %v167
    %s173 = scalar_lea.vmem %s0, 20
    %v174 = vld.sshfl [vmem:[%s173] sm:$0xff pattern:$0xb3a29180]
    %175 = vrot.lane.b32.xlu0 %v174, 64
    %v176 = vpop.permute.xlu0 %175
    %vm177 = vcmask 130048
    %s178 = scalar_lea.vmem [#allocation0], 196
    %179 = vst.msk [vmem:[%s178] ss:$8 sm:$0xf] %vm177, %v176
    %s180 = scalar_lea.vmem [#allocation0], 196
    %181 = vst.msk [vmem:[%s180] ss:$8 sm:$0xf0] %vm177, %v176
    %v182 = vld.sshfl [vmem:[%s0] sm:$0xff pattern:$0xb3a29180]
    %183 = vrot.lane.b32.xlu0 %v182, 48
    %v184 = vpop.permute.xlu0 %183
    %vm185 = vcmask 130048
    %s186 = scalar_lea.vmem [#allocation0], 5
    %187 = vst.msk [vmem:[%s186] ss:$8 sm:$0xf] %vm185, %v184
    %s188 = scalar_lea.vmem [#allocation0], 5
    %189 = vst.msk [vmem:[%s188] ss:$8 sm:$0xf0] %vm185, %v184
    %s190 = scalar_lea.vmem %s0, 4
    %v191 = vld.sshfl [vmem:[%s190] sm:$0xff pattern:$0xb3a29180]
    %192 = vrot.lane.b32.xlu0 %v191, 48
    %v193 = vpop.permute.xlu0 %192
    %vm194 = vcmask 130048
    %s195 = scalar_lea.vmem [#allocation0], 69
    %196 = vst.msk [vmem:[%s195] ss:$8 sm:$0xf] %vm194, %v193
    %s197 = scalar_lea.vmem [#allocation0], 69
    %198 = vst.msk [vmem:[%s197] ss:$8 sm:$0xf0] %vm194, %v193
    %s199 = scalar_lea.vmem %s0, 16
    %v200 = vld.sshfl [vmem:[%s199] sm:$0xff pattern:$0xb3a29180]
    %201 = vrot.lane.b32.xlu0 %v200, 48
    %v202 = vpop.permute.xlu0 %201
    %vm203 = vcmask 130048
    %s204 = scalar_lea.vmem [#allocation0], 133
    %205 = vst.msk [vmem:[%s204] ss:$8 sm:$0xf] %vm203, %v202
    %s206 = scalar_lea.vmem [#allocation0], 133
    %207 = vst.msk [vmem:[%s206] ss:$8 sm:$0xf0] %vm203, %v202
    %s208 = scalar_lea.vmem %s0, 20
    %v209 = vld.sshfl [vmem:[%s208] sm:$0xff pattern:$0xb3a29180]
    %210 = vrot.lane.b32.xlu0 %v209, 48
    %v211 = vpop.permute.xlu0 %210
    %vm212 = vcmask 130048
    %s213 = scalar_lea.vmem [#allocation0], 197
    %214 = vst.msk [vmem:[%s213] ss:$8 sm:$0xf] %vm212, %v211
    %s215 = scalar_lea.vmem [#allocation0], 197
    %216 = vst.msk [vmem:[%s215] ss:$8 sm:$0xf0] %vm212, %v211
    %v217 = vld.sshfl [vmem:[%s0] sm:$0xff pattern:$0xb3a29180]
    %218 = vrot.lane.b32.xlu0 %v217, 32
    %v219 = vpop.permute.xlu0 %218
    %vm220 = vcmask 130048
    %s221 = scalar_lea.vmem [#allocation0], 6
    %222 = vst.msk [vmem:[%s221] ss:$8 sm:$0xf] %vm220, %v219
    %s223 = scalar_lea.vmem [#allocation0], 6
    %224 = vst.msk [vmem:[%s223] ss:$8 sm:$0xf0] %vm220, %v219
    %s225 = scalar_lea.vmem %s0, 4
    %v226 = vld.sshfl [vmem:[%s225] sm:$0xff pattern:$0xb3a29180]
    %227 = vrot.lane.b32.xlu0 %v226, 32
    %v228 = vpop.permute.xlu0 %227
    %vm229 = vcmask 130048
    %s230 = scalar_lea.vmem [#allocation0], 70
    %231 = vst.msk [vmem:[%s230] ss:$8 sm:$0xf] %vm229, %v228
    %s232 = scalar_lea.vmem [#allocation0], 70
    %233 = vst.msk [vmem:[%s232] ss:$8 sm:$0xf0] %vm229, %v228
    %s234 = scalar_lea.vmem %s0, 16
    %v235 = vld.sshfl [vmem:[%s234] sm:$0xff pattern:$0xb3a29180]
    %236 = vrot.lane.b32.xlu0 %v235, 32
    %v237 = vpop.permute.xlu0 %236
    %vm238 = vcmask 130048
    %s239 = scalar_lea.vmem [#allocation0], 134
    %240 = vst.msk [vmem:[%s239] ss:$8 sm:$0xf] %vm238, %v237
    %s241 = scalar_lea.vmem [#allocation0], 134
    %242 = vst.msk [vmem:[%s241] ss:$8 sm:$0xf0] %vm238, %v237
    %s243 = scalar_lea.vmem %s0, 20
    %v244 = vld.sshfl [vmem:[%s243] sm:$0xff pattern:$0xb3a29180]
    %245 = vrot.lane.b32.xlu0 %v244, 32
    %v246 = vpop.permute.xlu0 %245
    %vm247 = vcmask 130048
    %s248 = scalar_lea.vmem [#allocation0], 198
    %249 = vst.msk [vmem:[%s248] ss:$8 sm:$0xf] %vm247, %v246
    %s250 = scalar_lea.vmem [#allocation0], 198
    %251 = vst.msk [vmem:[%s250] ss:$8 sm:$0xf0] %vm247, %v246
    %v252 = vld.sshfl [vmem:[%s0] sm:$0xff pattern:$0xb3a29180]
    %253 = vrot.lane.b32.xlu0 %v252, 16
    %v254 = vpop.permute.xlu0 %253
    %vm255 = vcmask 130048
    %s256 = scalar_lea.vmem [#allocation0], 7
    %257 = vst.msk [vmem:[%s256] ss:$8 sm:$0xf] %vm255, %v254
    %s258 = scalar_lea.vmem [#allocation0], 7
    %259 = vst.msk [vmem:[%s258] ss:$8 sm:$0xf0] %vm255, %v254
    %s260 = scalar_lea.vmem %s0, 4
    %v261 = vld.sshfl [vmem:[%s260] sm:$0xff pattern:$0xb3a29180]
    %262 = vrot.lane.b32.xlu0 %v261, 16
    %v263 = vpop.permute.xlu0 %262
    %vm264 = vcmask 130048
    %s265 = scalar_lea.vmem [#allocation0], 71
    %266 = vst.msk [vmem:[%s265] ss:$8 sm:$0xf] %vm264, %v263
    %s267 = scalar_lea.vmem [#allocation0], 71
    %268 = vst.msk [vmem:[%s267] ss:$8 sm:$0xf0] %vm264, %v263
    %s269 = scalar_lea.vmem %s0, 16
    %v270 = vld.sshfl [vmem:[%s269] sm:$0xff pattern:$0xb3a29180]
    %271 = vrot.lane.b32.xlu0 %v270, 16
    %v272 = vpop.permute.xlu0 %271
    %vm273 = vcmask 130048
    %s274 = scalar_lea.vmem [#allocation0], 135
    %275 = vst.msk [vmem:[%s274] ss:$8 sm:$0xf] %vm273, %v272
    %s276 = scalar_lea.vmem [#allocation0], 135
    %277 = vst.msk [vmem:[%s276] ss:$8 sm:$0xf0] %vm273, %v272
    %s278 = scalar_lea.vmem %s0, 20
    %v279 = vld.sshfl [vmem:[%s278] sm:$0xff pattern:$0xb3a29180]
    %280 = vrot.lane.b32.xlu0 %v279, 16
    %v281 = vpop.permute.xlu0 %280
    %vm282 = vcmask 130048
    %s283 = scalar_lea.vmem [#allocation0], 199
    %284 = vst.msk [vmem:[%s283] ss:$8 sm:$0xf] %vm282, %v281
    %s285 = scalar_lea.vmem [#allocation0], 199
    %286 = vst.msk [vmem:[%s285] ss:$8 sm:$0xf0] %vm282, %v281
    %s288 = ssub.s32 4096, 4096
    %289 = vsyncadd [#allocation1], %s288
    %s291 = sshll.u32 [#allocation0], 4
    %s292 = int_to_ptr.vmem [resolvable:$true] %s291
    %294 = dma.vmem_to_hbm [thread:$0]  %s292, 4096, %s1, [#allocation1]
    %295 = dma.done [#allocation1], 4096
    %296 = vsyncpa [#allocation1], 1

// kernel: pvcnet_forward.3
$region0: #{pvcnet_forward.3}
  #allocation0 [shape = 'u32[]', space=smem, size = 0x4, offset = 0x4, fixed_abs, tag = 'smem constant byte address 0x4 - core index']
  #allocation1 [shape = 'u32[144,128]{1,0:T(1,128)}', space=vmem, size = 0x12000, scoped, tag = 'internal scratch']
  %s0 = inlined_call_operand.vmem [shape: bf16[2,27,512], index: 0, kind: input, shape index: {}]
  %s1 = inlined_call_operand.vmem [shape: bf16[8,27], index: 1, kind: input, shape index: {}]
  %s2 = inlined_call_operand.vmem [shape: f32[8,1], index: 2, kind: input, shape index: {}]
  %s3 = inlined_call_operand.vmem [shape: bf16[8,512,64], index: 3, kind: input, shape index: {}]
  %s4 = inlined_call_operand.vmem [shape: f32[1,64], index: 4, kind: input, shape index: {}]
  %s5 = inlined_call_operand.vmem [shape: bf16[64,12], index: 5, kind: input, shape index: {}]
  %s6 = inlined_call_operand.vmem [shape: f32[1,12], index: 6, kind: input, shape index: {}]
  %s7 = inlined_call_operand.vmem [shape: f32[2,1,12], index: 7, kind: output, shape index: {}]
  %s8 = sld [smem:[#allocation0]]
  $region61: #{pvcnet_forward.3} parent=0
    _
  %s10 = ssub.s32 1, %s8
  %s11 = scalar_select 0, %s10, %s8
  loop: start=0, step=1, limit=4
  $region2: #{pvcnet_forward.3} parent=0 // loop_pre_header
    _
  $region3: #{pvcnet_forward.3} parent=0 // loop_header
    %s13 = sphi 0, %s17
    %p14 = scmp.ge.s32.totalorder %s13, 4
    %s23 = sphi 0, %s25
    %s26 = sphi 0, %s23
    %s27 = sphi 0, %s26
    %s43 = sphi 0, %s27
    %s47 = sphi 0, %s47
    %s49 = sphi 0, %s47
    %s50 = sphi 0, %s49
    %s64 = sphi 0, %s50
    %s68 = sphi 0, %s68
    %s70 = sphi 0, %s68
    %s71 = sphi 0, %s70
    %s85 = sphi 0, %s71
    %s89 = sphi 0, %s89
    %s91 = sphi 0, %s89
    %s92 = sphi 0, %s91
    %s106 = sphi 0, %s92
    %s110 = sphi 0, %s110
    %s112 = sphi 0, %s110
    %s113 = sphi 0, %s112
    %s127 = sphi 0, %s113
    %s131 = sphi 0, %s131
    %s133 = sphi 0, %s131
    %s134 = sphi 0, %s133
    %s148 = sphi 0, %s134
    %s152 = sphi 0, %s152
    %s154 = sphi 0, %s152
    %s155 = sphi 0, %s154
    %s169 = sphi 0, %s155
    %s175 = sphi 0, %s177
    %s178 = sphi 0, %s175
    %s179 = sphi 0, %s178
    %s195 = sphi 0, %s179
  $region4: #{pvcnet_forward.3} parent=0 // loop_header_branch
    %16 = sbr.rel (%p14) target = $region8
  $region5: #{pvcnet_forward.3} parent=0 // loop_body
    %s18 = ssub.s32 %s13, 1
    %s19 = ssub.s32 %s13, 2
    %s20 = sadd.s32 %s13, 1
    %s21 = ssub.s32 %s13, %s20
    %p22 = scmp.eq.s32.totalorder %s21, 0
    %s24 = sadd.s32 %s23, 1
    %s25 = scalar_select %p22, %s23, %s24
    %p28 = pneg %p22
    %p29 = scmp.eq.s32.totalorder %s13, 1
    %p30 = por %p28, %p29
    %p31 = scmp.ne.s32.totalorder %s23, %s26
    %p32 = scmp.eq.s32.totalorder %s13, 0
    %p33 = por %p31, %p32
    %p34 = scmp.ne.s32.totalorder %s23, %s26
    %p35 = scmp.eq.s32.totalorder %s18, 1
    %p36 = por %p34, %p35
    %p37 = scmp.ne.s32.totalorder %s26, %s27
    %p38 = scmp.eq.s32.totalorder %s18, 0
    %p39 = por %p37, %p38
    %p40 = scmp.ne.s32.totalorder %s26, %s27
    %p41 = scmp.eq.s32.totalorder %s19, 1
    %p42 = por %p40, %p41
    %p44 = scmp.ne.s32.totalorder %s27, %s43
    %p45 = scmp.eq.s32.totalorder %s19, 0
    %p46 = por %p44, %p45
    %s48 = sadd.s32 %s47, 1
    %p51 = scmp.eq.s32.totalorder %s13, 1
    %p52 = scmp.ne.s32.totalorder %s47, %s49
    %p53 = scmp.eq.s32.totalorder %s13, 0
    %p54 = por %p52, %p53
    %p55 = scmp.ne.s32.totalorder %s47, %s49
    %p56 = scmp.eq.s32.totalorder %s18, 1
    %p57 = por %p55, %p56
    %p58 = scmp.ne.s32.totalorder %s49, %s50
    %p59 = scmp.eq.s32.totalorder %s18, 0
    %p60 = por %p58, %p59
    %p61 = scmp.ne.s32.totalorder %s49, %s50
    %p62 = scmp.eq.s32.totalorder %s19, 1
    %p63 = por %p61, %p62
    %p65 = scmp.ne.s32.totalorder %s50, %s64
    %p66 = scmp.eq.s32.totalorder %s19, 0
    %p67 = por %p65, %p66
    %s69 = sadd.s32 %s68, 1
    %p72 = scmp.eq.s32.totalorder %s13, 1
    %p73 = scmp.ne.s32.totalorder %s68, %s70
    %p74 = scmp.eq.s32.totalorder %s13, 0
    %p75 = por %p73, %p74
    %p76 = scmp.ne.s32.totalorder %s68, %s70
    %p77 = scmp.eq.s32.totalorder %s18, 1
    %p78 = por %p76, %p77
    %p79 = scmp.ne.s32.totalorder %s70, %s71
    %p80 = scmp.eq.s32.totalorder %s18, 0
    %p81 = por %p79, %p80
    %p82 = scmp.ne.s32.totalorder %s70, %s71
    %p83 = scmp.eq.s32.totalorder %s19, 1
    %p84 = por %p82, %p83
    %p86 = scmp.ne.s32.totalorder %s71, %s85
    %p87 = scmp.eq.s32.totalorder %s19, 0
    %p88 = por %p86, %p87
    %s90 = sadd.s32 %s89, 1
    %p93 = scmp.eq.s32.totalorder %s13, 1
    %p94 = scmp.ne.s32.totalorder %s89, %s91
    %p95 = scmp.eq.s32.totalorder %s13, 0
    %p96 = por %p94, %p95
    %p97 = scmp.ne.s32.totalorder %s89, %s91
    %p98 = scmp.eq.s32.totalorder %s18, 1
    %p99 = por %p97, %p98
    %p100 = scmp.ne.s32.totalorder %s91, %s92
    %p101 = scmp.eq.s32.totalorder %s18, 0
    %p102 = por %p100, %p101
    %p103 = scmp.ne.s32.totalorder %s91, %s92
    %p104 = scmp.eq.s32.totalorder %s19, 1
    %p105 = por %p103, %p104
    %p107 = scmp.ne.s32.totalorder %s92, %s106
    %p108 = scmp.eq.s32.totalorder %s19, 0
    %p109 = por %p107, %p108
    %s111 = sadd.s32 %s110, 1
    %p114 = scmp.eq.s32.totalorder %s13, 1
    %p115 = scmp.ne.s32.totalorder %s110, %s112
    %p116 = scmp.eq.s32.totalorder %s13, 0
    %p117 = por %p115, %p116
    %p118 = scmp.ne.s32.totalorder %s110, %s112
    %p119 = scmp.eq.s32.totalorder %s18, 1
    %p120 = por %p118, %p119
    %p121 = scmp.ne.s32.totalorder %s112, %s113
    %p122 = scmp.eq.s32.totalorder %s18, 0
    %p123 = por %p121, %p122
    %p124 = scmp.ne.s32.totalorder %s112, %s113
    %p125 = scmp.eq.s32.totalorder %s19, 1
    %p126 = por %p124, %p125
    %p128 = scmp.ne.s32.totalorder %s113, %s127
    %p129 = scmp.eq.s32.totalorder %s19, 0
    %p130 = por %p128, %p129
    %s132 = sadd.s32 %s131, 1
    %p135 = scmp.eq.s32.totalorder %s13, 1
    %p136 = scmp.ne.s32.totalorder %s131, %s133
    %p137 = scmp.eq.s32.totalorder %s13, 0
    %p138 = por %p136, %p137
    %p139 = scmp.ne.s32.totalorder %s131, %s133
    %p140 = scmp.eq.s32.totalorder %s18, 1
    %p141 = por %p139, %p140
    %p142 = scmp.ne.s32.totalorder %s133, %s134
    %p143 = scmp.eq.s32.totalorder %s18, 0
    %p144 = por %p142, %p143
    %p145 = scmp.ne.s32.totalorder %s133, %s134
    %p146 = scmp.eq.s32.totalorder %s19, 1
    %p147 = por %p145, %p146
    %p149 = scmp.ne.s32.totalorder %s134, %s148
    %p150 = scmp.eq.s32.totalorder %s19, 0
    %p151 = por %p149, %p150
    %s153 = sadd.s32 %s152, 1
    %p156 = scmp.eq.s32.totalorder %s13, 1
    %p157 = scmp.ne.s32.totalorder %s152, %s154
    %p158 = scmp.eq.s32.totalorder %s13, 0
    %p159 = por %p157, %p158
    %p160 = scmp.ne.s32.totalorder %s152, %s154
    %p161 = scmp.eq.s32.totalorder %s18, 1
    %p162 = por %p160, %p161
    %p163 = scmp.ne.s32.totalorder %s154, %s155
    %p164 = scmp.eq.s32.totalorder %s18, 0
    %p165 = por %p163, %p164
    %p166 = scmp.ne.s32.totalorder %s154, %s155
    %p167 = scmp.eq.s32.totalorder %s19, 1
    %p168 = por %p166, %p167
    %p170 = scmp.ne.s32.totalorder %s155, %s169
    %p171 = scmp.eq.s32.totalorder %s19, 0
    %p172 = por %p170, %p171
    %s173 = ssub.s32 %s13, %s20
    %p174 = scmp.eq.s32.totalorder %s173, 0
    %s176 = sadd.s32 %s175, 1
    %s177 = scalar_select %p174, %s175, %s176
    %p180 = pneg %p174
    %p181 = scmp.eq.s32.totalorder %s13, 1
    %p182 = por %p180, %p181
    %p183 = scmp.ne.s32.totalorder %s175, %s178
    %p184 = scmp.eq.s32.totalorder %s13, 0
    %p185 = por %p183, %p184
    %p186 = scmp.ne.s32.totalorder %s175, %s178
    %p187 = scmp.eq.s32.totalorder %s18, 1
    %p188 = por %p186, %p187
    %p189 = scmp.ne.s32.totalorder %s178, %s179
    %p190 = scmp.eq.s32.totalorder %s18, 0
    %p191 = por %p189, %p190
    %p192 = scmp.ne.s32.totalorder %s178, %s179
    %p193 = scmp.eq.s32.totalorder %s19, 1
    %p194 = por %p192, %p193
    %p196 = scmp.ne.s32.totalorder %s179, %s195
    %p197 = scmp.eq.s32.totalorder %s19, 0
    %p198 = por %p196, %p197
    %p199 = scmp.le.s32.totalorder 1, %s13
    %p200 = scmp.lt.s32.totalorder %s13, 3
    %p201 = pnand %p199, %p200
    %p202 = pneg %p201
    // Predicated region
    $region9: #{pvcnet_forward.3} parent=5 // pred_check
      _
    $region10: #{pvcnet_forward.3} parent=5 // pred_check_branch
      %204 = sbr.rel (%p201) target = $region12
    $region11: #{pvcnet_forward.3} parent=5 // pred_region
      %s205 = ssub.s32 %s13, 1
      // Predicated region
      $region13: #{pvcnet_forward.3} parent=11 // pred_check
        %p206 = pneg %p60
      $region14: #{pvcnet_forward.3} parent=11 // pred_check_branch
        %208 = sbr.rel (%p206) target = $region16
      $region15: #{pvcnet_forward.3} parent=11 // pred_region
        _
      $region16: #{pvcnet_forward.3} parent=11 // pred_fallthru
        _
      // Predicated region
      $region17: #{pvcnet_forward.3} parent=11 // pred_check
        %p209 = pneg %p81
      $region18: #{pvcnet_forward.3} parent=11 // pred_check_branch
        %211 = sbr.rel (%p209) target = $region20
      $region19: #{pvcnet_forward.3} parent=11 // pred_region
        _
      $region20: #{pvcnet_forward.3} parent=11 // pred_fallthru
        _
      // Predicated region
      $region21: #{pvcnet_forward.3} parent=11 // pred_check
        %p212 = pneg %p102
      $region22: #{pvcnet_forward.3} parent=11 // pred_check_branch
        %214 = sbr.rel (%p212) target = $region24
      $region23: #{pvcnet_forward.3} parent=11 // pred_region
        _
      $region24: #{pvcnet_forward.3} parent=11 // pred_fallthru
        _
      // Predicated region
      $region25: #{pvcnet_forward.3} parent=11 // pred_check
        %p215 = pneg %p123
      $region26: #{pvcnet_forward.3} parent=11 // pred_check_branch
        %217 = sbr.rel (%p215) target = $region28
      $region27: #{pvcnet_forward.3} parent=11 // pred_region
        _
      $region28: #{pvcnet_forward.3} parent=11 // pred_fallthru
        _
      // Predicated region
      $region29: #{pvcnet_forward.3} parent=11 // pred_check
        %p218 = pneg %p144
      $region30: #{pvcnet_forward.3} parent=11 // pred_check_branch
        %220 = sbr.rel (%p218) target = $region32
      $region31: #{pvcnet_forward.3} parent=11 // pred_region
        _
      $region32: #{pvcnet_forward.3} parent=11 // pred_fallthru
        _
      // Predicated region
      $region33: #{pvcnet_forward.3} parent=11 // pred_check
        %p221 = pneg %p165
      $region34: #{pvcnet_forward.3} parent=11 // pred_check_branch
        %223 = sbr.rel (%p221) target = $region36
      $region35: #{pvcnet_forward.3} parent=11 // pred_region
        _
      $region36: #{pvcnet_forward.3} parent=11 // pred_fallthru
        _
    $region12: #{pvcnet_forward.3} parent=5 // pred_fallthru
      _
    %p224 = scmp.lt.s32.totalorder %s13, 2
    // Predicated region
    $region37: #{pvcnet_forward.3} parent=5 // pred_check
      %p225 = pneg %p224
    $region38: #{pvcnet_forward.3} parent=5 // pred_check_branch
      %227 = sbr.rel (%p225) target = $region40
    $region39: #{pvcnet_forward.3} parent=5 // pred_region
      // Predicated region
      $region41: #{pvcnet_forward.3} parent=39 // pred_check
        %p228 = pneg %p33
      $region42: #{pvcnet_forward.3} parent=39 // pred_check_branch
        %230 = sbr.rel (%p228) target = $region44
      $region43: #{pvcnet_forward.3} parent=39 // pred_region
        %p231 = scmp.lt.s32.totalorder %s13, 1
        %s232 = scalar_select %p231, %s13, 1
        %s233 = smul.addr %s232, 16
        %s234 = smul.addr %s233, 4
        %s235 = scalar_lea.vmem %s0, %s234
      $region44: #{pvcnet_forward.3} parent=39 // pred_fallthru
        _
    $region40: #{pvcnet_forward.3} parent=5 // pred_fallthru
      _
    %p236 = scmp.le.s32.totalorder 1, %s13
    %p237 = scmp.lt.s32.totalorder %s13, 3
    %p238 = pnand %p236, %p237
    %p239 = pneg %p238
    // Predicated region
    $region45: #{pvcnet_forward.3} parent=5 // pred_check
      _
    $region46: #{pvcnet_forward.3} parent=5 // pred_check_branch
      %241 = sbr.rel (%p238) target = $region48
    $region47: #{pvcnet_forward.3} parent=5 // pred_region
      %s242 = ssub.s32 %s13, 1
      %p243 = scmp.lt.s32.totalorder %s18, 1
      %s244 = scalar_select %p243, %s18, 1
      %s245 = smul.addr %s244, 16
      %s246 = smul.addr %s245, 4
      %s247 = scalar_lea.vmem %s0, %s246
      %p248 = pneg %p39
      %p249 = pneg %p36
      %p250 = pneg %p60
      %p251 = pneg %p57
      %p252 = pneg %p81
      %p253 = pneg %p78
      %p254 = pneg %p102
      %p255 = pneg %p99
      %p256 = pneg %p123
      %p257 = pneg %p120
      %p258 = pneg %p144
      %p259 = pneg %p141
      %p260 = pneg %p165
      %p261 = pneg %p162
      %p262 = pneg %p191
      %p263 = pneg %p188
      %p264 = scmp.lt.s32.totalorder %s18, 1
      %s265 = scalar_select %p264, %s18, 1
      %s266 = scalar_lea.vmem %s7, %s265
      %p267 = scmp.lt.s32.totalorder %s18, 1
      %s268 = scalar_select %p267, %s18, 1
      %s269 = smul.addr %s268, 16
      %s270 = smul.addr %s269, 4
      %s271 = scalar_lea.vmem %s0, %s270
      %p272 = scmp.lt.s32.totalorder %s18, 1
      %s273 = scalar_select %p272, %s18, 1
      %s274 = scalar_lea.vmem %s7, %s273
      %v276 = vld [vmem:[%s1] sm:$0xf]
      %v277 = vld [vmem:[%s271] sm:$0xff]
      %v278 = vld [vmem:[%s271 + $0x8] sm:$0xff]
      %v279 = vld [vmem:[%s271 + $0x10] sm:$0xff]
      %v280 = vld [vmem:[%s271 + $0x18] sm:$0xff]
      %v281 = vld [vmem:[%s271 + $0x20] sm:$0xff]
      %v282 = vld [vmem:[%s271 + $0x28] sm:$0xff]
      %v283 = vld [vmem:[%s271 + $0x30] sm:$0x33]
      %v284 = vld [vmem:[%s271 + $0x38] sm:$0x33]
      %v285 = vld [vmem:[%s2] sm:$0xff]
      %287 = vset.pattern.permute.xlu0 0
      %288 = vperm.xlu0 %287, %v285
      %v289 = vpop.permute.xlu0 %288
      %v299 = vunpack.c.l.b16 %v277
      %v300 = vunpack.c.h.b16 %v277
      %v301 = vunpack.c.l.b16 %v278
      %v302 = vunpack.c.h.b16 %v278
      %v303 = vunpack.c.l.b16 %v279
      %v304 = vunpack.c.h.b16 %v279
      %v305 = vunpack.c.l.b16 %v280
      %v306 = vunpack.c.h.b16 %v280
      %v307 = vunpack.c.l.b16 %v281
      %v308 = vunpack.c.h.b16 %v281
      %v309 = vunpack.c.l.b16 %v282
      %v310 = vunpack.c.h.b16 %v282
      %v311 = vunpack.c.l.b16 %v283
      %v312 = vunpack.c.h.b16 %v283
      %v313 = vunpack.c.l.b16 %v284
      %v314 = vunpack.c.h.b16 %v284
      %v315 = vpack.c.b16 %v303, %v299
      %v316 = vpack.c.b16 %v304, %v300
      %v317 = vpack.c.b16 %v305, %v301
      %v318 = vpack.c.b16 %v306, %v302
      %v319 = vpack.c.b16 %v311, %v307
      %v320 = vpack.c.b16 %v312, %v308
      %v321 = vpack.c.b16 %v313, %v309
      %v322 = vpack.c.b16 %v314, %v310
      %vm327 = vcmask 220160
      %v329 = vsel %vm327, %v276, 0
      %vm331 = vcmask 1044480
      %vm332 = vcmask 1045504
      %v333 = vsel %vm331, 4294967295, 65535
      %v334 = vsel %vm332, %v333, 0
      %v336 = vand.u32 %v319, %v334
      %v339 = vand.u32 %v320, %v334
      %v342 = vand.u32 %v321, %v334
      %v345 = vand.u32 %v322, %v334
      %347 = vmatprep.subr.bf16.mxu0 0
      %348 = vmatpush1.bf16.msra.mxu0 0
      %349 = vmatprep.subr.bf16.mxu0 0
      %350 = vmatpush1.bf16.msra.mxu0 0
      %351 = vmatprep.subr.bf16.mxu0 0
      %352 = vmatpush1.bf16.msra.mxu0 0
      %353 = vmatprep.subr.bf16.mxu0 0
      %354 = vmatpush1.bf16.msra.mxu0 0
      %355 = vmatprep.subr.bf16.mxu0 0
      %356 = vmatpush1.bf16.msra.mxu0 0
      %357 = vmatprep.subr.bf16.mxu0 0
      %358 = vmatpush1.bf16.msra.mxu0 0
      %359 = vmatprep.subr.bf16.mxu0 %v339
      %360 = vmatpush1.bf16.msra.mxu0 %v336
      %361 = vmatprep.subr.bf16.mxu0 %v316
      %362 = vmatpush1.bf16.msra.mxu0 %v315
      %363 = vmatprep.subr.bf16.mxu0 0
      %364 = vmatpush2.bf16.msra.mxu0 0
      %365 = vmatprep.subr.bf16.mxu0 0
      %366 = vmatpush2.bf16.msra.mxu0 0
      %367 = vmatprep.subr.bf16.mxu0 0
      %368 = vmatpush2.bf16.msra.mxu0 0
      %369 = vmatprep.subr.bf16.mxu0 0
      %370 = vmatpush2.bf16.msra.mxu0 0
      %371 = vmatprep.subr.bf16.mxu0 0
      %372 = vmatpush2.bf16.msra.mxu0 0
      %373 = vmatprep.subr.bf16.mxu0 0
      %374 = vmatpush2.bf16.msra.mxu0 0
      %375 = vmatprep.subr.bf16.mxu0 0
      %376 = vmatpush2.bf16.msra.mxu0 0
      %377 = vmatprep.subr.bf16.mxu0 0
      %378 = vmatpush2.bf16.msra.mxu0 0
      %379 = vmatprep.mubr.bf16.mxu0 0
      %380 = vmatmul.mubr.bf16.gmra.mxu0 %v329
      %v381 = vpop.f32.mrf.mxu0
      %v382 = vadd.f32 %v289, %v381
      %v383 = vpop.f32.mrf.mxu0
      %v384 = vadd.f32 %v289, %v383
      %v385 = vpop.f32.mrf.mxu0
      %v386 = vpop.f32.mrf.mxu0
      %387 = vdwg.mxu0
      %388 = vmatprep.subr.bf16.mxu0 0
      %389 = vmatpush1.bf16.msra.mxu0 0
      %390 = vmatprep.subr.bf16.mxu0 0
      %391 = vmatpush1.bf16.msra.mxu0 0
      %392 = vmatprep.subr.bf16.mxu0 0
      %393 = vmatpush1.bf16.msra.mxu0 0
      %394 = vmatprep.subr.bf16.mxu0 0
      %395 = vmatpush1.bf16.msra.mxu0 0
      %396 = vmatprep.subr.bf16.mxu0 0
      %397 = vmatpush1.bf16.msra.mxu0 0
      %398 = vmatprep.subr.bf16.mxu0 0
      %399 = vmatpush1.bf16.msra.mxu0 0
      %400 = vmatprep.subr.bf16.mxu0 %v345
      %401 = vmatpush1.bf16.msra.mxu0 %v342
      %402 = vmatprep.subr.bf16.mxu0 %v318
      %403 = vmatpush1.bf16.msra.mxu0 %v317
      %404 = vmatprep.subr.bf16.mxu0 0
      %405 = vmatpush2.bf16.msra.mxu0 0
      %406 = vmatprep.subr.bf16.mxu0 0
      %407 = vmatpush2.bf16.msra.mxu0 0
      %408 = vmatprep.subr.bf16.mxu0 0
      %409 = vmatpush2.bf16.msra.mxu0 0
      %410 = vmatprep.subr.bf16.mxu0 0
      %411 = vmatpush2.bf16.msra.mxu0 0
      %412 = vmatprep.subr.bf16.mxu0 0
      %413 = vmatpush2.bf16.msra.mxu0 0
      %414 = vmatprep.subr.bf16.mxu0 0
      %415 = vmatpush2.bf16.msra.mxu0 0
      %416 = vmatprep.subr.bf16.mxu0 0
      %417 = vmatpush2.bf16.msra.mxu0 0
      %418 = vmatprep.subr.bf16.mxu0 0
      %419 = vmatpush2.bf16.msra.mxu0 0
      %420 = vmatprep.mubr.bf16.mxu0 0
      %421 = vmatmul.mubr.bf16.gmra.mxu0 %v329
      %v422 = vpop.f32.mrf.mxu0
      %v423 = vadd.f32 %v289, %v422
      %v424 = vpop.f32.mrf.mxu0
      %v425 = vadd.f32 %v289, %v424
      %v426 = vpop.f32.mrf.mxu0
      %v427 = vpop.f32.mrf.mxu0
      %428 = vdwg.mxu0
      %v429 = vmax.f32 %v382, 0.0
      %v430 = vmax.f32 %v384, 0.0
      %v431 = vmax.f32 %v423, 0.0
      %v432 = vmax.f32 %v425, 0.0
      %v433 = vpack.c.bf16 %v429, %v429
      %v434 = vpack.c.bf16 %v430, %v430
      %v435 = vpack.c.bf16 %v431, %v431
      %v436 = vpack.c.bf16 %v432, %v432
      %v437 = vld [vmem:[%s4] sm:$0x1]
      %v438 = vld [vmem:[%s3] sm:$0xf]
      %v439 = vld [vmem:[%s3 + $0x4] sm:$0xf]
      %v440 = vld [vmem:[%s3 + $0x8] sm:$0xf]
      %v441 = vld [vmem:[%s3 + $0xc] sm:$0xf]
      %v442 = vld [vmem:[%s3 + $0x10] sm:$0xf]
      %v443 = vld [vmem:[%s3 + $0x14] sm:$0xf]
      %v444 = vld [vmem:[%s3 + $0x18] sm:$0xf]
      %v445 = vld [vmem:[%s3 + $0x1c] sm:$0xf]
      %v446 = vld [vmem:[%s3 + $0x20] sm:$0xf]
      %v447 = vld [vmem:[%s3 + $0x24] sm:$0xf]
      %v448 = vld [vmem:[%s3 + $0x28] sm:$0xf]
      %v449 = vld [vmem:[%s3 + $0x2c] sm:$0xf]
      %v450 = vld [vmem:[%s3 + $0x30] sm:$0xf]
      %v451 = vld [vmem:[%s3 + $0x34] sm:$0xf]
      %v452 = vld [vmem:[%s3 + $0x38] sm:$0xf]
      %v453 = vld [vmem:[%s3 + $0x3c] sm:$0xf]
      %v454 = vld [vmem:[%s3 + $0x40] sm:$0xf]
      %v455 = vld [vmem:[%s3 + $0x44] sm:$0xf]
      %v456 = vld [vmem:[%s3 + $0x48] sm:$0xf]
      %v457 = vld [vmem:[%s3 + $0x4c] sm:$0xf]
      %v458 = vld [vmem:[%s3 + $0x50] sm:$0xf]
      %v459 = vld [vmem:[%s3 + $0x54] sm:$0xf]
      %v460 = vld [vmem:[%s3 + $0x58] sm:$0xf]
      %v461 = vld [vmem:[%s3 + $0x5c] sm:$0xf]
      %v462 = vld [vmem:[%s3 + $0x60] sm:$0xf]
      %v463 = vld [vmem:[%s3 + $0x64] sm:$0xf]
      %v464 = vld [vmem:[%s3 + $0x68] sm:$0xf]
      %v465 = vld [vmem:[%s3 + $0x6c] sm:$0xf]
      %v466 = vld [vmem:[%s3 + $0x70] sm:$0xf]
      %v467 = vld [vmem:[%s3 + $0x74] sm:$0xf]
      %v468 = vld [vmem:[%s3 + $0x78] sm:$0xf]
      %v469 = vld [vmem:[%s3 + $0x7c] sm:$0xf]
      %v470 = vld [vmem:[%s3 + $0x80] sm:$0xf]
      %v471 = vld [vmem:[%s3 + $0x84] sm:$0xf]
      %v472 = vld [vmem:[%s3 + $0x88] sm:$0xf]
      %v473 = vld [vmem:[%s3 + $0x8c] sm:$0xf]
      %v474 = vld [vmem:[%s3 + $0x90] sm:$0xf]
      %v475 = vld [vmem:[%s3 + $0x94] sm:$0xf]
      %v476 = vld [vmem:[%s3 + $0x98] sm:$0xf]
      %v477 = vld [vmem:[%s3 + $0x9c] sm:$0xf]
      %v478 = vld [vmem:[%s3 + $0xa0] sm:$0xf]
      %v479 = vld [vmem:[%s3 + $0xa4] sm:$0xf]
      %v480 = vld [vmem:[%s3 + $0xa8] sm:$0xf]
      %v481 = vld [vmem:[%s3 + $0xac] sm:$0xf]
      %v482 = vld [vmem:[%s3 + $0xb0] sm:$0xf]
      %v483 = vld [vmem:[%s3 + $0xb4] sm:$0xf]
      %v484 = vld [vmem:[%s3 + $0xb8] sm:$0xf]
      %v485 = vld [vmem:[%s3 + $0xbc] sm:$0xf]
      %v486 = vld [vmem:[%s3 + $0xc0] sm:$0xf]
      %v487 = vld [vmem:[%s3 + $0xc4] sm:$0xf]
      %v488 = vld [vmem:[%s3 + $0xc8] sm:$0xf]
      %v489 = vld [vmem:[%s3 + $0xcc] sm:$0xf]
      %v490 = vld [vmem:[%s3 + $0xd0] sm:$0xf]
      %v491 = vld [vmem:[%s3 + $0xd4] sm:$0xf]
      %v492 = vld [vmem:[%s3 + $0xd8] sm:$0xf]
      %v493 = vld [vmem:[%s3 + $0xdc] sm:$0xf]
      %v494 = vld [vmem:[%s3 + $0xe0] sm:$0xf]
      %v495 = vld [vmem:[%s3 + $0xe4] sm:$0xf]
      %v496 = vld [vmem:[%s3 + $0xe8] sm:$0xf]
      %v497 = vld [vmem:[%s3 + $0xec] sm:$0xf]
      %v498 = vld [vmem:[%s3 + $0xf0] sm:$0xf]
      %v499 = vld [vmem:[%s3 + $0xf4] sm:$0xf]
      %v500 = vld [vmem:[%s3 + $0xf8] sm:$0xf]
      %v501 = vld [vmem:[%s3 + $0xfc] sm:$0xf]
      %v566 = vunpack.c.l.b16 %v438
      %v567 = vunpack.c.l.b16 %v439
      %v568 = vunpack.c.l.b16 %v440
      %v569 = vunpack.c.l.b16 %v441
      %v570 = vunpack.c.l.b16 %v442
      %v571 = vunpack.c.l.b16 %v443
      %v572 = vunpack.c.l.b16 %v444
      %v573 = vunpack.c.l.b16 %v445
      %v574 = vunpack.c.l.b16 %v446
      %v575 = vunpack.c.l.b16 %v447
      %v576 = vunpack.c.l.b16 %v448
      %v577 = vunpack.c.l.b16 %v449
      %v578 = vunpack.c.l.b16 %v450
      %v579 = vunpack.c.l.b16 %v451
      %v580 = vunpack.c.l.b16 %v452
      %v581 = vunpack.c.l.b16 %v453
      %v582 = vunpack.c.l.b16 %v454
      %v583 = vunpack.c.l.b16 %v455
      %v584 = vunpack.c.l.b16 %v456
      %v585 = vunpack.c.l.b16 %v457
      %v586 = vunpack.c.l.b16 %v458
      %v587 = vunpack.c.l.b16 %v459
      %v588 = vunpack.c.l.b16 %v460
      %v589 = vunpack.c.l.b16 %v461
      %v590 = vunpack.c.l.b16 %v462
      %v591 = vunpack.c.l.b16 %v463
      %v592 = vunpack.c.l.b16 %v464
      %v593 = vunpack.c.l.b16 %v465
      %v594 = vunpack.c.l.b16 %v466
      %v595 = vunpack.c.l.b16 %v467
      %v596 = vunpack.c.l.b16 %v468
      %v597 = vunpack.c.l.b16 %v469
      %v598 = vunpack.c.l.b16 %v470
      %v599 = vunpack.c.l.b16 %v471
      %v600 = vunpack.c.l.b16 %v472
      %v601 = vunpack.c.l.b16 %v473
      %v602 = vunpack.c.l.b16 %v474
      %v603 = vunpack.c.l.b16 %v475
      %v604 = vunpack.c.l.b16 %v476
      %v605 = vunpack.c.l.b16 %v477
      %v606 = vunpack.c.l.b16 %v478
      %v607 = vunpack.c.l.b16 %v479
      %v608 = vunpack.c.l.b16 %v480
      %v609 = vunpack.c.l.b16 %v481
      %v610 = vunpack.c.l.b16 %v482
      %v611 = vunpack.c.l.b16 %v483
      %v612 = vunpack.c.l.b16 %v484
      %v613 = vunpack.c.l.b16 %v485
      %v614 = vunpack.c.l.b16 %v486
      %v615 = vunpack.c.l.b16 %v487
      %v616 = vunpack.c.l.b16 %v488
      %v617 = vunpack.c.l.b16 %v489
      %v618 = vunpack.c.l.b16 %v490
      %v619 = vunpack.c.l.b16 %v491
      %v620 = vunpack.c.l.b16 %v492
      %v621 = vunpack.c.l.b16 %v493
      %v622 = vunpack.c.l.b16 %v494
      %v623 = vunpack.c.l.b16 %v495
      %v624 = vunpack.c.l.b16 %v496
      %v625 = vunpack.c.l.b16 %v497
      %v626 = vunpack.c.l.b16 %v498
      %v627 = vunpack.c.l.b16 %v499
      %v628 = vunpack.c.l.b16 %v500
      %v629 = vunpack.c.l.b16 %v501
      %v630 = vpack.c.b16 %v567, %v566
      %v631 = vpack.c.b16 %v569, %v568
      %v632 = vpack.c.b16 %v571, %v570
      %v633 = vpack.c.b16 %v573, %v572
      %v634 = vpack.c.b16 %v575, %v574
      %v635 = vpack.c.b16 %v577, %v576
      %v636 = vpack.c.b16 %v579, %v578
      %v637 = vpack.c.b16 %v581, %v580
      %v638 = vpack.c.b16 %v583, %v582
      %v639 = vpack.c.b16 %v585, %v584
      %v640 = vpack.c.b16 %v587, %v586
      %v641 = vpack.c.b16 %v589, %v588
      %v642 = vpack.c.b16 %v591, %v590
      %v643 = vpack.c.b16 %v593, %v592
      %v644 = vpack.c.b16 %v595, %v594
      %v645 = vpack.c.b16 %v597, %v596
      %v646 = vpack.c.b16 %v599, %v598
      %v647 = vpack.c.b16 %v601, %v600
      %v648 = vpack.c.b16 %v603, %v602
      %v649 = vpack.c.b16 %v605, %v604
      %v650 = vpack.c.b16 %v607, %v606
      %v651 = vpack.c.b16 %v609, %v608
      %v652 = vpack.c.b16 %v611, %v610
      %v653 = vpack.c.b16 %v613, %v612
      %v654 = vpack.c.b16 %v615, %v614
      %v655 = vpack.c.b16 %v617, %v616
      %v656 = vpack.c.b16 %v619, %v618
      %v657 = vpack.c.b16 %v621, %v620
      %v658 = vpack.c.b16 %v623, %v622
      %v659 = vpack.c.b16 %v625, %v624
      %v660 = vpack.c.b16 %v627, %v626
      %v661 = vpack.c.b16 %v629, %v628
      %694 = vmatprep.subr.bf16.mxu0 0
      %695 = vmatpush1.bf16.msra.mxu0 %v637
      %696 = vmatprep.subr.bf16.mxu0 0
      %697 = vmatpush1.bf16.msra.mxu0 %v636
      %698 = vmatprep.subr.bf16.mxu0 0
      %699 = vmatpush1.bf16.msra.mxu0 %v635
      %700 = vmatprep.subr.bf16.mxu0 0
      %701 = vmatpush1.bf16.msra.mxu0 %v634
      %702 = vmatprep.subr.bf16.mxu0 0
      %703 = vmatpush1.bf16.msra.mxu0 %v633
      %704 = vmatprep.subr.bf16.mxu0 0
      %705 = vmatpush1.bf16.msra.mxu0 %v632
      %706 = vmatprep.subr.bf16.mxu0 0
      %707 = vmatpush1.bf16.msra.mxu0 %v631
      %708 = vmatprep.subr.bf16.mxu0 0
      %709 = vmatpush1.bf16.msra.mxu0 %v630
      %710 = vmatprep.subr.bf16.mxu0 0
      %711 = vmatpush2.bf16.msra.mxu0 %v645
      %712 = vmatprep.subr.bf16.mxu0 0
      %713 = vmatpush2.bf16.msra.mxu0 %v644
      %714 = vmatprep.subr.bf16.mxu0 0
      %715 = vmatpush2.bf16.msra.mxu0 %v643
      %716 = vmatprep.subr.bf16.mxu0 0
      %717 = vmatpush2.bf16.msra.mxu0 %v642
      %718 = vmatprep.subr.bf16.mxu0 0
      %719 = vmatpush2.bf16.msra.mxu0 %v641
      %720 = vmatprep.subr.bf16.mxu0 0
      %721 = vmatpush2.bf16.msra.mxu0 %v640
      %722 = vmatprep.subr.bf16.mxu0 0
      %723 = vmatpush2.bf16.msra.mxu0 %v639
      %724 = vmatprep.subr.bf16.mxu0 0
      %725 = vmatpush2.bf16.msra.mxu0 %v638
      %726 = vmatprep.mubr.bf16.mxu0 %v434
      %727 = vmatmul.mubr.bf16.gmra.mxu0 %v433
      %v728 = vpop.f32.mrf.mxu0
      %v729 = vadd.f32 0.0, %v728
      %v730 = vpop.f32.mrf.mxu0
      %v731 = vpop.f32.mrf.mxu0
      %v732 = vpop.f32.mrf.mxu0
      %733 = vdwg.mxu0
      %734 = vmatprep.subr.bf16.mxu0 0
      %735 = vmatpush1.bf16.msra.mxu0 %v653
      %736 = vmatprep.subr.bf16.mxu0 0
      %737 = vmatpush1.bf16.msra.mxu0 %v652
      %738 = vmatprep.subr.bf16.mxu0 0
      %739 = vmatpush1.bf16.msra.mxu0 %v651
      %740 = vmatprep.subr.bf16.mxu0 0
      %741 = vmatpush1.bf16.msra.mxu0 %v650
      %742 = vmatprep.subr.bf16.mxu0 0
      %743 = vmatpush1.bf16.msra.mxu0 %v649
      %744 = vmatprep.subr.bf16.mxu0 0
      %745 = vmatpush1.bf16.msra.mxu0 %v648
      %746 = vmatprep.subr.bf16.mxu0 0
      %747 = vmatpush1.bf16.msra.mxu0 %v647
      %748 = vmatprep.subr.bf16.mxu0 0
      %749 = vmatpush1.bf16.msra.mxu0 %v646
      %750 = vmatprep.subr.bf16.mxu0 0
      %751 = vmatpush2.bf16.msra.mxu0 %v661
      %752 = vmatprep.subr.bf16.mxu0 0
      %753 = vmatpush2.bf16.msra.mxu0 %v660
      %754 = vmatprep.subr.bf16.mxu0 0
      %755 = vmatpush2.bf16.msra.mxu0 %v659
      %756 = vmatprep.subr.bf16.mxu0 0
      %757 = vmatpush2.bf16.msra.mxu0 %v658
      %758 = vmatprep.subr.bf16.mxu0 0
      %759 = vmatpush2.bf16.msra.mxu0 %v657
      %760 = vmatprep.subr.bf16.mxu0 0
      %761 = vmatpush2.bf16.msra.mxu0 %v656
      %762 = vmatprep.subr.bf16.mxu0 0
      %763 = vmatpush2.bf16.msra.mxu0 %v655
      %764 = vmatprep.subr.bf16.mxu0 0
      %765 = vmatpush2.bf16.msra.mxu0 %v654
      %766 = vmatprep.mubr.bf16.mxu0 %v436
      %767 = vmatmul.mubr.bf16.gmra.mxu0 %v435
      %v768 = vpop.f32.mrf.mxu0
      %v769 = vadd.f32 %v729, %v768
      %v770 = vpop.f32.mrf.mxu0
      %v771 = vpop.f32.mrf.mxu0
      %v772 = vpop.f32.mrf.mxu0
      %773 = vdwg.mxu0
      %v774 = vadd.f32 %v437, %v769
      %s775 = scalar_lea.vmem %s3, 256
      %v776 = vld [vmem:[%s775] sm:$0xf]
      %v777 = vld [vmem:[%s775 + $0x4] sm:$0xf]
      %v778 = vld [vmem:[%s775 + $0x8] sm:$0xf]
      %v779 = vld [vmem:[%s775 + $0xc] sm:$0xf]
      %v780 = vld [vmem:[%s775 + $0x10] sm:$0xf]
      %v781 = vld [vmem:[%s775 + $0x14] sm:$0xf]
      %v782 = vld [vmem:[%s775 + $0x18] sm:$0xf]
      %v783 = vld [vmem:[%s775 + $0x1c] sm:$0xf]
      %v784 = vld [vmem:[%s775 + $0x20] sm:$0xf]
      %v785 = vld [vmem:[%s775 + $0x24] sm:$0xf]
      %v786 = vld [vmem:[%s775 + $0x28] sm:$0xf]
      %v787 = vld [vmem:[%s775 + $0x2c] sm:$0xf]
      %v788 = vld [vmem:[%s775 + $0x30] sm:$0xf]
      %v789 = vld [vmem:[%s775 + $0x34] sm:$0xf]
      %v790 = vld [vmem:[%s775 + $0x38] sm:$0xf]
      %v791 = vld [vmem:[%s775 + $0x3c] sm:$0xf]
      %v792 = vld [vmem:[%s775 + $0x40] sm:$0xf]
      %v793 = vld [vmem:[%s775 + $0x44] sm:$0xf]
      %v794 = vld [vmem:[%s775 + $0x48] sm:$0xf]
      %v795 = vld [vmem:[%s775 + $0x4c] sm:$0xf]
      %v796 = vld [vmem:[%s775 + $0x50] sm:$0xf]
      %v797 = vld [vmem:[%s775 + $0x54] sm:$0xf]
      %v798 = vld [vmem:[%s775 + $0x58] sm:$0xf]
      %v799 = vld [vmem:[%s775 + $0x5c] sm:$0xf]
      %v800 = vld [vmem:[%s775 + $0x60] sm:$0xf]
      %v801 = vld [vmem:[%s775 + $0x64] sm:$0xf]
      %v802 = vld [vmem:[%s775 + $0x68] sm:$0xf]
      %v803 = vld [vmem:[%s775 + $0x6c] sm:$0xf]
      %v804 = vld [vmem:[%s775 + $0x70] sm:$0xf]
      %v805 = vld [vmem:[%s775 + $0x74] sm:$0xf]
      %v806 = vld [vmem:[%s775 + $0x78] sm:$0xf]
      %v807 = vld [vmem:[%s775 + $0x7c] sm:$0xf]
      %v808 = vld [vmem:[%s775 + $0x80] sm:$0xf]
      %v809 = vld [vmem:[%s775 + $0x84] sm:$0xf]
      %v810 = vld [vmem:[%s775 + $0x88] sm:$0xf]
      %v811 = vld [vmem:[%s775 + $0x8c] sm:$0xf]
      %v812 = vld [vmem:[%s775 + $0x90] sm:$0xf]
      %v813 = vld [vmem:[%s775 + $0x94] sm:$0xf]
      %v814 = vld [vmem:[%s775 + $0x98] sm:$0xf]
      %v815 = vld [vmem:[%s775 + $0x9c] sm:$0xf]
      %v816 = vld [vmem:[%s775 + $0xa0] sm:$0xf]
      %v817 = vld [vmem:[%s775 + $0xa4] sm:$0xf]
      %v818 = vld [vmem:[%s775 + $0xa8] sm:$0xf]
      %v819 = vld [vmem:[%s775 + $0xac] sm:$0xf]
      %v820 = vld [vmem:[%s775 + $0xb0] sm:$0xf]
      %v821 = vld [vmem:[%s775 + $0xb4] sm:$0xf]
      %v822 = vld [vmem:[%s775 + $0xb8] sm:$0xf]
      %v823 = vld [vmem:[%s775 + $0xbc] sm:$0xf]
      %v824 = vld [vmem:[%s775 + $0xc0] sm:$0xf]
      %v825 = vld [vmem:[%s775 + $0xc4] sm:$0xf]
      %v826 = vld [vmem:[%s775 + $0xc8] sm:$0xf]
      %v827 = vld [vmem:[%s775 + $0xcc] sm:$0xf]
      %v828 = vld [vmem:[%s775 + $0xd0] sm:$0xf]
      %v829 = vld [vmem:[%s775 + $0xd4] sm:$0xf]
      %v830 = vld [vmem:[%s775 + $0xd8] sm:$0xf]
      %v831 = vld [vmem:[%s775 + $0xdc] sm:$0xf]
      %v832 = vld [vmem:[%s775 + $0xe0] sm:$0xf]
      %v833 = vld [vmem:[%s775 + $0xe4] sm:$0xf]
      %v834 = vld [vmem:[%s775 + $0xe8] sm:$0xf]
      %v835 = vld [vmem:[%s775 + $0xec] sm:$0xf]
      %v836 = vld [vmem:[%s775 + $0xf0] sm:$0xf]
      %v837 = vld [vmem:[%s775 + $0xf4] sm:$0xf]
      %v838 = vld [vmem:[%s775 + $0xf8] sm:$0xf]
      %v839 = vld [vmem:[%s775 + $0xfc] sm:$0xf]
      %v841 = vshrl.u32 %v433, 16
      %v844 = vshrl.u32 %v434, 16
      %v847 = vshrl.u32 %v435, 16
      %v850 = vshrl.u32 %v436, 16
      %v920 = vunpack.c.l.b16 %v776
      %v921 = vunpack.c.l.b16 %v777
      %v922 = vunpack.c.l.b16 %v778
      %v923 = vunpack.c.l.b16 %v779
      %v924 = vunpack.c.l.b16 %v780
      %v925 = vunpack.c.l.b16 %v781
      %v926 = vunpack.c.l.b16 %v782
      %v927 = vunpack.c.l.b16 %v783
      %v928 = vunpack.c.l.b16 %v784
      %v929 = vunpack.c.l.b16 %v785
      %v930 = vunpack.c.l.b16 %v786
      %v931 = vunpack.c.l.b16 %v787
      %v932 = vunpack.c.l.b16 %v788
      %v933 = vunpack.c.l.b16 %v789
      %v934 = vunpack.c.l.b16 %v790
      %v935 = vunpack.c.l.b16 %v791
      %v936 = vunpack.c.l.b16 %v792
      %v937 = vunpack.c.l.b16 %v793
      %v938 = vunpack.c.l.b16 %v794
      %v939 = vunpack.c.l.b16 %v795
      %v940 = vunpack.c.l.b16 %v796
      %v941 = vunpack.c.l.b16 %v797
      %v942 = vunpack.c.l.b16 %v798
      %v943 = vunpack.c.l.b16 %v799
      %v944 = vunpack.c.l.b16 %v800
      %v945 = vunpack.c.l.b16 %v801
      %v946 = vunpack.c.l.b16 %v802
      %v947 = vunpack.c.l.b16 %v803
      %v948 = vunpack.c.l.b16 %v804
      %v949 = vunpack.c.l.b16 %v805
      %v950 = vunpack.c.l.b16 %v806
      %v951 = vunpack.c.l.b16 %v807
      %v952 = vunpack.c.l.b16 %v808
      %v953 = vunpack.c.l.b16 %v809
      %v954 = vunpack.c.l.b16 %v810
      %v955 = vunpack.c.l.b16 %v811
      %v956 = vunpack.c.l.b16 %v812
      %v957 = vunpack.c.l.b16 %v813
      %v958 = vunpack.c.l.b16 %v814
      %v959 = vunpack.c.l.b16 %v815
      %v960 = vunpack.c.l.b16 %v816
      %v961 = vunpack.c.l.b16 %v817
      %v962 = vunpack.c.l.b16 %v818
      %v963 = vunpack.c.l.b16 %v819
      %v964 = vunpack.c.l.b16 %v820
      %v965 = vunpack.c.l.b16 %v821
      %v966 = vunpack.c.l.b16 %v822
      %v967 = vunpack.c.l.b16 %v823
      %v968 = vunpack.c.l.b16 %v824
      %v969 = vunpack.c.l.b16 %v825
      %v970 = vunpack.c.l.b16 %v826
      %v971 = vunpack.c.l.b16 %v827
      %v972 = vunpack.c.l.b16 %v828
      %v973 = vunpack.c.l.b16 %v829
      %v974 = vunpack.c.l.b16 %v830
      %v975 = vunpack.c.l.b16 %v831
      %v976 = vunpack.c.l.b16 %v832
      %v977 = vunpack.c.l.b16 %v833
      %v978 = vunpack.c.l.b16 %v834
      %v979 = vunpack.c.l.b16 %v835
      %v980 = vunpack.c.l.b16 %v836
      %v981 = vunpack.c.l.b16 %v837
      %v982 = vunpack.c.l.b16 %v838
      %v983 = vunpack.c.l.b16 %v839
      %v984 = vpack.c.b16 %v921, %v920
      %v985 = vpack.c.b16 %v923, %v922
      %v986 = vpack.c.b16 %v925, %v924
      %v987 = vpack.c.b16 %v927, %v926
      %v988 = vpack.c.b16 %v929, %v928
      %v989 = vpack.c.b16 %v931, %v930
      %v990 = vpack.c.b16 %v933, %v932
      %v991 = vpack.c.b16 %v935, %v934
      %v992 = vpack.c.b16 %v937, %v936
      %v993 = vpack.c.b16 %v939, %v938
      %v994 = vpack.c.b16 %v941, %v940
      %v995 = vpack.c.b16 %v943, %v942
      %v996 = vpack.c.b16 %v945, %v944
      %v997 = vpack.c.b16 %v947, %v946
      %v998 = vpack.c.b16 %v949, %v948
      %v999 = vpack.c.b16 %v951, %v950
      %v1000 = vpack.c.b16 %v953, %v952
      %v1001 = vpack.c.b16 %v955, %v954
      %v1002 = vpack.c.b16 %v957, %v956
      %v1003 = vpack.c.b16 %v959, %v958
      %v1004 = vpack.c.b16 %v961, %v960
      %v1005 = vpack.c.b16 %v963, %v962
      %v1006 = vpack.c.b16 %v965, %v964
      %v1007 = vpack.c.b16 %v967, %v966
      %v1008 = vpack.c.b16 %v969, %v968
      %v1009 = vpack.c.b16 %v971, %v970
      %v1010 = vpack.c.b16 %v973, %v972
      %v1011 = vpack.c.b16 %v975, %v974
      %v1012 = vpack.c.b16 %v977, %v976
      %v1013 = vpack.c.b16 %v979, %v978
      %v1014 = vpack.c.b16 %v981, %v980
      %v1015 = vpack.c.b16 %v983, %v982
      %1048 = vmatprep.subr.bf16.mxu0 0
      %1049 = vmatpush1.bf16.msra.mxu0 %v991
      %1050 = vmatprep.subr.bf16.mxu0 0
      %1051 = vmatpush1.bf16.msra.mxu0 %v990
      %1052 = vmatprep.subr.bf16.mxu0 0
      %1053 = vmatpush1.bf16.msra.mxu0 %v989
      %1054 = vmatprep.subr.bf16.mxu0 0
      %1055 = vmatpush1.bf16.msra.mxu0 %v988
      %1056 = vmatprep.subr.bf16.mxu0 0
      %1057 = vmatpush1.bf16.msra.mxu0 %v987
      %1058 = vmatprep.subr.bf16.mxu0 0
      %1059 = vmatpush1.bf16.msra.mxu0 %v986
      %1060 = vmatprep.subr.bf16.mxu0 0
      %1061 = vmatpush1.bf16.msra.mxu0 %v985
      %1062 = vmatprep.subr.bf16.mxu0 0
      %1063 = vmatpush1.bf16.msra.mxu0 %v984
      %1064 = vmatprep.subr.bf16.mxu0 0
      %1065 = vmatpush2.bf16.msra.mxu0 %v999
      %1066 = vmatprep.subr.bf16.mxu0 0
      %1067 = vmatpush2.bf16.msra.mxu0 %v998
      %1068 = vmatprep.subr.bf16.mxu0 0
      %1069 = vmatpush2.bf16.msra.mxu0 %v997
      %1070 = vmatprep.subr.bf16.mxu0 0
      %1071 = vmatpush2.bf16.msra.mxu0 %v996
      %1072 = vmatprep.subr.bf16.mxu0 0
      %1073 = vmatpush2.bf16.msra.mxu0 %v995
      %1074 = vmatprep.subr.bf16.mxu0 0
      %1075 = vmatpush2.bf16.msra.mxu0 %v994
      %1076 = vmatprep.subr.bf16.mxu0 0
      %1077 = vmatpush2.bf16.msra.mxu0 %v993
      %1078 = vmatprep.subr.bf16.mxu0 0
      %1079 = vmatpush2.bf16.msra.mxu0 %v992
      %1080 = vmatprep.mubr.bf16.mxu0 %v844
      %1081 = vmatmul.mubr.bf16.gmra.mxu0 %v841
      %v1082 = vpop.f32.mrf.mxu0
      %v1083 = vadd.f32 0.0, %v1082
      %v1084 = vpop.f32.mrf.mxu0
      %v1085 = vpop.f32.mrf.mxu0
      %v1086 = vpop.f32.mrf.mxu0
      %1087 = vdwg.mxu0
      %1088 = vmatprep.subr.bf16.mxu0 0
      %1089 = vmatpush1.bf16.msra.mxu0 %v1007
      %1090 = vmatprep.subr.bf16.mxu0 0
      %1091 = vmatpush1.bf16.msra.mxu0 %v1006
      %1092 = vmatprep.subr.bf16.mxu0 0
      %1093 = vmatpush1.bf16.msra.mxu0 %v1005
      %1094 = vmatprep.subr.bf16.mxu0 0
      %1095 = vmatpush1.bf16.msra.mxu0 %v1004
      %1096 = vmatprep.subr.bf16.mxu0 0
      %1097 = vmatpush1.bf16.msra.mxu0 %v1003
      %1098 = vmatprep.subr.bf16.mxu0 0
      %1099 = vmatpush1.bf16.msra.mxu0 %v1002
      %1100 = vmatprep.subr.bf16.mxu0 0
      %1101 = vmatpush1.bf16.msra.mxu0 %v1001
      %1102 = vmatprep.subr.bf16.mxu0 0
      %1103 = vmatpush1.bf16.msra.mxu0 %v1000
      %1104 = vmatprep.subr.bf16.mxu0 0
      %1105 = vmatpush2.bf16.msra.mxu0 %v1015
      %1106 = vmatprep.subr.bf16.mxu0 0
      %1107 = vmatpush2.bf16.msra.mxu0 %v1014
      %1108 = vmatprep.subr.bf16.mxu0 0
      %1109 = vmatpush2.bf16.msra.mxu0 %v1013
      %1110 = vmatprep.subr.bf16.mxu0 0
      %1111 = vmatpush2.bf16.msra.mxu0 %v1012
      %1112 = vmatprep.subr.bf16.mxu0 0
      %1113 = vmatpush2.bf16.msra.mxu0 %v1011
      %1114 = vmatprep.subr.bf16.mxu0 0
      %1115 = vmatpush2.bf16.msra.mxu0 %v1010
      %1116 = vmatprep.subr.bf16.mxu0 0
      %1117 = vmatpush2.bf16.msra.mxu0 %v1009
      %1118 = vmatprep.subr.bf16.mxu0 0
      %1119 = vmatpush2.bf16.msra.mxu0 %v1008
      %1120 = vmatprep.mubr.bf16.mxu0 %v850
      %1121 = vmatmul.mubr.bf16.gmra.mxu0 %v847
      %v1122 = vpop.f32.mrf.mxu0
      %v1123 = vadd.f32 %v1083, %v1122
      %v1124 = vpop.f32.mrf.mxu0
      %v1125 = vpop.f32.mrf.mxu0
      %v1126 = vpop.f32.mrf.mxu0
      %1127 = vdwg.mxu0
      %v1128 = vadd.f32 %v774, %v1123
      %s1129 = scalar_lea.vmem %s3, 512
      %v1130 = vld [vmem:[%s1129] sm:$0xf]
      %v1131 = vld [vmem:[%s1129 + $0x4] sm:$0xf]
      %v1132 = vld [vmem:[%s1129 + $0x8] sm:$0xf]
      %v1133 = vld [vmem:[%s1129 + $0xc] sm:$0xf]
      %v1134 = vld [vmem:[%s1129 + $0x10] sm:$0xf]
      %v1135 = vld [vmem:[%s1129 + $0x14] sm:$0xf]
      %v1136 = vld [vmem:[%s1129 + $0x18] sm:$0xf]
      %v1137 = vld [vmem:[%s1129 + $0x1c] sm:$0xf]
      %v1138 = vld [vmem:[%s1129 + $0x20] sm:$0xf]
      %v1139 = vld [vmem:[%s1129 + $0x24] sm:$0xf]
      %v1140 = vld [vmem:[%s1129 + $0x28] sm:$0xf]
      %v1141 = vld [vmem:[%s1129 + $0x2c] sm:$0xf]
      %v1142 = vld [vmem:[%s1129 + $0x30] sm:$0xf]
      %v1143 = vld [vmem:[%s1129 + $0x34] sm:$0xf]
      %v1144 = vld [vmem:[%s1129 + $0x38] sm:$0xf]
      %v1145 = vld [vmem:[%s1129 + $0x3c] sm:$0xf]
      %v1146 = vld [vmem:[%s1129 + $0x40] sm:$0xf]
      %v1147 = vld [vmem:[%s1129 + $0x44] sm:$0xf]
      %v1148 = vld [vmem:[%s1129 + $0x48] sm:$0xf]
      %v1149 = vld [vmem:[%s1129 + $0x4c] sm:$0xf]
      %v1150 = vld [vmem:[%s1129 + $0x50] sm:$0xf]
      %v1151 = vld [vmem:[%s1129 + $0x54] sm:$0xf]
      %v1152 = vld [vmem:[%s1129 + $0x58] sm:$0xf]
      %v1153 = vld [vmem:[%s1129 + $0x5c] sm:$0xf]
      %v1154 = vld [vmem:[%s1129 + $0x60] sm:$0xf]
      %v1155 = vld [vmem:[%s1129 + $0x64] sm:$0xf]
      %v1156 = vld [vmem:[%s1129 + $0x68] sm:$0xf]
      %v1157 = vld [vmem:[%s1129 + $0x6c] sm:$0xf]
      %v1158 = vld [vmem:[%s1129 + $0x70] sm:$0xf]
      %v1159 = vld [vmem:[%s1129 + $0x74] sm:$0xf]
      %v1160 = vld [vmem:[%s1129 + $0x78] sm:$0xf]
      %v1161 = vld [vmem:[%s1129 + $0x7c] sm:$0xf]
      %v1162 = vld [vmem:[%s1129 + $0x80] sm:$0xf]
      %v1163 = vld [vmem:[%s1129 + $0x84] sm:$0xf]
      %v1164 = vld [vmem:[%s1129 + $0x88] sm:$0xf]
      %v1165 = vld [vmem:[%s1129 + $0x8c] sm:$0xf]
      %v1166 = vld [vmem:[%s1129 + $0x90] sm:$0xf]
      %v1167 = vld [vmem:[%s1129 + $0x94] sm:$0xf]
      %v1168 = vld [vmem:[%s1129 + $0x98] sm:$0xf]
      %v1169 = vld [vmem:[%s1129 + $0x9c] sm:$0xf]
      %v1170 = vld [vmem:[%s1129 + $0xa0] sm:$0xf]
      %v1171 = vld [vmem:[%s1129 + $0xa4] sm:$0xf]
      %v1172 = vld [vmem:[%s1129 + $0xa8] sm:$0xf]
      %v1173 = vld [vmem:[%s1129 + $0xac] sm:$0xf]
      %v1174 = vld [vmem:[%s1129 + $0xb0] sm:$0xf]
      %v1175 = vld [vmem:[%s1129 + $0xb4] sm:$0xf]
      %v1176 = vld [vmem:[%s1129 + $0xb8] sm:$0xf]
      %v1177 = vld [vmem:[%s1129 + $0xbc] sm:$0xf]
      %v1178 = vld [vmem:[%s1129 + $0xc0] sm:$0xf]
      %v1179 = vld [vmem:[%s1129 + $0xc4] sm:$0xf]
      %v1180 = vld [vmem:[%s1129 + $0xc8] sm:$0xf]
      %v1181 = vld [vmem:[%s1129 + $0xcc] sm:$0xf]
      %v1182 = vld [vmem:[%s1129 + $0xd0] sm:$0xf]
      %v1183 = vld [vmem:[%s1129 + $0xd4] sm:$0xf]
      %v1184 = vld [vmem:[%s1129 + $0xd8] sm:$0xf]
      %v1185 = vld [vmem:[%s1129 + $0xdc] sm:$0xf]
      %v1186 = vld [vmem:[%s1129 + $0xe0] sm:$0xf]
      %v1187 = vld [vmem:[%s1129 + $0xe4] sm:$0xf]
      %v1188 = vld [vmem:[%s1129 + $0xe8] sm:$0xf]
      %v1189 = vld [vmem:[%s1129 + $0xec] sm:$0xf]
      %v1190 = vld [vmem:[%s1129 + $0xf0] sm:$0xf]
      %v1191 = vld [vmem:[%s1129 + $0xf4] sm:$0xf]
      %v1192 = vld [vmem:[%s1129 + $0xf8] sm:$0xf]
      %v1193 = vld [vmem:[%s1129 + $0xfc] sm:$0xf]
      %v1198 = vrot.slane %v433, 1
      %v1199 = vrot.slane %v434, 1
      %v1200 = vrot.slane %v435, 1
      %v1201 = vrot.slane %v436, 1
      %v1270 = vunpack.c.l.b16 %v1130
      %v1271 = vunpack.c.l.b16 %v1131
      %v1272 = vunpack.c.l.b16 %v1132
      %v1273 = vunpack.c.l.b16 %v1133
      %v1274 = vunpack.c.l.b16 %v1134
      %v1275 = vunpack.c.l.b16 %v1135
      %v1276 = vunpack.c.l.b16 %v1136
      %v1277 = vunpack.c.l.b16 %v1137
      %v1278 = vunpack.c.l.b16 %v1138
      %v1279 = vunpack.c.l.b16 %v1139
      %v1280 = vunpack.c.l.b16 %v1140
      %v1281 = vunpack.c.l.b16 %v1141
      %v1282 = vunpack.c.l.b16 %v1142
      %v1283 = vunpack.c.l.b16 %v1143
      %v1284 = vunpack.c.l.b16 %v1144
      %v1285 = vunpack.c.l.b16 %v1145
      %v1286 = vunpack.c.l.b16 %v1146
      %v1287 = vunpack.c.l.b16 %v1147
      %v1288 = vunpack.c.l.b16 %v1148
      %v1289 = vunpack.c.l.b16 %v1149
      %v1290 = vunpack.c.l.b16 %v1150
      %v1291 = vunpack.c.l.b16 %v1151
      %v1292 = vunpack.c.l.b16 %v1152
      %v1293 = vunpack.c.l.b16 %v1153
      %v1294 = vunpack.c.l.b16 %v1154
      %v1295 = vunpack.c.l.b16 %v1155
      %v1296 = vunpack.c.l.b16 %v1156
      %v1297 = vunpack.c.l.b16 %v1157
      %v1298 = vunpack.c.l.b16 %v1158
      %v1299 = vunpack.c.l.b16 %v1159
      %v1300 = vunpack.c.l.b16 %v1160
      %v1301 = vunpack.c.l.b16 %v1161
      %v1302 = vunpack.c.l.b16 %v1162
      %v1303 = vunpack.c.l.b16 %v1163
      %v1304 = vunpack.c.l.b16 %v1164
      %v1305 = vunpack.c.l.b16 %v1165
      %v1306 = vunpack.c.l.b16 %v1166
      %v1307 = vunpack.c.l.b16 %v1167
      %v1308 = vunpack.c.l.b16 %v1168
      %v1309 = vunpack.c.l.b16 %v1169
      %v1310 = vunpack.c.l.b16 %v1170
      %v1311 = vunpack.c.l.b16 %v1171
      %v1312 = vunpack.c.l.b16 %v1172
      %v1313 = vunpack.c.l.b16 %v1173
      %v1314 = vunpack.c.l.b16 %v1174
      %v1315 = vunpack.c.l.b16 %v1175
      %v1316 = vunpack.c.l.b16 %v1176
      %v1317 = vunpack.c.l.b16 %v1177
      %v1318 = vunpack.c.l.b16 %v1178
      %v1319 = vunpack.c.l.b16 %v1179
      %v1320 = vunpack.c.l.b16 %v1180
      %v1321 = vunpack.c.l.b16 %v1181
      %v1322 = vunpack.c.l.b16 %v1182
      %v1323 = vunpack.c.l.b16 %v1183
      %v1324 = vunpack.c.l.b16 %v1184
      %v1325 = vunpack.c.l.b16 %v1185
      %v1326 = vunpack.c.l.b16 %v1186
      %v1327 = vunpack.c.l.b16 %v1187
      %v1328 = vunpack.c.l.b16 %v1188
      %v1329 = vunpack.c.l.b16 %v1189
      %v1330 = vunpack.c.l.b16 %v1190
      %v1331 = vunpack.c.l.b16 %v1191
      %v1332 = vunpack.c.l.b16 %v1192
      %v1333 = vunpack.c.l.b16 %v1193
      %v1334 = vpack.c.b16 %v1271, %v1270
      %v1335 = vpack.c.b16 %v1273, %v1272
      %v1336 = vpack.c.b16 %v1275, %v1274
      %v1337 = vpack.c.b16 %v1277, %v1276
      %v1338 = vpack.c.b16 %v1279, %v1278
      %v1339 = vpack.c.b16 %v1281, %v1280
      %v1340 = vpack.c.b16 %v1283, %v1282
      %v1341 = vpack.c.b16 %v1285, %v1284
      %v1342 = vpack.c.b16 %v1287, %v1286
      %v1343 = vpack.c.b16 %v1289, %v1288
      %v1344 = vpack.c.b16 %v1291, %v1290
      %v1345 = vpack.c.b16 %v1293, %v1292
      %v1346 = vpack.c.b16 %v1295, %v1294
      %v1347 = vpack.c.b16 %v1297, %v1296
      %v1348 = vpack.c.b16 %v1299, %v1298
      %v1349 = vpack.c.b16 %v1301, %v1300
      %v1350 = vpack.c.b16 %v1303, %v1302
      %v1351 = vpack.c.b16 %v1305, %v1304
      %v1352 = vpack.c.b16 %v1307, %v1306
      %v1353 = vpack.c.b16 %v1309, %v1308
      %v1354 = vpack.c.b16 %v1311, %v1310
      %v1355 = vpack.c.b16 %v1313, %v1312
      %v1356 = vpack.c.b16 %v1315, %v1314
      %v1357 = vpack.c.b16 %v1317, %v1316
      %v1358 = vpack.c.b16 %v1319, %v1318
      %v1359 = vpack.c.b16 %v1321, %v1320
      %v1360 = vpack.c.b16 %v1323, %v1322
      %v1361 = vpack.c.b16 %v1325, %v1324
      %v1362 = vpack.c.b16 %v1327, %v1326
      %v1363 = vpack.c.b16 %v1329, %v1328
      %v1364 = vpack.c.b16 %v1331, %v1330
      %v1365 = vpack.c.b16 %v1333, %v1332
      %1398 = vmatprep.subr.bf16.mxu0 0
      %1399 = vmatpush1.bf16.msra.mxu0 %v1341
      %1400 = vmatprep.subr.bf16.mxu0 0
      %1401 = vmatpush1.bf16.msra.mxu0 %v1340
      %1402 = vmatprep.subr.bf16.mxu0 0
      %1403 = vmatpush1.bf16.msra.mxu0 %v1339
      %1404 = vmatprep.subr.bf16.mxu0 0
      %1405 = vmatpush1.bf16.msra.mxu0 %v1338
      %1406 = vmatprep.subr.bf16.mxu0 0
      %1407 = vmatpush1.bf16.msra.mxu0 %v1337
      %1408 = vmatprep.subr.bf16.mxu0 0
      %1409 = vmatpush1.bf16.msra.mxu0 %v1336
      %1410 = vmatprep.subr.bf16.mxu0 0
      %1411 = vmatpush1.bf16.msra.mxu0 %v1335
      %1412 = vmatprep.subr.bf16.mxu0 0
      %1413 = vmatpush1.bf16.msra.mxu0 %v1334
      %1414 = vmatprep.subr.bf16.mxu0 0
      %1415 = vmatpush2.bf16.msra.mxu0 %v1349
      %1416 = vmatprep.subr.bf16.mxu0 0
      %1417 = vmatpush2.bf16.msra.mxu0 %v1348
      %1418 = vmatprep.subr.bf16.mxu0 0
      %1419 = vmatpush2.bf16.msra.mxu0 %v1347
      %1420 = vmatprep.subr.bf16.mxu0 0
      %1421 = vmatpush2.bf16.msra.mxu0 %v1346
      %1422 = vmatprep.subr.bf16.mxu0 0
      %1423 = vmatpush2.bf16.msra.mxu0 %v1345
      %1424 = vmatprep.subr.bf16.mxu0 0
      %1425 = vmatpush2.bf16.msra.mxu0 %v1344
      %1426 = vmatprep.subr.bf16.mxu0 0
      %1427 = vmatpush2.bf16.msra.mxu0 %v1343
      %1428 = vmatprep.subr.bf16.mxu0 0
      %1429 = vmatpush2.bf16.msra.mxu0 %v1342
      %1430 = vmatprep.mubr.bf16.mxu0 %v1199
      %1431 = vmatmul.mubr.bf16.gmra.mxu0 %v1198
      %v1432 = vpop.f32.mrf.mxu0
      %v1433 = vadd.f32 0.0, %v1432
      %v1434 = vpop.f32.mrf.mxu0
      %v1435 = vpop.f32.mrf.mxu0
      %v1436 = vpop.f32.mrf.mxu0
      %1437 = vdwg.mxu0
      %1438 = vmatprep.subr.bf16.mxu0 0
      %1439 = vmatpush1.bf16.msra.mxu0 %v1357
      %1440 = vmatprep.subr.bf16.mxu0 0
      %1441 = vmatpush1.bf16.msra.mxu0 %v1356
      %1442 = vmatprep.subr.bf16.mxu0 0
      %1443 = vmatpush1.bf16.msra.mxu0 %v1355
      %1444 = vmatprep.subr.bf16.mxu0 0
      %1445 = vmatpush1.bf16.msra.mxu0 %v1354
      %1446 = vmatprep.subr.bf16.mxu0 0
      %1447 = vmatpush1.bf16.msra.mxu0 %v1353
      %1448 = vmatprep.subr.bf16.mxu0 0
      %1449 = vmatpush1.bf16.msra.mxu0 %v1352
      %1450 = vmatprep.subr.bf16.mxu0 0
      %1451 = vmatpush1.bf16.msra.mxu0 %v1351
      %1452 = vmatprep.subr.bf16.mxu0 0
      %1453 = vmatpush1.bf16.msra.mxu0 %v1350
      %1454 = vmatprep.subr.bf16.mxu0 0
      %1455 = vmatpush2.bf16.msra.mxu0 %v1365
      %1456 = vmatprep.subr.bf16.mxu0 0
      %1457 = vmatpush2.bf16.msra.mxu0 %v1364
      %1458 = vmatprep.subr.bf16.mxu0 0
      %1459 = vmatpush2.bf16.msra.mxu0 %v1363
      %1460 = vmatprep.subr.bf16.mxu0 0
      %1461 = vmatpush2.bf16.msra.mxu0 %v1362
      %1462 = vmatprep.subr.bf16.mxu0 0
      %1463 = vmatpush2.bf16.msra.mxu0 %v1361
      %1464 = vmatprep.subr.bf16.mxu0 0
      %1465 = vmatpush2.bf16.msra.mxu0 %v1360
      %1466 = vmatprep.subr.bf16.mxu0 0
      %1467 = vmatpush2.bf16.msra.mxu0 %v1359
      %1468 = vmatprep.subr.bf16.mxu0 0
      %1469 = vmatpush2.bf16.msra.mxu0 %v1358
      %1470 = vmatprep.mubr.bf16.mxu0 %v1201
      %1471 = vmatmul.mubr.bf16.gmra.mxu0 %v1200
      %v1472 = vpop.f32.mrf.mxu0
      %v1473 = vadd.f32 %v1433, %v1472
      %v1474 = vpop.f32.mrf.mxu0
      %v1475 = vpop.f32.mrf.mxu0
      %v1476 = vpop.f32.mrf.mxu0
      %1477 = vdwg.mxu0
      %v1478 = vadd.f32 %v1128, %v1473
      %s1479 = scalar_lea.vmem %s3, 768
      %v1480 = vld [vmem:[%s1479] sm:$0xf]
      %v1481 = vld [vmem:[%s1479 + $0x4] sm:$0xf]
      %v1482 = vld [vmem:[%s1479 + $0x8] sm:$0xf]
      %v1483 = vld [vmem:[%s1479 + $0xc] sm:$0xf]
      %v1484 = vld [vmem:[%s1479 + $0x10] sm:$0xf]
      %v1485 = vld [vmem:[%s1479 + $0x14] sm:$0xf]
      %v1486 = vld [vmem:[%s1479 + $0x18] sm:$0xf]
      %v1487 = vld [vmem:[%s1479 + $0x1c] sm:$0xf]
      %v1488 = vld [vmem:[%s1479 + $0x20] sm:$0xf]
      %v1489 = vld [vmem:[%s1479 + $0x24] sm:$0xf]
      %v1490 = vld [vmem:[%s1479 + $0x28] sm:$0xf]
      %v1491 = vld [vmem:[%s1479 + $0x2c] sm:$0xf]
      %v1492 = vld [vmem:[%s1479 + $0x30] sm:$0xf]
      %v1493 = vld [vmem:[%s1479 + $0x34] sm:$0xf]
      %v1494 = vld [vmem:[%s1479 + $0x38] sm:$0xf]
      %v1495 = vld [vmem:[%s1479 + $0x3c] sm:$0xf]
      %v1496 = vld [vmem:[%s1479 + $0x40] sm:$0xf]
      %v1497 = vld [vmem:[%s1479 + $0x44] sm:$0xf]
      %v1498 = vld [vmem:[%s1479 + $0x48] sm:$0xf]
      %v1499 = vld [vmem:[%s1479 + $0x4c] sm:$0xf]
      %v1500 = vld [vmem:[%s1479 + $0x50] sm:$0xf]
      %v1501 = vld [vmem:[%s1479 + $0x54] sm:$0xf]
      %v1502 = vld [vmem:[%s1479 + $0x58] sm:$0xf]
      %v1503 = vld [vmem:[%s1479 + $0x5c] sm:$0xf]
      %v1504 = vld [vmem:[%s1479 + $0x60] sm:$0xf]
      %v1505 = vld [vmem:[%s1479 + $0x64] sm:$0xf]
      %v1506 = vld [vmem:[%s1479 + $0x68] sm:$0xf]
      %v1507 = vld [vmem:[%s1479 + $0x6c] sm:$0xf]
      %v1508 = vld [vmem:[%s1479 + $0x70] sm:$0xf]
      %v1509 = vld [vmem:[%s1479 + $0x74] sm:$0xf]
      %v1510 = vld [vmem:[%s1479 + $0x78] sm:$0xf]
      %v1511 = vld [vmem:[%s1479 + $0x7c] sm:$0xf]
      %v1512 = vld [vmem:[%s1479 + $0x80] sm:$0xf]
      %v1513 = vld [vmem:[%s1479 + $0x84] sm:$0xf]
      %v1514 = vld [vmem:[%s1479 + $0x88] sm:$0xf]
      %v1515 = vld [vmem:[%s1479 + $0x8c] sm:$0xf]
      %v1516 = vld [vmem:[%s1479 + $0x90] sm:$0xf]
      %v1517 = vld [vmem:[%s1479 + $0x94] sm:$0xf]
      %v1518 = vld [vmem:[%s1479 + $0x98] sm:$0xf]
      %v1519 = vld [vmem:[%s1479 + $0x9c] sm:$0xf]
      %v1520 = vld [vmem:[%s1479 + $0xa0] sm:$0xf]
      %v1521 = vld [vmem:[%s1479 + $0xa4] sm:$0xf]
      %v1522 = vld [vmem:[%s1479 + $0xa8] sm:$0xf]
      %v1523 = vld [vmem:[%s1479 + $0xac] sm:$0xf]
      %v1524 = vld [vmem:[%s1479 + $0xb0] sm:$0xf]
      %v1525 = vld [vmem:[%s1479 + $0xb4] sm:$0xf]
      %v1526 = vld [vmem:[%s1479 + $0xb8] sm:$0xf]
      %v1527 = vld [vmem:[%s1479 + $0xbc] sm:$0xf]
      %v1528 = vld [vmem:[%s1479 + $0xc0] sm:$0xf]
      %v1529 = vld [vmem:[%s1479 + $0xc4] sm:$0xf]
      %v1530 = vld [vmem:[%s1479 + $0xc8] sm:$0xf]
      %v1531 = vld [vmem:[%s1479 + $0xcc] sm:$0xf]
      %v1532 = vld [vmem:[%s1479 + $0xd0] sm:$0xf]
      %v1533 = vld [vmem:[%s1479 + $0xd4] sm:$0xf]
      %v1534 = vld [vmem:[%s1479 + $0xd8] sm:$0xf]
      %v1535 = vld [vmem:[%s1479 + $0xdc] sm:$0xf]
      %v1536 = vld [vmem:[%s1479 + $0xe0] sm:$0xf]
      %v1537 = vld [vmem:[%s1479 + $0xe4] sm:$0xf]
      %v1538 = vld [vmem:[%s1479 + $0xe8] sm:$0xf]
      %v1539 = vld [vmem:[%s1479 + $0xec] sm:$0xf]
      %v1540 = vld [vmem:[%s1479 + $0xf0] sm:$0xf]
      %v1541 = vld [vmem:[%s1479 + $0xf4] sm:$0xf]
      %v1542 = vld [vmem:[%s1479 + $0xf8] sm:$0xf]
      %v1543 = vld [vmem:[%s1479 + $0xfc] sm:$0xf]
      %v1544 = vrot.slane %v841, 1
      %v1545 = vrot.slane %v844, 1
      %v1546 = vrot.slane %v847, 1
      %v1547 = vrot.slane %v850, 1
      %v1616 = vunpack.c.l.b16 %v1480
      %v1617 = vunpack.c.l.b16 %v1481
      %v1618 = vunpack.c.l.b16 %v1482
      %v1619 = vunpack.c.l.b16 %v1483
      %v1620 = vunpack.c.l.b16 %v1484
      %v1621 = vunpack.c.l.b16 %v1485
      %v1622 = vunpack.c.l.b16 %v1486
      %v1623 = vunpack.c.l.b16 %v1487
      %v1624 = vunpack.c.l.b16 %v1488
      %v1625 = vunpack.c.l.b16 %v1489
      %v1626 = vunpack.c.l.b16 %v1490
      %v1627 = vunpack.c.l.b16 %v1491
      %v1628 = vunpack.c.l.b16 %v1492
      %v1629 = vunpack.c.l.b16 %v1493
      %v1630 = vunpack.c.l.b16 %v1494
      %v1631 = vunpack.c.l.b16 %v1495
      %v1632 = vunpack.c.l.b16 %v1496
      %v1633 = vunpack.c.l.b16 %v1497
      %v1634 = vunpack.c.l.b16 %v1498
      %v1635 = vunpack.c.l.b16 %v1499
      %v1636 = vunpack.c.l.b16 %v1500
      %v1637 = vunpack.c.l.b16 %v1501
      %v1638 = vunpack.c.l.b16 %v1502
      %v1639 = vunpack.c.l.b16 %v1503
      %v1640 = vunpack.c.l.b16 %v1504
      %v1641 = vunpack.c.l.b16 %v1505
      %v1642 = vunpack.c.l.b16 %v1506
      %v1643 = vunpack.c.l.b16 %v1507
      %v1644 = vunpack.c.l.b16 %v1508
      %v1645 = vunpack.c.l.b16 %v1509
      %v1646 = vunpack.c.l.b16 %v1510
      %v1647 = vunpack.c.l.b16 %v1511
      %v1648 = vunpack.c.l.b16 %v1512
      %v1649 = vunpack.c.l.b16 %v1513
      %v1650 = vunpack.c.l.b16 %v1514
      %v1651 = vunpack.c.l.b16 %v1515
      %v1652 = vunpack.c.l.b16 %v1516
      %v1653 = vunpack.c.l.b16 %v1517
      %v1654 = vunpack.c.l.b16 %v1518
      %v1655 = vunpack.c.l.b16 %v1519
      %v1656 = vunpack.c.l.b16 %v1520
      %v1657 = vunpack.c.l.b16 %v1521
      %v1658 = vunpack.c.l.b16 %v1522
      %v1659 = vunpack.c.l.b16 %v1523
      %v1660 = vunpack.c.l.b16 %v1524
      %v1661 = vunpack.c.l.b16 %v1525
      %v1662 = vunpack.c.l.b16 %v1526
      %v1663 = vunpack.c.l.b16 %v1527
      %v1664 = vunpack.c.l.b16 %v1528
      %v1665 = vunpack.c.l.b16 %v1529
      %v1666 = vunpack.c.l.b16 %v1530
      %v1667 = vunpack.c.l.b16 %v1531
      %v1668 = vunpack.c.l.b16 %v1532
      %v1669 = vunpack.c.l.b16 %v1533
      %v1670 = vunpack.c.l.b16 %v1534
      %v1671 = vunpack.c.l.b16 %v1535
      %v1672 = vunpack.c.l.b16 %v1536
      %v1673 = vunpack.c.l.b16 %v1537
      %v1674 = vunpack.c.l.b16 %v1538
      %v1675 = vunpack.c.l.b16 %v1539
      %v1676 = vunpack.c.l.b16 %v1540
      %v1677 = vunpack.c.l.b16 %v1541
      %v1678 = vunpack.c.l.b16 %v1542
      %v1679 = vunpack.c.l.b16 %v1543
      %v1680 = vpack.c.b16 %v1617, %v1616
      %v1681 = vpack.c.b16 %v1619, %v1618
      %v1682 = vpack.c.b16 %v1621, %v1620
      %v1683 = vpack.c.b16 %v1623, %v1622
      %v1684 = vpack.c.b16 %v1625, %v1624
      %v1685 = vpack.c.b16 %v1627, %v1626
      %v1686 = vpack.c.b16 %v1629, %v1628
      %v1687 = vpack.c.b16 %v1631, %v1630
      %v1688 = vpack.c.b16 %v1633, %v1632
      %v1689 = vpack.c.b16 %v1635, %v1634
      %v1690 = vpack.c.b16 %v1637, %v1636
      %v1691 = vpack.c.b16 %v1639, %v1638
      %v1692 = vpack.c.b16 %v1641, %v1640
      %v1693 = vpack.c.b16 %v1643, %v1642
      %v1694 = vpack.c.b16 %v1645, %v1644
      %v1695 = vpack.c.b16 %v1647, %v1646
      %v1696 = vpack.c.b16 %v1649, %v1648
      %v1697 = vpack.c.b16 %v1651, %v1650
      %v1698 = vpack.c.b16 %v1653, %v1652
      %v1699 = vpack.c.b16 %v1655, %v1654
      %v1700 = vpack.c.b16 %v1657, %v1656
      %v1701 = vpack.c.b16 %v1659, %v1658
      %v1702 = vpack.c.b16 %v1661, %v1660
      %v1703 = vpack.c.b16 %v1663, %v1662
      %v1704 = vpack.c.b16 %v1665, %v1664
      %v1705 = vpack.c.b16 %v1667, %v1666
      %v1706 = vpack.c.b16 %v1669, %v1668
      %v1707 = vpack.c.b16 %v1671, %v1670
      %v1708 = vpack.c.b16 %v1673, %v1672
      %v1709 = vpack.c.b16 %v1675, %v1674
      %v1710 = vpack.c.b16 %v1677, %v1676
      %v1711 = vpack.c.b16 %v1679, %v1678
      %1744 = vmatprep.subr.bf16.mxu0 0
      %1745 = vmatpush1.bf16.msra.mxu0 %v1687
      %1746 = vmatprep.subr.bf16.mxu0 0
      %1747 = vmatpush1.bf16.msra.mxu0 %v1686
      %1748 = vmatprep.subr.bf16.mxu0 0
      %1749 = vmatpush1.bf16.msra.mxu0 %v1685
      %1750 = vmatprep.subr.bf16.mxu0 0
      %1751 = vmatpush1.bf16.msra.mxu0 %v1684
      %1752 = vmatprep.subr.bf16.mxu0 0
      %1753 = vmatpush1.bf16.msra.mxu0 %v1683
      %1754 = vmatprep.subr.bf16.mxu0 0
      %1755 = vmatpush1.bf16.msra.mxu0 %v1682
      %1756 = vmatprep.subr.bf16.mxu0 0
      %1757 = vmatpush1.bf16.msra.mxu0 %v1681
      %1758 = vmatprep.subr.bf16.mxu0 0
      %1759 = vmatpush1.bf16.msra.mxu0 %v1680
      %1760 = vmatprep.subr.bf16.mxu0 0
      %1761 = vmatpush2.bf16.msra.mxu0 %v1695
      %1762 = vmatprep.subr.bf16.mxu0 0
      %1763 = vmatpush2.bf16.msra.mxu0 %v1694
      %1764 = vmatprep.subr.bf16.mxu0 0
      %1765 = vmatpush2.bf16.msra.mxu0 %v1693
      %1766 = vmatprep.subr.bf16.mxu0 0
      %1767 = vmatpush2.bf16.msra.mxu0 %v1692
      %1768 = vmatprep.subr.bf16.mxu0 0
      %1769 = vmatpush2.bf16.msra.mxu0 %v1691
      %1770 = vmatprep.subr.bf16.mxu0 0
      %1771 = vmatpush2.bf16.msra.mxu0 %v1690
      %1772 = vmatprep.subr.bf16.mxu0 0
      %1773 = vmatpush2.bf16.msra.mxu0 %v1689
      %1774 = vmatprep.subr.bf16.mxu0 0
      %1775 = vmatpush2.bf16.msra.mxu0 %v1688
      %1776 = vmatprep.mubr.bf16.mxu0 %v1545
      %1777 = vmatmul.mubr.bf16.gmra.mxu0 %v1544
      %v1778 = vpop.f32.mrf.mxu0
      %v1779 = vadd.f32 0.0, %v1778
      %v1780 = vpop.f32.mrf.mxu0
      %v1781 = vpop.f32.mrf.mxu0
      %v1782 = vpop.f32.mrf.mxu0
      %1783 = vdwg.mxu0
      %1784 = vmatprep.subr.bf16.mxu0 0
      %1785 = vmatpush1.bf16.msra.mxu0 %v1703
      %1786 = vmatprep.subr.bf16.mxu0 0
      %1787 = vmatpush1.bf16.msra.mxu0 %v1702
      %1788 = vmatprep.subr.bf16.mxu0 0
      %1789 = vmatpush1.bf16.msra.mxu0 %v1701
      %1790 = vmatprep.subr.bf16.mxu0 0
      %1791 = vmatpush1.bf16.msra.mxu0 %v1700
      %1792 = vmatprep.subr.bf16.mxu0 0
      %1793 = vmatpush1.bf16.msra.mxu0 %v1699
      %1794 = vmatprep.subr.bf16.mxu0 0
      %1795 = vmatpush1.bf16.msra.mxu0 %v1698
      %1796 = vmatprep.subr.bf16.mxu0 0
      %1797 = vmatpush1.bf16.msra.mxu0 %v1697
      %1798 = vmatprep.subr.bf16.mxu0 0
      %1799 = vmatpush1.bf16.msra.mxu0 %v1696
      %1800 = vmatprep.subr.bf16.mxu0 0
      %1801 = vmatpush2.bf16.msra.mxu0 %v1711
      %1802 = vmatprep.subr.bf16.mxu0 0
      %1803 = vmatpush2.bf16.msra.mxu0 %v1710
      %1804 = vmatprep.subr.bf16.mxu0 0
      %1805 = vmatpush2.bf16.msra.mxu0 %v1709
      %1806 = vmatprep.subr.bf16.mxu0 0
      %1807 = vmatpush2.bf16.msra.mxu0 %v1708
      %1808 = vmatprep.subr.bf16.mxu0 0
      %1809 = vmatpush2.bf16.msra.mxu0 %v1707
      %1810 = vmatprep.subr.bf16.mxu0 0
      %1811 = vmatpush2.bf16.msra.mxu0 %v1706
      %1812 = vmatprep.subr.bf16.mxu0 0
      %1813 = vmatpush2.bf16.msra.mxu0 %v1705
      %1814 = vmatprep.subr.bf16.mxu0 0
      %1815 = vmatpush2.bf16.msra.mxu0 %v1704
      %1816 = vmatprep.mubr.bf16.mxu0 %v1547
      %1817 = vmatmul.mubr.bf16.gmra.mxu0 %v1546
      %v1818 = vpop.f32.mrf.mxu0
      %v1819 = vadd.f32 %v1779, %v1818
      %v1820 = vpop.f32.mrf.mxu0
      %v1821 = vpop.f32.mrf.mxu0
      %v1822 = vpop.f32.mrf.mxu0
      %1823 = vdwg.mxu0
      %v1824 = vadd.f32 %v1478, %v1819
      %s1825 = scalar_lea.vmem %s3, 1024
      %v1826 = vld [vmem:[%s1825] sm:$0xf]
      %v1827 = vld [vmem:[%s1825 + $0x4] sm:$0xf]
      %v1828 = vld [vmem:[%s1825 + $0x8] sm:$0xf]
      %v1829 = vld [vmem:[%s1825 + $0xc] sm:$0xf]
      %v1830 = vld [vmem:[%s1825 + $0x10] sm:$0xf]
      %v1831 = vld [vmem:[%s1825 + $0x14] sm:$0xf]
      %v1832 = vld [vmem:[%s1825 + $0x18] sm:$0xf]
      %v1833 = vld [vmem:[%s1825 + $0x1c] sm:$0xf]
      %v1834 = vld [vmem:[%s1825 + $0x20] sm:$0xf]
      %v1835 = vld [vmem:[%s1825 + $0x24] sm:$0xf]
      %v1836 = vld [vmem:[%s1825 + $0x28] sm:$0xf]
      %v1837 = vld [vmem:[%s1825 + $0x2c] sm:$0xf]
      %v1838 = vld [vmem:[%s1825 + $0x30] sm:$0xf]
      %v1839 = vld [vmem:[%s1825 + $0x34] sm:$0xf]
      %v1840 = vld [vmem:[%s1825 + $0x38] sm:$0xf]
      %v1841 = vld [vmem:[%s1825 + $0x3c] sm:$0xf]
      %v1842 = vld [vmem:[%s1825 + $0x40] sm:$0xf]
      %v1843 = vld [vmem:[%s1825 + $0x44] sm:$0xf]
      %v1844 = vld [vmem:[%s1825 + $0x48] sm:$0xf]
      %v1845 = vld [vmem:[%s1825 + $0x4c] sm:$0xf]
      %v1846 = vld [vmem:[%s1825 + $0x50] sm:$0xf]
      %v1847 = vld [vmem:[%s1825 + $0x54] sm:$0xf]
      %v1848 = vld [vmem:[%s1825 + $0x58] sm:$0xf]
      %v1849 = vld [vmem:[%s1825 + $0x5c] sm:$0xf]
      %v1850 = vld [vmem:[%s1825 + $0x60] sm:$0xf]
      %v1851 = vld [vmem:[%s1825 + $0x64] sm:$0xf]
      %v1852 = vld [vmem:[%s1825 + $0x68] sm:$0xf]
      %v1853 = vld [vmem:[%s1825 + $0x6c] sm:$0xf]
      %v1854 = vld [vmem:[%s1825 + $0x70] sm:$0xf]
      %v1855 = vld [vmem:[%s1825 + $0x74] sm:$0xf]
      %v1856 = vld [vmem:[%s1825 + $0x78] sm:$0xf]
      %v1857 = vld [vmem:[%s1825 + $0x7c] sm:$0xf]
      %v1858 = vld [vmem:[%s1825 + $0x80] sm:$0xf]
      %v1859 = vld [vmem:[%s1825 + $0x84] sm:$0xf]
      %v1860 = vld [vmem:[%s1825 + $0x88] sm:$0xf]
      %v1861 = vld [vmem:[%s1825 + $0x8c] sm:$0xf]
      %v1862 = vld [vmem:[%s1825 + $0x90] sm:$0xf]
      %v1863 = vld [vmem:[%s1825 + $0x94] sm:$0xf]
      %v1864 = vld [vmem:[%s1825 + $0x98] sm:$0xf]
      %v1865 = vld [vmem:[%s1825 + $0x9c] sm:$0xf]
      %v1866 = vld [vmem:[%s1825 + $0xa0] sm:$0xf]
      %v1867 = vld [vmem:[%s1825 + $0xa4] sm:$0xf]
      %v1868 = vld [vmem:[%s1825 + $0xa8] sm:$0xf]
      %v1869 = vld [vmem:[%s1825 + $0xac] sm:$0xf]
      %v1870 = vld [vmem:[%s1825 + $0xb0] sm:$0xf]
      %v1871 = vld [vmem:[%s1825 + $0xb4] sm:$0xf]
      %v1872 = vld [vmem:[%s1825 + $0xb8] sm:$0xf]
      %v1873 = vld [vmem:[%s1825 + $0xbc] sm:$0xf]
      %v1874 = vld [vmem:[%s1825 + $0xc0] sm:$0xf]
      %v1875 = vld [vmem:[%s1825 + $0xc4] sm:$0xf]
      %v1876 = vld [vmem:[%s1825 + $0xc8] sm:$0xf]
      %v1877 = vld [vmem:[%s1825 + $0xcc] sm:$0xf]
      %v1878 = vld [vmem:[%s1825 + $0xd0] sm:$0xf]
      %v1879 = vld [vmem:[%s1825 + $0xd4] sm:$0xf]
      %v1880 = vld [vmem:[%s1825 + $0xd8] sm:$0xf]
      %v1881 = vld [vmem:[%s1825 + $0xdc] sm:$0xf]
      %v1882 = vld [vmem:[%s1825 + $0xe0] sm:$0xf]
      %v1883 = vld [vmem:[%s1825 + $0xe4] sm:$0xf]
      %v1884 = vld [vmem:[%s1825 + $0xe8] sm:$0xf]
      %v1885 = vld [vmem:[%s1825 + $0xec] sm:$0xf]
      %v1886 = vld [vmem:[%s1825 + $0xf0] sm:$0xf]
      %v1887 = vld [vmem:[%s1825 + $0xf4] sm:$0xf]
      %v1888 = vld [vmem:[%s1825 + $0xf8] sm:$0xf]
      %v1889 = vld [vmem:[%s1825 + $0xfc] sm:$0xf]
      %v1890 = vrot.slane %v433, 2
      %v1891 = vrot.slane %v434, 2
      %v1892 = vrot.slane %v435, 2
      %v1893 = vrot.slane %v436, 2
      %v1962 = vunpack.c.l.b16 %v1826
      %v1963 = vunpack.c.l.b16 %v1827
      %v1964 = vunpack.c.l.b16 %v1828
      %v1965 = vunpack.c.l.b16 %v1829
      %v1966 = vunpack.c.l.b16 %v1830
      %v1967 = vunpack.c.l.b16 %v1831
      %v1968 = vunpack.c.l.b16 %v1832
      %v1969 = vunpack.c.l.b16 %v1833
      %v1970 = vunpack.c.l.b16 %v1834
      %v1971 = vunpack.c.l.b16 %v1835
      %v1972 = vunpack.c.l.b16 %v1836
      %v1973 = vunpack.c.l.b16 %v1837
      %v1974 = vunpack.c.l.b16 %v1838
      %v1975 = vunpack.c.l.b16 %v1839
      %v1976 = vunpack.c.l.b16 %v1840
      %v1977 = vunpack.c.l.b16 %v1841
      %v1978 = vunpack.c.l.b16 %v1842
      %v1979 = vunpack.c.l.b16 %v1843
      %v1980 = vunpack.c.l.b16 %v1844
      %v1981 = vunpack.c.l.b16 %v1845
      %v1982 = vunpack.c.l.b16 %v1846
      %v1983 = vunpack.c.l.b16 %v1847
      %v1984 = vunpack.c.l.b16 %v1848
      %v1985 = vunpack.c.l.b16 %v1849
      %v1986 = vunpack.c.l.b16 %v1850
      %v1987 = vunpack.c.l.b16 %v1851
      %v1988 = vunpack.c.l.b16 %v1852
      %v1989 = vunpack.c.l.b16 %v1853
      %v1990 = vunpack.c.l.b16 %v1854
      %v1991 = vunpack.c.l.b16 %v1855
      %v1992 = vunpack.c.l.b16 %v1856
      %v1993 = vunpack.c.l.b16 %v1857
      %v1994 = vunpack.c.l.b16 %v1858
      %v1995 = vunpack.c.l.b16 %v1859
      %v1996 = vunpack.c.l.b16 %v1860
      %v1997 = vunpack.c.l.b16 %v1861
      %v1998 = vunpack.c.l.b16 %v1862
      %v1999 = vunpack.c.l.b16 %v1863
      %v2000 = vunpack.c.l.b16 %v1864
      %v2001 = vunpack.c.l.b16 %v1865
      %v2002 = vunpack.c.l.b16 %v1866
      %v2003 = vunpack.c.l.b16 %v1867
      %v2004 = vunpack.c.l.b16 %v1868
      %v2005 = vunpack.c.l.b16 %v1869
      %v2006 = vunpack.c.l.b16 %v1870
      %v2007 = vunpack.c.l.b16 %v1871
      %v2008 = vunpack.c.l.b16 %v1872
      %v2009 = vunpack.c.l.b16 %v1873
      %v2010 = vunpack.c.l.b16 %v1874
      %v2011 = vunpack.c.l.b16 %v1875
      %v2012 = vunpack.c.l.b16 %v1876
      %v2013 = vunpack.c.l.b16 %v1877
      %v2014 = vunpack.c.l.b16 %v1878
      %v2015 = vunpack.c.l.b16 %v1879
      %v2016 = vunpack.c.l.b16 %v1880
      %v2017 = vunpack.c.l.b16 %v1881
      %v2018 = vunpack.c.l.b16 %v1882
      %v2019 = vunpack.c.l.b16 %v1883
      %v2020 = vunpack.c.l.b16 %v1884
      %v2021 = vunpack.c.l.b16 %v1885
      %v2022 = vunpack.c.l.b16 %v1886
      %v2023 = vunpack.c.l.b16 %v1887
      %v2024 = vunpack.c.l.b16 %v1888
      %v2025 = vunpack.c.l.b16 %v1889
      %v2026 = vpack.c.b16 %v1963, %v1962
      %v2027 = vpack.c.b16 %v1965, %v1964
      %v2028 = vpack.c.b16 %v1967, %v1966
      %v2029 = vpack.c.b16 %v1969, %v1968
      %v2030 = vpack.c.b16 %v1971, %v1970
      %v2031 = vpack.c.b16 %v1973, %v1972
      %v2032 = vpack.c.b16 %v1975, %v1974
      %v2033 = vpack.c.b16 %v1977, %v1976
      %v2034 = vpack.c.b16 %v1979, %v1978
      %v2035 = vpack.c.b16 %v1981, %v1980
      %v2036 = vpack.c.b16 %v1983, %v1982
      %v2037 = vpack.c.b16 %v1985, %v1984
      %v2038 = vpack.c.b16 %v1987, %v1986
      %v2039 = vpack.c.b16 %v1989, %v1988
      %v2040 = vpack.c.b16 %v1991, %v1990
      %v2041 = vpack.c.b16 %v1993, %v1992
      %v2042 = vpack.c.b16 %v1995, %v1994
      %v2043 = vpack.c.b16 %v1997, %v1996
      %v2044 = vpack.c.b16 %v1999, %v1998
      %v2045 = vpack.c.b16 %v2001, %v2000
      %v2046 = vpack.c.b16 %v2003, %v2002
      %v2047 = vpack.c.b16 %v2005, %v2004
      %v2048 = vpack.c.b16 %v2007, %v2006
      %v2049 = vpack.c.b16 %v2009, %v2008
      %v2050 = vpack.c.b16 %v2011, %v2010
      %v2051 = vpack.c.b16 %v2013, %v2012
      %v2052 = vpack.c.b16 %v2015, %v2014
      %v2053 = vpack.c.b16 %v2017, %v2016
      %v2054 = vpack.c.b16 %v2019, %v2018
      %v2055 = vpack.c.b16 %v2021, %v2020
      %v2056 = vpack.c.b16 %v2023, %v2022
      %v2057 = vpack.c.b16 %v2025, %v2024
      %2090 = vmatprep.subr.bf16.mxu0 0
      %2091 = vmatpush1.bf16.msra.mxu0 %v2033
      %2092 = vmatprep.subr.bf16.mxu0 0
      %2093 = vmatpush1.bf16.msra.mxu0 %v2032
      %2094 = vmatprep.subr.bf16.mxu0 0
      %2095 = vmatpush1.bf16.msra.mxu0 %v2031
      %2096 = vmatprep.subr.bf16.mxu0 0
      %2097 = vmatpush1.bf16.msra.mxu0 %v2030
      %2098 = vmatprep.subr.bf16.mxu0 0
      %2099 = vmatpush1.bf16.msra.mxu0 %v2029
      %2100 = vmatprep.subr.bf16.mxu0 0
      %2101 = vmatpush1.bf16.msra.mxu0 %v2028
      %2102 = vmatprep.subr.bf16.mxu0 0
      %2103 = vmatpush1.bf16.msra.mxu0 %v2027
      %2104 = vmatprep.subr.bf16.mxu0 0
      %2105 = vmatpush1.bf16.msra.mxu0 %v2026
      %2106 = vmatprep.subr.bf16.mxu0 0
      %2107 = vmatpush2.bf16.msra.mxu0 %v2041
      %2108 = vmatprep.subr.bf16.mxu0 0
      %2109 = vmatpush2.bf16.msra.mxu0 %v2040
      %2110 = vmatprep.subr.bf16.mxu0 0
      %2111 = vmatpush2.bf16.msra.mxu0 %v2039
      %2112 = vmatprep.subr.bf16.mxu0 0
      %2113 = vmatpush2.bf16.msra.mxu0 %v2038
      %2114 = vmatprep.subr.bf16.mxu0 0
      %2115 = vmatpush2.bf16.msra.mxu0 %v2037
      %2116 = vmatprep.subr.bf16.mxu0 0
      %2117 = vmatpush2.bf16.msra.mxu0 %v2036
      %2118 = vmatprep.subr.bf16.mxu0 0
      %2119 = vmatpush2.bf16.msra.mxu0 %v2035
      %2120 = vmatprep.subr.bf16.mxu0 0
      %2121 = vmatpush2.bf16.msra.mxu0 %v2034
      %2122 = vmatprep.mubr.bf16.mxu0 %v1891
      %2123 = vmatmul.mubr.bf16.gmra.mxu0 %v1890
      %v2124 = vpop.f32.mrf.mxu0
      %v2125 = vadd.f32 0.0, %v2124
      %v2126 = vpop.f32.mrf.mxu0
      %v2127 = vpop.f32.mrf.mxu0
      %v2128 = vpop.f32.mrf.mxu0
      %2129 = vdwg.mxu0
      %2130 = vmatprep.subr.bf16.mxu0 0
      %2131 = vmatpush1.bf16.msra.mxu0 %v2049
      %2132 = vmatprep.subr.bf16.mxu0 0
      %2133 = vmatpush1.bf16.msra.mxu0 %v2048
      %2134 = vmatprep.subr.bf16.mxu0 0
      %2135 = vmatpush1.bf16.msra.mxu0 %v2047
      %2136 = vmatprep.subr.bf16.mxu0 0
      %2137 = vmatpush1.bf16.msra.mxu0 %v2046
      %2138 = vmatprep.subr.bf16.mxu0 0
      %2139 = vmatpush1.bf16.msra.mxu0 %v2045
      %2140 = vmatprep.subr.bf16.mxu0 0
      %2141 = vmatpush1.bf16.msra.mxu0 %v2044
      %2142 = vmatprep.subr.bf16.mxu0 0
      %2143 = vmatpush1.bf16.msra.mxu0 %v2043
      %2144 = vmatprep.subr.bf16.mxu0 0
      %2145 = vmatpush1.bf16.msra.mxu0 %v2042
      %2146 = vmatprep.subr.bf16.mxu0 0
      %2147 = vmatpush2.bf16.msra.mxu0 %v2057
      %2148 = vmatprep.subr.bf16.mxu0 0
      %2149 = vmatpush2.bf16.msra.mxu0 %v2056
      %2150 = vmatprep.subr.bf16.mxu0 0
      %2151 = vmatpush2.bf16.msra.mxu0 %v2055
      %2152 = vmatprep.subr.bf16.mxu0 0
      %2153 = vmatpush2.bf16.msra.mxu0 %v2054
      %2154 = vmatprep.subr.bf16.mxu0 0
      %2155 = vmatpush2.bf16.msra.mxu0 %v2053
      %2156 = vmatprep.subr.bf16.mxu0 0
      %2157 = vmatpush2.bf16.msra.mxu0 %v2052
      %2158 = vmatprep.subr.bf16.mxu0 0
      %2159 = vmatpush2.bf16.msra.mxu0 %v2051
      %2160 = vmatprep.subr.bf16.mxu0 0
      %2161 = vmatpush2.bf16.msra.mxu0 %v2050
      %2162 = vmatprep.mubr.bf16.mxu0 %v1893
      %2163 = vmatmul.mubr.bf16.gmra.mxu0 %v1892
      %v2164 = vpop.f32.mrf.mxu0
      %v2165 = vadd.f32 %v2125, %v2164
      %v2166 = vpop.f32.mrf.mxu0
      %v2167 = vpop.f32.mrf.mxu0
      %v2168 = vpop.f32.mrf.mxu0
      %2169 = vdwg.mxu0
      %v2170 = vadd.f32 %v1824, %v2165
      %s2171 = scalar_lea.vmem %s3, 1280
      %v2172 = vld [vmem:[%s2171] sm:$0xf]
      %v2173 = vld [vmem:[%s2171 + $0x4] sm:$0xf]
      %v2174 = vld [vmem:[%s2171 + $0x8] sm:$0xf]
      %v2175 = vld [vmem:[%s2171 + $0xc] sm:$0xf]
      %v2176 = vld [vmem:[%s2171 + $0x10] sm:$0xf]
      %v2177 = vld [vmem:[%s2171 + $0x14] sm:$0xf]
      %v2178 = vld [vmem:[%s2171 + $0x18] sm:$0xf]
      %v2179 = vld [vmem:[%s2171 + $0x1c] sm:$0xf]
      %v2180 = vld [vmem:[%s2171 + $0x20] sm:$0xf]
      %v2181 = vld [vmem:[%s2171 + $0x24] sm:$0xf]
      %v2182 = vld [vmem:[%s2171 + $0x28] sm:$0xf]
      %v2183 = vld [vmem:[%s2171 + $0x2c] sm:$0xf]
      %v2184 = vld [vmem:[%s2171 + $0x30] sm:$0xf]
      %v2185 = vld [vmem:[%s2171 + $0x34] sm:$0xf]
      %v2186 = vld [vmem:[%s2171 + $0x38] sm:$0xf]
      %v2187 = vld [vmem:[%s2171 + $0x3c] sm:$0xf]
      %v2188 = vld [vmem:[%s2171 + $0x40] sm:$0xf]
      %v2189 = vld [vmem:[%s2171 + $0x44] sm:$0xf]
      %v2190 = vld [vmem:[%s2171 + $0x48] sm:$0xf]
      %v2191 = vld [vmem:[%s2171 + $0x4c] sm:$0xf]
      %v2192 = vld [vmem:[%s2171 + $0x50] sm:$0xf]
      %v2193 = vld [vmem:[%s2171 + $0x54] sm:$0xf]
      %v2194 = vld [vmem:[%s2171 + $0x58] sm:$0xf]
      %v2195 = vld [vmem:[%s2171 + $0x5c] sm:$0xf]
      %v2196 = vld [vmem:[%s2171 + $0x60] sm:$0xf]
      %v2197 = vld [vmem:[%s2171 + $0x64] sm:$0xf]
      %v2198 = vld [vmem:[%s2171 + $0x68] sm:$0xf]
      %v2199 = vld [vmem:[%s2171 + $0x6c] sm:$0xf]
      %v2200 = vld [vmem:[%s2171 + $0x70] sm:$0xf]
      %v2201 = vld [vmem:[%s2171 + $0x74] sm:$0xf]
      %v2202 = vld [vmem:[%s2171 + $0x78] sm:$0xf]
      %v2203 = vld [vmem:[%s2171 + $0x7c] sm:$0xf]
      %v2204 = vld [vmem:[%s2171 + $0x80] sm:$0xf]
      %v2205 = vld [vmem:[%s2171 + $0x84] sm:$0xf]
      %v2206 = vld [vmem:[%s2171 + $0x88] sm:$0xf]
      %v2207 = vld [vmem:[%s2171 + $0x8c] sm:$0xf]
      %v2208 = vld [vmem:[%s2171 + $0x90] sm:$0xf]
      %v2209 = vld [vmem:[%s2171 + $0x94] sm:$0xf]
      %v2210 = vld [vmem:[%s2171 + $0x98] sm:$0xf]
      %v2211 = vld [vmem:[%s2171 + $0x9c] sm:$0xf]
      %v2212 = vld [vmem:[%s2171 + $0xa0] sm:$0xf]
      %v2213 = vld [vmem:[%s2171 + $0xa4] sm:$0xf]
      %v2214 = vld [vmem:[%s2171 + $0xa8] sm:$0xf]
      %v2215 = vld [vmem:[%s2171 + $0xac] sm:$0xf]
      %v2216 = vld [vmem:[%s2171 + $0xb0] sm:$0xf]
      %v2217 = vld [vmem:[%s2171 + $0xb4] sm:$0xf]
      %v2218 = vld [vmem:[%s2171 + $0xb8] sm:$0xf]
      %v2219 = vld [vmem:[%s2171 + $0xbc] sm:$0xf]
      %v2220 = vld [vmem:[%s2171 + $0xc0] sm:$0xf]
      %v2221 = vld [vmem:[%s2171 + $0xc4] sm:$0xf]
      %v2222 = vld [vmem:[%s2171 + $0xc8] sm:$0xf]
      %v2223 = vld [vmem:[%s2171 + $0xcc] sm:$0xf]
      %v2224 = vld [vmem:[%s2171 + $0xd0] sm:$0xf]
      %v2225 = vld [vmem:[%s2171 + $0xd4] sm:$0xf]
      %v2226 = vld [vmem:[%s2171 + $0xd8] sm:$0xf]
      %v2227 = vld [vmem:[%s2171 + $0xdc] sm:$0xf]
      %v2228 = vld [vmem:[%s2171 + $0xe0] sm:$0xf]
      %v2229 = vld [vmem:[%s2171 + $0xe4] sm:$0xf]
      %v2230 = vld [vmem:[%s2171 + $0xe8] sm:$0xf]
      %v2231 = vld [vmem:[%s2171 + $0xec] sm:$0xf]
      %v2232 = vld [vmem:[%s2171 + $0xf0] sm:$0xf]
      %v2233 = vld [vmem:[%s2171 + $0xf4] sm:$0xf]
      %v2234 = vld [vmem:[%s2171 + $0xf8] sm:$0xf]
      %v2235 = vld [vmem:[%s2171 + $0xfc] sm:$0xf]
      %v2236 = vrot.slane %v841, 2
      %v2237 = vrot.slane %v844, 2
      %v2238 = vrot.slane %v847, 2
      %v2239 = vrot.slane %v850, 2
      %v2308 = vunpack.c.l.b16 %v2172
      %v2309 = vunpack.c.l.b16 %v2173
      %v2310 = vunpack.c.l.b16 %v2174
      %v2311 = vunpack.c.l.b16 %v2175
      %v2312 = vunpack.c.l.b16 %v2176
      %v2313 = vunpack.c.l.b16 %v2177
      %v2314 = vunpack.c.l.b16 %v2178
      %v2315 = vunpack.c.l.b16 %v2179
      %v2316 = vunpack.c.l.b16 %v2180
      %v2317 = vunpack.c.l.b16 %v2181
      %v2318 = vunpack.c.l.b16 %v2182
      %v2319 = vunpack.c.l.b16 %v2183
      %v2320 = vunpack.c.l.b16 %v2184
      %v2321 = vunpack.c.l.b16 %v2185
      %v2322 = vunpack.c.l.b16 %v2186
      %v2323 = vunpack.c.l.b16 %v2187
      %v2324 = vunpack.c.l.b16 %v2188
      %v2325 = vunpack.c.l.b16 %v2189
      %v2326 = vunpack.c.l.b16 %v2190
      %v2327 = vunpack.c.l.b16 %v2191
      %v2328 = vunpack.c.l.b16 %v2192
      %v2329 = vunpack.c.l.b16 %v2193
      %v2330 = vunpack.c.l.b16 %v2194
      %v2331 = vunpack.c.l.b16 %v2195
      %v2332 = vunpack.c.l.b16 %v2196
      %v2333 = vunpack.c.l.b16 %v2197
      %v2334 = vunpack.c.l.b16 %v2198
      %v2335 = vunpack.c.l.b16 %v2199
      %v2336 = vunpack.c.l.b16 %v2200
      %v2337 = vunpack.c.l.b16 %v2201
      %v2338 = vunpack.c.l.b16 %v2202
      %v2339 = vunpack.c.l.b16 %v2203
      %v2340 = vunpack.c.l.b16 %v2204
      %v2341 = vunpack.c.l.b16 %v2205
      %v2342 = vunpack.c.l.b16 %v2206
      %v2343 = vunpack.c.l.b16 %v2207
      %v2344 = vunpack.c.l.b16 %v2208
      %v2345 = vunpack.c.l.b16 %v2209
      %v2346 = vunpack.c.l.b16 %v2210
      %v2347 = vunpack.c.l.b16 %v2211
      %v2348 = vunpack.c.l.b16 %v2212
      %v2349 = vunpack.c.l.b16 %v2213
      %v2350 = vunpack.c.l.b16 %v2214
      %v2351 = vunpack.c.l.b16 %v2215
      %v2352 = vunpack.c.l.b16 %v2216
      %v2353 = vunpack.c.l.b16 %v2217
      %v2354 = vunpack.c.l.b16 %v2218
      %v2355 = vunpack.c.l.b16 %v2219
      %v2356 = vunpack.c.l.b16 %v2220
      %v2357 = vunpack.c.l.b16 %v2221
      %v2358 = vunpack.c.l.b16 %v2222
      %v2359 = vunpack.c.l.b16 %v2223
      %v2360 = vunpack.c.l.b16 %v2224
      %v2361 = vunpack.c.l.b16 %v2225
      %v2362 = vunpack.c.l.b16 %v2226
      %v2363 = vunpack.c.l.b16 %v2227
      %v2364 = vunpack.c.l.b16 %v2228
      %v2365 = vunpack.c.l.b16 %v2229
      %v2366 = vunpack.c.l.b16 %v2230
      %v2367 = vunpack.c.l.b16 %v2231
      %v2368 = vunpack.c.l.b16 %v2232
      %v2369 = vunpack.c.l.b16 %v2233
      %v2370 = vunpack.c.l.b16 %v2234
      %v2371 = vunpack.c.l.b16 %v2235
      %v2372 = vpack.c.b16 %v2309, %v2308
      %v2373 = vpack.c.b16 %v2311, %v2310
      %v2374 = vpack.c.b16 %v2313, %v2312
      %v2375 = vpack.c.b16 %v2315, %v2314
      %v2376 = vpack.c.b16 %v2317, %v2316
      %v2377 = vpack.c.b16 %v2319, %v2318
      %v2378 = vpack.c.b16 %v2321, %v2320
      %v2379 = vpack.c.b16 %v2323, %v2322
      %v2380 = vpack.c.b16 %v2325, %v2324
      %v2381 = vpack.c.b16 %v2327, %v2326
      %v2382 = vpack.c.b16 %v2329, %v2328
      %v2383 = vpack.c.b16 %v2331, %v2330
      %v2384 = vpack.c.b16 %v2333, %v2332
      %v2385 = vpack.c.b16 %v2335, %v2334
      %v2386 = vpack.c.b16 %v2337, %v2336
      %v2387 = vpack.c.b16 %v2339, %v2338
      %v2388 = vpack.c.b16 %v2341, %v2340
      %v2389 = vpack.c.b16 %v2343, %v2342
      %v2390 = vpack.c.b16 %v2345, %v2344
      %v2391 = vpack.c.b16 %v2347, %v2346
      %v2392 = vpack.c.b16 %v2349, %v2348
      %v2393 = vpack.c.b16 %v2351, %v2350
      %v2394 = vpack.c.b16 %v2353, %v2352
      %v2395 = vpack.c.b16 %v2355, %v2354
      %v2396 = vpack.c.b16 %v2357, %v2356
      %v2397 = vpack.c.b16 %v2359, %v2358
      %v2398 = vpack.c.b16 %v2361, %v2360
      %v2399 = vpack.c.b16 %v2363, %v2362
      %v2400 = vpack.c.b16 %v2365, %v2364
      %v2401 = vpack.c.b16 %v2367, %v2366
      %v2402 = vpack.c.b16 %v2369, %v2368
      %v2403 = vpack.c.b16 %v2371, %v2370
      %2436 = vmatprep.subr.bf16.mxu0 0
      %2437 = vmatpush1.bf16.msra.mxu0 %v2379
      %2438 = vmatprep.subr.bf16.mxu0 0
      %2439 = vmatpush1.bf16.msra.mxu0 %v2378
      %2440 = vmatprep.subr.bf16.mxu0 0
      %2441 = vmatpush1.bf16.msra.mxu0 %v2377
      %2442 = vmatprep.subr.bf16.mxu0 0
      %2443 = vmatpush1.bf16.msra.mxu0 %v2376
      %2444 = vmatprep.subr.bf16.mxu0 0
      %2445 = vmatpush1.bf16.msra.mxu0 %v2375
      %2446 = vmatprep.subr.bf16.mxu0 0
      %2447 = vmatpush1.bf16.msra.mxu0 %v2374
      %2448 = vmatprep.subr.bf16.mxu0 0
      %2449 = vmatpush1.bf16.msra.mxu0 %v2373
      %2450 = vmatprep.subr.bf16.mxu0 0
      %2451 = vmatpush1.bf16.msra.mxu0 %v2372
      %2452 = vmatprep.subr.bf16.mxu0 0
      %2453 = vmatpush2.bf16.msra.mxu0 %v2387
      %2454 = vmatprep.subr.bf16.mxu0 0
      %2455 = vmatpush2.bf16.msra.mxu0 %v2386
      %2456 = vmatprep.subr.bf16.mxu0 0
      %2457 = vmatpush2.bf16.msra.mxu0 %v2385
      %2458 = vmatprep.subr.bf16.mxu0 0
      %2459 = vmatpush2.bf16.msra.mxu0 %v2384
      %2460 = vmatprep.subr.bf16.mxu0 0
      %2461 = vmatpush2.bf16.msra.mxu0 %v2383
      %2462 = vmatprep.subr.bf16.mxu0 0
      %2463 = vmatpush2.bf16.msra.mxu0 %v2382
      %2464 = vmatprep.subr.bf16.mxu0 0
      %2465 = vmatpush2.bf16.msra.mxu0 %v2381
      %2466 = vmatprep.subr.bf16.mxu0 0
      %2467 = vmatpush2.bf16.msra.mxu0 %v2380
      %2468 = vmatprep.mubr.bf16.mxu0 %v2237
      %2469 = vmatmul.mubr.bf16.gmra.mxu0 %v2236
      %v2470 = vpop.f32.mrf.mxu0
      %v2471 = vadd.f32 0.0, %v2470
      %v2472 = vpop.f32.mrf.mxu0
      %v2473 = vpop.f32.mrf.mxu0
      %v2474 = vpop.f32.mrf.mxu0
      %2475 = vdwg.mxu0
      %2476 = vmatprep.subr.bf16.mxu0 0
      %2477 = vmatpush1.bf16.msra.mxu0 %v2395
      %2478 = vmatprep.subr.bf16.mxu0 0
      %2479 = vmatpush1.bf16.msra.mxu0 %v2394
      %2480 = vmatprep.subr.bf16.mxu0 0
      %2481 = vmatpush1.bf16.msra.mxu0 %v2393
      %2482 = vmatprep.subr.bf16.mxu0 0
      %2483 = vmatpush1.bf16.msra.mxu0 %v2392
      %2484 = vmatprep.subr.bf16.mxu0 0
      %2485 = vmatpush1.bf16.msra.mxu0 %v2391
      %2486 = vmatprep.subr.bf16.mxu0 0
      %2487 = vmatpush1.bf16.msra.mxu0 %v2390
      %2488 = vmatprep.subr.bf16.mxu0 0
      %2489 = vmatpush1.bf16.msra.mxu0 %v2389
      %2490 = vmatprep.subr.bf16.mxu0 0
      %2491 = vmatpush1.bf16.msra.mxu0 %v2388
      %2492 = vmatprep.subr.bf16.mxu0 0
      %2493 = vmatpush2.bf16.msra.mxu0 %v2403
      %2494 = vmatprep.subr.bf16.mxu0 0
      %2495 = vmatpush2.bf16.msra.mxu0 %v2402
      %2496 = vmatprep.subr.bf16.mxu0 0
      %2497 = vmatpush2.bf16.msra.mxu0 %v2401
      %2498 = vmatprep.subr.bf16.mxu0 0
      %2499 = vmatpush2.bf16.msra.mxu0 %v2400
      %2500 = vmatprep.subr.bf16.mxu0 0
      %2501 = vmatpush2.bf16.msra.mxu0 %v2399
      %2502 = vmatprep.subr.bf16.mxu0 0
      %2503 = vmatpush2.bf16.msra.mxu0 %v2398
      %2504 = vmatprep.subr.bf16.mxu0 0
      %2505 = vmatpush2.bf16.msra.mxu0 %v2397
      %2506 = vmatprep.subr.bf16.mxu0 0
      %2507 = vmatpush2.bf16.msra.mxu0 %v2396
      %2508 = vmatprep.mubr.bf16.mxu0 %v2239
      %2509 = vmatmul.mubr.bf16.gmra.mxu0 %v2238
      %v2510 = vpop.f32.mrf.mxu0
      %v2511 = vadd.f32 %v2471, %v2510
      %v2512 = vpop.f32.mrf.mxu0
      %v2513 = vpop.f32.mrf.mxu0
      %v2514 = vpop.f32.mrf.mxu0
      %2515 = vdwg.mxu0
      %v2516 = vadd.f32 %v2170, %v2511
      %s2517 = scalar_lea.vmem %s3, 1536
      %v2518 = vld [vmem:[%s2517] sm:$0xf]
      %v2519 = vld [vmem:[%s2517 + $0x4] sm:$0xf]
      %v2520 = vld [vmem:[%s2517 + $0x8] sm:$0xf]
      %v2521 = vld [vmem:[%s2517 + $0xc] sm:$0xf]
      %v2522 = vld [vmem:[%s2517 + $0x10] sm:$0xf]
      %v2523 = vld [vmem:[%s2517 + $0x14] sm:$0xf]
      %v2524 = vld [vmem:[%s2517 + $0x18] sm:$0xf]
      %v2525 = vld [vmem:[%s2517 + $0x1c] sm:$0xf]
      %v2526 = vld [vmem:[%s2517 + $0x20] sm:$0xf]
      %v2527 = vld [vmem:[%s2517 + $0x24] sm:$0xf]
      %v2528 = vld [vmem:[%s2517 + $0x28] sm:$0xf]
      %v2529 = vld [vmem:[%s2517 + $0x2c] sm:$0xf]
      %v2530 = vld [vmem:[%s2517 + $0x30] sm:$0xf]
      %v2531 = vld [vmem:[%s2517 + $0x34] sm:$0xf]
      %v2532 = vld [vmem:[%s2517 + $0x38] sm:$0xf]
      %v2533 = vld [vmem:[%s2517 + $0x3c] sm:$0xf]
      %v2534 = vld [vmem:[%s2517 + $0x40] sm:$0xf]
      %v2535 = vld [vmem:[%s2517 + $0x44] sm:$0xf]
      %v2536 = vld [vmem:[%s2517 + $0x48] sm:$0xf]
      %v2537 = vld [vmem:[%s2517 + $0x4c] sm:$0xf]
      %v2538 = vld [vmem:[%s2517 + $0x50] sm:$0xf]
      %v2539 = vld [vmem:[%s2517 + $0x54] sm:$0xf]
      %v2540 = vld [vmem:[%s2517 + $0x58] sm:$0xf]
      %v2541 = vld [vmem:[%s2517 + $0x5c] sm:$0xf]
      %v2542 = vld [vmem:[%s2517 + $0x60] sm:$0xf]
      %v2543 = vld [vmem:[%s2517 + $0x64] sm:$0xf]
      %v2544 = vld [vmem:[%s2517 + $0x68] sm:$0xf]
      %v2545 = vld [vmem:[%s2517 + $0x6c] sm:$0xf]
      %v2546 = vld [vmem:[%s2517 + $0x70] sm:$0xf]
      %v2547 = vld [vmem:[%s2517 + $0x74] sm:$0xf]
      %v2548 = vld [vmem:[%s2517 + $0x78] sm:$0xf]
      %v2549 = vld [vmem:[%s2517 + $0x7c] sm:$0xf]
      %v2550 = vld [vmem:[%s2517 + $0x80] sm:$0xf]
      %v2551 = vld [vmem:[%s2517 + $0x84] sm:$0xf]
      %v2552 = vld [vmem:[%s2517 + $0x88] sm:$0xf]
      %v2553 = vld [vmem:[%s2517 + $0x8c] sm:$0xf]
      %v2554 = vld [vmem:[%s2517 + $0x90] sm:$0xf]
      %v2555 = vld [vmem:[%s2517 + $0x94] sm:$0xf]
      %v2556 = vld [vmem:[%s2517 + $0x98] sm:$0xf]
      %v2557 = vld [vmem:[%s2517 + $0x9c] sm:$0xf]
      %v2558 = vld [vmem:[%s2517 + $0xa0] sm:$0xf]
      %v2559 = vld [vmem:[%s2517 + $0xa4] sm:$0xf]
      %v2560 = vld [vmem:[%s2517 + $0xa8] sm:$0xf]
      %v2561 = vld [vmem:[%s2517 + $0xac] sm:$0xf]
      %v2562 = vld [vmem:[%s2517 + $0xb0] sm:$0xf]
      %v2563 = vld [vmem:[%s2517 + $0xb4] sm:$0xf]
      %v2564 = vld [vmem:[%s2517 + $0xb8] sm:$0xf]
      %v2565 = vld [vmem:[%s2517 + $0xbc] sm:$0xf]
      %v2566 = vld [vmem:[%s2517 + $0xc0] sm:$0xf]
      %v2567 = vld [vmem:[%s2517 + $0xc4] sm:$0xf]
      %v2568 = vld [vmem:[%s2517 + $0xc8] sm:$0xf]
      %v2569 = vld [vmem:[%s2517 + $0xcc] sm:$0xf]
      %v2570 = vld [vmem:[%s2517 + $0xd0] sm:$0xf]
      %v2571 = vld [vmem:[%s2517 + $0xd4] sm:$0xf]
      %v2572 = vld [vmem:[%s2517 + $0xd8] sm:$0xf]
      %v2573 = vld [vmem:[%s2517 + $0xdc] sm:$0xf]
      %v2574 = vld [vmem:[%s2517 + $0xe0] sm:$0xf]
      %v2575 = vld [vmem:[%s2517 + $0xe4] sm:$0xf]
      %v2576 = vld [vmem:[%s2517 + $0xe8] sm:$0xf]
      %v2577 = vld [vmem:[%s2517 + $0xec] sm:$0xf]
      %v2578 = vld [vmem:[%s2517 + $0xf0] sm:$0xf]
      %v2579 = vld [vmem:[%s2517 + $0xf4] sm:$0xf]
      %v2580 = vld [vmem:[%s2517 + $0xf8] sm:$0xf]
      %v2581 = vld [vmem:[%s2517 + $0xfc] sm:$0xf]
      %v2582 = vrot.slane %v433, 3
      %v2583 = vrot.slane %v434, 3
      %v2584 = vrot.slane %v435, 3
      %v2585 = vrot.slane %v436, 3
      %v2654 = vunpack.c.l.b16 %v2518
      %v2655 = vunpack.c.l.b16 %v2519
      %v2656 = vunpack.c.l.b16 %v2520
      %v2657 = vunpack.c.l.b16 %v2521
      %v2658 = vunpack.c.l.b16 %v2522
      %v2659 = vunpack.c.l.b16 %v2523
      %v2660 = vunpack.c.l.b16 %v2524
      %v2661 = vunpack.c.l.b16 %v2525
      %v2662 = vunpack.c.l.b16 %v2526
      %v2663 = vunpack.c.l.b16 %v2527
      %v2664 = vunpack.c.l.b16 %v2528
      %v2665 = vunpack.c.l.b16 %v2529
      %v2666 = vunpack.c.l.b16 %v2530
      %v2667 = vunpack.c.l.b16 %v2531
      %v2668 = vunpack.c.l.b16 %v2532
      %v2669 = vunpack.c.l.b16 %v2533
      %v2670 = vunpack.c.l.b16 %v2534
      %v2671 = vunpack.c.l.b16 %v2535
      %v2672 = vunpack.c.l.b16 %v2536
      %v2673 = vunpack.c.l.b16 %v2537
      %v2674 = vunpack.c.l.b16 %v2538
      %v2675 = vunpack.c.l.b16 %v2539
      %v2676 = vunpack.c.l.b16 %v2540
      %v2677 = vunpack.c.l.b16 %v2541
      %v2678 = vunpack.c.l.b16 %v2542
      %v2679 = vunpack.c.l.b16 %v2543
      %v2680 = vunpack.c.l.b16 %v2544
      %v2681 = vunpack.c.l.b16 %v2545
      %v2682 = vunpack.c.l.b16 %v2546
      %v2683 = vunpack.c.l.b16 %v2547
      %v2684 = vunpack.c.l.b16 %v2548
      %v2685 = vunpack.c.l.b16 %v2549
      %v2686 = vunpack.c.l.b16 %v2550
      %v2687 = vunpack.c.l.b16 %v2551
      %v2688 = vunpack.c.l.b16 %v2552
      %v2689 = vunpack.c.l.b16 %v2553
      %v2690 = vunpack.c.l.b16 %v2554
      %v2691 = vunpack.c.l.b16 %v2555
      %v2692 = vunpack.c.l.b16 %v2556
      %v2693 = vunpack.c.l.b16 %v2557
      %v2694 = vunpack.c.l.b16 %v2558
      %v2695 = vunpack.c.l.b16 %v2559
      %v2696 = vunpack.c.l.b16 %v2560
      %v2697 = vunpack.c.l.b16 %v2561
      %v2698 = vunpack.c.l.b16 %v2562
      %v2699 = vunpack.c.l.b16 %v2563
      %v2700 = vunpack.c.l.b16 %v2564
      %v2701 = vunpack.c.l.b16 %v2565
      %v2702 = vunpack.c.l.b16 %v2566
      %v2703 = vunpack.c.l.b16 %v2567
      %v2704 = vunpack.c.l.b16 %v2568
      %v2705 = vunpack.c.l.b16 %v2569
      %v2706 = vunpack.c.l.b16 %v2570
      %v2707 = vunpack.c.l.b16 %v2571
      %v2708 = vunpack.c.l.b16 %v2572
      %v2709 = vunpack.c.l.b16 %v2573
      %v2710 = vunpack.c.l.b16 %v2574
      %v2711 = vunpack.c.l.b16 %v2575
      %v2712 = vunpack.c.l.b16 %v2576
      %v2713 = vunpack.c.l.b16 %v2577
      %v2714 = vunpack.c.l.b16 %v2578
      %v2715 = vunpack.c.l.b16 %v2579
      %v2716 = vunpack.c.l.b16 %v2580
      %v2717 = vunpack.c.l.b16 %v2581
      %v2718 = vpack.c.b16 %v2655, %v2654
      %v2719 = vpack.c.b16 %v2657, %v2656
      %v2720 = vpack.c.b16 %v2659, %v2658
      %v2721 = vpack.c.b16 %v2661, %v2660
      %v2722 = vpack.c.b16 %v2663, %v2662
      %v2723 = vpack.c.b16 %v2665, %v2664
      %v2724 = vpack.c.b16 %v2667, %v2666
      %v2725 = vpack.c.b16 %v2669, %v2668
      %v2726 = vpack.c.b16 %v2671, %v2670
      %v2727 = vpack.c.b16 %v2673, %v2672
      %v2728 = vpack.c.b16 %v2675, %v2674
      %v2729 = vpack.c.b16 %v2677, %v2676
      %v2730 = vpack.c.b16 %v2679, %v2678
      %v2731 = vpack.c.b16 %v2681, %v2680
      %v2732 = vpack.c.b16 %v2683, %v2682
      %v2733 = vpack.c.b16 %v2685, %v2684
      %v2734 = vpack.c.b16 %v2687, %v2686
      %v2735 = vpack.c.b16 %v2689, %v2688
      %v2736 = vpack.c.b16 %v2691, %v2690
      %v2737 = vpack.c.b16 %v2693, %v2692
      %v2738 = vpack.c.b16 %v2695, %v2694
      %v2739 = vpack.c.b16 %v2697, %v2696
      %v2740 = vpack.c.b16 %v2699, %v2698
      %v2741 = vpack.c.b16 %v2701, %v2700
      %v2742 = vpack.c.b16 %v2703, %v2702
      %v2743 = vpack.c.b16 %v2705, %v2704
      %v2744 = vpack.c.b16 %v2707, %v2706
      %v2745 = vpack.c.b16 %v2709, %v2708
      %v2746 = vpack.c.b16 %v2711, %v2710
      %v2747 = vpack.c.b16 %v2713, %v2712
      %v2748 = vpack.c.b16 %v2715, %v2714
      %v2749 = vpack.c.b16 %v2717, %v2716
      %2782 = vmatprep.subr.bf16.mxu0 0
      %2783 = vmatpush1.bf16.msra.mxu0 %v2725
      %2784 = vmatprep.subr.bf16.mxu0 0
      %2785 = vmatpush1.bf16.msra.mxu0 %v2724
      %2786 = vmatprep.subr.bf16.mxu0 0
      %2787 = vmatpush1.bf16.msra.mxu0 %v2723
      %2788 = vmatprep.subr.bf16.mxu0 0
      %2789 = vmatpush1.bf16.msra.mxu0 %v2722
      %2790 = vmatprep.subr.bf16.mxu0 0
      %2791 = vmatpush1.bf16.msra.mxu0 %v2721
      %2792 = vmatprep.subr.bf16.mxu0 0
      %2793 = vmatpush1.bf16.msra.mxu0 %v2720
      %2794 = vmatprep.subr.bf16.mxu0 0
      %2795 = vmatpush1.bf16.msra.mxu0 %v2719
      %2796 = vmatprep.subr.bf16.mxu0 0
      %2797 = vmatpush1.bf16.msra.mxu0 %v2718
      %2798 = vmatprep.subr.bf16.mxu0 0
      %2799 = vmatpush2.bf16.msra.mxu0 %v2733
      %2800 = vmatprep.subr.bf16.mxu0 0
      %2801 = vmatpush2.bf16.msra.mxu0 %v2732
      %2802 = vmatprep.subr.bf16.mxu0 0
      %2803 = vmatpush2.bf16.msra.mxu0 %v2731
      %2804 = vmatprep.subr.bf16.mxu0 0
      %2805 = vmatpush2.bf16.msra.mxu0 %v2730
      %2806 = vmatprep.subr.bf16.mxu0 0
      %2807 = vmatpush2.bf16.msra.mxu0 %v2729
      %2808 = vmatprep.subr.bf16.mxu0 0
      %2809 = vmatpush2.bf16.msra.mxu0 %v2728
      %2810 = vmatprep.subr.bf16.mxu0 0
      %2811 = vmatpush2.bf16.msra.mxu0 %v2727
      %2812 = vmatprep.subr.bf16.mxu0 0
      %2813 = vmatpush2.bf16.msra.mxu0 %v2726
      %2814 = vmatprep.mubr.bf16.mxu0 %v2583
      %2815 = vmatmul.mubr.bf16.gmra.mxu0 %v2582
      %v2816 = vpop.f32.mrf.mxu0
      %v2817 = vadd.f32 0.0, %v2816
      %v2818 = vpop.f32.mrf.mxu0
      %v2819 = vpop.f32.mrf.mxu0
      %v2820 = vpop.f32.mrf.mxu0
      %2821 = vdwg.mxu0
      %2822 = vmatprep.subr.bf16.mxu0 0
      %2823 = vmatpush1.bf16.msra.mxu0 %v2741
      %2824 = vmatprep.subr.bf16.mxu0 0
      %2825 = vmatpush1.bf16.msra.mxu0 %v2740
      %2826 = vmatprep.subr.bf16.mxu0 0
      %2827 = vmatpush1.bf16.msra.mxu0 %v2739
      %2828 = vmatprep.subr.bf16.mxu0 0
      %2829 = vmatpush1.bf16.msra.mxu0 %v2738
      %2830 = vmatprep.subr.bf16.mxu0 0
      %2831 = vmatpush1.bf16.msra.mxu0 %v2737
      %2832 = vmatprep.subr.bf16.mxu0 0
      %2833 = vmatpush1.bf16.msra.mxu0 %v2736
      %2834 = vmatprep.subr.bf16.mxu0 0
      %2835 = vmatpush1.bf16.msra.mxu0 %v2735
      %2836 = vmatprep.subr.bf16.mxu0 0
      %2837 = vmatpush1.bf16.msra.mxu0 %v2734
      %2838 = vmatprep.subr.bf16.mxu0 0
      %2839 = vmatpush2.bf16.msra.mxu0 %v2749
      %2840 = vmatprep.subr.bf16.mxu0 0
      %2841 = vmatpush2.bf16.msra.mxu0 %v2748
      %2842 = vmatprep.subr.bf16.mxu0 0
      %2843 = vmatpush2.bf16.msra.mxu0 %v2747
      %2844 = vmatprep.subr.bf16.mxu0 0
      %2845 = vmatpush2.bf16.msra.mxu0 %v2746
      %2846 = vmatprep.subr.bf16.mxu0 0
      %2847 = vmatpush2.bf16.msra.mxu0 %v2745
      %2848 = vmatprep.subr.bf16.mxu0 0
      %2849 = vmatpush2.bf16.msra.mxu0 %v2744
      %2850 = vmatprep.subr.bf16.mxu0 0
      %2851 = vmatpush2.bf16.msra.mxu0 %v2743
      %2852 = vmatprep.subr.bf16.mxu0 0
      %2853 = vmatpush2.bf16.msra.mxu0 %v2742
      %2854 = vmatprep.mubr.bf16.mxu0 %v2585
      %2855 = vmatmul.mubr.bf16.gmra.mxu0 %v2584
      %v2856 = vpop.f32.mrf.mxu0
      %v2857 = vadd.f32 %v2817, %v2856
      %v2858 = vpop.f32.mrf.mxu0
      %v2859 = vpop.f32.mrf.mxu0
      %v2860 = vpop.f32.mrf.mxu0
      %2861 = vdwg.mxu0
      %v2862 = vadd.f32 %v2516, %v2857
      %s2863 = scalar_lea.vmem %s3, 1792
      %v2864 = vld [vmem:[%s2863] sm:$0xf]
      %v2865 = vld [vmem:[%s2863 + $0x4] sm:$0xf]
      %v2866 = vld [vmem:[%s2863 + $0x8] sm:$0xf]
      %v2867 = vld [vmem:[%s2863 + $0xc] sm:$0xf]
      %v2868 = vld [vmem:[%s2863 + $0x10] sm:$0xf]
      %v2869 = vld [vmem:[%s2863 + $0x14] sm:$0xf]
      %v2870 = vld [vmem:[%s2863 + $0x18] sm:$0xf]
      %v2871 = vld [vmem:[%s2863 + $0x1c] sm:$0xf]
      %v2872 = vld [vmem:[%s2863 + $0x20] sm:$0xf]
      %v2873 = vld [vmem:[%s2863 + $0x24] sm:$0xf]
      %v2874 = vld [vmem:[%s2863 + $0x28] sm:$0xf]
      %v2875 = vld [vmem:[%s2863 + $0x2c] sm:$0xf]
      %v2876 = vld [vmem:[%s2863 + $0x30] sm:$0xf]
      %v2877 = vld [vmem:[%s2863 + $0x34] sm:$0xf]
      %v2878 = vld [vmem:[%s2863 + $0x38] sm:$0xf]
      %v2879 = vld [vmem:[%s2863 + $0x3c] sm:$0xf]
      %v2880 = vld [vmem:[%s2863 + $0x40] sm:$0xf]
      %v2881 = vld [vmem:[%s2863 + $0x44] sm:$0xf]
      %v2882 = vld [vmem:[%s2863 + $0x48] sm:$0xf]
      %v2883 = vld [vmem:[%s2863 + $0x4c] sm:$0xf]
      %v2884 = vld [vmem:[%s2863 + $0x50] sm:$0xf]
      %v2885 = vld [vmem:[%s2863 + $0x54] sm:$0xf]
      %v2886 = vld [vmem:[%s2863 + $0x58] sm:$0xf]
      %v2887 = vld [vmem:[%s2863 + $0x5c] sm:$0xf]
      %v2888 = vld [vmem:[%s2863 + $0x60] sm:$0xf]
      %v2889 = vld [vmem:[%s2863 + $0x64] sm:$0xf]
      %v2890 = vld [vmem:[%s2863 + $0x68] sm:$0xf]
      %v2891 = vld [vmem:[%s2863 + $0x6c] sm:$0xf]
      %v2892 = vld [vmem:[%s2863 + $0x70] sm:$0xf]
      %v2893 = vld [vmem:[%s2863 + $0x74] sm:$0xf]
      %v2894 = vld [vmem:[%s2863 + $0x78] sm:$0xf]
      %v2895 = vld [vmem:[%s2863 + $0x7c] sm:$0xf]
      %v2896 = vld [vmem:[%s2863 + $0x80] sm:$0xf]
      %v2897 = vld [vmem:[%s2863 + $0x84] sm:$0xf]
      %v2898 = vld [vmem:[%s2863 + $0x88] sm:$0xf]
      %v2899 = vld [vmem:[%s2863 + $0x8c] sm:$0xf]
      %v2900 = vld [vmem:[%s2863 + $0x90] sm:$0xf]
      %v2901 = vld [vmem:[%s2863 + $0x94] sm:$0xf]
      %v2902 = vld [vmem:[%s2863 + $0x98] sm:$0xf]
      %v2903 = vld [vmem:[%s2863 + $0x9c] sm:$0xf]
      %v2904 = vld [vmem:[%s2863 + $0xa0] sm:$0xf]
      %v2905 = vld [vmem:[%s2863 + $0xa4] sm:$0xf]
      %v2906 = vld [vmem:[%s2863 + $0xa8] sm:$0xf]
      %v2907 = vld [vmem:[%s2863 + $0xac] sm:$0xf]
      %v2908 = vld [vmem:[%s2863 + $0xb0] sm:$0xf]
      %v2909 = vld [vmem:[%s2863 + $0xb4] sm:$0xf]
      %v2910 = vld [vmem:[%s2863 + $0xb8] sm:$0xf]
      %v2911 = vld [vmem:[%s2863 + $0xbc] sm:$0xf]
      %v2912 = vld [vmem:[%s2863 + $0xc0] sm:$0xf]
      %v2913 = vld [vmem:[%s2863 + $0xc4] sm:$0xf]
      %v2914 = vld [vmem:[%s2863 + $0xc8] sm:$0xf]
      %v2915 = vld [vmem:[%s2863 + $0xcc] sm:$0xf]
      %v2916 = vld [vmem:[%s2863 + $0xd0] sm:$0xf]
      %v2917 = vld [vmem:[%s2863 + $0xd4] sm:$0xf]
      %v2918 = vld [vmem:[%s2863 + $0xd8] sm:$0xf]
      %v2919 = vld [vmem:[%s2863 + $0xdc] sm:$0xf]
      %v2920 = vld [vmem:[%s2863 + $0xe0] sm:$0xf]
      %v2921 = vld [vmem:[%s2863 + $0xe4] sm:$0xf]
      %v2922 = vld [vmem:[%s2863 + $0xe8] sm:$0xf]
      %v2923 = vld [vmem:[%s2863 + $0xec] sm:$0xf]
      %v2924 = vld [vmem:[%s2863 + $0xf0] sm:$0xf]
      %v2925 = vld [vmem:[%s2863 + $0xf4] sm:$0xf]
      %v2926 = vld [vmem:[%s2863 + $0xf8] sm:$0xf]
      %v2927 = vld [vmem:[%s2863 + $0xfc] sm:$0xf]
      %v2928 = vrot.slane %v841, 3
      %v2929 = vrot.slane %v844, 3
      %v2930 = vrot.slane %v847, 3
      %v2931 = vrot.slane %v850, 3
      %v3000 = vunpack.c.l.b16 %v2864
      %v3001 = vunpack.c.l.b16 %v2865
      %v3002 = vunpack.c.l.b16 %v2866
      %v3003 = vunpack.c.l.b16 %v2867
      %v3004 = vunpack.c.l.b16 %v2868
      %v3005 = vunpack.c.l.b16 %v2869
      %v3006 = vunpack.c.l.b16 %v2870
      %v3007 = vunpack.c.l.b16 %v2871
      %v3008 = vunpack.c.l.b16 %v2872
      %v3009 = vunpack.c.l.b16 %v2873
      %v3010 = vunpack.c.l.b16 %v2874
      %v3011 = vunpack.c.l.b16 %v2875
      %v3012 = vunpack.c.l.b16 %v2876
      %v3013 = vunpack.c.l.b16 %v2877
      %v3014 = vunpack.c.l.b16 %v2878
      %v3015 = vunpack.c.l.b16 %v2879
      %v3016 = vunpack.c.l.b16 %v2880
      %v3017 = vunpack.c.l.b16 %v2881
      %v3018 = vunpack.c.l.b16 %v2882
      %v3019 = vunpack.c.l.b16 %v2883
      %v3020 = vunpack.c.l.b16 %v2884
      %v3021 = vunpack.c.l.b16 %v2885
      %v3022 = vunpack.c.l.b16 %v2886
      %v3023 = vunpack.c.l.b16 %v2887
      %v3024 = vunpack.c.l.b16 %v2888
      %v3025 = vunpack.c.l.b16 %v2889
      %v3026 = vunpack.c.l.b16 %v2890
      %v3027 = vunpack.c.l.b16 %v2891
      %v3028 = vunpack.c.l.b16 %v2892
      %v3029 = vunpack.c.l.b16 %v2893
      %v3030 = vunpack.c.l.b16 %v2894
      %v3031 = vunpack.c.l.b16 %v2895
      %v3032 = vunpack.c.l.b16 %v2896
      %v3033 = vunpack.c.l.b16 %v2897
      %v3034 = vunpack.c.l.b16 %v2898
      %v3035 = vunpack.c.l.b16 %v2899
      %v3036 = vunpack.c.l.b16 %v2900
      %v3037 = vunpack.c.l.b16 %v2901
      %v3038 = vunpack.c.l.b16 %v2902
      %v3039 = vunpack.c.l.b16 %v2903
      %v3040 = vunpack.c.l.b16 %v2904
      %v3041 = vunpack.c.l.b16 %v2905
      %v3042 = vunpack.c.l.b16 %v2906
      %v3043 = vunpack.c.l.b16 %v2907
      %v3044 = vunpack.c.l.b16 %v2908
      %v3045 = vunpack.c.l.b16 %v2909
      %v3046 = vunpack.c.l.b16 %v2910
      %v3047 = vunpack.c.l.b16 %v2911
      %v3048 = vunpack.c.l.b16 %v2912
      %v3049 = vunpack.c.l.b16 %v2913
      %v3050 = vunpack.c.l.b16 %v2914
      %v3051 = vunpack.c.l.b16 %v2915
      %v3052 = vunpack.c.l.b16 %v2916
      %v3053 = vunpack.c.l.b16 %v2917
      %v3054 = vunpack.c.l.b16 %v2918
      %v3055 = vunpack.c.l.b16 %v2919
      %v3056 = vunpack.c.l.b16 %v2920
      %v3057 = vunpack.c.l.b16 %v2921
      %v3058 = vunpack.c.l.b16 %v2922
      %v3059 = vunpack.c.l.b16 %v2923
      %v3060 = vunpack.c.l.b16 %v2924
      %v3061 = vunpack.c.l.b16 %v2925
      %v3062 = vunpack.c.l.b16 %v2926
      %v3063 = vunpack.c.l.b16 %v2927
      %v3064 = vpack.c.b16 %v3001, %v3000
      %v3065 = vpack.c.b16 %v3003, %v3002
      %v3066 = vpack.c.b16 %v3005, %v3004
      %v3067 = vpack.c.b16 %v3007, %v3006
      %v3068 = vpack.c.b16 %v3009, %v3008
      %v3069 = vpack.c.b16 %v3011, %v3010
      %v3070 = vpack.c.b16 %v3013, %v3012
      %v3071 = vpack.c.b16 %v3015, %v3014
      %v3072 = vpack.c.b16 %v3017, %v3016
      %v3073 = vpack.c.b16 %v3019, %v3018
      %v3074 = vpack.c.b16 %v3021, %v3020
      %v3075 = vpack.c.b16 %v3023, %v3022
      %v3076 = vpack.c.b16 %v3025, %v3024
      %v3077 = vpack.c.b16 %v3027, %v3026
      %v3078 = vpack.c.b16 %v3029, %v3028
      %v3079 = vpack.c.b16 %v3031, %v3030
      %v3080 = vpack.c.b16 %v3033, %v3032
      %v3081 = vpack.c.b16 %v3035, %v3034
      %v3082 = vpack.c.b16 %v3037, %v3036
      %v3083 = vpack.c.b16 %v3039, %v3038
      %v3084 = vpack.c.b16 %v3041, %v3040
      %v3085 = vpack.c.b16 %v3043, %v3042
      %v3086 = vpack.c.b16 %v3045, %v3044
      %v3087 = vpack.c.b16 %v3047, %v3046
      %v3088 = vpack.c.b16 %v3049, %v3048
      %v3089 = vpack.c.b16 %v3051, %v3050
      %v3090 = vpack.c.b16 %v3053, %v3052
      %v3091 = vpack.c.b16 %v3055, %v3054
      %v3092 = vpack.c.b16 %v3057, %v3056
      %v3093 = vpack.c.b16 %v3059, %v3058
      %v3094 = vpack.c.b16 %v3061, %v3060
      %v3095 = vpack.c.b16 %v3063, %v3062
      %3128 = vmatprep.subr.bf16.mxu0 0
      %3129 = vmatpush1.bf16.msra.mxu0 %v3071
      %3130 = vmatprep.subr.bf16.mxu0 0
      %3131 = vmatpush1.bf16.msra.mxu0 %v3070
      %3132 = vmatprep.subr.bf16.mxu0 0
      %3133 = vmatpush1.bf16.msra.mxu0 %v3069
      %3134 = vmatprep.subr.bf16.mxu0 0
      %3135 = vmatpush1.bf16.msra.mxu0 %v3068
      %3136 = vmatprep.subr.bf16.mxu0 0
      %3137 = vmatpush1.bf16.msra.mxu0 %v3067
      %3138 = vmatprep.subr.bf16.mxu0 0
      %3139 = vmatpush1.bf16.msra.mxu0 %v3066
      %3140 = vmatprep.subr.bf16.mxu0 0
      %3141 = vmatpush1.bf16.msra.mxu0 %v3065
      %3142 = vmatprep.subr.bf16.mxu0 0
      %3143 = vmatpush1.bf16.msra.mxu0 %v3064
      %3144 = vmatprep.subr.bf16.mxu0 0
      %3145 = vmatpush2.bf16.msra.mxu0 %v3079
      %3146 = vmatprep.subr.bf16.mxu0 0
      %3147 = vmatpush2.bf16.msra.mxu0 %v3078
      %3148 = vmatprep.subr.bf16.mxu0 0
      %3149 = vmatpush2.bf16.msra.mxu0 %v3077
      %3150 = vmatprep.subr.bf16.mxu0 0
      %3151 = vmatpush2.bf16.msra.mxu0 %v3076
      %3152 = vmatprep.subr.bf16.mxu0 0
      %3153 = vmatpush2.bf16.msra.mxu0 %v3075
      %3154 = vmatprep.subr.bf16.mxu0 0
      %3155 = vmatpush2.bf16.msra.mxu0 %v3074
      %3156 = vmatprep.subr.bf16.mxu0 0
      %3157 = vmatpush2.bf16.msra.mxu0 %v3073
      %3158 = vmatprep.subr.bf16.mxu0 0
      %3159 = vmatpush2.bf16.msra.mxu0 %v3072
      %3160 = vmatprep.mubr.bf16.mxu0 %v2929
      %3161 = vmatmul.mubr.bf16.gmra.mxu0 %v2928
      %v3162 = vpop.f32.mrf.mxu0
      %v3163 = vadd.f32 0.0, %v3162
      %v3164 = vpop.f32.mrf.mxu0
      %v3165 = vpop.f32.mrf.mxu0
      %v3166 = vpop.f32.mrf.mxu0
      %3167 = vdwg.mxu0
      %3168 = vmatprep.subr.bf16.mxu0 0
      %3169 = vmatpush1.bf16.msra.mxu0 %v3087
      %3170 = vmatprep.subr.bf16.mxu0 0
      %3171 = vmatpush1.bf16.msra.mxu0 %v3086
      %3172 = vmatprep.subr.bf16.mxu0 0
      %3173 = vmatpush1.bf16.msra.mxu0 %v3085
      %3174 = vmatprep.subr.bf16.mxu0 0
      %3175 = vmatpush1.bf16.msra.mxu0 %v3084
      %3176 = vmatprep.subr.bf16.mxu0 0
      %3177 = vmatpush1.bf16.msra.mxu0 %v3083
      %3178 = vmatprep.subr.bf16.mxu0 0
      %3179 = vmatpush1.bf16.msra.mxu0 %v3082
      %3180 = vmatprep.subr.bf16.mxu0 0
      %3181 = vmatpush1.bf16.msra.mxu0 %v3081
      %3182 = vmatprep.subr.bf16.mxu0 0
      %3183 = vmatpush1.bf16.msra.mxu0 %v3080
      %3184 = vmatprep.subr.bf16.mxu0 0
      %3185 = vmatpush2.bf16.msra.mxu0 %v3095
      %3186 = vmatprep.subr.bf16.mxu0 0
      %3187 = vmatpush2.bf16.msra.mxu0 %v3094
      %3188 = vmatprep.subr.bf16.mxu0 0
      %3189 = vmatpush2.bf16.msra.mxu0 %v3093
      %3190 = vmatprep.subr.bf16.mxu0 0
      %3191 = vmatpush2.bf16.msra.mxu0 %v3092
      %3192 = vmatprep.subr.bf16.mxu0 0
      %3193 = vmatpush2.bf16.msra.mxu0 %v3091
      %3194 = vmatprep.subr.bf16.mxu0 0
      %3195 = vmatpush2.bf16.msra.mxu0 %v3090
      %3196 = vmatprep.subr.bf16.mxu0 0
      %3197 = vmatpush2.bf16.msra.mxu0 %v3089
      %3198 = vmatprep.subr.bf16.mxu0 0
      %3199 = vmatpush2.bf16.msra.mxu0 %v3088
      %3200 = vmatprep.mubr.bf16.mxu0 %v2931
      %3201 = vmatmul.mubr.bf16.gmra.mxu0 %v2930
      %v3202 = vpop.f32.mrf.mxu0
      %v3203 = vadd.f32 %v3163, %v3202
      %v3204 = vpop.f32.mrf.mxu0
      %v3205 = vpop.f32.mrf.mxu0
      %v3206 = vpop.f32.mrf.mxu0
      %3207 = vdwg.mxu0
      %v3208 = vadd.f32 %v2862, %v3203
      %v3209 = vmax.f32 %v3208, 0.0
      %v3210 = vpack.c.bf16 %v3209, %v3209
      %v3211 = vld [vmem:[%s5] sm:$0xf]
      %v3212 = vld [vmem:[%s5 + $0x4] sm:$0xf]
      %v3213 = vld [vmem:[%s5 + $0x8] sm:$0xf]
      %v3214 = vld [vmem:[%s5 + $0xc] sm:$0xf]
      %v3215 = vld [vmem:[%s5 + $0x10] sm:$0xf]
      %v3216 = vld [vmem:[%s5 + $0x14] sm:$0xf]
      %v3217 = vld [vmem:[%s5 + $0x18] sm:$0xf]
      %v3218 = vld [vmem:[%s5 + $0x1c] sm:$0xf]
      %v3219 = vld [vmem:[%s6] sm:$0x1]
      %v3228 = vunpack.c.l.b16 %v3211
      %v3229 = vunpack.c.l.b16 %v3212
      %v3230 = vunpack.c.l.b16 %v3213
      %v3231 = vunpack.c.l.b16 %v3214
      %v3232 = vunpack.c.l.b16 %v3215
      %v3233 = vunpack.c.l.b16 %v3216
      %v3234 = vunpack.c.l.b16 %v3217
      %v3235 = vunpack.c.l.b16 %v3218
      %v3236 = vpack.c.b16 %v3229, %v3228
      %v3237 = vpack.c.b16 %v3231, %v3230
      %v3238 = vpack.c.b16 %v3233, %v3232
      %v3239 = vpack.c.b16 %v3235, %v3234
      %vm3244 = vcmask 523264
      %v3246 = vsel %vm3244, %v3210, 0
      %3248 = vmatprep.subr.bf16.mxu0 0
      %3249 = vmatpush1.bf16.msra.mxu0 0
      %3250 = vmatprep.subr.bf16.mxu0 0
      %3251 = vmatpush1.bf16.msra.mxu0 0
      %3252 = vmatprep.subr.bf16.mxu0 0
      %3253 = vmatpush1.bf16.msra.mxu0 0
      %3254 = vmatprep.subr.bf16.mxu0 0
      %3255 = vmatpush1.bf16.msra.mxu0 0
      %3256 = vmatprep.subr.bf16.mxu0 0
      %3257 = vmatpush1.bf16.msra.mxu0 %v3239
      %3258 = vmatprep.subr.bf16.mxu0 0
      %3259 = vmatpush1.bf16.msra.mxu0 %v3238
      %3260 = vmatprep.subr.bf16.mxu0 0
      %3261 = vmatpush1.bf16.msra.mxu0 %v3237
      %3262 = vmatprep.subr.bf16.mxu0 0
      %3263 = vmatpush1.bf16.msra.mxu0 %v3236
      %3264 = vmatprep.subr.bf16.mxu0 0
      %3265 = vmatpush2.bf16.msra.mxu0 0
      %3266 = vmatprep.subr.bf16.mxu0 0
      %3267 = vmatpush2.bf16.msra.mxu0 0
      %3268 = vmatprep.subr.bf16.mxu0 0
      %3269 = vmatpush2.bf16.msra.mxu0 0
      %3270 = vmatprep.subr.bf16.mxu0 0
      %3271 = vmatpush2.bf16.msra.mxu0 0
      %3272 = vmatprep.subr.bf16.mxu0 0
      %3273 = vmatpush2.bf16.msra.mxu0 0
      %3274 = vmatprep.subr.bf16.mxu0 0
      %3275 = vmatpush2.bf16.msra.mxu0 0
      %3276 = vmatprep.subr.bf16.mxu0 0
      %3277 = vmatpush2.bf16.msra.mxu0 0
      %3278 = vmatprep.subr.bf16.mxu0 0
      %3279 = vmatpush2.bf16.msra.mxu0 0
      %3280 = vmatprep.mubr.bf16.mxu0 0
      %3281 = vmatmul.mubr.bf16.gmra.mxu0 %v3246
      %v3282 = vpop.f32.mrf.mxu0
      %v3283 = vadd.f32 %v3219, %v3282
      %v3284 = vpop.f32.mrf.mxu0
      %v3285 = vpop.f32.mrf.mxu0
      %v3286 = vpop.f32.mrf.mxu0
      %3287 = vdwg.mxu0
      %vm3288 = vcmask 90112
      %3289 = vst.msk [vmem:[%s274] sm:$0x1] %vm3288, %v3283
      %p3290 = scmp.lt.s32.totalorder %s18, 1
      %s3291 = scalar_select %p3290, %s18, 1
      %s3292 = scalar_lea.vmem %s7, %s3291
      // Predicated region
      $region49: #{pvcnet_forward.3} parent=47 // pred_check
        %p3293 = pneg %p188
      $region50: #{pvcnet_forward.3} parent=47 // pred_check_branch
        %3295 = sbr.rel (%p3293) target = $region52
      $region51: #{pvcnet_forward.3} parent=47 // pred_region
        _
      $region52: #{pvcnet_forward.3} parent=47 // pred_fallthru
        _
    $region48: #{pvcnet_forward.3} parent=5 // pred_fallthru
      _
    %p3296 = scmp.le.s32.totalorder 2, %s13
    // Predicated region
    $region53: #{pvcnet_forward.3} parent=5 // pred_check
      %p3297 = pneg %p3296
    $region54: #{pvcnet_forward.3} parent=5 // pred_check_branch
      %3299 = sbr.rel (%p3297) target = $region56
    $region55: #{pvcnet_forward.3} parent=5 // pred_region
      %s3300 = ssub.s32 %s13, 2
      // Predicated region
      $region57: #{pvcnet_forward.3} parent=55 // pred_check
        %p3301 = pneg %p194
      $region58: #{pvcnet_forward.3} parent=55 // pred_check_branch
        %3303 = sbr.rel (%p3301) target = $region60
      $region59: #{pvcnet_forward.3} parent=55 // pred_region
        %p3304 = scmp.lt.s32.totalorder %s19, 1
        %s3305 = scalar_select %p3304, %s19, 1
        %s3306 = scalar_lea.vmem %s7, %s3305
      $region60: #{pvcnet_forward.3} parent=55 // pred_fallthru
        _
    $region56: #{pvcnet_forward.3} parent=5 // pred_fallthru
      _
  $region6: #{pvcnet_forward.3} parent=0 // loop_footer
    %s17 = sadd.s32 1, %s13
  $region7: #{pvcnet_forward.3} parent=0 // loop_footer_branch
    %12 = sbr.rel target = $region3
  $region8: #{pvcnet_forward.3} parent=0 // loop_exit
    _

</llo_original>
